<compile_context>
chip_gen: v5e
topology: v5e:2x2
jax: 0.10.0
libtpu: 0.0.40
codegen_flags: <defaults>
</compile_context>

<pallas_src>
import functools

import jax
import jax.numpy as jnp
from jax import lax
from jax.experimental import pallas as pl
from jax.experimental.pallas import tpu as pltpu

ROW_TILE = 128          # query-row tile; node axis is padded to a multiple of this
NEG_INF = -1e9

_VMEM = pl.BlockSpec(memory_space=pltpu.MemorySpace.VMEM)


# ----------------------------- Pallas kernels ------------------------------

def _qkv_kernel(x_ref, w_ref, b_ref, o_ref):
    # Fused Q/K/V projection: one [TQ, d] x [d, 3d] matmul (bf16 in, f32 accumulate).
    x = x_ref[...].astype(jnp.bfloat16)
    o_ref[...] = jnp.dot(x, w_ref[...],
                         preferred_element_type=jnp.float32) + b_ref[...]


def _attn_ffn_kernel(qkv_tile_ref, qkv_all_ref, x_ref, bcol_ref, brow_ref,
                     wo_ref, bo_ref, ln1g_ref, ln1b_ref,
                     w1_ref, b1_ref, w2_ref, b2_ref, ln2g_ref, ln2b_ref,
                     o_ref, *, num_heads, scale):
    """Fused: MHA (per-graph masked) + out-proj + res + LN1 + FFN + res + LN2."""
    d = x_ref.shape[1]
    dh = d // num_heads

    qkv_t = qkv_tile_ref[...]            # [TQ, 3d]  (query rows of this tile)
    qkv_a = qkv_all_ref[...]             # [N , 3d]  (all keys / values)
    q = qkv_t[:, 0:d]
    k = qkv_a[:, d:2 * d]
    v = qkv_a[:, 2 * d:3 * d]

    # Per-graph additive mask computed on the fly (no [N, N] HBM mask).
    same = bcol_ref[...] == brow_ref[...]                    # [TQ, N] bool
    mask = jnp.where(same, 0.0, NEG_INF).astype(jnp.float32)

    heads = []
    for h in range(num_heads):                               # static, unrolled
        q_h = (q[:, h * dh:(h + 1) * dh] * scale).astype(jnp.bfloat16)
        k_h = k[:, h * dh:(h + 1) * dh].astype(jnp.bfloat16)
        v_h = v[:, h * dh:(h + 1) * dh].astype(jnp.bfloat16)
        s = lax.dot_general(q_h, k_h, (((1,), (1,)), ((), ())),
                            preferred_element_type=jnp.float32)   # [TQ, N]
        s = s + mask
        s = s - jnp.max(s, axis=-1, keepdims=True)
        p = jnp.exp(s)
        p = p * pl.reciprocal(jnp.sum(p, axis=-1, keepdims=True), approx=True)
        heads.append(jnp.dot(p.astype(jnp.bfloat16), v_h,
                             preferred_element_type=jnp.float32))  # [TQ, dh]
    attn = jnp.concatenate(heads, axis=1)                    # [TQ, d]

    attn = jnp.dot(attn.astype(jnp.bfloat16), wo_ref[...],
                   preferred_element_type=jnp.float32) + bo_ref[...]

    # residual + LayerNorm 1 (post-norm, eps matches PyTorch)
    h1 = x_ref[...] + attn
    mu = jnp.mean(h1, axis=-1, keepdims=True)
    var = jnp.mean((h1 - mu) ** 2, axis=-1, keepdims=True)
    h1 = (h1 - mu) * lax.rsqrt(var + 1e-5) * ln1g_ref[...] + ln1b_ref[...]

    # FFN: W1 -> ReLU -> W2 (kept in VMEM, no HBM intermediate)
    f = jnp.dot(h1.astype(jnp.bfloat16), w1_ref[...],
                preferred_element_type=jnp.float32) + b1_ref[...]
    f = jnp.maximum(f, 0.0)
    f = jnp.dot(f.astype(jnp.bfloat16), w2_ref[...],
                preferred_element_type=jnp.float32) + b2_ref[...]

    # residual + LayerNorm 2
    h2 = h1 + f
    mu2 = jnp.mean(h2, axis=-1, keepdims=True)
    var2 = jnp.mean((h2 - mu2) ** 2, axis=-1, keepdims=True)
    o_ref[...] = (h2 - mu2) * lax.rsqrt(var2 + 1e-5) * ln2g_ref[...] + ln2b_ref[...]


def _pool_classify_kernel(oh_ref, x_ref, cnt_ref, w1_ref, b1_ref, w2_ref, b2_ref,
                          o_ref):
    # global mean pool (one-hot matmul) fused with classifier Linear->ReLU->Linear.
    pooled = jnp.dot(oh_ref[...].astype(jnp.bfloat16),
                     x_ref[...].astype(jnp.bfloat16),
                     preferred_element_type=jnp.float32)
    pooled = pooled * pl.reciprocal(cnt_ref[...], approx=True)
    h = jnp.dot(pooled.astype(jnp.bfloat16), w1_ref[...],
                preferred_element_type=jnp.float32) + b1_ref[...]
    h = jnp.maximum(h, 0.0)
    o_ref[...] = jnp.dot(h.astype(jnp.bfloat16), w2_ref[...],
                         preferred_element_type=jnp.float32) + b2_ref[...]


# ----------------------------- kernel wrappers ------------------------------

def qkv_projection(x, w, b):
    n_pad, d = x.shape
    d3 = w.shape[1]
    return pl.pallas_call(
        _qkv_kernel,
        out_shape=jax.ShapeDtypeStruct((n_pad, d3), jnp.float32),
        grid=(n_pad // ROW_TILE,),
        in_specs=[pl.BlockSpec((ROW_TILE, d), lambda i: (i, 0)),
                  pl.BlockSpec((d, d3), lambda i: (0, 0)),
                  pl.BlockSpec((1, d3), lambda i: (0, 0))],
        out_specs=pl.BlockSpec((ROW_TILE, d3), lambda i: (i, 0)),
        compiler_params=pltpu.CompilerParams(dimension_semantics=("parallel",)),
    )(x, w, b)


def encoder_layer(x_pad, bcol, brow, p, num_heads):
    n_pad, d = x_pad.shape
    dff = p['w1'].shape[1]
    scale = 1.0 / float(d // num_heads) ** 0.5

    qkv = qkv_projection(x_pad, p['wqkv'], p['bqkv'])        # [N_pad, 3d]

    kern = functools.partial(_attn_ffn_kernel, num_heads=num_heads, scale=scale)
    full = lambda shape: pl.BlockSpec(shape, lambda i: (0, 0))

    return pl.pallas_call(
        kern,
        out_shape=jax.ShapeDtypeStruct((n_pad, d), jnp.float32),
        grid=(n_pad // ROW_TILE,),
        in_specs=[pl.BlockSpec((ROW_TILE, 3 * d), lambda i: (i, 0)),   # q rows
                  pl.BlockSpec((n_pad, 3 * d), lambda i: (0, 0)),      # full k/v
                  pl.BlockSpec((ROW_TILE, d), lambda i: (i, 0)),       # residual x
                  pl.BlockSpec((ROW_TILE, 1), lambda i: (i, 0)),       # batch ids (col)
                  pl.BlockSpec((1, n_pad), lambda i: (0, 0)),          # batch ids (row)
                  full((d, d)), full((1, d)),                          # wo, bo
                  full((1, d)), full((1, d)),                          # ln1 g/b
                  full((d, dff)), full((1, dff)),                      # w1, b1
                  full((dff, d)), full((1, d)),                        # w2, b2
                  full((1, d)), full((1, d))],                         # ln2 g/b
        out_specs=pl.BlockSpec((ROW_TILE, d), lambda i: (i, 0)),
        compiler_params=pltpu.CompilerParams(dimension_semantics=("parallel",)),
    )(qkv, qkv, x_pad, bcol, brow,
      p['wo'], p['bo'], p['ln1_g'], p['ln1_b'],
      p['w1'], p['b1'], p['w2'], p['b2'], p['ln2_g'], p['ln2_b'])


# ----------------------------- model assembly ------------------------------

def graph_transformer_forward(params, x_idx, batch, num_graphs, num_heads):
    # Embedding lookup (glue).  nn.Dropout(0.1): identity in eval mode.
    x = jnp.take(params['embedding'], x_idx, axis=0)          # [N, d] f32

    n, d = x.shape
    n_pad = ((n + ROW_TILE - 1) // ROW_TILE) * ROW_TILE
    x = jnp.pad(x, ((0, n_pad - n), (0, 0)))
    bpad = jnp.pad(batch.astype(jnp.int32), (0, n_pad - n), constant_values=-1)
    bcol = bpad.reshape(n_pad, 1)                             # int32 graph ids
    brow = bpad.reshape(1, n_pad)

    for layer_p in params['layers']:
        x = encoder_layer(x, bcol, brow, layer_p, num_heads)
    # TransformerEncoder norm is None -> no final norm.

    # fused global mean pool + classifier
    onehot = (bpad[None, :] ==
              jnp.arange(num_graphs, dtype=jnp.int32)[:, None]).astype(jnp.float32)
    counts = jnp.maximum(jnp.sum(onehot, axis=1, keepdims=True), 1.0)
    num_class = params['wc2'].shape[1]
    out = pl.pallas_call(
        _pool_classify_kernel,
        out_shape=jax.ShapeDtypeStruct((num_graphs, num_class), jnp.float32),
        in_specs=[_VMEM] * 7,
        out_specs=_VMEM,
    )(onehot, x, counts, params['wc1'], params['bc1'], params['wc2'], params['bc2'])
    return out


# ----------------------------- parameter init ------------------------------

def init_params(key, vocab_size, d_model, num_heads, dim_feedforward,
                num_layers, num_class):
    keys = jax.random.split(key, 3 + num_layers)

    def dense(k, fan_in, fan_out):
        w = (0.02 * jax.random.normal(k, (fan_in, fan_out), jnp.float32)
             ).astype(jnp.bfloat16)                 # weights in bf16 for the MXU
        b = jnp.zeros((1, fan_out), jnp.float32)    # biases / LN params in f32
        return w, b

    params = {'embedding': 0.02 * jax.random.normal(
        keys[0], (vocab_size, d_model), jnp.float32)}

    layers = []
    for li in range(num_layers):
        lk = jax.random.split(keys[1 + li], 4)
        wqkv, bqkv = dense(lk[0], d_model, 3 * d_model)   # fused Wq|Wk|Wv
        wo, bo = dense(lk[1], d_model, d_model)
        w1, b1 = dense(lk[2], d_model, dim_feedforward)
        w2, b2 = dense(lk[3], dim_feedforward, d_model)
        layers.append(dict(
            wqkv=wqkv, bqkv=bqkv, wo=wo, bo=bo, w1=w1, b1=b1, w2=w2, b2=b2,
            ln1_g=jnp.ones((1, d_model), jnp.float32),
            ln1_b=jnp.zeros((1, d_model), jnp.float32),
            ln2_g=jnp.ones((1, d_model), jnp.float32),
            ln2_b=jnp.zeros((1, d_model), jnp.float32),
        ))
    params['layers'] = layers

    wc1, bc1 = dense(keys[1 + num_layers], d_model, d_model)
    wc2, bc2 = dense(keys[2 + num_layers], d_model, num_class)
    params['wc1'], params['bc1'] = wc1, bc1
    params['wc2'], params['bc2'] = wc2, bc2
    return params


# ---------------------------------- main -----------------------------------

if __name__ == "__main__":
    VOCAB = 50          # in_size (int -> nn.Embedding)
    D_MODEL = 128       # lane-dense (multiple of 128)
    NUM_HEADS = 8       # module default
    DIM_FF = 256        # lane-dense (multiple of 128)
    NUM_LAYERS = 2
    NUM_CLASS = 10
    N_NODES = 16        # total nodes across the batch of graphs
    NUM_GRAPHS = 2

    key = jax.random.PRNGKey(0)
    k_param, k_x = jax.random.split(key)

    params = init_params(k_param, VOCAB, D_MODEL, NUM_HEADS, DIM_FF,
                         NUM_LAYERS, NUM_CLASS)

    x_idx = jax.random.randint(k_x, (N_NODES,), 0, VOCAB, dtype=jnp.int32)
    batch = jnp.concatenate([
        jnp.zeros((N_NODES // 2,), jnp.int32),
        jnp.ones((N_NODES // 2,), jnp.int32),
    ])

    fwd = jax.jit(functools.partial(graph_transformer_forward,
                                    num_graphs=NUM_GRAPHS,
                                    num_heads=NUM_HEADS))
    out = jax.block_until_ready(fwd(params, x_idx, batch))
    assert out.shape == (NUM_GRAPHS, NUM_CLASS)
    assert bool(jnp.all(jnp.isfinite(out)))
    print("KERNEL_OK")
</pallas_src>

<mosaic_0001>
module attributes {stable_mosaic.version = 11 : i64} {
  func.func @_qkv_kernel(%arg0: i32, %arg1: memref<128x128xf32, #tpu.memory_space<vmem>>, %arg2: memref<128x384xbf16, #tpu.memory_space<vmem>>, %arg3: memref<1x384xf32, #tpu.memory_space<vmem>>, %arg4: memref<128x384xf32, #tpu.memory_space<vmem>>) attributes {dimension_semantics = [#tpu.dimension_semantics<parallel>], iteration_bounds = array<i64: 1>, scalar_prefetch = 0 : i64, scratch_operands = 0 : i64, tpu.core_type = #tpu.core_type<tc>, window_params = [{transform_indices = @transform_0, window_bounds = array<i64: 128, 128>}, {pipeline_mode = #tpu.pipeline_mode<synchronous>, transform_indices = @transform_1, window_bounds = array<i64: 128, 384>}, {pipeline_mode = #tpu.pipeline_mode<synchronous>, transform_indices = @transform_2, window_bounds = array<i64: 1, 384>}, {transform_indices = @transform_3, window_bounds = array<i64: 128, 384>}]} {
    %c0 = arith.constant 0 : index
    %c0_0 = arith.constant 0 : index
    %0 = vector.load %arg1[%c0, %c0_0] : memref<128x128xf32, #tpu.memory_space<vmem>>, vector<128x128xf32>
    %1 = arith.truncf %0 : vector<128x128xf32> to vector<128x128xbf16>
    %c0_1 = arith.constant 0 : index
    %c0_2 = arith.constant 0 : index
    %2 = vector.load %arg2[%c0_1, %c0_2] : memref<128x384xbf16, #tpu.memory_space<vmem>>, vector<128x384xbf16>
    %cst = arith.constant dense<0.000000e+00> : vector<128x384xf32>
    %3 = tpu.matmul %1, %2, %cst {dimension_numbers = #tpu.dot_dimension_numbers<[1], [0], [0], [1], [0, 0, 1, 1], [], []>} : vector<128x128xbf16>, vector<128x384xbf16>, vector<128x384xf32> -> vector<128x384xf32>
    %c0_3 = arith.constant 0 : index
    %c0_4 = arith.constant 0 : index
    %4 = vector.load %arg3[%c0_3, %c0_4] : memref<1x384xf32, #tpu.memory_space<vmem>>, vector<1x384xf32>
    %5 = vector.broadcast %4 : vector<1x384xf32> to vector<128x384xf32>
    %6 = arith.addf %3, %5 : vector<128x384xf32>
    %c0_5 = arith.constant 0 : index
    %c0_6 = arith.constant 0 : index
    %7 = vector.load %arg4[%c0_5, %c0_6] : memref<128x384xf32, #tpu.memory_space<vmem>>, vector<128x384xf32>
    tpu.vector_store %arg4[%c0_5, %c0_6], %6 {strides = array<i32>} : memref<128x384xf32, #tpu.memory_space<vmem>>, vector<128x384xf32>,
    return
  }
  func.func @transform_0(%arg0: i32) -> (i32, i32) {
    %c0_i32 = arith.constant 0 : i32
    %c0_i32_0 = arith.constant 0 : i32
    return %arg0, %c0_i32 : i32, i32
  }
  func.func @transform_1(%arg0: i32) -> (i32, i32) {
    %c0_i32 = arith.constant 0 : i32
    %c0_i32_0 = arith.constant 0 : i32
    %c0_i32_1 = arith.constant 0 : i32
    return %c0_i32, %c0_i32_0 : i32, i32
  }
  func.func @transform_2(%arg0: i32) -> (i32, i32) {
    %c0_i32 = arith.constant 0 : i32
    %c0_i32_0 = arith.constant 0 : i32
    %c0_i32_1 = arith.constant 0 : i32
    return %c0_i32, %c0_i32_0 : i32, i32
  }
  func.func @transform_3(%arg0: i32) -> (i32, i32) {
    %c0_i32 = arith.constant 0 : i32
    %c0_i32_0 = arith.constant 0 : i32
    return %arg0, %c0_i32 : i32, i32
  }
}

module attributes {stable_mosaic.version = 11 : i64} {
  func.func @_attn_ffn_kernel(%arg0: i32, %arg1: memref<128x384xf32, #tpu.memory_space<vmem>>, %arg2: memref<128x384xf32, #tpu.memory_space<vmem>>, %arg3: memref<128x128xf32, #tpu.memory_space<vmem>>, %arg4: memref<128x1xi32, #tpu.memory_space<vmem>>, %arg5: memref<1x128xi32, #tpu.memory_space<vmem>>, %arg6: memref<128x128xbf16, #tpu.memory_space<vmem>>, %arg7: memref<1x128xf32, #tpu.memory_space<vmem>>, %arg8: memref<1x128xf32, #tpu.memory_space<vmem>>, %arg9: memref<1x128xf32, #tpu.memory_space<vmem>>, %arg10: memref<128x256xbf16, #tpu.memory_space<vmem>>, %arg11: memref<1x256xf32, #tpu.memory_space<vmem>>, %arg12: memref<256x128xbf16, #tpu.memory_space<vmem>>, %arg13: memref<1x128xf32, #tpu.memory_space<vmem>>, %arg14: memref<1x128xf32, #tpu.memory_space<vmem>>, %arg15: memref<1x128xf32, #tpu.memory_space<vmem>>, %arg16: memref<128x128xf32, #tpu.memory_space<vmem>>) attributes {dimension_semantics = [#tpu.dimension_semantics<parallel>], iteration_bounds = array<i64: 1>, scalar_prefetch = 0 : i64, scratch_operands = 0 : i64, tpu.core_type = #tpu.core_type<tc>, window_params = [{transform_indices = @transform_0, window_bounds = array<i64: 128, 384>}, {pipeline_mode = #tpu.pipeline_mode<synchronous>, transform_indices = @transform_1, window_bounds = array<i64: 128, 384>}, {transform_indices = @transform_2, window_bounds = array<i64: 128, 128>}, {transform_indices = @transform_3, window_bounds = array<i64: 128, 1>}, {pipeline_mode = #tpu.pipeline_mode<synchronous>, transform_indices = @transform_4, window_bounds = array<i64: 1, 128>}, {pipeline_mode = #tpu.pipeline_mode<synchronous>, transform_indices = @transform_5, window_bounds = array<i64: 128, 128>}, {pipeline_mode = #tpu.pipeline_mode<synchronous>, transform_indices = @transform_6, window_bounds = array<i64: 1, 128>}, {pipeline_mode = #tpu.pipeline_mode<synchronous>, transform_indices = @transform_7, window_bounds = array<i64: 1, 128>}, {pipeline_mode = #tpu.pipeline_mode<synchronous>, transform_indices = @transform_8, window_bounds = array<i64: 1, 128>}, {pipeline_mode = #tpu.pipeline_mode<synchronous>, transform_indices = @transform_9, window_bounds = array<i64: 128, 256>}, {pipeline_mode = #tpu.pipeline_mode<synchronous>, transform_indices = @transform_10, window_bounds = array<i64: 1, 256>}, {pipeline_mode = #tpu.pipeline_mode<synchronous>, transform_indices = @transform_11, window_bounds = array<i64: 256, 128>}, {pipeline_mode = #tpu.pipeline_mode<synchronous>, transform_indices = @transform_12, window_bounds = array<i64: 1, 128>}, {pipeline_mode = #tpu.pipeline_mode<synchronous>, transform_indices = @transform_13, window_bounds = array<i64: 1, 128>}, {pipeline_mode = #tpu.pipeline_mode<synchronous>, transform_indices = @transform_14, window_bounds = array<i64: 1, 128>}, {transform_indices = @transform_15, window_bounds = array<i64: 128, 128>}]} {
    %c0 = arith.constant 0 : index
    %c0_0 = arith.constant 0 : index
    %0 = vector.load %arg1[%c0, %c0_0] : memref<128x384xf32, #tpu.memory_space<vmem>>, vector<128x384xf32>
    %c0_1 = arith.constant 0 : index
    %c0_2 = arith.constant 0 : index
    %1 = vector.load %arg2[%c0_1, %c0_2] : memref<128x384xf32, #tpu.memory_space<vmem>>, vector<128x384xf32>
    %2 = vector.extract_strided_slice %0 {offsets = [0, 0], sizes = [128, 128], strides = [1, 1]} : vector<128x384xf32> to vector<128x128xf32>
    %3 = vector.extract_strided_slice %1 {offsets = [0, 128], sizes = [128, 128], strides = [1, 1]} : vector<128x384xf32> to vector<128x128xf32>
    %4 = vector.extract_strided_slice %1 {offsets = [0, 256], sizes = [128, 128], strides = [1, 1]} : vector<128x384xf32> to vector<128x128xf32>
    %c0_3 = arith.constant 0 : index
    %c0_4 = arith.constant 0 : index
    %5 = vector.load %arg4[%c0_3, %c0_4] : memref<128x1xi32, #tpu.memory_space<vmem>>, vector<128x1xi32>
    %c0_5 = arith.constant 0 : index
    %c0_6 = arith.constant 0 : index
    %6 = vector.load %arg5[%c0_5, %c0_6] : memref<1x128xi32, #tpu.memory_space<vmem>>, vector<1x128xi32>
    %7 = vector.broadcast %5 : vector<128x1xi32> to vector<128x128xi32>
    %8 = vector.broadcast %6 : vector<1x128xi32> to vector<128x128xi32>
    %9 = arith.cmpi eq, %7, %8 : vector<128x128xi32>
    %cst = arith.constant 0.000000e+00 : f32
    %cst_7 = arith.constant -1.000000e+09 : f32
    %10 = vector.broadcast %cst : f32 to vector<128x128xf32>
    %11 = vector.broadcast %cst_7 : f32 to vector<128x128xf32>
    %12 = arith.select %9, %10, %11 : vector<128x128xi1>, vector<128x128xf32>
    %13 = vector.extract_strided_slice %2 {offsets = [0, 0], sizes = [128, 16], strides = [1, 1]} : vector<128x128xf32> to vector<128x16xf32>
    %cst_8 = arith.constant 2.500000e-01 : f32
    %14 = vector.broadcast %cst_8 : f32 to vector<128x16xf32>
    %15 = arith.mulf %13, %14 : vector<128x16xf32>
    %16 = arith.truncf %15 : vector<128x16xf32> to vector<128x16xbf16>
    %17 = vector.extract_strided_slice %3 {offsets = [0, 0], sizes = [128, 16], strides = [1, 1]} : vector<128x128xf32> to vector<128x16xf32>
    %18 = arith.truncf %17 : vector<128x16xf32> to vector<128x16xbf16>
    %19 = vector.extract_strided_slice %4 {offsets = [0, 0], sizes = [128, 16], strides = [1, 1]} : vector<128x128xf32> to vector<128x16xf32>
    %20 = arith.truncf %19 : vector<128x16xf32> to vector<128x16xbf16>
    %cst_9 = arith.constant dense<0.000000e+00> : vector<128x128xf32>
    %21 = tpu.matmul %16, %18, %cst_9 {dimension_numbers = #tpu.dot_dimension_numbers<[1], [1], [0], [0], [0, 0, 1, 0], [], []>} : vector<128x16xbf16>, vector<128x16xbf16>, vector<128x128xf32> -> vector<128x128xf32>
    %22 = arith.addf %21, %12 : vector<128x128xf32>
    %cst_10 = arith.constant dense<0xFF800000> : vector<128xf32>
    %23 = vector.multi_reduction <maximumf>, %22, %cst_10 [1] : vector<128x128xf32> to vector<128xf32>
    %24 = vector.shape_cast %23 : vector<128xf32> to vector<128x1xf32>
    %25 = vector.broadcast %24 : vector<128x1xf32> to vector<128x128xf32>
    %26 = arith.subf %22, %25 : vector<128x128xf32>
    %27 = math.exp %26 : vector<128x128xf32>
    %cst_11 = arith.constant dense<0.000000e+00> : vector<128xf32>
    %28 = vector.multi_reduction <add>, %27, %cst_11 [1] : vector<128x128xf32> to vector<128xf32>
    %29 = vector.shape_cast %28 : vector<128xf32> to vector<128x1xf32>
    %30 = tpu.reciprocal %29 {approx = true} : vector<128x1xf32> -> vector<128x1xf32>
    %31 = vector.broadcast %30 : vector<128x1xf32> to vector<128x128xf32>
    %32 = arith.mulf %27, %31 : vector<128x128xf32>
    %33 = arith.truncf %32 : vector<128x128xf32> to vector<128x128xbf16>
    %cst_12 = arith.constant dense<0.000000e+00> : vector<128x16xf32>
    %34 = tpu.matmul %33, %20, %cst_12 {dimension_numbers = #tpu.dot_dimension_numbers<[1], [0], [0], [1], [0, 0, 1, 1], [], []>} : vector<128x128xbf16>, vector<128x16xbf16>, vector<128x16xf32> -> vector<128x16xf32>
    %35 = vector.extract_strided_slice %2 {offsets = [0, 16], sizes = [128, 16], strides = [1, 1]} : vector<128x128xf32> to vector<128x16xf32>
    %cst_13 = arith.constant 2.500000e-01 : f32
    %36 = vector.broadcast %cst_13 : f32 to vector<128x16xf32>
    %37 = arith.mulf %35, %36 : vector<128x16xf32>
    %38 = arith.truncf %37 : vector<128x16xf32> to vector<128x16xbf16>
    %39 = vector.extract_strided_slice %3 {offsets = [0, 16], sizes = [128, 16], strides = [1, 1]} : vector<128x128xf32> to vector<128x16xf32>
    %40 = arith.truncf %39 : vector<128x16xf32> to vector<128x16xbf16>
    %41 = vector.extract_strided_slice %4 {offsets = [0, 16], sizes = [128, 16], strides = [1, 1]} : vector<128x128xf32> to vector<128x16xf32>
    %42 = arith.truncf %41 : vector<128x16xf32> to vector<128x16xbf16>
    %cst_14 = arith.constant dense<0.000000e+00> : vector<128x128xf32>
    %43 = tpu.matmul %38, %40, %cst_14 {dimension_numbers = #tpu.dot_dimension_numbers<[1], [1], [0], [0], [0, 0, 1, 0], [], []>} : vector<128x16xbf16>, vector<128x16xbf16>, vector<128x128xf32> -> vector<128x128xf32>
    %44 = arith.addf %43, %12 : vector<128x128xf32>
    %cst_15 = arith.constant dense<0xFF800000> : vector<128xf32>
    %45 = vector.multi_reduction <maximumf>, %44, %cst_15 [1] : vector<128x128xf32> to vector<128xf32>
    %46 = vector.shape_cast %45 : vector<128xf32> to vector<128x1xf32>
    %47 = vector.broadcast %46 : vector<128x1xf32> to vector<128x128xf32>
    %48 = arith.subf %44, %47 : vector<128x128xf32>
    %49 = math.exp %48 : vector<128x128xf32>
    %cst_16 = arith.constant dense<0.000000e+00> : vector<128xf32>
    %50 = vector.multi_reduction <add>, %49, %cst_16 [1] : vector<128x128xf32> to vector<128xf32>
    %51 = vector.shape_cast %50 : vector<128xf32> to vector<128x1xf32>
    %52 = tpu.reciprocal %51 {approx = true} : vector<128x1xf32> -> vector<128x1xf32>
    %53 = vector.broadcast %52 : vector<128x1xf32> to vector<128x128xf32>
    %54 = arith.mulf %49, %53 : vector<128x128xf32>
    %55 = arith.truncf %54 : vector<128x128xf32> to vector<128x128xbf16>
    %cst_17 = arith.constant dense<0.000000e+00> : vector<128x16xf32>
    %56 = tpu.matmul %55, %42, %cst_17 {dimension_numbers = #tpu.dot_dimension_numbers<[1], [0], [0], [1], [0, 0, 1, 1], [], []>} : vector<128x128xbf16>, vector<128x16xbf16>, vector<128x16xf32> -> vector<128x16xf32>
    %57 = vector.extract_strided_slice %2 {offsets = [0, 32], sizes = [128, 16], strides = [1, 1]} : vector<128x128xf32> to vector<128x16xf32>
    %cst_18 = arith.constant 2.500000e-01 : f32
    %58 = vector.broadcast %cst_18 : f32 to vector<128x16xf32>
    %59 = arith.mulf %57, %58 : vector<128x16xf32>
    %60 = arith.truncf %59 : vector<128x16xf32> to vector<128x16xbf16>
    %61 = vector.extract_strided_slice %3 {offsets = [0, 32], sizes = [128, 16], strides = [1, 1]} : vector<128x128xf32> to vector<128x16xf32>
    %62 = arith.truncf %61 : vector<128x16xf32> to vector<128x16xbf16>
    %63 = vector.extract_strided_slice %4 {offsets = [0, 32], sizes = [128, 16], strides = [1, 1]} : vector<128x128xf32> to vector<128x16xf32>
    %64 = arith.truncf %63 : vector<128x16xf32> to vector<128x16xbf16>
    %cst_19 = arith.constant dense<0.000000e+00> : vector<128x128xf32>
    %65 = tpu.matmul %60, %62, %cst_19 {dimension_numbers = #tpu.dot_dimension_numbers<[1], [1], [0], [0], [0, 0, 1, 0], [], []>} : vector<128x16xbf16>, vector<128x16xbf16>, vector<128x128xf32> -> vector<128x128xf32>
    %66 = arith.addf %65, %12 : vector<128x128xf32>
    %cst_20 = arith.constant dense<0xFF800000> : vector<128xf32>
    %67 = vector.multi_reduction <maximumf>, %66, %cst_20 [1] : vector<128x128xf32> to vector<128xf32>
    %68 = vector.shape_cast %67 : vector<128xf32> to vector<128x1xf32>
    %69 = vector.broadcast %68 : vector<128x1xf32> to vector<128x128xf32>
    %70 = arith.subf %66, %69 : vector<128x128xf32>
    %71 = math.exp %70 : vector<128x128xf32>
    %cst_21 = arith.constant dense<0.000000e+00> : vector<128xf32>
    %72 = vector.multi_reduction <add>, %71, %cst_21 [1] : vector<128x128xf32> to vector<128xf32>
    %73 = vector.shape_cast %72 : vector<128xf32> to vector<128x1xf32>
    %74 = tpu.reciprocal %73 {approx = true} : vector<128x1xf32> -> vector<128x1xf32>
    %75 = vector.broadcast %74 : vector<128x1xf32> to vector<128x128xf32>
    %76 = arith.mulf %71, %75 : vector<128x128xf32>
    %77 = arith.truncf %76 : vector<128x128xf32> to vector<128x128xbf16>
    %cst_22 = arith.constant dense<0.000000e+00> : vector<128x16xf32>
    %78 = tpu.matmul %77, %64, %cst_22 {dimension_numbers = #tpu.dot_dimension_numbers<[1], [0], [0], [1], [0, 0, 1, 1], [], []>} : vector<128x128xbf16>, vector<128x16xbf16>, vector<128x16xf32> -> vector<128x16xf32>
    %79 = vector.extract_strided_slice %2 {offsets = [0, 48], sizes = [128, 16], strides = [1, 1]} : vector<128x128xf32> to vector<128x16xf32>
    %cst_23 = arith.constant 2.500000e-01 : f32
    %80 = vector.broadcast %cst_23 : f32 to vector<128x16xf32>
    %81 = arith.mulf %79, %80 : vector<128x16xf32>
    %82 = arith.truncf %81 : vector<128x16xf32> to vector<128x16xbf16>
    %83 = vector.extract_strided_slice %3 {offsets = [0, 48], sizes = [128, 16], strides = [1, 1]} : vector<128x128xf32> to vector<128x16xf32>
    %84 = arith.truncf %83 : vector<128x16xf32> to vector<128x16xbf16>
    %85 = vector.extract_strided_slice %4 {offsets = [0, 48], sizes = [128, 16], strides = [1, 1]} : vector<128x128xf32> to vector<128x16xf32>
    %86 = arith.truncf %85 : vector<128x16xf32> to vector<128x16xbf16>
    %cst_24 = arith.constant dense<0.000000e+00> : vector<128x128xf32>
    %87 = tpu.matmul %82, %84, %cst_24 {dimension_numbers = #tpu.dot_dimension_numbers<[1], [1], [0], [0], [0, 0, 1, 0], [], []>} : vector<128x16xbf16>, vector<128x16xbf16>, vector<128x128xf32> -> vector<128x128xf32>
    %88 = arith.addf %87, %12 : vector<128x128xf32>
    %cst_25 = arith.constant dense<0xFF800000> : vector<128xf32>
    %89 = vector.multi_reduction <maximumf>, %88, %cst_25 [1] : vector<128x128xf32> to vector<128xf32>
    %90 = vector.shape_cast %89 : vector<128xf32> to vector<128x1xf32>
    %91 = vector.broadcast %90 : vector<128x1xf32> to vector<128x128xf32>
    %92 = arith.subf %88, %91 : vector<128x128xf32>
    %93 = math.exp %92 : vector<128x128xf32>
    %cst_26 = arith.constant dense<0.000000e+00> : vector<128xf32>
    %94 = vector.multi_reduction <add>, %93, %cst_26 [1] : vector<128x128xf32> to vector<128xf32>
    %95 = vector.shape_cast %94 : vector<128xf32> to vector<128x1xf32>
    %96 = tpu.reciprocal %95 {approx = true} : vector<128x1xf32> -> vector<128x1xf32>
    %97 = vector.broadcast %96 : vector<128x1xf32> to vector<128x128xf32>
    %98 = arith.mulf %93, %97 : vector<128x128xf32>
    %99 = arith.truncf %98 : vector<128x128xf32> to vector<128x128xbf16>
    %cst_27 = arith.constant dense<0.000000e+00> : vector<128x16xf32>
    %100 = tpu.matmul %99, %86, %cst_27 {dimension_numbers = #tpu.dot_dimension_numbers<[1], [0], [0], [1], [0, 0, 1, 1], [], []>} : vector<128x128xbf16>, vector<128x16xbf16>, vector<128x16xf32> -> vector<128x16xf32>
    %101 = vector.extract_strided_slice %2 {offsets = [0, 64], sizes = [128, 16], strides = [1, 1]} : vector<128x128xf32> to vector<128x16xf32>
    %cst_28 = arith.constant 2.500000e-01 : f32
    %102 = vector.broadcast %cst_28 : f32 to vector<128x16xf32>
    %103 = arith.mulf %101, %102 : vector<128x16xf32>
    %104 = arith.truncf %103 : vector<128x16xf32> to vector<128x16xbf16>
    %105 = vector.extract_strided_slice %3 {offsets = [0, 64], sizes = [128, 16], strides = [1, 1]} : vector<128x128xf32> to vector<128x16xf32>
    %106 = arith.truncf %105 : vector<128x16xf32> to vector<128x16xbf16>
    %107 = vector.extract_strided_slice %4 {offsets = [0, 64], sizes = [128, 16], strides = [1, 1]} : vector<128x128xf32> to vector<128x16xf32>
    %108 = arith.truncf %107 : vector<128x16xf32> to vector<128x16xbf16>
    %cst_29 = arith.constant dense<0.000000e+00> : vector<128x128xf32>
    %109 = tpu.matmul %104, %106, %cst_29 {dimension_numbers = #tpu.dot_dimension_numbers<[1], [1], [0], [0], [0, 0, 1, 0], [], []>} : vector<128x16xbf16>, vector<128x16xbf16>, vector<128x128xf32> -> vector<128x128xf32>
    %110 = arith.addf %109, %12 : vector<128x128xf32>
    %cst_30 = arith.constant dense<0xFF800000> : vector<128xf32>
    %111 = vector.multi_reduction <maximumf>, %110, %cst_30 [1] : vector<128x128xf32> to vector<128xf32>
    %112 = vector.shape_cast %111 : vector<128xf32> to vector<128x1xf32>
    %113 = vector.broadcast %112 : vector<128x1xf32> to vector<128x128xf32>
    %114 = arith.subf %110, %113 : vector<128x128xf32>
    %115 = math.exp %114 : vector<128x128xf32>
    %cst_31 = arith.constant dense<0.000000e+00> : vector<128xf32>
    %116 = vector.multi_reduction <add>, %115, %cst_31 [1] : vector<128x128xf32> to vector<128xf32>
    %117 = vector.shape_cast %116 : vector<128xf32> to vector<128x1xf32>
    %118 = tpu.reciprocal %117 {approx = true} : vector<128x1xf32> -> vector<128x1xf32>
    %119 = vector.broadcast %118 : vector<128x1xf32> to vector<128x128xf32>
    %120 = arith.mulf %115, %119 : vector<128x128xf32>
    %121 = arith.truncf %120 : vector<128x128xf32> to vector<128x128xbf16>
    %cst_32 = arith.constant dense<0.000000e+00> : vector<128x16xf32>
    %122 = tpu.matmul %121, %108, %cst_32 {dimension_numbers = #tpu.dot_dimension_numbers<[1], [0], [0], [1], [0, 0, 1, 1], [], []>} : vector<128x128xbf16>, vector<128x16xbf16>, vector<128x16xf32> -> vector<128x16xf32>
    %123 = vector.extract_strided_slice %2 {offsets = [0, 80], sizes = [128, 16], strides = [1, 1]} : vector<128x128xf32> to vector<128x16xf32>
    %cst_33 = arith.constant 2.500000e-01 : f32
    %124 = vector.broadcast %cst_33 : f32 to vector<128x16xf32>
    %125 = arith.mulf %123, %124 : vector<128x16xf32>
    %126 = arith.truncf %125 : vector<128x16xf32> to vector<128x16xbf16>
    %127 = vector.extract_strided_slice %3 {offsets = [0, 80], sizes = [128, 16], strides = [1, 1]} : vector<128x128xf32> to vector<128x16xf32>
    %128 = arith.truncf %127 : vector<128x16xf32> to vector<128x16xbf16>
    %129 = vector.extract_strided_slice %4 {offsets = [0, 80], sizes = [128, 16], strides = [1, 1]} : vector<128x128xf32> to vector<128x16xf32>
    %130 = arith.truncf %129 : vector<128x16xf32> to vector<128x16xbf16>
    %cst_34 = arith.constant dense<0.000000e+00> : vector<128x128xf32>
    %131 = tpu.matmul %126, %128, %cst_34 {dimension_numbers = #tpu.dot_dimension_numbers<[1], [1], [0], [0], [0, 0, 1, 0], [], []>} : vector<128x16xbf16>, vector<128x16xbf16>, vector<128x128xf32> -> vector<128x128xf32>
    %132 = arith.addf %131, %12 : vector<128x128xf32>
    %cst_35 = arith.constant dense<0xFF800000> : vector<128xf32>
    %133 = vector.multi_reduction <maximumf>, %132, %cst_35 [1] : vector<128x128xf32> to vector<128xf32>
    %134 = vector.shape_cast %133 : vector<128xf32> to vector<128x1xf32>
    %135 = vector.broadcast %134 : vector<128x1xf32> to vector<128x128xf32>
    %136 = arith.subf %132, %135 : vector<128x128xf32>
    %137 = math.exp %136 : vector<128x128xf32>
    %cst_36 = arith.constant dense<0.000000e+00> : vector<128xf32>
    %138 = vector.multi_reduction <add>, %137, %cst_36 [1] : vector<128x128xf32> to vector<128xf32>
    %139 = vector.shape_cast %138 : vector<128xf32> to vector<128x1xf32>
    %140 = tpu.reciprocal %139 {approx = true} : vector<128x1xf32> -> vector<128x1xf32>
    %141 = vector.broadcast %140 : vector<128x1xf32> to vector<128x128xf32>
    %142 = arith.mulf %137, %141 : vector<128x128xf32>
    %143 = arith.truncf %142 : vector<128x128xf32> to vector<128x128xbf16>
    %cst_37 = arith.constant dense<0.000000e+00> : vector<128x16xf32>
    %144 = tpu.matmul %143, %130, %cst_37 {dimension_numbers = #tpu.dot_dimension_numbers<[1], [0], [0], [1], [0, 0, 1, 1], [], []>} : vector<128x128xbf16>, vector<128x16xbf16>, vector<128x16xf32> -> vector<128x16xf32>
    %145 = vector.extract_strided_slice %2 {offsets = [0, 96], sizes = [128, 16], strides = [1, 1]} : vector<128x128xf32> to vector<128x16xf32>
    %cst_38 = arith.constant 2.500000e-01 : f32
    %146 = vector.broadcast %cst_38 : f32 to vector<128x16xf32>
    %147 = arith.mulf %145, %146 : vector<128x16xf32>
    %148 = arith.truncf %147 : vector<128x16xf32> to vector<128x16xbf16>
    %149 = vector.extract_strided_slice %3 {offsets = [0, 96], sizes = [128, 16], strides = [1, 1]} : vector<128x128xf32> to vector<128x16xf32>
    %150 = arith.truncf %149 : vector<128x16xf32> to vector<128x16xbf16>
    %151 = vector.extract_strided_slice %4 {offsets = [0, 96], sizes = [128, 16], strides = [1, 1]} : vector<128x128xf32> to vector<128x16xf32>
    %152 = arith.truncf %151 : vector<128x16xf32> to vector<128x16xbf16>
    %cst_39 = arith.constant dense<0.000000e+00> : vector<128x128xf32>
    %153 = tpu.matmul %148, %150, %cst_39 {dimension_numbers = #tpu.dot_dimension_numbers<[1], [1], [0], [0], [0, 0, 1, 0], [], []>} : vector<128x16xbf16>, vector<128x16xbf16>, vector<128x128xf32> -> vector<128x128xf32>
    %154 = arith.addf %153, %12 : vector<128x128xf32>
    %cst_40 = arith.constant dense<0xFF800000> : vector<128xf32>
    %155 = vector.multi_reduction <maximumf>, %154, %cst_40 [1] : vector<128x128xf32> to vector<128xf32>
    %156 = vector.shape_cast %155 : vector<128xf32> to vector<128x1xf32>
    %157 = vector.broadcast %156 : vector<128x1xf32> to vector<128x128xf32>
    %158 = arith.subf %154, %157 : vector<128x128xf32>
    %159 = math.exp %158 : vector<128x128xf32>
    %cst_41 = arith.constant dense<0.000000e+00> : vector<128xf32>
    %160 = vector.multi_reduction <add>, %159, %cst_41 [1] : vector<128x128xf32> to vector<128xf32>
    %161 = vector.shape_cast %160 : vector<128xf32> to vector<128x1xf32>
    %162 = tpu.reciprocal %161 {approx = true} : vector<128x1xf32> -> vector<128x1xf32>
    %163 = vector.broadcast %162 : vector<128x1xf32> to vector<128x128xf32>
    %164 = arith.mulf %159, %163 : vector<128x128xf32>
    %165 = arith.truncf %164 : vector<128x128xf32> to vector<128x128xbf16>
    %cst_42 = arith.constant dense<0.000000e+00> : vector<128x16xf32>
    %166 = tpu.matmul %165, %152, %cst_42 {dimension_numbers = #tpu.dot_dimension_numbers<[1], [0], [0], [1], [0, 0, 1, 1], [], []>} : vector<128x128xbf16>, vector<128x16xbf16>, vector<128x16xf32> -> vector<128x16xf32>
    %167 = vector.extract_strided_slice %2 {offsets = [0, 112], sizes = [128, 16], strides = [1, 1]} : vector<128x128xf32> to vector<128x16xf32>
    %cst_43 = arith.constant 2.500000e-01 : f32
    %168 = vector.broadcast %cst_43 : f32 to vector<128x16xf32>
    %169 = arith.mulf %167, %168 : vector<128x16xf32>
    %170 = arith.truncf %169 : vector<128x16xf32> to vector<128x16xbf16>
    %171 = vector.extract_strided_slice %3 {offsets = [0, 112], sizes = [128, 16], strides = [1, 1]} : vector<128x128xf32> to vector<128x16xf32>
    %172 = arith.truncf %171 : vector<128x16xf32> to vector<128x16xbf16>
    %173 = vector.extract_strided_slice %4 {offsets = [0, 112], sizes = [128, 16], strides = [1, 1]} : vector<128x128xf32> to vector<128x16xf32>
    %174 = arith.truncf %173 : vector<128x16xf32> to vector<128x16xbf16>
    %cst_44 = arith.constant dense<0.000000e+00> : vector<128x128xf32>
    %175 = tpu.matmul %170, %172, %cst_44 {dimension_numbers = #tpu.dot_dimension_numbers<[1], [1], [0], [0], [0, 0, 1, 0], [], []>} : vector<128x16xbf16>, vector<128x16xbf16>, vector<128x128xf32> -> vector<128x128xf32>
    %176 = arith.addf %175, %12 : vector<128x128xf32>
    %cst_45 = arith.constant dense<0xFF800000> : vector<128xf32>
    %177 = vector.multi_reduction <maximumf>, %176, %cst_45 [1] : vector<128x128xf32> to vector<128xf32>
    %178 = vector.shape_cast %177 : vector<128xf32> to vector<128x1xf32>
    %179 = vector.broadcast %178 : vector<128x1xf32> to vector<128x128xf32>
    %180 = arith.subf %176, %179 : vector<128x128xf32>
    %181 = math.exp %180 : vector<128x128xf32>
    %cst_46 = arith.constant dense<0.000000e+00> : vector<128xf32>
    %182 = vector.multi_reduction <add>, %181, %cst_46 [1] : vector<128x128xf32> to vector<128xf32>
    %183 = vector.shape_cast %182 : vector<128xf32> to vector<128x1xf32>
    %184 = tpu.reciprocal %183 {approx = true} : vector<128x1xf32> -> vector<128x1xf32>
    %185 = vector.broadcast %184 : vector<128x1xf32> to vector<128x128xf32>
    %186 = arith.mulf %181, %185 : vector<128x128xf32>
    %187 = arith.truncf %186 : vector<128x128xf32> to vector<128x128xbf16>
    %cst_47 = arith.constant dense<0.000000e+00> : vector<128x16xf32>
    %188 = tpu.matmul %187, %174, %cst_47 {dimension_numbers = #tpu.dot_dimension_numbers<[1], [0], [0], [1], [0, 0, 1, 1], [], []>} : vector<128x128xbf16>, vector<128x16xbf16>, vector<128x16xf32> -> vector<128x16xf32>
    %189 = tpu.concatenate %34, %56, %78, %100, %122, %144, %166, %188 in 1 : vector<128x16xf32>, vector<128x16xf32>, vector<128x16xf32>, vector<128x16xf32>, vector<128x16xf32>, vector<128x16xf32>, vector<128x16xf32>, vector<128x16xf32> -> vector<128x128xf32>
    %190 = arith.truncf %189 : vector<128x128xf32> to vector<128x128xbf16>
    %c0_48 = arith.constant 0 : index
    %c0_49 = arith.constant 0 : index
    %191 = vector.load %arg6[%c0_48, %c0_49] : memref<128x128xbf16, #tpu.memory_space<vmem>>, vector<128x128xbf16>
    %cst_50 = arith.constant dense<0.000000e+00> : vector<128x128xf32>
    %192 = tpu.matmul %190, %191, %cst_50 {dimension_numbers = #tpu.dot_dimension_numbers<[1], [0], [0], [1], [0, 0, 1, 1], [], []>} : vector<128x128xbf16>, vector<128x128xbf16>, vector<128x128xf32> -> vector<128x128xf32>
    %c0_51 = arith.constant 0 : index
    %c0_52 = arith.constant 0 : index
    %193 = vector.load %arg7[%c0_51, %c0_52] : memref<1x128xf32, #tpu.memory_space<vmem>>, vector<1x128xf32>
    %194 = vector.broadcast %193 : vector<1x128xf32> to vector<128x128xf32>
    %195 = arith.addf %192, %194 : vector<128x128xf32>
    %c0_53 = arith.constant 0 : index
    %c0_54 = arith.constant 0 : index
    %196 = vector.load %arg3[%c0_53, %c0_54] : memref<128x128xf32, #tpu.memory_space<vmem>>, vector<128x128xf32>
    %197 = arith.addf %196, %195 : vector<128x128xf32>
    %cst_55 = arith.constant dense<0.000000e+00> : vector<128xf32>
    %198 = vector.multi_reduction <add>, %197, %cst_55 [1] : vector<128x128xf32> to vector<128xf32>
    %199 = vector.shape_cast %198 : vector<128xf32> to vector<128x1xf32>
    %cst_56 = arith.constant 1.280000e+02 : f32
    %200 = vector.broadcast %cst_56 : f32 to vector<128x1xf32>
    %201 = arith.divf %199, %200 : vector<128x1xf32>
    %202 = vector.broadcast %201 : vector<128x1xf32> to vector<128x128xf32>
    %203 = arith.subf %197, %202 : vector<128x128xf32>
    %204 = arith.mulf %203, %203 : vector<128x128xf32>
    %cst_57 = arith.constant dense<0.000000e+00> : vector<128xf32>
    %205 = vector.multi_reduction <add>, %204, %cst_57 [1] : vector<128x128xf32> to vector<128xf32>
    %206 = vector.shape_cast %205 : vector<128xf32> to vector<128x1xf32>
    %cst_58 = arith.constant 1.280000e+02 : f32
    %207 = vector.broadcast %cst_58 : f32 to vector<128x1xf32>
    %208 = arith.divf %206, %207 : vector<128x1xf32>
    %209 = vector.broadcast %201 : vector<128x1xf32> to vector<128x128xf32>
    %210 = arith.subf %197, %209 : vector<128x128xf32>
    %cst_59 = arith.constant 9.99999974E-6 : f32
    %211 = vector.broadcast %cst_59 : f32 to vector<128x1xf32>
    %212 = arith.addf %208, %211 : vector<128x1xf32>
    %213 = math.rsqrt %212 : vector<128x1xf32>
    %214 = vector.broadcast %213 : vector<128x1xf32> to vector<128x128xf32>
    %215 = arith.mulf %210, %214 : vector<128x128xf32>
    %c0_60 = arith.constant 0 : index
    %c0_61 = arith.constant 0 : index
    %216 = vector.load %arg8[%c0_60, %c0_61] : memref<1x128xf32, #tpu.memory_space<vmem>>, vector<1x128xf32>
    %217 = vector.broadcast %216 : vector<1x128xf32> to vector<128x128xf32>
    %218 = arith.mulf %215, %217 : vector<128x128xf32>
    %c0_62 = arith.constant 0 : index
    %c0_63 = arith.constant 0 : index
    %219 = vector.load %arg9[%c0_62, %c0_63] : memref<1x128xf32, #tpu.memory_space<vmem>>, vector<1x128xf32>
    %220 = vector.broadcast %219 : vector<1x128xf32> to vector<128x128xf32>
    %221 = arith.addf %218, %220 : vector<128x128xf32>
    %222 = arith.truncf %221 : vector<128x128xf32> to vector<128x128xbf16>
    %c0_64 = arith.constant 0 : index
    %c0_65 = arith.constant 0 : index
    %223 = vector.load %arg10[%c0_64, %c0_65] : memref<128x256xbf16, #tpu.memory_space<vmem>>, vector<128x256xbf16>
    %cst_66 = arith.constant dense<0.000000e+00> : vector<128x256xf32>
    %224 = tpu.matmul %222, %223, %cst_66 {dimension_numbers = #tpu.dot_dimension_numbers<[1], [0], [0], [1], [0, 0, 1, 1], [], []>} : vector<128x128xbf16>, vector<128x256xbf16>, vector<128x256xf32> -> vector<128x256xf32>
    %c0_67 = arith.constant 0 : index
    %c0_68 = arith.constant 0 : index
    %225 = vector.load %arg11[%c0_67, %c0_68] : memref<1x256xf32, #tpu.memory_space<vmem>>, vector<1x256xf32>
    %226 = vector.broadcast %225 : vector<1x256xf32> to vector<128x256xf32>
    %227 = arith.addf %224, %226 : vector<128x256xf32>
    %cst_69 = arith.constant 0.000000e+00 : f32
    %228 = vector.broadcast %cst_69 : f32 to vector<128x256xf32>
    %229 = arith.maximumf %227, %228 : vector<128x256xf32>
    %230 = arith.truncf %229 : vector<128x256xf32> to vector<128x256xbf16>
    %c0_70 = arith.constant 0 : index
    %c0_71 = arith.constant 0 : index
    %231 = vector.load %arg12[%c0_70, %c0_71] : memref<256x128xbf16, #tpu.memory_space<vmem>>, vector<256x128xbf16>
    %cst_72 = arith.constant dense<0.000000e+00> : vector<128x128xf32>
    %232 = tpu.matmul %230, %231, %cst_72 {dimension_numbers = #tpu.dot_dimension_numbers<[1], [0], [0], [1], [0, 0, 1, 1], [], []>} : vector<128x256xbf16>, vector<256x128xbf16>, vector<128x128xf32> -> vector<128x128xf32>
    %c0_73 = arith.constant 0 : index
    %c0_74 = arith.constant 0 : index
    %233 = vector.load %arg13[%c0_73, %c0_74] : memref<1x128xf32, #tpu.memory_space<vmem>>, vector<1x128xf32>
    %234 = vector.broadcast %233 : vector<1x128xf32> to vector<128x128xf32>
    %235 = arith.addf %232, %234 : vector<128x128xf32>
    %236 = arith.addf %221, %235 : vector<128x128xf32>
    %cst_75 = arith.constant dense<0.000000e+00> : vector<128xf32>
    %237 = vector.multi_reduction <add>, %236, %cst_75 [1] : vector<128x128xf32> to vector<128xf32>
    %238 = vector.shape_cast %237 : vector<128xf32> to vector<128x1xf32>
    %cst_76 = arith.constant 1.280000e+02 : f32
    %239 = vector.broadcast %cst_76 : f32 to vector<128x1xf32>
    %240 = arith.divf %238, %239 : vector<128x1xf32>
    %241 = vector.broadcast %240 : vector<128x1xf32> to vector<128x128xf32>
    %242 = arith.subf %236, %241 : vector<128x128xf32>
    %243 = arith.mulf %242, %242 : vector<128x128xf32>
    %cst_77 = arith.constant dense<0.000000e+00> : vector<128xf32>
    %244 = vector.multi_reduction <add>, %243, %cst_77 [1] : vector<128x128xf32> to vector<128xf32>
    %245 = vector.shape_cast %244 : vector<128xf32> to vector<128x1xf32>
    %cst_78 = arith.constant 1.280000e+02 : f32
    %246 = vector.broadcast %cst_78 : f32 to vector<128x1xf32>
    %247 = arith.divf %245, %246 : vector<128x1xf32>
    %248 = vector.broadcast %240 : vector<128x1xf32> to vector<128x128xf32>
    %249 = arith.subf %236, %248 : vector<128x128xf32>
    %cst_79 = arith.constant 9.99999974E-6 : f32
    %250 = vector.broadcast %cst_79 : f32 to vector<128x1xf32>
    %251 = arith.addf %247, %250 : vector<128x1xf32>
    %252 = math.rsqrt %251 : vector<128x1xf32>
    %253 = vector.broadcast %252 : vector<128x1xf32> to vector<128x128xf32>
    %254 = arith.mulf %249, %253 : vector<128x128xf32>
    %c0_80 = arith.constant 0 : index
    %c0_81 = arith.constant 0 : index
    %255 = vector.load %arg14[%c0_80, %c0_81] : memref<1x128xf32, #tpu.memory_space<vmem>>, vector<1x128xf32>
    %256 = vector.broadcast %255 : vector<1x128xf32> to vector<128x128xf32>
    %257 = arith.mulf %254, %256 : vector<128x128xf32>
    %c0_82 = arith.constant 0 : index
    %c0_83 = arith.constant 0 : index
    %258 = vector.load %arg15[%c0_82, %c0_83] : memref<1x128xf32, #tpu.memory_space<vmem>>, vector<1x128xf32>
    %259 = vector.broadcast %258 : vector<1x128xf32> to vector<128x128xf32>
    %260 = arith.addf %257, %259 : vector<128x128xf32>
    %c0_84 = arith.constant 0 : index
    %c0_85 = arith.constant 0 : index
    %261 = vector.load %arg16[%c0_84, %c0_85] : memref<128x128xf32, #tpu.memory_space<vmem>>, vector<128x128xf32>
    tpu.vector_store %arg16[%c0_84, %c0_85], %260 {strides = array<i32>} : memref<128x128xf32, #tpu.memory_space<vmem>>, vector<128x128xf32>,
    return
  }
  func.func @transform_0(%arg0: i32) -> (i32, i32) {
    %c0_i32 = arith.constant 0 : i32
    %c0_i32_0 = arith.constant 0 : i32
    return %arg0, %c0_i32 : i32, i32
  }
  func.func @transform_1(%arg0: i32) -> (i32, i32) {
    %c0_i32 = arith.constant 0 : i32
    %c0_i32_0 = arith.constant 0 : i32
    %c0_i32_1 = arith.constant 0 : i32
    return %c0_i32, %c0_i32_0 : i32, i32
  }
  func.func @transform_2(%arg0: i32) -> (i32, i32) {
    %c0_i32 = arith.constant 0 : i32
    %c0_i32_0 = arith.constant 0 : i32
    return %arg0, %c0_i32 : i32, i32
  }
  func.func @transform_3(%arg0: i32) -> (i32, i32) {
    %c0_i32 = arith.constant 0 : i32
    %c0_i32_0 = arith.constant 0 : i32
    return %arg0, %c0_i32 : i32, i32
  }
  func.func @transform_4(%arg0: i32) -> (i32, i32) {
    %c0_i32 = arith.constant 0 : i32
    %c0_i32_0 = arith.constant 0 : i32
    %c0_i32_1 = arith.constant 0 : i32
    return %c0_i32, %c0_i32_0 : i32, i32
  }
  func.func @transform_5(%arg0: i32) -> (i32, i32) {
    %c0_i32 = arith.constant 0 : i32
    %c0_i32_0 = arith.constant 0 : i32
    %c0_i32_1 = arith.constant 0 : i32
    return %c0_i32, %c0_i32_0 : i32, i32
  }
  func.func @transform_6(%arg0: i32) -> (i32, i32) {
    %c0_i32 = arith.constant 0 : i32
    %c0_i32_0 = arith.constant 0 : i32
    %c0_i32_1 = arith.constant 0 : i32
    return %c0_i32, %c0_i32_0 : i32, i32
  }
  func.func @transform_7(%arg0: i32) -> (i32, i32) {
    %c0_i32 = arith.constant 0 : i32
    %c0_i32_0 = arith.constant 0 : i32
    %c0_i32_1 = arith.constant 0 : i32
    return %c0_i32, %c0_i32_0 : i32, i32
  }
  func.func @transform_8(%arg0: i32) -> (i32, i32) {
    %c0_i32 = arith.constant 0 : i32
    %c0_i32_0 = arith.constant 0 : i32
    %c0_i32_1 = arith.constant 0 : i32
    return %c0_i32, %c0_i32_0 : i32, i32
  }
  func.func @transform_9(%arg0: i32) -> (i32, i32) {
    %c0_i32 = arith.constant 0 : i32
    %c0_i32_0 = arith.constant 0 : i32
    %c0_i32_1 = arith.constant 0 : i32
    return %c0_i32, %c0_i32_0 : i32, i32
  }
  func.func @transform_10(%arg0: i32) -> (i32, i32) {
    %c0_i32 = arith.constant 0 : i32
    %c0_i32_0 = arith.constant 0 : i32
    %c0_i32_1 = arith.constant 0 : i32
    return %c0_i32, %c0_i32_0 : i32, i32
  }
  func.func @transform_11(%arg0: i32) -> (i32, i32) {
    %c0_i32 = arith.constant 0 : i32
    %c0_i32_0 = arith.constant 0 : i32
    %c0_i32_1 = arith.constant 0 : i32
    return %c0_i32, %c0_i32_0 : i32, i32
  }
  func.func @transform_12(%arg0: i32) -> (i32, i32) {
    %c0_i32 = arith.constant 0 : i32
    %c0_i32_0 = arith.constant 0 : i32
    %c0_i32_1 = arith.constant 0 : i32
    return %c0_i32, %c0_i32_0 : i32, i32
  }
  func.func @transform_13(%arg0: i32) -> (i32, i32) {
    %c0_i32 = arith.constant 0 : i32
    %c0_i32_0 = arith.constant 0 : i32
    %c0_i32_1 = arith.constant 0 : i32
    return %c0_i32, %c0_i32_0 : i32, i32
  }
  func.func @transform_14(%arg0: i32) -> (i32, i32) {
    %c0_i32 = arith.constant 0 : i32
    %c0_i32_0 = arith.constant 0 : i32
    %c0_i32_1 = arith.constant 0 : i32
    return %c0_i32, %c0_i32_0 : i32, i32
  }
  func.func @transform_15(%arg0: i32) -> (i32, i32) {
    %c0_i32 = arith.constant 0 : i32
    %c0_i32_0 = arith.constant 0 : i32
    return %arg0, %c0_i32 : i32, i32
  }
}

module attributes {stable_mosaic.version = 11 : i64} {
  func.func @_attn_ffn_kernel(%arg0: i32, %arg1: memref<128x384xf32, #tpu.memory_space<vmem>>, %arg2: memref<128x384xf32, #tpu.memory_space<vmem>>, %arg3: memref<128x128xf32, #tpu.memory_space<vmem>>, %arg4: memref<128x1xi32, #tpu.memory_space<vmem>>, %arg5: memref<1x128xi32, #tpu.memory_space<vmem>>, %arg6: memref<128x128xbf16, #tpu.memory_space<vmem>>, %arg7: memref<1x128xf32, #tpu.memory_space<vmem>>, %arg8: memref<1x128xf32, #tpu.memory_space<vmem>>, %arg9: memref<1x128xf32, #tpu.memory_space<vmem>>, %arg10: memref<128x256xbf16, #tpu.memory_space<vmem>>, %arg11: memref<1x256xf32, #tpu.memory_space<vmem>>, %arg12: memref<256x128xbf16, #tpu.memory_space<vmem>>, %arg13: memref<1x128xf32, #tpu.memory_space<vmem>>, %arg14: memref<1x128xf32, #tpu.memory_space<vmem>>, %arg15: memref<1x128xf32, #tpu.memory_space<vmem>>, %arg16: memref<128x128xf32, #tpu.memory_space<vmem>>) attributes {dimension_semantics = [#tpu.dimension_semantics<parallel>], iteration_bounds = array<i64: 1>, scalar_prefetch = 0 : i64, scratch_operands = 0 : i64, tpu.core_type = #tpu.core_type<tc>, window_params = [{transform_indices = @transform_0, window_bounds = array<i64: 128, 384>}, {pipeline_mode = #tpu.pipeline_mode<synchronous>, transform_indices = @transform_1, window_bounds = array<i64: 128, 384>}, {transform_indices = @transform_2, window_bounds = array<i64: 128, 128>}, {transform_indices = @transform_3, window_bounds = array<i64: 128, 1>}, {pipeline_mode = #tpu.pipeline_mode<synchronous>, transform_indices = @transform_4, window_bounds = array<i64: 1, 128>}, {pipeline_mode = #tpu.pipeline_mode<synchronous>, transform_indices = @transform_5, window_bounds = array<i64: 128, 128>}, {pipeline_mode = #tpu.pipeline_mode<synchronous>, transform_indices = @transform_6, window_bounds = array<i64: 1, 128>}, {pipeline_mode = #tpu.pipeline_mode<synchronous>, transform_indices = @transform_7, window_bounds = array<i64: 1, 128>}, {pipeline_mode = #tpu.pipeline_mode<synchronous>, transform_indices = @transform_8, window_bounds = array<i64: 1, 128>}, {pipeline_mode = #tpu.pipeline_mode<synchronous>, transform_indices = @transform_9, window_bounds = array<i64: 128, 256>}, {pipeline_mode = #tpu.pipeline_mode<synchronous>, transform_indices = @transform_10, window_bounds = array<i64: 1, 256>}, {pipeline_mode = #tpu.pipeline_mode<synchronous>, transform_indices = @transform_11, window_bounds = array<i64: 256, 128>}, {pipeline_mode = #tpu.pipeline_mode<synchronous>, transform_indices = @transform_12, window_bounds = array<i64: 1, 128>}, {pipeline_mode = #tpu.pipeline_mode<synchronous>, transform_indices = @transform_13, window_bounds = array<i64: 1, 128>}, {pipeline_mode = #tpu.pipeline_mode<synchronous>, transform_indices = @transform_14, window_bounds = array<i64: 1, 128>}, {transform_indices = @transform_15, window_bounds = array<i64: 128, 128>}]} {
    %c0 = arith.constant 0 : index
    %c0_0 = arith.constant 0 : index
    %0 = vector.load %arg1[%c0, %c0_0] : memref<128x384xf32, #tpu.memory_space<vmem>>, vector<128x384xf32>
    %c0_1 = arith.constant 0 : index
    %c0_2 = arith.constant 0 : index
    %1 = vector.load %arg2[%c0_1, %c0_2] : memref<128x384xf32, #tpu.memory_space<vmem>>, vector<128x384xf32>
    %2 = vector.extract_strided_slice %0 {offsets = [0, 0], sizes = [128, 128], strides = [1, 1]} : vector<128x384xf32> to vector<128x128xf32>
    %3 = vector.extract_strided_slice %1 {offsets = [0, 128], sizes = [128, 128], strides = [1, 1]} : vector<128x384xf32> to vector<128x128xf32>
    %4 = vector.extract_strided_slice %1 {offsets = [0, 256], sizes = [128, 128], strides = [1, 1]} : vector<128x384xf32> to vector<128x128xf32>
    %c0_3 = arith.constant 0 : index
    %c0_4 = arith.constant 0 : index
    %5 = vector.load %arg4[%c0_3, %c0_4] : memref<128x1xi32, #tpu.memory_space<vmem>>, vector<128x1xi32>
    %c0_5 = arith.constant 0 : index
    %c0_6 = arith.constant 0 : index
    %6 = vector.load %arg5[%c0_5, %c0_6] : memref<1x128xi32, #tpu.memory_space<vmem>>, vector<1x128xi32>
    %7 = vector.broadcast %5 : vector<128x1xi32> to vector<128x128xi32>
    %8 = vector.broadcast %6 : vector<1x128xi32> to vector<128x128xi32>
    %9 = arith.cmpi eq, %7, %8 : vector<128x128xi32>
    %cst = arith.constant 0.000000e+00 : f32
    %cst_7 = arith.constant -1.000000e+09 : f32
    %10 = vector.broadcast %cst : f32 to vector<128x128xf32>
    %11 = vector.broadcast %cst_7 : f32 to vector<128x128xf32>
    %12 = arith.select %9, %10, %11 : vector<128x128xi1>, vector<128x128xf32>
    %13 = vector.extract_strided_slice %2 {offsets = [0, 0], sizes = [128, 16], strides = [1, 1]} : vector<128x128xf32> to vector<128x16xf32>
    %cst_8 = arith.constant 2.500000e-01 : f32
    %14 = vector.broadcast %cst_8 : f32 to vector<128x16xf32>
    %15 = arith.mulf %13, %14 : vector<128x16xf32>
    %16 = arith.truncf %15 : vector<128x16xf32> to vector<128x16xbf16>
    %17 = vector.extract_strided_slice %3 {offsets = [0, 0], sizes = [128, 16], strides = [1, 1]} : vector<128x128xf32> to vector<128x16xf32>
    %18 = arith.truncf %17 : vector<128x16xf32> to vector<128x16xbf16>
    %19 = vector.extract_strided_slice %4 {offsets = [0, 0], sizes = [128, 16], strides = [1, 1]} : vector<128x128xf32> to vector<128x16xf32>
    %20 = arith.truncf %19 : vector<128x16xf32> to vector<128x16xbf16>
    %cst_9 = arith.constant dense<0.000000e+00> : vector<128x128xf32>
    %21 = tpu.matmul %16, %18, %cst_9 {dimension_numbers = #tpu.dot_dimension_numbers<[1], [1], [0], [0], [0, 0, 1, 0], [], []>} : vector<128x16xbf16>, vector<128x16xbf16>, vector<128x128xf32> -> vector<128x128xf32>
    %22 = arith.addf %21, %12 : vector<128x128xf32>
    %cst_10 = arith.constant dense<0xFF800000> : vector<128xf32>
    %23 = vector.multi_reduction <maximumf>, %22, %cst_10 [1] : vector<128x128xf32> to vector<128xf32>
    %24 = vector.shape_cast %23 : vector<128xf32> to vector<128x1xf32>
    %25 = vector.broadcast %24 : vector<128x1xf32> to vector<128x128xf32>
    %26 = arith.subf %22, %25 : vector<128x128xf32>
    %27 = math.exp %26 : vector<128x128xf32>
    %cst_11 = arith.constant dense<0.000000e+00> : vector<128xf32>
    %28 = vector.multi_reduction <add>, %27, %cst_11 [1] : vector<128x128xf32> to vector<128xf32>
    %29 = vector.shape_cast %28 : vector<128xf32> to vector<128x1xf32>
    %30 = tpu.reciprocal %29 {approx = true} : vector<128x1xf32> -> vector<128x1xf32>
    %31 = vector.broadcast %30 : vector<128x1xf32> to vector<128x128xf32>
    %32 = arith.mulf %27, %31 : vector<128x128xf32>
    %33 = arith.truncf %32 : vector<128x128xf32> to vector<128x128xbf16>
    %cst_12 = arith.constant dense<0.000000e+00> : vector<128x16xf32>
    %34 = tpu.matmul %33, %20, %cst_12 {dimension_numbers = #tpu.dot_dimension_numbers<[1], [0], [0], [1], [0, 0, 1, 1], [], []>} : vector<128x128xbf16>, vector<128x16xbf16>, vector<128x16xf32> -> vector<128x16xf32>
    %35 = vector.extract_strided_slice %2 {offsets = [0, 16], sizes = [128, 16], strides = [1, 1]} : vector<128x128xf32> to vector<128x16xf32>
    %cst_13 = arith.constant 2.500000e-01 : f32
    %36 = vector.broadcast %cst_13 : f32 to vector<128x16xf32>
    %37 = arith.mulf %35, %36 : vector<128x16xf32>
    %38 = arith.truncf %37 : vector<128x16xf32> to vector<128x16xbf16>
    %39 = vector.extract_strided_slice %3 {offsets = [0, 16], sizes = [128, 16], strides = [1, 1]} : vector<128x128xf32> to vector<128x16xf32>
    %40 = arith.truncf %39 : vector<128x16xf32> to vector<128x16xbf16>
    %41 = vector.extract_strided_slice %4 {offsets = [0, 16], sizes = [128, 16], strides = [1, 1]} : vector<128x128xf32> to vector<128x16xf32>
    %42 = arith.truncf %41 : vector<128x16xf32> to vector<128x16xbf16>
    %cst_14 = arith.constant dense<0.000000e+00> : vector<128x128xf32>
    %43 = tpu.matmul %38, %40, %cst_14 {dimension_numbers = #tpu.dot_dimension_numbers<[1], [1], [0], [0], [0, 0, 1, 0], [], []>} : vector<128x16xbf16>, vector<128x16xbf16>, vector<128x128xf32> -> vector<128x128xf32>
    %44 = arith.addf %43, %12 : vector<128x128xf32>
    %cst_15 = arith.constant dense<0xFF800000> : vector<128xf32>
    %45 = vector.multi_reduction <maximumf>, %44, %cst_15 [1] : vector<128x128xf32> to vector<128xf32>
    %46 = vector.shape_cast %45 : vector<128xf32> to vector<128x1xf32>
    %47 = vector.broadcast %46 : vector<128x1xf32> to vector<128x128xf32>
    %48 = arith.subf %44, %47 : vector<128x128xf32>
    %49 = math.exp %48 : vector<128x128xf32>
    %cst_16 = arith.constant dense<0.000000e+00> : vector<128xf32>
    %50 = vector.multi_reduction <add>, %49, %cst_16 [1] : vector<128x128xf32> to vector<128xf32>
    %51 = vector.shape_cast %50 : vector<128xf32> to vector<128x1xf32>
    %52 = tpu.reciprocal %51 {approx = true} : vector<128x1xf32> -> vector<128x1xf32>
    %53 = vector.broadcast %52 : vector<128x1xf32> to vector<128x128xf32>
    %54 = arith.mulf %49, %53 : vector<128x128xf32>
    %55 = arith.truncf %54 : vector<128x128xf32> to vector<128x128xbf16>
    %cst_17 = arith.constant dense<0.000000e+00> : vector<128x16xf32>
    %56 = tpu.matmul %55, %42, %cst_17 {dimension_numbers = #tpu.dot_dimension_numbers<[1], [0], [0], [1], [0, 0, 1, 1], [], []>} : vector<128x128xbf16>, vector<128x16xbf16>, vector<128x16xf32> -> vector<128x16xf32>
    %57 = vector.extract_strided_slice %2 {offsets = [0, 32], sizes = [128, 16], strides = [1, 1]} : vector<128x128xf32> to vector<128x16xf32>
    %cst_18 = arith.constant 2.500000e-01 : f32
    %58 = vector.broadcast %cst_18 : f32 to vector<128x16xf32>
    %59 = arith.mulf %57, %58 : vector<128x16xf32>
    %60 = arith.truncf %59 : vector<128x16xf32> to vector<128x16xbf16>
    %61 = vector.extract_strided_slice %3 {offsets = [0, 32], sizes = [128, 16], strides = [1, 1]} : vector<128x128xf32> to vector<128x16xf32>
    %62 = arith.truncf %61 : vector<128x16xf32> to vector<128x16xbf16>
    %63 = vector.extract_strided_slice %4 {offsets = [0, 32], sizes = [128, 16], strides = [1, 1]} : vector<128x128xf32> to vector<128x16xf32>
    %64 = arith.truncf %63 : vector<128x16xf32> to vector<128x16xbf16>
    %cst_19 = arith.constant dense<0.000000e+00> : vector<128x128xf32>
    %65 = tpu.matmul %60, %62, %cst_19 {dimension_numbers = #tpu.dot_dimension_numbers<[1], [1], [0], [0], [0, 0, 1, 0], [], []>} : vector<128x16xbf16>, vector<128x16xbf16>, vector<128x128xf32> -> vector<128x128xf32>
    %66 = arith.addf %65, %12 : vector<128x128xf32>
    %cst_20 = arith.constant dense<0xFF800000> : vector<128xf32>
    %67 = vector.multi_reduction <maximumf>, %66, %cst_20 [1] : vector<128x128xf32> to vector<128xf32>
    %68 = vector.shape_cast %67 : vector<128xf32> to vector<128x1xf32>
    %69 = vector.broadcast %68 : vector<128x1xf32> to vector<128x128xf32>
    %70 = arith.subf %66, %69 : vector<128x128xf32>
    %71 = math.exp %70 : vector<128x128xf32>
    %cst_21 = arith.constant dense<0.000000e+00> : vector<128xf32>
    %72 = vector.multi_reduction <add>, %71, %cst_21 [1] : vector<128x128xf32> to vector<128xf32>
    %73 = vector.shape_cast %72 : vector<128xf32> to vector<128x1xf32>
    %74 = tpu.reciprocal %73 {approx = true} : vector<128x1xf32> -> vector<128x1xf32>
    %75 = vector.broadcast %74 : vector<128x1xf32> to vector<128x128xf32>
    %76 = arith.mulf %71, %75 : vector<128x128xf32>
    %77 = arith.truncf %76 : vector<128x128xf32> to vector<128x128xbf16>
    %cst_22 = arith.constant dense<0.000000e+00> : vector<128x16xf32>
    %78 = tpu.matmul %77, %64, %cst_22 {dimension_numbers = #tpu.dot_dimension_numbers<[1], [0], [0], [1], [0, 0, 1, 1], [], []>} : vector<128x128xbf16>, vector<128x16xbf16>, vector<128x16xf32> -> vector<128x16xf32>
    %79 = vector.extract_strided_slice %2 {offsets = [0, 48], sizes = [128, 16], strides = [1, 1]} : vector<128x128xf32> to vector<128x16xf32>
    %cst_23 = arith.constant 2.500000e-01 : f32
    %80 = vector.broadcast %cst_23 : f32 to vector<128x16xf32>
    %81 = arith.mulf %79, %80 : vector<128x16xf32>
    %82 = arith.truncf %81 : vector<128x16xf32> to vector<128x16xbf16>
    %83 = vector.extract_strided_slice %3 {offsets = [0, 48], sizes = [128, 16], strides = [1, 1]} : vector<128x128xf32> to vector<128x16xf32>
    %84 = arith.truncf %83 : vector<128x16xf32> to vector<128x16xbf16>
    %85 = vector.extract_strided_slice %4 {offsets = [0, 48], sizes = [128, 16], strides = [1, 1]} : vector<128x128xf32> to vector<128x16xf32>
    %86 = arith.truncf %85 : vector<128x16xf32> to vector<128x16xbf16>
    %cst_24 = arith.constant dense<0.000000e+00> : vector<128x128xf32>
    %87 = tpu.matmul %82, %84, %cst_24 {dimension_numbers = #tpu.dot_dimension_numbers<[1], [1], [0], [0], [0, 0, 1, 0], [], []>} : vector<128x16xbf16>, vector<128x16xbf16>, vector<128x128xf32> -> vector<128x128xf32>
    %88 = arith.addf %87, %12 : vector<128x128xf32>
    %cst_25 = arith.constant dense<0xFF800000> : vector<128xf32>
    %89 = vector.multi_reduction <maximumf>, %88, %cst_25 [1] : vector<128x128xf32> to vector<128xf32>
    %90 = vector.shape_cast %89 : vector<128xf32> to vector<128x1xf32>
    %91 = vector.broadcast %90 : vector<128x1xf32> to vector<128x128xf32>
    %92 = arith.subf %88, %91 : vector<128x128xf32>
    %93 = math.exp %92 : vector<128x128xf32>
    %cst_26 = arith.constant dense<0.000000e+00> : vector<128xf32>
    %94 = vector.multi_reduction <add>, %93, %cst_26 [1] : vector<128x128xf32> to vector<128xf32>
    %95 = vector.shape_cast %94 : vector<128xf32> to vector<128x1xf32>
    %96 = tpu.reciprocal %95 {approx = true} : vector<128x1xf32> -> vector<128x1xf32>
    %97 = vector.broadcast %96 : vector<128x1xf32> to vector<128x128xf32>
    %98 = arith.mulf %93, %97 : vector<128x128xf32>
    %99 = arith.truncf %98 : vector<128x128xf32> to vector<128x128xbf16>
    %cst_27 = arith.constant dense<0.000000e+00> : vector<128x16xf32>
    %100 = tpu.matmul %99, %86, %cst_27 {dimension_numbers = #tpu.dot_dimension_numbers<[1], [0], [0], [1], [0, 0, 1, 1], [], []>} : vector<128x128xbf16>, vector<128x16xbf16>, vector<128x16xf32> -> vector<128x16xf32>
    %101 = vector.extract_strided_slice %2 {offsets = [0, 64], sizes = [128, 16], strides = [1, 1]} : vector<128x128xf32> to vector<128x16xf32>
    %cst_28 = arith.constant 2.500000e-01 : f32
    %102 = vector.broadcast %cst_28 : f32 to vector<128x16xf32>
    %103 = arith.mulf %101, %102 : vector<128x16xf32>
    %104 = arith.truncf %103 : vector<128x16xf32> to vector<128x16xbf16>
    %105 = vector.extract_strided_slice %3 {offsets = [0, 64], sizes = [128, 16], strides = [1, 1]} : vector<128x128xf32> to vector<128x16xf32>
    %106 = arith.truncf %105 : vector<128x16xf32> to vector<128x16xbf16>
    %107 = vector.extract_strided_slice %4 {offsets = [0, 64], sizes = [128, 16], strides = [1, 1]} : vector<128x128xf32> to vector<128x16xf32>
    %108 = arith.truncf %107 : vector<128x16xf32> to vector<128x16xbf16>
    %cst_29 = arith.constant dense<0.000000e+00> : vector<128x128xf32>
    %109 = tpu.matmul %104, %106, %cst_29 {dimension_numbers = #tpu.dot_dimension_numbers<[1], [1], [0], [0], [0, 0, 1, 0], [], []>} : vector<128x16xbf16>, vector<128x16xbf16>, vector<128x128xf32> -> vector<128x128xf32>
    %110 = arith.addf %109, %12 : vector<128x128xf32>
    %cst_30 = arith.constant dense<0xFF800000> : vector<128xf32>
    %111 = vector.multi_reduction <maximumf>, %110, %cst_30 [1] : vector<128x128xf32> to vector<128xf32>
    %112 = vector.shape_cast %111 : vector<128xf32> to vector<128x1xf32>
    %113 = vector.broadcast %112 : vector<128x1xf32> to vector<128x128xf32>
    %114 = arith.subf %110, %113 : vector<128x128xf32>
    %115 = math.exp %114 : vector<128x128xf32>
    %cst_31 = arith.constant dense<0.000000e+00> : vector<128xf32>
    %116 = vector.multi_reduction <add>, %115, %cst_31 [1] : vector<128x128xf32> to vector<128xf32>
    %117 = vector.shape_cast %116 : vector<128xf32> to vector<128x1xf32>
    %118 = tpu.reciprocal %117 {approx = true} : vector<128x1xf32> -> vector<128x1xf32>
    %119 = vector.broadcast %118 : vector<128x1xf32> to vector<128x128xf32>
    %120 = arith.mulf %115, %119 : vector<128x128xf32>
    %121 = arith.truncf %120 : vector<128x128xf32> to vector<128x128xbf16>
    %cst_32 = arith.constant dense<0.000000e+00> : vector<128x16xf32>
    %122 = tpu.matmul %121, %108, %cst_32 {dimension_numbers = #tpu.dot_dimension_numbers<[1], [0], [0], [1], [0, 0, 1, 1], [], []>} : vector<128x128xbf16>, vector<128x16xbf16>, vector<128x16xf32> -> vector<128x16xf32>
    %123 = vector.extract_strided_slice %2 {offsets = [0, 80], sizes = [128, 16], strides = [1, 1]} : vector<128x128xf32> to vector<128x16xf32>
    %cst_33 = arith.constant 2.500000e-01 : f32
    %124 = vector.broadcast %cst_33 : f32 to vector<128x16xf32>
    %125 = arith.mulf %123, %124 : vector<128x16xf32>
    %126 = arith.truncf %125 : vector<128x16xf32> to vector<128x16xbf16>
    %127 = vector.extract_strided_slice %3 {offsets = [0, 80], sizes = [128, 16], strides = [1, 1]} : vector<128x128xf32> to vector<128x16xf32>
    %128 = arith.truncf %127 : vector<128x16xf32> to vector<128x16xbf16>
    %129 = vector.extract_strided_slice %4 {offsets = [0, 80], sizes = [128, 16], strides = [1, 1]} : vector<128x128xf32> to vector<128x16xf32>
    %130 = arith.truncf %129 : vector<128x16xf32> to vector<128x16xbf16>
    %cst_34 = arith.constant dense<0.000000e+00> : vector<128x128xf32>
    %131 = tpu.matmul %126, %128, %cst_34 {dimension_numbers = #tpu.dot_dimension_numbers<[1], [1], [0], [0], [0, 0, 1, 0], [], []>} : vector<128x16xbf16>, vector<128x16xbf16>, vector<128x128xf32> -> vector<128x128xf32>
    %132 = arith.addf %131, %12 : vector<128x128xf32>
    %cst_35 = arith.constant dense<0xFF800000> : vector<128xf32>
    %133 = vector.multi_reduction <maximumf>, %132, %cst_35 [1] : vector<128x128xf32> to vector<128xf32>
    %134 = vector.shape_cast %133 : vector<128xf32> to vector<128x1xf32>
    %135 = vector.broadcast %134 : vector<128x1xf32> to vector<128x128xf32>
    %136 = arith.subf %132, %135 : vector<128x128xf32>
    %137 = math.exp %136 : vector<128x128xf32>
    %cst_36 = arith.constant dense<0.000000e+00> : vector<128xf32>
    %138 = vector.multi_reduction <add>, %137, %cst_36 [1] : vector<128x128xf32> to vector<128xf32>
    %139 = vector.shape_cast %138 : vector<128xf32> to vector<128x1xf32>
    %140 = tpu.reciprocal %139 {approx = true} : vector<128x1xf32> -> vector<128x1xf32>
    %141 = vector.broadcast %140 : vector<128x1xf32> to vector<128x128xf32>
    %142 = arith.mulf %137, %141 : vector<128x128xf32>
    %143 = arith.truncf %142 : vector<128x128xf32> to vector<128x128xbf16>
    %cst_37 = arith.constant dense<0.000000e+00> : vector<128x16xf32>
    %144 = tpu.matmul %143, %130, %cst_37 {dimension_numbers = #tpu.dot_dimension_numbers<[1], [0], [0], [1], [0, 0, 1, 1], [], []>} : vector<128x128xbf16>, vector<128x16xbf16>, vector<128x16xf32> -> vector<128x16xf32>
    %145 = vector.extract_strided_slice %2 {offsets = [0, 96], sizes = [128, 16], strides = [1, 1]} : vector<128x128xf32> to vector<128x16xf32>
    %cst_38 = arith.constant 2.500000e-01 : f32
    %146 = vector.broadcast %cst_38 : f32 to vector<128x16xf32>
    %147 = arith.mulf %145, %146 : vector<128x16xf32>
    %148 = arith.truncf %147 : vector<128x16xf32> to vector<128x16xbf16>
    %149 = vector.extract_strided_slice %3 {offsets = [0, 96], sizes = [128, 16], strides = [1, 1]} : vector<128x128xf32> to vector<128x16xf32>
    %150 = arith.truncf %149 : vector<128x16xf32> to vector<128x16xbf16>
    %151 = vector.extract_strided_slice %4 {offsets = [0, 96], sizes = [128, 16], strides = [1, 1]} : vector<128x128xf32> to vector<128x16xf32>
    %152 = arith.truncf %151 : vector<128x16xf32> to vector<128x16xbf16>
    %cst_39 = arith.constant dense<0.000000e+00> : vector<128x128xf32>
    %153 = tpu.matmul %148, %150, %cst_39 {dimension_numbers = #tpu.dot_dimension_numbers<[1], [1], [0], [0], [0, 0, 1, 0], [], []>} : vector<128x16xbf16>, vector<128x16xbf16>, vector<128x128xf32> -> vector<128x128xf32>
    %154 = arith.addf %153, %12 : vector<128x128xf32>
    %cst_40 = arith.constant dense<0xFF800000> : vector<128xf32>
    %155 = vector.multi_reduction <maximumf>, %154, %cst_40 [1] : vector<128x128xf32> to vector<128xf32>
    %156 = vector.shape_cast %155 : vector<128xf32> to vector<128x1xf32>
    %157 = vector.broadcast %156 : vector<128x1xf32> to vector<128x128xf32>
    %158 = arith.subf %154, %157 : vector<128x128xf32>
    %159 = math.exp %158 : vector<128x128xf32>
    %cst_41 = arith.constant dense<0.000000e+00> : vector<128xf32>
    %160 = vector.multi_reduction <add>, %159, %cst_41 [1] : vector<128x128xf32> to vector<128xf32>
    %161 = vector.shape_cast %160 : vector<128xf32> to vector<128x1xf32>
    %162 = tpu.reciprocal %161 {approx = true} : vector<128x1xf32> -> vector<128x1xf32>
    %163 = vector.broadcast %162 : vector<128x1xf32> to vector<128x128xf32>
    %164 = arith.mulf %159, %163 : vector<128x128xf32>
    %165 = arith.truncf %164 : vector<128x128xf32> to vector<128x128xbf16>
    %cst_42 = arith.constant dense<0.000000e+00> : vector<128x16xf32>
    %166 = tpu.matmul %165, %152, %cst_42 {dimension_numbers = #tpu.dot_dimension_numbers<[1], [0], [0], [1], [0, 0, 1, 1], [], []>} : vector<128x128xbf16>, vector<128x16xbf16>, vector<128x16xf32> -> vector<128x16xf32>
    %167 = vector.extract_strided_slice %2 {offsets = [0, 112], sizes = [128, 16], strides = [1, 1]} : vector<128x128xf32> to vector<128x16xf32>
    %cst_43 = arith.constant 2.500000e-01 : f32
    %168 = vector.broadcast %cst_43 : f32 to vector<128x16xf32>
    %169 = arith.mulf %167, %168 : vector<128x16xf32>
    %170 = arith.truncf %169 : vector<128x16xf32> to vector<128x16xbf16>
    %171 = vector.extract_strided_slice %3 {offsets = [0, 112], sizes = [128, 16], strides = [1, 1]} : vector<128x128xf32> to vector<128x16xf32>
    %172 = arith.truncf %171 : vector<128x16xf32> to vector<128x16xbf16>
    %173 = vector.extract_strided_slice %4 {offsets = [0, 112], sizes = [128, 16], strides = [1, 1]} : vector<128x128xf32> to vector<128x16xf32>
    %174 = arith.truncf %173 : vector<128x16xf32> to vector<128x16xbf16>
    %cst_44 = arith.constant dense<0.000000e+00> : vector<128x128xf32>
    %175 = tpu.matmul %170, %172, %cst_44 {dimension_numbers = #tpu.dot_dimension_numbers<[1], [1], [0], [0], [0, 0, 1, 0], [], []>} : vector<128x16xbf16>, vector<128x16xbf16>, vector<128x128xf32> -> vector<128x128xf32>
    %176 = arith.addf %175, %12 : vector<128x128xf32>
    %cst_45 = arith.constant dense<0xFF800000> : vector<128xf32>
    %177 = vector.multi_reduction <maximumf>, %176, %cst_45 [1] : vector<128x128xf32> to vector<128xf32>
    %178 = vector.shape_cast %177 : vector<128xf32> to vector<128x1xf32>
    %179 = vector.broadcast %178 : vector<128x1xf32> to vector<128x128xf32>
    %180 = arith.subf %176, %179 : vector<128x128xf32>
    %181 = math.exp %180 : vector<128x128xf32>
    %cst_46 = arith.constant dense<0.000000e+00> : vector<128xf32>
    %182 = vector.multi_reduction <add>, %181, %cst_46 [1] : vector<128x128xf32> to vector<128xf32>
    %183 = vector.shape_cast %182 : vector<128xf32> to vector<128x1xf32>
    %184 = tpu.reciprocal %183 {approx = true} : vector<128x1xf32> -> vector<128x1xf32>
    %185 = vector.broadcast %184 : vector<128x1xf32> to vector<128x128xf32>
    %186 = arith.mulf %181, %185 : vector<128x128xf32>
    %187 = arith.truncf %186 : vector<128x128xf32> to vector<128x128xbf16>
    %cst_47 = arith.constant dense<0.000000e+00> : vector<128x16xf32>
    %188 = tpu.matmul %187, %174, %cst_47 {dimension_numbers = #tpu.dot_dimension_numbers<[1], [0], [0], [1], [0, 0, 1, 1], [], []>} : vector<128x128xbf16>, vector<128x16xbf16>, vector<128x16xf32> -> vector<128x16xf32>
    %189 = tpu.concatenate %34, %56, %78, %100, %122, %144, %166, %188 in 1 : vector<128x16xf32>, vector<128x16xf32>, vector<128x16xf32>, vector<128x16xf32>, vector<128x16xf32>, vector<128x16xf32>, vector<128x16xf32>, vector<128x16xf32> -> vector<128x128xf32>
    %190 = arith.truncf %189 : vector<128x128xf32> to vector<128x128xbf16>
    %c0_48 = arith.constant 0 : index
    %c0_49 = arith.constant 0 : index
    %191 = vector.load %arg6[%c0_48, %c0_49] : memref<128x128xbf16, #tpu.memory_space<vmem>>, vector<128x128xbf16>
    %cst_50 = arith.constant dense<0.000000e+00> : vector<128x128xf32>
    %192 = tpu.matmul %190, %191, %cst_50 {dimension_numbers = #tpu.dot_dimension_numbers<[1], [0], [0], [1], [0, 0, 1, 1], [], []>} : vector<128x128xbf16>, vector<128x128xbf16>, vector<128x128xf32> -> vector<128x128xf32>
    %c0_51 = arith.constant 0 : index
    %c0_52 = arith.constant 0 : index
    %193 = vector.load %arg7[%c0_51, %c0_52] : memref<1x128xf32, #tpu.memory_space<vmem>>, vector<1x128xf32>
    %194 = vector.broadcast %193 : vector<1x128xf32> to vector<128x128xf32>
    %195 = arith.addf %192, %194 : vector<128x128xf32>
    %c0_53 = arith.constant 0 : index
    %c0_54 = arith.constant 0 : index
    %196 = vector.load %arg3[%c0_53, %c0_54] : memref<128x128xf32, #tpu.memory_space<vmem>>, vector<128x128xf32>
    %197 = arith.addf %196, %195 : vector<128x128xf32>
    %cst_55 = arith.constant dense<0.000000e+00> : vector<128xf32>
    %198 = vector.multi_reduction <add>, %197, %cst_55 [1] : vector<128x128xf32> to vector<128xf32>
    %199 = vector.shape_cast %198 : vector<128xf32> to vector<128x1xf32>
    %cst_56 = arith.constant 1.280000e+02 : f32
    %200 = vector.broadcast %cst_56 : f32 to vector<128x1xf32>
    %201 = arith.divf %199, %200 : vector<128x1xf32>
    %202 = vector.broadcast %201 : vector<128x1xf32> to vector<128x128xf32>
    %203 = arith.subf %197, %202 : vector<128x128xf32>
    %204 = arith.mulf %203, %203 : vector<128x128xf32>
    %cst_57 = arith.constant dense<0.000000e+00> : vector<128xf32>
    %205 = vector.multi_reduction <add>, %204, %cst_57 [1] : vector<128x128xf32> to vector<128xf32>
    %206 = vector.shape_cast %205 : vector<128xf32> to vector<128x1xf32>
    %cst_58 = arith.constant 1.280000e+02 : f32
    %207 = vector.broadcast %cst_58 : f32 to vector<128x1xf32>
    %208 = arith.divf %206, %207 : vector<128x1xf32>
    %209 = vector.broadcast %201 : vector<128x1xf32> to vector<128x128xf32>
    %210 = arith.subf %197, %209 : vector<128x128xf32>
    %cst_59 = arith.constant 9.99999974E-6 : f32
    %211 = vector.broadcast %cst_59 : f32 to vector<128x1xf32>
    %212 = arith.addf %208, %211 : vector<128x1xf32>
    %213 = math.rsqrt %212 : vector<128x1xf32>
    %214 = vector.broadcast %213 : vector<128x1xf32> to vector<128x128xf32>
    %215 = arith.mulf %210, %214 : vector<128x128xf32>
    %c0_60 = arith.constant 0 : index
    %c0_61 = arith.constant 0 : index
    %216 = vector.load %arg8[%c0_60, %c0_61] : memref<1x128xf32, #tpu.memory_space<vmem>>, vector<1x128xf32>
    %217 = vector.broadcast %216 : vector<1x128xf32> to vector<128x128xf32>
    %218 = arith.mulf %215, %217 : vector<128x128xf32>
    %c0_62 = arith.constant 0 : index
    %c0_63 = arith.constant 0 : index
    %219 = vector.load %arg9[%c0_62, %c0_63] : memref<1x128xf32, #tpu.memory_space<vmem>>, vector<1x128xf32>
    %220 = vector.broadcast %219 : vector<1x128xf32> to vector<128x128xf32>
    %221 = arith.addf %218, %220 : vector<128x128xf32>
    %222 = arith.truncf %221 : vector<128x128xf32> to vector<128x128xbf16>
    %c0_64 = arith.constant 0 : index
    %c0_65 = arith.constant 0 : index
    %223 = vector.load %arg10[%c0_64, %c0_65] : memref<128x256xbf16, #tpu.memory_space<vmem>>, vector<128x256xbf16>
    %cst_66 = arith.constant dense<0.000000e+00> : vector<128x256xf32>
    %224 = tpu.matmul %222, %223, %cst_66 {dimension_numbers = #tpu.dot_dimension_numbers<[1], [0], [0], [1], [0, 0, 1, 1], [], []>} : vector<128x128xbf16>, vector<128x256xbf16>, vector<128x256xf32> -> vector<128x256xf32>
    %c0_67 = arith.constant 0 : index
    %c0_68 = arith.constant 0 : index
    %225 = vector.load %arg11[%c0_67, %c0_68] : memref<1x256xf32, #tpu.memory_space<vmem>>, vector<1x256xf32>
    %226 = vector.broadcast %225 : vector<1x256xf32> to vector<128x256xf32>
    %227 = arith.addf %224, %226 : vector<128x256xf32>
    %cst_69 = arith.constant 0.000000e+00 : f32
    %228 = vector.broadcast %cst_69 : f32 to vector<128x256xf32>
    %229 = arith.maximumf %227, %228 : vector<128x256xf32>
    %230 = arith.truncf %229 : vector<128x256xf32> to vector<128x256xbf16>
    %c0_70 = arith.constant 0 : index
    %c0_71 = arith.constant 0 : index
    %231 = vector.load %arg12[%c0_70, %c0_71] : memref<256x128xbf16, #tpu.memory_space<vmem>>, vector<256x128xbf16>
    %cst_72 = arith.constant dense<0.000000e+00> : vector<128x128xf32>
    %232 = tpu.matmul %230, %231, %cst_72 {dimension_numbers = #tpu.dot_dimension_numbers<[1], [0], [0], [1], [0, 0, 1, 1], [], []>} : vector<128x256xbf16>, vector<256x128xbf16>, vector<128x128xf32> -> vector<128x128xf32>
    %c0_73 = arith.constant 0 : index
    %c0_74 = arith.constant 0 : index
    %233 = vector.load %arg13[%c0_73, %c0_74] : memref<1x128xf32, #tpu.memory_space<vmem>>, vector<1x128xf32>
    %234 = vector.broadcast %233 : vector<1x128xf32> to vector<128x128xf32>
    %235 = arith.addf %232, %234 : vector<128x128xf32>
    %236 = arith.addf %221, %235 : vector<128x128xf32>
    %cst_75 = arith.constant dense<0.000000e+00> : vector<128xf32>
    %237 = vector.multi_reduction <add>, %236, %cst_75 [1] : vector<128x128xf32> to vector<128xf32>
    %238 = vector.shape_cast %237 : vector<128xf32> to vector<128x1xf32>
    %cst_76 = arith.constant 1.280000e+02 : f32
    %239 = vector.broadcast %cst_76 : f32 to vector<128x1xf32>
    %240 = arith.divf %238, %239 : vector<128x1xf32>
    %241 = vector.broadcast %240 : vector<128x1xf32> to vector<128x128xf32>
    %242 = arith.subf %236, %241 : vector<128x128xf32>
    %243 = arith.mulf %242, %242 : vector<128x128xf32>
    %cst_77 = arith.constant dense<0.000000e+00> : vector<128xf32>
    %244 = vector.multi_reduction <add>, %243, %cst_77 [1] : vector<128x128xf32> to vector<128xf32>
    %245 = vector.shape_cast %244 : vector<128xf32> to vector<128x1xf32>
    %cst_78 = arith.constant 1.280000e+02 : f32
    %246 = vector.broadcast %cst_78 : f32 to vector<128x1xf32>
    %247 = arith.divf %245, %246 : vector<128x1xf32>
    %248 = vector.broadcast %240 : vector<128x1xf32> to vector<128x128xf32>
    %249 = arith.subf %236, %248 : vector<128x128xf32>
    %cst_79 = arith.constant 9.99999974E-6 : f32
    %250 = vector.broadcast %cst_79 : f32 to vector<128x1xf32>
    %251 = arith.addf %247, %250 : vector<128x1xf32>
    %252 = math.rsqrt %251 : vector<128x1xf32>
    %253 = vector.broadcast %252 : vector<128x1xf32> to vector<128x128xf32>
    %254 = arith.mulf %249, %253 : vector<128x128xf32>
    %c0_80 = arith.constant 0 : index
    %c0_81 = arith.constant 0 : index
    %255 = vector.load %arg14[%c0_80, %c0_81] : memref<1x128xf32, #tpu.memory_space<vmem>>, vector<1x128xf32>
    %256 = vector.broadcast %255 : vector<1x128xf32> to vector<128x128xf32>
    %257 = arith.mulf %254, %256 : vector<128x128xf32>
    %c0_82 = arith.constant 0 : index
    %c0_83 = arith.constant 0 : index
    %258 = vector.load %arg15[%c0_82, %c0_83] : memref<1x128xf32, #tpu.memory_space<vmem>>, vector<1x128xf32>
    %259 = vector.broadcast %258 : vector<1x128xf32> to vector<128x128xf32>
    %260 = arith.addf %257, %259 : vector<128x128xf32>
    %c0_84 = arith.constant 0 : index
    %c0_85 = arith.constant 0 : index
    %261 = vector.load %arg16[%c0_84, %c0_85] : memref<128x128xf32, #tpu.memory_space<vmem>>, vector<128x128xf32>
    tpu.vector_store %arg16[%c0_84, %c0_85], %260 {strides = array<i32>} : memref<128x128xf32, #tpu.memory_space<vmem>>, vector<128x128xf32>,
    return
  }
  func.func @transform_0(%arg0: i32) -> (i32, i32) {
    %c0_i32 = arith.constant 0 : i32
    %c0_i32_0 = arith.constant 0 : i32
    return %arg0, %c0_i32 : i32, i32
  }
  func.func @transform_1(%arg0: i32) -> (i32, i32) {
    %c0_i32 = arith.constant 0 : i32
    %c0_i32_0 = arith.constant 0 : i32
    %c0_i32_1 = arith.constant 0 : i32
    return %c0_i32, %c0_i32_0 : i32, i32
  }
  func.func @transform_2(%arg0: i32) -> (i32, i32) {
    %c0_i32 = arith.constant 0 : i32
    %c0_i32_0 = arith.constant 0 : i32
    return %arg0, %c0_i32 : i32, i32
  }
  func.func @transform_3(%arg0: i32) -> (i32, i32) {
    %c0_i32 = arith.constant 0 : i32
    %c0_i32_0 = arith.constant 0 : i32
    return %arg0, %c0_i32 : i32, i32
  }
  func.func @transform_4(%arg0: i32) -> (i32, i32) {
    %c0_i32 = arith.constant 0 : i32
    %c0_i32_0 = arith.constant 0 : i32
    %c0_i32_1 = arith.constant 0 : i32
    return %c0_i32, %c0_i32_0 : i32, i32
  }
  func.func @transform_5(%arg0: i32) -> (i32, i32) {
    %c0_i32 = arith.constant 0 : i32
    %c0_i32_0 = arith.constant 0 : i32
    %c0_i32_1 = arith.constant 0 : i32
    return %c0_i32, %c0_i32_0 : i32, i32
  }
  func.func @transform_6(%arg0: i32) -> (i32, i32) {
    %c0_i32 = arith.constant 0 : i32
    %c0_i32_0 = arith.constant 0 : i32
    %c0_i32_1 = arith.constant 0 : i32
    return %c0_i32, %c0_i32_0 : i32, i32
  }
  func.func @transform_7(%arg0: i32) -> (i32, i32) {
    %c0_i32 = arith.constant 0 : i32
    %c0_i32_0 = arith.constant 0 : i32
    %c0_i32_1 = arith.constant 0 : i32
    return %c0_i32, %c0_i32_0 : i32, i32
  }
  func.func @transform_8(%arg0: i32) -> (i32, i32) {
    %c0_i32 = arith.constant 0 : i32
    %c0_i32_0 = arith.constant 0 : i32
    %c0_i32_1 = arith.constant 0 : i32
    return %c0_i32, %c0_i32_0 : i32, i32
  }
  func.func @transform_9(%arg0: i32) -> (i32, i32) {
    %c0_i32 = arith.constant 0 : i32
    %c0_i32_0 = arith.constant 0 : i32
    %c0_i32_1 = arith.constant 0 : i32
    return %c0_i32, %c0_i32_0 : i32, i32
  }
  func.func @transform_10(%arg0: i32) -> (i32, i32) {
    %c0_i32 = arith.constant 0 : i32
    %c0_i32_0 = arith.constant 0 : i32
    %c0_i32_1 = arith.constant 0 : i32
    return %c0_i32, %c0_i32_0 : i32, i32
  }
  func.func @transform_11(%arg0: i32) -> (i32, i32) {
    %c0_i32 = arith.constant 0 : i32
    %c0_i32_0 = arith.constant 0 : i32
    %c0_i32_1 = arith.constant 0 : i32
    return %c0_i32, %c0_i32_0 : i32, i32
  }
  func.func @transform_12(%arg0: i32) -> (i32, i32) {
    %c0_i32 = arith.constant 0 : i32
    %c0_i32_0 = arith.constant 0 : i32
    %c0_i32_1 = arith.constant 0 : i32
    return %c0_i32, %c0_i32_0 : i32, i32
  }
  func.func @transform_13(%arg0: i32) -> (i32, i32) {
    %c0_i32 = arith.constant 0 : i32
    %c0_i32_0 = arith.constant 0 : i32
    %c0_i32_1 = arith.constant 0 : i32
    return %c0_i32, %c0_i32_0 : i32, i32
  }
  func.func @transform_14(%arg0: i32) -> (i32, i32) {
    %c0_i32 = arith.constant 0 : i32
    %c0_i32_0 = arith.constant 0 : i32
    %c0_i32_1 = arith.constant 0 : i32
    return %c0_i32, %c0_i32_0 : i32, i32
  }
  func.func @transform_15(%arg0: i32) -> (i32, i32) {
    %c0_i32 = arith.constant 0 : i32
    %c0_i32_0 = arith.constant 0 : i32
    return %arg0, %c0_i32 : i32, i32
  }
}

module attributes {stable_mosaic.version = 11 : i64} {
  func.func @_pool_classify_kernel(%arg0: memref<2x128xf32, #tpu.memory_space<vmem>>, %arg1: memref<128x128xf32, #tpu.memory_space<vmem>>, %arg2: memref<2x1xf32, #tpu.memory_space<vmem>>, %arg3: memref<128x128xbf16, #tpu.memory_space<vmem>>, %arg4: memref<1x128xf32, #tpu.memory_space<vmem>>, %arg5: memref<128x10xbf16, #tpu.memory_space<vmem>>, %arg6: memref<1x10xf32, #tpu.memory_space<vmem>>, %arg7: memref<2x10xf32, #tpu.memory_space<vmem>>) attributes {dimension_semantics = [], scalar_prefetch = 0 : i64, scratch_operands = 0 : i64, tpu.core_type = #tpu.core_type<tc>} {
    %c0 = arith.constant 0 : index
    %c0_0 = arith.constant 0 : index
    %0 = vector.load %arg0[%c0, %c0_0] : memref<2x128xf32, #tpu.memory_space<vmem>>, vector<2x128xf32>
    %1 = arith.truncf %0 : vector<2x128xf32> to vector<2x128xbf16>
    %c0_1 = arith.constant 0 : index
    %c0_2 = arith.constant 0 : index
    %2 = vector.load %arg1[%c0_1, %c0_2] : memref<128x128xf32, #tpu.memory_space<vmem>>, vector<128x128xf32>
    %3 = arith.truncf %2 : vector<128x128xf32> to vector<128x128xbf16>
    %cst = arith.constant dense<0.000000e+00> : vector<2x128xf32>
    %4 = tpu.matmul %1, %3, %cst {dimension_numbers = #tpu.dot_dimension_numbers<[1], [0], [0], [1], [0, 0, 1, 1], [], []>} : vector<2x128xbf16>, vector<128x128xbf16>, vector<2x128xf32> -> vector<2x128xf32>
    %c0_3 = arith.constant 0 : index
    %c0_4 = arith.constant 0 : index
    %5 = vector.load %arg2[%c0_3, %c0_4] : memref<2x1xf32, #tpu.memory_space<vmem>>, vector<2x1xf32>
    %6 = tpu.reciprocal %5 {approx = true} : vector<2x1xf32> -> vector<2x1xf32>
    %7 = vector.broadcast %6 : vector<2x1xf32> to vector<2x128xf32>
    %8 = arith.mulf %4, %7 : vector<2x128xf32>
    %9 = arith.truncf %8 : vector<2x128xf32> to vector<2x128xbf16>
    %c0_5 = arith.constant 0 : index
    %c0_6 = arith.constant 0 : index
    %10 = vector.load %arg3[%c0_5, %c0_6] : memref<128x128xbf16, #tpu.memory_space<vmem>>, vector<128x128xbf16>
    %cst_7 = arith.constant dense<0.000000e+00> : vector<2x128xf32>
    %11 = tpu.matmul %9, %10, %cst_7 {dimension_numbers = #tpu.dot_dimension_numbers<[1], [0], [0], [1], [0, 0, 1, 1], [], []>} : vector<2x128xbf16>, vector<128x128xbf16>, vector<2x128xf32> -> vector<2x128xf32>
    %c0_8 = arith.constant 0 : index
    %c0_9 = arith.constant 0 : index
    %12 = vector.load %arg4[%c0_8, %c0_9] : memref<1x128xf32, #tpu.memory_space<vmem>>, vector<1x128xf32>
    %13 = vector.broadcast %12 : vector<1x128xf32> to vector<2x128xf32>
    %14 = arith.addf %11, %13 : vector<2x128xf32>
    %cst_10 = arith.constant 0.000000e+00 : f32
    %15 = vector.broadcast %cst_10 : f32 to vector<2x128xf32>
    %16 = arith.maximumf %14, %15 : vector<2x128xf32>
    %17 = arith.truncf %16 : vector<2x128xf32> to vector<2x128xbf16>
    %c0_11 = arith.constant 0 : index
    %c0_12 = arith.constant 0 : index
    %18 = vector.load %arg5[%c0_11, %c0_12] : memref<128x10xbf16, #tpu.memory_space<vmem>>, vector<128x10xbf16>
    %cst_13 = arith.constant dense<0.000000e+00> : vector<2x10xf32>
    %19 = tpu.matmul %17, %18, %cst_13 {dimension_numbers = #tpu.dot_dimension_numbers<[1], [0], [0], [1], [0, 0, 1, 1], [], []>} : vector<2x128xbf16>, vector<128x10xbf16>, vector<2x10xf32> -> vector<2x10xf32>
    %c0_14 = arith.constant 0 : index
    %c0_15 = arith.constant 0 : index
    %20 = vector.load %arg6[%c0_14, %c0_15] : memref<1x10xf32, #tpu.memory_space<vmem>>, vector<1x10xf32>
    %21 = vector.broadcast %20 : vector<1x10xf32> to vector<2x10xf32>
    %22 = arith.addf %19, %21 : vector<2x10xf32>
    %c0_16 = arith.constant 0 : index
    %c0_17 = arith.constant 0 : index
    %23 = vector.load %arg7[%c0_16, %c0_17] : memref<2x10xf32, #tpu.memory_space<vmem>>, vector<2x10xf32>
    tpu.vector_store %arg7[%c0_16, %c0_17], %22 {strides = array<i32>} : memref<2x10xf32, #tpu.memory_space<vmem>>, vector<2x10xf32>,
    return
  }
}

</mosaic_0001>

<llo_original>
// kernel: graph_transformer_forward.5
$region0: #{graph_transformer_forward.5}
  #allocation0 [shape = 'u32[]', space=smem, size = 0x4, offset = 0x4, fixed_abs, tag = 'smem constant byte address 0x4 - core index']
  #allocation1 [shape = 'u32[72,128]{1,0:T(1,128)}', space=vmem, size = 0x9000, scoped, tag = 'internal scratch']
  %s0 = inlined_call_operand.vmem [shape: f32[128,128], index: 0, kind: input, shape index: {}]
  %s1 = inlined_call_operand.vmem [shape: bf16[128,384], index: 1, kind: input, shape index: {}]
  %s2 = inlined_call_operand.vmem [shape: f32[1,384], index: 2, kind: input, shape index: {}]
  %s3 = inlined_call_operand.vmem [shape: f32[128,384], index: 3, kind: output, shape index: {}]
  %s4 = sld [smem:[#allocation0]]
  $region22: #{graph_transformer_forward.5} parent=0
    _
  %s6 = ssub.s32 1, %s4
  %s7 = scalar_select 0, %s6, %s4
  // Predicated region
  $region2: #{graph_transformer_forward.5} parent=0 // pred_check
    _
  $region3: #{graph_transformer_forward.5} parent=0 // pred_check_branch
    %9 = sbr.rel (0) target = $region5
  $region4: #{graph_transformer_forward.5} parent=0 // pred_region
    _
  $region5: #{graph_transformer_forward.5} parent=0 // pred_fallthru
    _
  // Predicated region
  $region6: #{graph_transformer_forward.5} parent=0 // pred_check
    _
  $region7: #{graph_transformer_forward.5} parent=0 // pred_check_branch
    %11 = sbr.rel (0) target = $region9
  $region8: #{graph_transformer_forward.5} parent=0 // pred_region
    _
  $region9: #{graph_transformer_forward.5} parent=0 // pred_fallthru
    _
  // Predicated region
  $region10: #{graph_transformer_forward.5} parent=0 // pred_check
    _
  $region11: #{graph_transformer_forward.5} parent=0 // pred_check_branch
    %13 = sbr.rel (0) target = $region13
  $region12: #{graph_transformer_forward.5} parent=0 // pred_region
    _
  $region13: #{graph_transformer_forward.5} parent=0 // pred_fallthru
    _
  %v14 = vld [vmem:[%s0] sm:$0xff]
  %v15 = vld [vmem:[%s0 + $0x8] sm:$0xff]
  %v16 = vld [vmem:[%s0 + $0x10] sm:$0xff]
  %v17 = vld [vmem:[%s0 + $0x18] sm:$0xff]
  %v18 = vld [vmem:[%s0 + $0x20] sm:$0xff]
  %v19 = vld [vmem:[%s0 + $0x28] sm:$0xff]
  %v20 = vld [vmem:[%s0 + $0x30] sm:$0xff]
  %v21 = vld [vmem:[%s0 + $0x38] sm:$0xff]
  %v22 = vld [vmem:[%s0 + $0x40] sm:$0xff]
  %v23 = vld [vmem:[%s0 + $0x48] sm:$0xff]
  %v24 = vld [vmem:[%s0 + $0x50] sm:$0xff]
  %v25 = vld [vmem:[%s0 + $0x58] sm:$0xff]
  %v26 = vld [vmem:[%s0 + $0x60] sm:$0xff]
  %v27 = vld [vmem:[%s0 + $0x68] sm:$0xff]
  %v28 = vld [vmem:[%s0 + $0x70] sm:$0xff]
  %v29 = vld [vmem:[%s0 + $0x78] sm:$0xff]
  %v30 = vpack.c.bf16 %v15, %v14
  %v31 = vpack.c.bf16 %v17, %v16
  %v32 = vpack.c.bf16 %v19, %v18
  %v33 = vpack.c.bf16 %v21, %v20
  %v34 = vpack.c.bf16 %v23, %v22
  %v35 = vpack.c.bf16 %v25, %v24
  %v36 = vpack.c.bf16 %v27, %v26
  %v37 = vpack.c.bf16 %v29, %v28
  %v38 = vld [vmem:[%s1] sm:$0xff]
  %v39 = vld [vmem:[%s1 + $0x8] sm:$0xf]
  %v40 = vld [vmem:[%s1 + $0xc] sm:$0xff]
  %v41 = vld [vmem:[%s1 + $0x14] sm:$0xf]
  %v42 = vld [vmem:[%s1 + $0x18] sm:$0xff]
  %v43 = vld [vmem:[%s1 + $0x20] sm:$0xf]
  %v44 = vld [vmem:[%s1 + $0x24] sm:$0xff]
  %v45 = vld [vmem:[%s1 + $0x2c] sm:$0xf]
  %v46 = vld [vmem:[%s1 + $0x30] sm:$0xff]
  %v47 = vld [vmem:[%s1 + $0x38] sm:$0xf]
  %v48 = vld [vmem:[%s1 + $0x3c] sm:$0xff]
  %v49 = vld [vmem:[%s1 + $0x44] sm:$0xf]
  %v50 = vld [vmem:[%s1 + $0x48] sm:$0xff]
  %v51 = vld [vmem:[%s1 + $0x50] sm:$0xf]
  %v52 = vld [vmem:[%s1 + $0x54] sm:$0xff]
  %v53 = vld [vmem:[%s1 + $0x5c] sm:$0xf]
  %v54 = vld [vmem:[%s1 + $0x60] sm:$0xff]
  %v55 = vld [vmem:[%s1 + $0x68] sm:$0xf]
  %v56 = vld [vmem:[%s1 + $0x6c] sm:$0xff]
  %v57 = vld [vmem:[%s1 + $0x74] sm:$0xf]
  %v58 = vld [vmem:[%s1 + $0x78] sm:$0xff]
  %v59 = vld [vmem:[%s1 + $0x80] sm:$0xf]
  %v60 = vld [vmem:[%s1 + $0x84] sm:$0xff]
  %v61 = vld [vmem:[%s1 + $0x8c] sm:$0xf]
  %v62 = vld [vmem:[%s1 + $0x90] sm:$0xff]
  %v63 = vld [vmem:[%s1 + $0x98] sm:$0xf]
  %v64 = vld [vmem:[%s1 + $0x9c] sm:$0xff]
  %v65 = vld [vmem:[%s1 + $0xa4] sm:$0xf]
  %v66 = vld [vmem:[%s1 + $0xa8] sm:$0xff]
  %v67 = vld [vmem:[%s1 + $0xb0] sm:$0xf]
  %v68 = vld [vmem:[%s1 + $0xb4] sm:$0xff]
  %v69 = vld [vmem:[%s1 + $0xbc] sm:$0xf]
  %v70 = vld [vmem:[%s2] sm:$0x7]
  %v72 = vperm.slane %v70, 0
  %v73 = vperm.slane %v70, 1
  %v74 = vperm.slane %v70, 2
  %v110 = vunpack.c.l.b16 %v38
  %v111 = vunpack.c.h.b16 %v38
  %v112 = vunpack.c.l.b16 %v39
  %v113 = vunpack.c.l.b16 %v40
  %v114 = vunpack.c.h.b16 %v40
  %v115 = vunpack.c.l.b16 %v41
  %v116 = vunpack.c.l.b16 %v42
  %v117 = vunpack.c.h.b16 %v42
  %v118 = vunpack.c.l.b16 %v43
  %v119 = vunpack.c.l.b16 %v44
  %v120 = vunpack.c.h.b16 %v44
  %v121 = vunpack.c.l.b16 %v45
  %v122 = vunpack.c.l.b16 %v46
  %v123 = vunpack.c.h.b16 %v46
  %v124 = vunpack.c.l.b16 %v47
  %v125 = vunpack.c.l.b16 %v48
  %v126 = vunpack.c.h.b16 %v48
  %v127 = vunpack.c.l.b16 %v49
  %v128 = vunpack.c.l.b16 %v50
  %v129 = vunpack.c.h.b16 %v50
  %v130 = vunpack.c.l.b16 %v51
  %v131 = vunpack.c.l.b16 %v52
  %v132 = vunpack.c.h.b16 %v52
  %v133 = vunpack.c.l.b16 %v53
  %v134 = vunpack.c.l.b16 %v54
  %v135 = vunpack.c.h.b16 %v54
  %v136 = vunpack.c.l.b16 %v55
  %v137 = vunpack.c.l.b16 %v56
  %v138 = vunpack.c.h.b16 %v56
  %v139 = vunpack.c.l.b16 %v57
  %v140 = vunpack.c.l.b16 %v58
  %v141 = vunpack.c.h.b16 %v58
  %v142 = vunpack.c.l.b16 %v59
  %v143 = vunpack.c.l.b16 %v60
  %v144 = vunpack.c.h.b16 %v60
  %v145 = vunpack.c.l.b16 %v61
  %v146 = vunpack.c.l.b16 %v62
  %v147 = vunpack.c.h.b16 %v62
  %v148 = vunpack.c.l.b16 %v63
  %v149 = vunpack.c.l.b16 %v64
  %v150 = vunpack.c.h.b16 %v64
  %v151 = vunpack.c.l.b16 %v65
  %v152 = vunpack.c.l.b16 %v66
  %v153 = vunpack.c.h.b16 %v66
  %v154 = vunpack.c.l.b16 %v67
  %v155 = vunpack.c.l.b16 %v68
  %v156 = vunpack.c.h.b16 %v68
  %v157 = vunpack.c.l.b16 %v69
  %v158 = vpack.c.b16 %v113, %v110
  %v159 = vpack.c.b16 %v114, %v111
  %v160 = vpack.c.b16 %v115, %v112
  %v161 = vpack.c.b16 %v119, %v116
  %v162 = vpack.c.b16 %v120, %v117
  %v163 = vpack.c.b16 %v121, %v118
  %v164 = vpack.c.b16 %v125, %v122
  %v165 = vpack.c.b16 %v126, %v123
  %v166 = vpack.c.b16 %v127, %v124
  %v167 = vpack.c.b16 %v131, %v128
  %v168 = vpack.c.b16 %v132, %v129
  %v169 = vpack.c.b16 %v133, %v130
  %v170 = vpack.c.b16 %v137, %v134
  %v171 = vpack.c.b16 %v138, %v135
  %v172 = vpack.c.b16 %v139, %v136
  %v173 = vpack.c.b16 %v143, %v140
  %v174 = vpack.c.b16 %v144, %v141
  %v175 = vpack.c.b16 %v145, %v142
  %v176 = vpack.c.b16 %v149, %v146
  %v177 = vpack.c.b16 %v150, %v147
  %v178 = vpack.c.b16 %v151, %v148
  %v179 = vpack.c.b16 %v155, %v152
  %v180 = vpack.c.b16 %v156, %v153
  %v181 = vpack.c.b16 %v157, %v154
  %206 = vmatpush.bf16.msra.mxu0 %v179
  %207 = vmatpush.bf16.msra.mxu0 %v176
  %208 = vmatpush.bf16.msra.mxu0 %v173
  %209 = vmatpush.bf16.msra.mxu0 %v170
  %210 = vmatpush.bf16.msra.mxu0 %v167
  %211 = vmatpush.bf16.msra.mxu0 %v164
  %212 = vmatpush.bf16.msra.mxu0 %v161
  %213 = vmatpush.bf16.msra.mxu0 %v158
  %214 = vmatmul.bf16.gmra.mxu0 %v30
  %v215 = vpop.f32.mrf.mxu0
  %v216 = vadd.f32 %v72, %v215
  %v217 = vpop.f32.mrf.mxu0
  %v218 = vadd.f32 %v72, %v217
  %219 = vmatmul.bf16.gmra.mxu0 %v31
  %v220 = vpop.f32.mrf.mxu0
  %v221 = vadd.f32 %v72, %v220
  %v222 = vpop.f32.mrf.mxu0
  %v223 = vadd.f32 %v72, %v222
  %224 = vmatmul.bf16.gmra.mxu0 %v32
  %v225 = vpop.f32.mrf.mxu0
  %v226 = vadd.f32 %v72, %v225
  %v227 = vpop.f32.mrf.mxu0
  %v228 = vadd.f32 %v72, %v227
  %229 = vmatmul.bf16.gmra.mxu0 %v33
  %v230 = vpop.f32.mrf.mxu0
  %v231 = vadd.f32 %v72, %v230
  %v232 = vpop.f32.mrf.mxu0
  %v233 = vadd.f32 %v72, %v232
  %234 = vmatmul.bf16.gmra.mxu0 %v34
  %v235 = vpop.f32.mrf.mxu0
  %v236 = vadd.f32 %v72, %v235
  %v237 = vpop.f32.mrf.mxu0
  %v238 = vadd.f32 %v72, %v237
  %239 = vmatmul.bf16.gmra.mxu0 %v35
  %v240 = vpop.f32.mrf.mxu0
  %v241 = vadd.f32 %v72, %v240
  %v242 = vpop.f32.mrf.mxu0
  %v243 = vadd.f32 %v72, %v242
  %244 = vmatmul.bf16.gmra.mxu0 %v36
  %v245 = vpop.f32.mrf.mxu0
  %v246 = vadd.f32 %v72, %v245
  %v247 = vpop.f32.mrf.mxu0
  %v248 = vadd.f32 %v72, %v247
  %249 = vmatmul.bf16.gmra.mxu0 %v37
  %v250 = vpop.f32.mrf.mxu0
  %v251 = vadd.f32 %v72, %v250
  %v252 = vpop.f32.mrf.mxu0
  %v253 = vadd.f32 %v72, %v252
  %254 = vdwg.mxu0
  %255 = vmatpush.bf16.msra.mxu0 %v180
  %256 = vmatpush.bf16.msra.mxu0 %v177
  %257 = vmatpush.bf16.msra.mxu0 %v174
  %258 = vmatpush.bf16.msra.mxu0 %v171
  %259 = vmatpush.bf16.msra.mxu0 %v168
  %260 = vmatpush.bf16.msra.mxu0 %v165
  %261 = vmatpush.bf16.msra.mxu0 %v162
  %262 = vmatpush.bf16.msra.mxu0 %v159
  %263 = vmatmul.bf16.gmra.mxu0 %v30
  %v264 = vpop.f32.mrf.mxu0
  %v265 = vadd.f32 %v73, %v264
  %v266 = vpop.f32.mrf.mxu0
  %v267 = vadd.f32 %v73, %v266
  %268 = vmatmul.bf16.gmra.mxu0 %v31
  %v269 = vpop.f32.mrf.mxu0
  %v270 = vadd.f32 %v73, %v269
  %v271 = vpop.f32.mrf.mxu0
  %v272 = vadd.f32 %v73, %v271
  %273 = vmatmul.bf16.gmra.mxu0 %v32
  %v274 = vpop.f32.mrf.mxu0
  %v275 = vadd.f32 %v73, %v274
  %v276 = vpop.f32.mrf.mxu0
  %v277 = vadd.f32 %v73, %v276
  %278 = vmatmul.bf16.gmra.mxu0 %v33
  %v279 = vpop.f32.mrf.mxu0
  %v280 = vadd.f32 %v73, %v279
  %v281 = vpop.f32.mrf.mxu0
  %v282 = vadd.f32 %v73, %v281
  %283 = vmatmul.bf16.gmra.mxu0 %v34
  %v284 = vpop.f32.mrf.mxu0
  %v285 = vadd.f32 %v73, %v284
  %v286 = vpop.f32.mrf.mxu0
  %v287 = vadd.f32 %v73, %v286
  %288 = vmatmul.bf16.gmra.mxu0 %v35
  %v289 = vpop.f32.mrf.mxu0
  %v290 = vadd.f32 %v73, %v289
  %v291 = vpop.f32.mrf.mxu0
  %v292 = vadd.f32 %v73, %v291
  %293 = vmatmul.bf16.gmra.mxu0 %v36
  %v294 = vpop.f32.mrf.mxu0
  %v295 = vadd.f32 %v73, %v294
  %v296 = vpop.f32.mrf.mxu0
  %v297 = vadd.f32 %v73, %v296
  %298 = vmatmul.bf16.gmra.mxu0 %v37
  %v299 = vpop.f32.mrf.mxu0
  %v300 = vadd.f32 %v73, %v299
  %v301 = vpop.f32.mrf.mxu0
  %v302 = vadd.f32 %v73, %v301
  %303 = vdwg.mxu0
  %304 = vmatpush.bf16.msra.mxu0 %v181
  %305 = vmatpush.bf16.msra.mxu0 %v178
  %306 = vmatpush.bf16.msra.mxu0 %v175
  %307 = vmatpush.bf16.msra.mxu0 %v172
  %308 = vmatpush.bf16.msra.mxu0 %v169
  %309 = vmatpush.bf16.msra.mxu0 %v166
  %310 = vmatpush.bf16.msra.mxu0 %v163
  %311 = vmatpush.bf16.msra.mxu0 %v160
  %312 = vmatmul.bf16.gmra.mxu0 %v30
  %v313 = vpop.f32.mrf.mxu0
  %v314 = vadd.f32 %v74, %v313
  %v315 = vpop.f32.mrf.mxu0
  %v316 = vadd.f32 %v74, %v315
  %317 = vmatmul.bf16.gmra.mxu0 %v31
  %v318 = vpop.f32.mrf.mxu0
  %v319 = vadd.f32 %v74, %v318
  %v320 = vpop.f32.mrf.mxu0
  %v321 = vadd.f32 %v74, %v320
  %322 = vmatmul.bf16.gmra.mxu0 %v32
  %v323 = vpop.f32.mrf.mxu0
  %v324 = vadd.f32 %v74, %v323
  %v325 = vpop.f32.mrf.mxu0
  %v326 = vadd.f32 %v74, %v325
  %327 = vmatmul.bf16.gmra.mxu0 %v33
  %v328 = vpop.f32.mrf.mxu0
  %v329 = vadd.f32 %v74, %v328
  %v330 = vpop.f32.mrf.mxu0
  %v331 = vadd.f32 %v74, %v330
  %332 = vmatmul.bf16.gmra.mxu0 %v34
  %v333 = vpop.f32.mrf.mxu0
  %v334 = vadd.f32 %v74, %v333
  %v335 = vpop.f32.mrf.mxu0
  %v336 = vadd.f32 %v74, %v335
  %337 = vmatmul.bf16.gmra.mxu0 %v35
  %v338 = vpop.f32.mrf.mxu0
  %v339 = vadd.f32 %v74, %v338
  %v340 = vpop.f32.mrf.mxu0
  %v341 = vadd.f32 %v74, %v340
  %342 = vmatmul.bf16.gmra.mxu0 %v36
  %v343 = vpop.f32.mrf.mxu0
  %v344 = vadd.f32 %v74, %v343
  %v345 = vpop.f32.mrf.mxu0
  %v346 = vadd.f32 %v74, %v345
  %347 = vmatmul.bf16.gmra.mxu0 %v37
  %v348 = vpop.f32.mrf.mxu0
  %v349 = vadd.f32 %v74, %v348
  %v350 = vpop.f32.mrf.mxu0
  %v351 = vadd.f32 %v74, %v350
  %352 = vdwg.mxu0
  %353 = vst [vmem:[%s3] sm:$0xff] %v216
  %354 = vst [vmem:[%s3 + $0x8] sm:$0xff] %v265
  %355 = vst [vmem:[%s3 + $0x10] sm:$0xff] %v314
  %356 = vst [vmem:[%s3 + $0x18] sm:$0xff] %v218
  %357 = vst [vmem:[%s3 + $0x20] sm:$0xff] %v267
  %358 = vst [vmem:[%s3 + $0x28] sm:$0xff] %v316
  %359 = vst [vmem:[%s3 + $0x30] sm:$0xff] %v221
  %360 = vst [vmem:[%s3 + $0x38] sm:$0xff] %v270
  %361 = vst [vmem:[%s3 + $0x40] sm:$0xff] %v319
  %362 = vst [vmem:[%s3 + $0x48] sm:$0xff] %v223
  %363 = vst [vmem:[%s3 + $0x50] sm:$0xff] %v272
  %364 = vst [vmem:[%s3 + $0x58] sm:$0xff] %v321
  %365 = vst [vmem:[%s3 + $0x60] sm:$0xff] %v226
  %366 = vst [vmem:[%s3 + $0x68] sm:$0xff] %v275
  %367 = vst [vmem:[%s3 + $0x70] sm:$0xff] %v324
  %368 = vst [vmem:[%s3 + $0x78] sm:$0xff] %v228
  %369 = vst [vmem:[%s3 + $0x80] sm:$0xff] %v277
  %370 = vst [vmem:[%s3 + $0x88] sm:$0xff] %v326
  %371 = vst [vmem:[%s3 + $0x90] sm:$0xff] %v231
  %372 = vst [vmem:[%s3 + $0x98] sm:$0xff] %v280
  %373 = vst [vmem:[%s3 + $0xa0] sm:$0xff] %v329
  %374 = vst [vmem:[%s3 + $0xa8] sm:$0xff] %v233
  %375 = vst [vmem:[%s3 + $0xb0] sm:$0xff] %v282
  %376 = vst [vmem:[%s3 + $0xb8] sm:$0xff] %v331
  %377 = vst [vmem:[%s3 + $0xc0] sm:$0xff] %v236
  %378 = vst [vmem:[%s3 + $0xc8] sm:$0xff] %v285
  %379 = vst [vmem:[%s3 + $0xd0] sm:$0xff] %v334
  %380 = vst [vmem:[%s3 + $0xd8] sm:$0xff] %v238
  %381 = vst [vmem:[%s3 + $0xe0] sm:$0xff] %v287
  %382 = vst [vmem:[%s3 + $0xe8] sm:$0xff] %v336
  %383 = vst [vmem:[%s3 + $0xf0] sm:$0xff] %v241
  %384 = vst [vmem:[%s3 + $0xf8] sm:$0xff] %v290
  %385 = vst [vmem:[%s3 + $0x100] sm:$0xff] %v339
  %386 = vst [vmem:[%s3 + $0x108] sm:$0xff] %v243
  %387 = vst [vmem:[%s3 + $0x110] sm:$0xff] %v292
  %388 = vst [vmem:[%s3 + $0x118] sm:$0xff] %v341
  %389 = vst [vmem:[%s3 + $0x120] sm:$0xff] %v246
  %390 = vst [vmem:[%s3 + $0x128] sm:$0xff] %v295
  %391 = vst [vmem:[%s3 + $0x130] sm:$0xff] %v344
  %392 = vst [vmem:[%s3 + $0x138] sm:$0xff] %v248
  %393 = vst [vmem:[%s3 + $0x140] sm:$0xff] %v297
  %394 = vst [vmem:[%s3 + $0x148] sm:$0xff] %v346
  %395 = vst [vmem:[%s3 + $0x150] sm:$0xff] %v251
  %396 = vst [vmem:[%s3 + $0x158] sm:$0xff] %v300
  %397 = vst [vmem:[%s3 + $0x160] sm:$0xff] %v349
  %398 = vst [vmem:[%s3 + $0x168] sm:$0xff] %v253
  %399 = vst [vmem:[%s3 + $0x170] sm:$0xff] %v302
  %400 = vst [vmem:[%s3 + $0x178] sm:$0xff] %v351
  // Predicated region
  $region14: #{graph_transformer_forward.5} parent=0 // pred_check
    _
  $region15: #{graph_transformer_forward.5} parent=0 // pred_check_branch
    %402 = sbr.rel (0) target = $region17
  $region16: #{graph_transformer_forward.5} parent=0 // pred_region
    _
  $region17: #{graph_transformer_forward.5} parent=0 // pred_fallthru
    _
  // Predicated region
  $region18: #{graph_transformer_forward.5} parent=0 // pred_check
    _
  $region19: #{graph_transformer_forward.5} parent=0 // pred_check_branch
    %404 = sbr.rel (0) target = $region21
  $region20: #{graph_transformer_forward.5} parent=0 // pred_region
    _
  $region21: #{graph_transformer_forward.5} parent=0 // pred_fallthru
    _

// kernel: graph_transformer_forward.9
$region0: #{graph_transformer_forward.9}
  #allocation0 [shape = 'u32[]', space=smem, size = 0x4, offset = 0x4, fixed_abs, tag = 'smem constant byte address 0x4 - core index']
  #allocation1 [shape = 'u32[72,128]{1,0:T(1,128)}', space=vmem, size = 0x9000, scoped, tag = 'internal scratch']
  %s0 = inlined_call_operand.vmem [shape: f32[2,128], index: 0, kind: input, shape index: {}]
  %s1 = inlined_call_operand.vmem [shape: f32[128,128], index: 1, kind: input, shape index: {}]
  %s2 = inlined_call_operand.vmem [shape: f32[2,1], index: 2, kind: input, shape index: {}]
  %s3 = inlined_call_operand.vmem [shape: bf16[128,128], index: 3, kind: input, shape index: {}]
  %s4 = inlined_call_operand.vmem [shape: f32[1,128], index: 4, kind: input, shape index: {}]
  %s5 = inlined_call_operand.vmem [shape: bf16[128,10], index: 5, kind: input, shape index: {}]
  %s6 = inlined_call_operand.vmem [shape: f32[1,10], index: 6, kind: input, shape index: {}]
  %s7 = inlined_call_operand.hbm [shape: f32[2,10], index: 7, kind: output, shape index: {}]
  %s8 = sld [smem:[#allocation0]]
  $region38: #{graph_transformer_forward.9} parent=0
    _
  %s10 = ssub.s32 1, %s8
  %s11 = scalar_select 0, %s10, %s8
  $region1: #{graph_transformer_forward.9} parent=0
    #allocation2 [shape = 'u8[1024]{0}', space=vmem, size = 0x400, scoped, tag = 'output window, operand 0, single buffered']
    #allocation3 [shape = 's32[1]{0}', space=sflag, size = 0x4, scoped, tag = 'scoped memory for graph_transformer_forward.9']
    %12 = vsyncpa [#allocation3], 0
    // Predicated region
    $region2: #{graph_transformer_forward.9} parent=1 // pred_check
      _
    $region3: #{graph_transformer_forward.9} parent=1 // pred_check_branch
      %14 = sbr.rel (0) target = $region5
    $region4: #{graph_transformer_forward.9} parent=1 // pred_region
      _
    $region5: #{graph_transformer_forward.9} parent=1 // pred_fallthru
      _
    // Predicated region
    $region6: #{graph_transformer_forward.9} parent=1 // pred_check
      _
    $region7: #{graph_transformer_forward.9} parent=1 // pred_check_branch
      %16 = sbr.rel (0) target = $region9
    $region8: #{graph_transformer_forward.9} parent=1 // pred_region
      _
    $region9: #{graph_transformer_forward.9} parent=1 // pred_fallthru
      _
    // Predicated region
    $region10: #{graph_transformer_forward.9} parent=1 // pred_check
      _
    $region11: #{graph_transformer_forward.9} parent=1 // pred_check_branch
      %18 = sbr.rel (0) target = $region13
    $region12: #{graph_transformer_forward.9} parent=1 // pred_region
      _
    $region13: #{graph_transformer_forward.9} parent=1 // pred_fallthru
      _
    // Predicated region
    $region14: #{graph_transformer_forward.9} parent=1 // pred_check
      _
    $region15: #{graph_transformer_forward.9} parent=1 // pred_check_branch
      %20 = sbr.rel (0) target = $region17
    $region16: #{graph_transformer_forward.9} parent=1 // pred_region
      _
    $region17: #{graph_transformer_forward.9} parent=1 // pred_fallthru
      _
    // Predicated region
    $region18: #{graph_transformer_forward.9} parent=1 // pred_check
      _
    $region19: #{graph_transformer_forward.9} parent=1 // pred_check_branch
      %22 = sbr.rel (0) target = $region21
    $region20: #{graph_transformer_forward.9} parent=1 // pred_region
      _
    $region21: #{graph_transformer_forward.9} parent=1 // pred_fallthru
      _
    // Predicated region
    $region22: #{graph_transformer_forward.9} parent=1 // pred_check
      _
    $region23: #{graph_transformer_forward.9} parent=1 // pred_check_branch
      %24 = sbr.rel (0) target = $region25
    $region24: #{graph_transformer_forward.9} parent=1 // pred_region
      _
    $region25: #{graph_transformer_forward.9} parent=1 // pred_fallthru
      _
    // Predicated region
    $region26: #{graph_transformer_forward.9} parent=1 // pred_check
      _
    $region27: #{graph_transformer_forward.9} parent=1 // pred_check_branch
      %26 = sbr.rel (0) target = $region29
    $region28: #{graph_transformer_forward.9} parent=1 // pred_region
      _
    $region29: #{graph_transformer_forward.9} parent=1 // pred_fallthru
      _
    %v27 = vld [vmem:[%s0] sm:$0x3]
    %v28 = vpack.c.bf16 %v27, %v27
    %v29 = vld [vmem:[%s1] sm:$0xff]
    %v30 = vld [vmem:[%s1 + $0x8] sm:$0xff]
    %v31 = vld [vmem:[%s1 + $0x10] sm:$0xff]
    %v32 = vld [vmem:[%s1 + $0x18] sm:$0xff]
    %v33 = vld [vmem:[%s1 + $0x20] sm:$0xff]
    %v34 = vld [vmem:[%s1 + $0x28] sm:$0xff]
    %v35 = vld [vmem:[%s1 + $0x30] sm:$0xff]
    %v36 = vld [vmem:[%s1 + $0x38] sm:$0xff]
    %v37 = vld [vmem:[%s1 + $0x40] sm:$0xff]
    %v38 = vld [vmem:[%s1 + $0x48] sm:$0xff]
    %v39 = vld [vmem:[%s1 + $0x50] sm:$0xff]
    %v40 = vld [vmem:[%s1 + $0x58] sm:$0xff]
    %v41 = vld [vmem:[%s1 + $0x60] sm:$0xff]
    %v42 = vld [vmem:[%s1 + $0x68] sm:$0xff]
    %v43 = vld [vmem:[%s1 + $0x70] sm:$0xff]
    %v44 = vld [vmem:[%s1 + $0x78] sm:$0xff]
    %v45 = vpack.c.bf16 %v30, %v29
    %v46 = vpack.c.bf16 %v32, %v31
    %v47 = vpack.c.bf16 %v34, %v33
    %v48 = vpack.c.bf16 %v36, %v35
    %v49 = vpack.c.bf16 %v38, %v37
    %v50 = vpack.c.bf16 %v40, %v39
    %v51 = vpack.c.bf16 %v42, %v41
    %v52 = vpack.c.bf16 %v44, %v43
    %53 = vmatpush.bf16.msra.mxu0 %v52
    %54 = vmatpush.bf16.msra.mxu0 %v51
    %55 = vmatpush.bf16.msra.mxu0 %v50
    %56 = vmatpush.bf16.msra.mxu0 %v49
    %57 = vmatpush.bf16.msra.mxu0 %v48
    %58 = vmatpush.bf16.msra.mxu0 %v47
    %59 = vmatpush.bf16.msra.mxu0 %v46
    %60 = vmatpush.bf16.msra.mxu0 %v45
    %61 = vmatmul.bf16.gmra.mxu0 %v28
    %v62 = vpop.f32.mrf.mxu0
    %v63 = vadd.f32 0.0, %v62
    %v64 = vpop.f32.mrf.mxu0
    %65 = vdwg.mxu0
    %v66 = vld [vmem:[%s2] sm:$0x3]
    %v67 = vrcp.pop %v66
    %69 = vset.pattern.permute.xlu0 0
    %70 = vperm.xlu0 %69, %v67
    %v71 = vpop.permute.xlu0 %70
    %v73 = vmul.f32 %v63, %v71
    %v74 = vpack.c.bf16 %v73, %v73
    %v75 = vld [vmem:[%s3] sm:$0xf]
    %v76 = vld [vmem:[%s3 + $0x4] sm:$0xf]
    %v77 = vld [vmem:[%s3 + $0x8] sm:$0xf]
    %v78 = vld [vmem:[%s3 + $0xc] sm:$0xf]
    %v79 = vld [vmem:[%s3 + $0x10] sm:$0xf]
    %v80 = vld [vmem:[%s3 + $0x14] sm:$0xf]
    %v81 = vld [vmem:[%s3 + $0x18] sm:$0xf]
    %v82 = vld [vmem:[%s3 + $0x1c] sm:$0xf]
    %v83 = vld [vmem:[%s3 + $0x20] sm:$0xf]
    %v84 = vld [vmem:[%s3 + $0x24] sm:$0xf]
    %v85 = vld [vmem:[%s3 + $0x28] sm:$0xf]
    %v86 = vld [vmem:[%s3 + $0x2c] sm:$0xf]
    %v87 = vld [vmem:[%s3 + $0x30] sm:$0xf]
    %v88 = vld [vmem:[%s3 + $0x34] sm:$0xf]
    %v89 = vld [vmem:[%s3 + $0x38] sm:$0xf]
    %v90 = vld [vmem:[%s3 + $0x3c] sm:$0xf]
    %v91 = vld [vmem:[%s4] sm:$0x1]
    %v93 = vperm.slane %v91, 0
    %v111 = vunpack.c.l.b16 %v75
    %v112 = vunpack.c.l.b16 %v76
    %v113 = vunpack.c.l.b16 %v77
    %v114 = vunpack.c.l.b16 %v78
    %v115 = vunpack.c.l.b16 %v79
    %v116 = vunpack.c.l.b16 %v80
    %v117 = vunpack.c.l.b16 %v81
    %v118 = vunpack.c.l.b16 %v82
    %v119 = vunpack.c.l.b16 %v83
    %v120 = vunpack.c.l.b16 %v84
    %v121 = vunpack.c.l.b16 %v85
    %v122 = vunpack.c.l.b16 %v86
    %v123 = vunpack.c.l.b16 %v87
    %v124 = vunpack.c.l.b16 %v88
    %v125 = vunpack.c.l.b16 %v89
    %v126 = vunpack.c.l.b16 %v90
    %v127 = vpack.c.b16 %v112, %v111
    %v128 = vpack.c.b16 %v114, %v113
    %v129 = vpack.c.b16 %v116, %v115
    %v130 = vpack.c.b16 %v118, %v117
    %v131 = vpack.c.b16 %v120, %v119
    %v132 = vpack.c.b16 %v122, %v121
    %v133 = vpack.c.b16 %v124, %v123
    %v134 = vpack.c.b16 %v126, %v125
    %143 = vmatpush.bf16.msra.mxu0 %v134
    %144 = vmatpush.bf16.msra.mxu0 %v133
    %145 = vmatpush.bf16.msra.mxu0 %v132
    %146 = vmatpush.bf16.msra.mxu0 %v131
    %147 = vmatpush.bf16.msra.mxu0 %v130
    %148 = vmatpush.bf16.msra.mxu0 %v129
    %149 = vmatpush.bf16.msra.mxu0 %v128
    %150 = vmatpush.bf16.msra.mxu0 %v127
    %151 = vmatmul.bf16.gmra.mxu0 %v74
    %v152 = vpop.f32.mrf.mxu0
    %v153 = vadd.f32 %v93, %v152
    %v154 = vpop.f32.mrf.mxu0
    %155 = vdwg.mxu0
    %v156 = vmax.f32 %v153, 0.0
    %v157 = vpack.c.bf16 %v156, %v156
    %v158 = vld [vmem:[%s5] sm:$0xf]
    %v159 = vld [vmem:[%s5 + $0x4] sm:$0xf]
    %v160 = vld [vmem:[%s5 + $0x8] sm:$0xf]
    %v161 = vld [vmem:[%s5 + $0xc] sm:$0xf]
    %v162 = vld [vmem:[%s5 + $0x10] sm:$0xf]
    %v163 = vld [vmem:[%s5 + $0x14] sm:$0xf]
    %v164 = vld [vmem:[%s5 + $0x18] sm:$0xf]
    %v165 = vld [vmem:[%s5 + $0x1c] sm:$0xf]
    %v166 = vld [vmem:[%s5 + $0x20] sm:$0xf]
    %v167 = vld [vmem:[%s5 + $0x24] sm:$0xf]
    %v168 = vld [vmem:[%s5 + $0x28] sm:$0xf]
    %v169 = vld [vmem:[%s5 + $0x2c] sm:$0xf]
    %v170 = vld [vmem:[%s5 + $0x30] sm:$0xf]
    %v171 = vld [vmem:[%s5 + $0x34] sm:$0xf]
    %v172 = vld [vmem:[%s5 + $0x38] sm:$0xf]
    %v173 = vld [vmem:[%s5 + $0x3c] sm:$0xf]
    %v174 = vld [vmem:[%s6] sm:$0x1]
    %v176 = vperm.slane %v174, 0
    %v194 = vunpack.c.l.b16 %v158
    %v195 = vunpack.c.l.b16 %v159
    %v196 = vunpack.c.l.b16 %v160
    %v197 = vunpack.c.l.b16 %v161
    %v198 = vunpack.c.l.b16 %v162
    %v199 = vunpack.c.l.b16 %v163
    %v200 = vunpack.c.l.b16 %v164
    %v201 = vunpack.c.l.b16 %v165
    %v202 = vunpack.c.l.b16 %v166
    %v203 = vunpack.c.l.b16 %v167
    %v204 = vunpack.c.l.b16 %v168
    %v205 = vunpack.c.l.b16 %v169
    %v206 = vunpack.c.l.b16 %v170
    %v207 = vunpack.c.l.b16 %v171
    %v208 = vunpack.c.l.b16 %v172
    %v209 = vunpack.c.l.b16 %v173
    %v210 = vpack.c.b16 %v195, %v194
    %v211 = vpack.c.b16 %v197, %v196
    %v212 = vpack.c.b16 %v199, %v198
    %v213 = vpack.c.b16 %v201, %v200
    %v214 = vpack.c.b16 %v203, %v202
    %v215 = vpack.c.b16 %v205, %v204
    %v216 = vpack.c.b16 %v207, %v206
    %v217 = vpack.c.b16 %v209, %v208
    %226 = vmatpush.bf16.msra.mxu0 %v217
    %227 = vmatpush.bf16.msra.mxu0 %v216
    %228 = vmatpush.bf16.msra.mxu0 %v215
    %229 = vmatpush.bf16.msra.mxu0 %v214
    %230 = vmatpush.bf16.msra.mxu0 %v213
    %231 = vmatpush.bf16.msra.mxu0 %v212
    %232 = vmatpush.bf16.msra.mxu0 %v211
    %233 = vmatpush.bf16.msra.mxu0 %v210
    %234 = vmatmul.bf16.gmra.mxu0 %v157
    %v235 = vpop.f32.mrf.mxu0
    %v236 = vadd.f32 %v176, %v235
    %v237 = vpop.f32.mrf.mxu0
    %238 = vdwg.mxu0
    %vm239 = vcmask 74752
    %240 = vst.msk [vmem:[#allocation2] sm:$0x3] %vm239, %v236
    // Predicated region
    $region30: #{graph_transformer_forward.9} parent=1 // pred_check
      _
    $region31: #{graph_transformer_forward.9} parent=1 // pred_check_branch
      %242 = sbr.rel (0) target = $region33
    $region32: #{graph_transformer_forward.9} parent=1 // pred_region
      %244 = vsyncadd [#allocation3], 0
      %s246 = sshll.u32 [#allocation2], 4
      %s247 = int_to_ptr.vmem [resolvable:$true] %s246
      %s248 = sshll.u32 %s7, 4
      %s249 = int_to_ptr.hbm [resolvable:$true] %s248
      %251 = dma.vmem_to_hbm [thread:$0]  %s247, 32, %s249, [#allocation3]
    $region33: #{graph_transformer_forward.9} parent=1 // pred_fallthru
      _
    // Predicated region
    $region34: #{graph_transformer_forward.9} parent=1 // pred_check
      _
    $region35: #{graph_transformer_forward.9} parent=1 // pred_check_branch
      %253 = sbr.rel (0) target = $region37
    $region36: #{graph_transformer_forward.9} parent=1 // pred_region
      %255 = dma.done [#allocation3], 32
    $region37: #{graph_transformer_forward.9} parent=1 // pred_fallthru
      _
    %256 = vsyncpa [#allocation3], 1

// kernel: graph_transformer_forward.6
$region0: #{graph_transformer_forward.6}
  #allocation0 [shape = 'u32[]', space=smem, size = 0x4, offset = 0x4, fixed_abs, tag = 'smem constant byte address 0x4 - core index']
  #allocation1 [shape = 'u32[72,128]{1,0:T(1,128)}', space=vmem, size = 0x9000, scoped, tag = 'internal scratch']
  %s0 = inlined_call_operand.vmem [shape: f32[128,384], index: 0, kind: input, shape index: {}, may-alias: {0,1}]
  %s1 = inlined_call_operand.vmem [shape: f32[128,384], index: 1, kind: input, shape index: {}, may-alias: {0,1}]
  %s2 = inlined_call_operand.vmem [shape: f32[128,128], index: 2, kind: input, shape index: {}]
  %s3 = inlined_call_operand.vmem [shape: s32[128,1], index: 3, kind: input, shape index: {}]
  %s4 = inlined_call_operand.vmem [shape: s32[1,128], index: 4, kind: input, shape index: {}]
  %s5 = inlined_call_operand.vmem [shape: bf16[128,128], index: 5, kind: input, shape index: {}]
  %s6 = inlined_call_operand.vmem [shape: f32[1,128], index: 6, kind: input, shape index: {}]
  %s7 = inlined_call_operand.vmem [shape: f32[1,128], index: 7, kind: input, shape index: {}]
  %s8 = inlined_call_operand.vmem [shape: f32[1,128], index: 8, kind: input, shape index: {}]
  %s9 = inlined_call_operand.hbm [shape: bf16[128,256], index: 9, kind: input, shape index: {}]
  %s10 = inlined_call_operand.vmem [shape: f32[1,256], index: 10, kind: input, shape index: {}]
  %s11 = inlined_call_operand.hbm [shape: bf16[256,128], index: 11, kind: input, shape index: {}]
  %s12 = inlined_call_operand.vmem [shape: f32[1,128], index: 12, kind: input, shape index: {}]
  %s13 = inlined_call_operand.vmem [shape: f32[1,128], index: 13, kind: input, shape index: {}]
  %s14 = inlined_call_operand.vmem [shape: f32[1,128], index: 14, kind: input, shape index: {}]
  %s15 = inlined_call_operand.vmem [shape: f32[128,128], index: 15, kind: output, shape index: {}]
  %s16 = sld [smem:[#allocation0]]
  $region78: #{graph_transformer_forward.6} parent=0
    _
  %s18 = ssub.s32 1, %s16
  %s19 = scalar_select 0, %s18, %s16
  $region1: #{graph_transformer_forward.6} parent=0
    #allocation2 [shape = 'u8[65536]{0}', space=vmem, size = 0x10000, scoped, tag = 'input window, operand 9, single buffered']
    #allocation3 [shape = 's32[1]{0}', space=sflag, size = 0x4, scoped, tag = 'scoped memory for graph_transformer_forward.6']
    #allocation4 [shape = 'u8[65536]{0}', space=vmem, size = 0x10000, scoped, tag = 'input window, operand 11, single buffered']
    #allocation5 [shape = 's32[1]{0}', space=sflag, size = 0x4, scoped, tag = 'scoped memory for graph_transformer_forward.6']
    %20 = vsyncpa [#allocation3], 0
    %21 = vsyncpa [#allocation5], 0
    // Predicated region
    $region2: #{graph_transformer_forward.6} parent=1 // pred_check
      _
    $region3: #{graph_transformer_forward.6} parent=1 // pred_check_branch
      %23 = sbr.rel (0) target = $region5
    $region4: #{graph_transformer_forward.6} parent=1 // pred_region
      _
    $region5: #{graph_transformer_forward.6} parent=1 // pred_fallthru
      _
    // Predicated region
    $region6: #{graph_transformer_forward.6} parent=1 // pred_check
      _
    $region7: #{graph_transformer_forward.6} parent=1 // pred_check_branch
      %25 = sbr.rel (0) target = $region9
    $region8: #{graph_transformer_forward.6} parent=1 // pred_region
      _
    $region9: #{graph_transformer_forward.6} parent=1 // pred_fallthru
      _
    // Predicated region
    $region10: #{graph_transformer_forward.6} parent=1 // pred_check
      _
    $region11: #{graph_transformer_forward.6} parent=1 // pred_check_branch
      %27 = sbr.rel (0) target = $region13
    $region12: #{graph_transformer_forward.6} parent=1 // pred_region
      _
    $region13: #{graph_transformer_forward.6} parent=1 // pred_fallthru
      _
    // Predicated region
    $region14: #{graph_transformer_forward.6} parent=1 // pred_check
      _
    $region15: #{graph_transformer_forward.6} parent=1 // pred_check_branch
      %29 = sbr.rel (0) target = $region17
    $region16: #{graph_transformer_forward.6} parent=1 // pred_region
      _
    $region17: #{graph_transformer_forward.6} parent=1 // pred_fallthru
      _
    // Predicated region
    $region18: #{graph_transformer_forward.6} parent=1 // pred_check
      _
    $region19: #{graph_transformer_forward.6} parent=1 // pred_check_branch
      %31 = sbr.rel (0) target = $region21
    $region20: #{graph_transformer_forward.6} parent=1 // pred_region
      _
    $region21: #{graph_transformer_forward.6} parent=1 // pred_fallthru
      _
    // Predicated region
    $region22: #{graph_transformer_forward.6} parent=1 // pred_check
      _
    $region23: #{graph_transformer_forward.6} parent=1 // pred_check_branch
      %33 = sbr.rel (0) target = $region25
    $region24: #{graph_transformer_forward.6} parent=1 // pred_region
      _
    $region25: #{graph_transformer_forward.6} parent=1 // pred_fallthru
      _
    // Predicated region
    $region26: #{graph_transformer_forward.6} parent=1 // pred_check
      _
    $region27: #{graph_transformer_forward.6} parent=1 // pred_check_branch
      %35 = sbr.rel (0) target = $region29
    $region28: #{graph_transformer_forward.6} parent=1 // pred_region
      _
    $region29: #{graph_transformer_forward.6} parent=1 // pred_fallthru
      _
    // Predicated region
    $region30: #{graph_transformer_forward.6} parent=1 // pred_check
      _
    $region31: #{graph_transformer_forward.6} parent=1 // pred_check_branch
      %37 = sbr.rel (0) target = $region33
    $region32: #{graph_transformer_forward.6} parent=1 // pred_region
      _
    $region33: #{graph_transformer_forward.6} parent=1 // pred_fallthru
      _
    // Predicated region
    $region34: #{graph_transformer_forward.6} parent=1 // pred_check
      _
    $region35: #{graph_transformer_forward.6} parent=1 // pred_check_branch
      %39 = sbr.rel (0) target = $region37
    $region36: #{graph_transformer_forward.6} parent=1 // pred_region
      _
    $region37: #{graph_transformer_forward.6} parent=1 // pred_fallthru
      _
    // Predicated region
    $region38: #{graph_transformer_forward.6} parent=1 // pred_check
      _
    $region39: #{graph_transformer_forward.6} parent=1 // pred_check_branch
      %41 = sbr.rel (0) target = $region41
    $region40: #{graph_transformer_forward.6} parent=1 // pred_region
      %43 = vsyncadd [#allocation3], 0
      %s44 = sshll.u32 %s9, 4
      %s45 = int_to_ptr.hbm [resolvable:$true] %s44
      %s46 = sshll.u32 [#allocation2], 4
      %s47 = int_to_ptr.vmem [resolvable:$true] %s46
      %52 = dma.hbm_to_vmem [thread:$0]  %s45, 2048, %s47, [#allocation3], 128, 128, 8
    $region41: #{graph_transformer_forward.6} parent=1 // pred_fallthru
      _
    // Predicated region
    $region42: #{graph_transformer_forward.6} parent=1 // pred_check
      _
    $region43: #{graph_transformer_forward.6} parent=1 // pred_check_branch
      %54 = sbr.rel (0) target = $region45
    $region44: #{graph_transformer_forward.6} parent=1 // pred_region
      _
    $region45: #{graph_transformer_forward.6} parent=1 // pred_fallthru
      _
    // Predicated region
    $region46: #{graph_transformer_forward.6} parent=1 // pred_check
      _
    $region47: #{graph_transformer_forward.6} parent=1 // pred_check_branch
      %56 = sbr.rel (0) target = $region49
    $region48: #{graph_transformer_forward.6} parent=1 // pred_region
      %58 = vsyncadd [#allocation5], 0
      %s59 = sshll.u32 %s11, 4
      %s60 = int_to_ptr.hbm [resolvable:$true] %s59
      %s61 = sshll.u32 [#allocation4], 4
      %s62 = int_to_ptr.vmem [resolvable:$true] %s61
      %67 = dma.hbm_to_vmem [thread:$0]  %s60, 2048, %s62, [#allocation5], 64, 64, 4
    $region49: #{graph_transformer_forward.6} parent=1 // pred_fallthru
      _
    // Predicated region
    $region50: #{graph_transformer_forward.6} parent=1 // pred_check
      _
    $region51: #{graph_transformer_forward.6} parent=1 // pred_check_branch
      %69 = sbr.rel (0) target = $region53
    $region52: #{graph_transformer_forward.6} parent=1 // pred_region
      _
    $region53: #{graph_transformer_forward.6} parent=1 // pred_fallthru
      _
    // Predicated region
    $region54: #{graph_transformer_forward.6} parent=1 // pred_check
      _
    $region55: #{graph_transformer_forward.6} parent=1 // pred_check_branch
      %71 = sbr.rel (0) target = $region57
    $region56: #{graph_transformer_forward.6} parent=1 // pred_region
      _
    $region57: #{graph_transformer_forward.6} parent=1 // pred_fallthru
      _
    // Predicated region
    $region58: #{graph_transformer_forward.6} parent=1 // pred_check
      _
    $region59: #{graph_transformer_forward.6} parent=1 // pred_check_branch
      %73 = sbr.rel (0) target = $region61
    $region60: #{graph_transformer_forward.6} parent=1 // pred_region
      _
    $region61: #{graph_transformer_forward.6} parent=1 // pred_fallthru
      _
    // Predicated region
    $region62: #{graph_transformer_forward.6} parent=1 // pred_check
      _
    $region63: #{graph_transformer_forward.6} parent=1 // pred_check_branch
      %75 = sbr.rel (0) target = $region65
    $region64: #{graph_transformer_forward.6} parent=1 // pred_region
      %77 = dma.done [#allocation3], 2048
    $region65: #{graph_transformer_forward.6} parent=1 // pred_fallthru
      _
    // Predicated region
    $region66: #{graph_transformer_forward.6} parent=1 // pred_check
      _
    $region67: #{graph_transformer_forward.6} parent=1 // pred_check_branch
      %79 = sbr.rel (0) target = $region69
    $region68: #{graph_transformer_forward.6} parent=1 // pred_region
      %81 = dma.done [#allocation5], 2048
    $region69: #{graph_transformer_forward.6} parent=1 // pred_fallthru
      _
    %v82 = vld [vmem:[%s0] sm:$0xff]
    %v83 = vld [vmem:[%s0 + $0x18] sm:$0xff]
    %v84 = vld [vmem:[%s0 + $0x30] sm:$0xff]
    %v85 = vld [vmem:[%s0 + $0x48] sm:$0xff]
    %v86 = vld [vmem:[%s0 + $0x60] sm:$0xff]
    %v87 = vld [vmem:[%s0 + $0x78] sm:$0xff]
    %v88 = vld [vmem:[%s0 + $0x90] sm:$0xff]
    %v89 = vld [vmem:[%s0 + $0xa8] sm:$0xff]
    %v90 = vld [vmem:[%s0 + $0xc0] sm:$0xff]
    %v91 = vld [vmem:[%s0 + $0xd8] sm:$0xff]
    %v92 = vld [vmem:[%s0 + $0xf0] sm:$0xff]
    %v93 = vld [vmem:[%s0 + $0x108] sm:$0xff]
    %v94 = vld [vmem:[%s0 + $0x120] sm:$0xff]
    %v95 = vld [vmem:[%s0 + $0x138] sm:$0xff]
    %v96 = vld [vmem:[%s0 + $0x150] sm:$0xff]
    %v97 = vld [vmem:[%s0 + $0x168] sm:$0xff]
    %v98 = vld [vmem:[%s1 + $0x8] sm:$0xff]
    %v99 = vld [vmem:[%s1 + $0x10] sm:$0xff]
    %v100 = vld [vmem:[%s1 + $0x20] sm:$0xff]
    %v101 = vld [vmem:[%s1 + $0x28] sm:$0xff]
    %v102 = vld [vmem:[%s1 + $0x38] sm:$0xff]
    %v103 = vld [vmem:[%s1 + $0x40] sm:$0xff]
    %v104 = vld [vmem:[%s1 + $0x50] sm:$0xff]
    %v105 = vld [vmem:[%s1 + $0x58] sm:$0xff]
    %v106 = vld [vmem:[%s1 + $0x68] sm:$0xff]
    %v107 = vld [vmem:[%s1 + $0x70] sm:$0xff]
    %v108 = vld [vmem:[%s1 + $0x80] sm:$0xff]
    %v109 = vld [vmem:[%s1 + $0x88] sm:$0xff]
    %v110 = vld [vmem:[%s1 + $0x98] sm:$0xff]
    %v111 = vld [vmem:[%s1 + $0xa0] sm:$0xff]
    %v112 = vld [vmem:[%s1 + $0xb0] sm:$0xff]
    %v113 = vld [vmem:[%s1 + $0xb8] sm:$0xff]
    %v114 = vld [vmem:[%s1 + $0xc8] sm:$0xff]
    %v115 = vld [vmem:[%s1 + $0xd0] sm:$0xff]
    %v116 = vld [vmem:[%s1 + $0xe0] sm:$0xff]
    %v117 = vld [vmem:[%s1 + $0xe8] sm:$0xff]
    %v118 = vld [vmem:[%s1 + $0xf8] sm:$0xff]
    %v119 = vld [vmem:[%s1 + $0x100] sm:$0xff]
    %v120 = vld [vmem:[%s1 + $0x110] sm:$0xff]
    %v121 = vld [vmem:[%s1 + $0x118] sm:$0xff]
    %v122 = vld [vmem:[%s1 + $0x128] sm:$0xff]
    %v123 = vld [vmem:[%s1 + $0x130] sm:$0xff]
    %v124 = vld [vmem:[%s1 + $0x140] sm:$0xff]
    %v125 = vld [vmem:[%s1 + $0x148] sm:$0xff]
    %v126 = vld [vmem:[%s1 + $0x158] sm:$0xff]
    %v127 = vld [vmem:[%s1 + $0x160] sm:$0xff]
    %v128 = vld [vmem:[%s1 + $0x170] sm:$0xff]
    %v129 = vld [vmem:[%s1 + $0x178] sm:$0xff]
    %v130 = vld [vmem:[%s3] sm:$0xff]
    %v131 = vld [vmem:[%s3 + $0x8] sm:$0xff]
    %v132 = vld [vmem:[%s3 + $0x10] sm:$0xff]
    %v133 = vld [vmem:[%s3 + $0x18] sm:$0xff]
    %v134 = vld [vmem:[%s3 + $0x20] sm:$0xff]
    %v135 = vld [vmem:[%s3 + $0x28] sm:$0xff]
    %v136 = vld [vmem:[%s3 + $0x30] sm:$0xff]
    %v137 = vld [vmem:[%s3 + $0x38] sm:$0xff]
    %v138 = vld [vmem:[%s3 + $0x40] sm:$0xff]
    %v139 = vld [vmem:[%s3 + $0x48] sm:$0xff]
    %v140 = vld [vmem:[%s3 + $0x50] sm:$0xff]
    %v141 = vld [vmem:[%s3 + $0x58] sm:$0xff]
    %v142 = vld [vmem:[%s3 + $0x60] sm:$0xff]
    %v143 = vld [vmem:[%s3 + $0x68] sm:$0xff]
    %v144 = vld [vmem:[%s3 + $0x70] sm:$0xff]
    %v145 = vld [vmem:[%s3 + $0x78] sm:$0xff]
    %v146 = vld [vmem:[%s4] sm:$0x1]
    %147 = vset.pattern.permute.xlu0 0
    %148 = vperm.xlu0 %147, %v130
    %v149 = vpop.permute.xlu0 %148
    %150 = vset.pattern.permute.xlu0 0
    %151 = vperm.xlu0 %150, %v131
    %v152 = vpop.permute.xlu0 %151
    %153 = vset.pattern.permute.xlu0 0
    %154 = vperm.xlu0 %153, %v132
    %v155 = vpop.permute.xlu0 %154
    %156 = vset.pattern.permute.xlu0 0
    %157 = vperm.xlu0 %156, %v133
    %v158 = vpop.permute.xlu0 %157
    %159 = vset.pattern.permute.xlu0 0
    %160 = vperm.xlu0 %159, %v134
    %v161 = vpop.permute.xlu0 %160
    %162 = vset.pattern.permute.xlu0 0
    %163 = vperm.xlu0 %162, %v135
    %v164 = vpop.permute.xlu0 %163
    %165 = vset.pattern.permute.xlu0 0
    %166 = vperm.xlu0 %165, %v136
    %v167 = vpop.permute.xlu0 %166
    %168 = vset.pattern.permute.xlu0 0
    %169 = vperm.xlu0 %168, %v137
    %v170 = vpop.permute.xlu0 %169
    %171 = vset.pattern.permute.xlu0 0
    %172 = vperm.xlu0 %171, %v138
    %v173 = vpop.permute.xlu0 %172
    %174 = vset.pattern.permute.xlu0 0
    %175 = vperm.xlu0 %174, %v139
    %v176 = vpop.permute.xlu0 %175
    %177 = vset.pattern.permute.xlu0 0
    %178 = vperm.xlu0 %177, %v140
    %v179 = vpop.permute.xlu0 %178
    %180 = vset.pattern.permute.xlu0 0
    %181 = vperm.xlu0 %180, %v141
    %v182 = vpop.permute.xlu0 %181
    %183 = vset.pattern.permute.xlu0 0
    %184 = vperm.xlu0 %183, %v142
    %v185 = vpop.permute.xlu0 %184
    %186 = vset.pattern.permute.xlu0 0
    %187 = vperm.xlu0 %186, %v143
    %v188 = vpop.permute.xlu0 %187
    %189 = vset.pattern.permute.xlu0 0
    %190 = vperm.xlu0 %189, %v144
    %v191 = vpop.permute.xlu0 %190
    %192 = vset.pattern.permute.xlu0 0
    %193 = vperm.xlu0 %192, %v145
    %v194 = vpop.permute.xlu0 %193
    %v195 = vperm.slane %v146, 0
    %vm196 = vcmp.eq.s32.totalorder %v149, %v195
    %vm197 = vcmp.eq.s32.totalorder %v152, %v195
    %vm198 = vcmp.eq.s32.totalorder %v155, %v195
    %vm199 = vcmp.eq.s32.totalorder %v158, %v195
    %vm200 = vcmp.eq.s32.totalorder %v161, %v195
    %vm201 = vcmp.eq.s32.totalorder %v164, %v195
    %vm202 = vcmp.eq.s32.totalorder %v167, %v195
    %vm203 = vcmp.eq.s32.totalorder %v170, %v195
    %vm204 = vcmp.eq.s32.totalorder %v173, %v195
    %vm205 = vcmp.eq.s32.totalorder %v176, %v195
    %vm206 = vcmp.eq.s32.totalorder %v179, %v195
    %vm207 = vcmp.eq.s32.totalorder %v182, %v195
    %vm208 = vcmp.eq.s32.totalorder %v185, %v195
    %vm209 = vcmp.eq.s32.totalorder %v188, %v195
    %vm210 = vcmp.eq.s32.totalorder %v191, %v195
    %vm211 = vcmp.eq.s32.totalorder %v194, %v195
    %v212 = vsel %vm196, 0.0, -1e+09
    %v213 = vsel %vm197, 0.0, -1e+09
    %v214 = vsel %vm198, 0.0, -1e+09
    %v215 = vsel %vm199, 0.0, -1e+09
    %v216 = vsel %vm200, 0.0, -1e+09
    %v217 = vsel %vm201, 0.0, -1e+09
    %v218 = vsel %vm202, 0.0, -1e+09
    %v219 = vsel %vm203, 0.0, -1e+09
    %v220 = vsel %vm204, 0.0, -1e+09
    %v221 = vsel %vm205, 0.0, -1e+09
    %v222 = vsel %vm206, 0.0, -1e+09
    %v223 = vsel %vm207, 0.0, -1e+09
    %v224 = vsel %vm208, 0.0, -1e+09
    %v225 = vsel %vm209, 0.0, -1e+09
    %v226 = vsel %vm210, 0.0, -1e+09
    %v227 = vsel %vm211, 0.0, -1e+09
    %v228 = vmul.f32 %v82, 0.25
    %v229 = vmul.f32 %v83, 0.25
    %v230 = vmul.f32 %v84, 0.25
    %v231 = vmul.f32 %v85, 0.25
    %v232 = vmul.f32 %v86, 0.25
    %v233 = vmul.f32 %v87, 0.25
    %v234 = vmul.f32 %v88, 0.25
    %v235 = vmul.f32 %v89, 0.25
    %v236 = vmul.f32 %v90, 0.25
    %v237 = vmul.f32 %v91, 0.25
    %v238 = vmul.f32 %v92, 0.25
    %v239 = vmul.f32 %v93, 0.25
    %v240 = vmul.f32 %v94, 0.25
    %v241 = vmul.f32 %v95, 0.25
    %v242 = vmul.f32 %v96, 0.25
    %v243 = vmul.f32 %v97, 0.25
    %v244 = vpack.c.bf16 %v229, %v228
    %v245 = vpack.c.bf16 %v231, %v230
    %v246 = vpack.c.bf16 %v233, %v232
    %v247 = vpack.c.bf16 %v235, %v234
    %v248 = vpack.c.bf16 %v237, %v236
    %v249 = vpack.c.bf16 %v239, %v238
    %v250 = vpack.c.bf16 %v241, %v240
    %v251 = vpack.c.bf16 %v243, %v242
    %v252 = vpack.c.bf16 %v100, %v98
    %v253 = vpack.c.bf16 %v104, %v102
    %v254 = vpack.c.bf16 %v108, %v106
    %v255 = vpack.c.bf16 %v112, %v110
    %v256 = vpack.c.bf16 %v116, %v114
    %v257 = vpack.c.bf16 %v120, %v118
    %v258 = vpack.c.bf16 %v124, %v122
    %v259 = vpack.c.bf16 %v128, %v126
    %v260 = vpack.c.bf16 %v101, %v99
    %v261 = vpack.c.bf16 %v105, %v103
    %v262 = vpack.c.bf16 %v109, %v107
    %v263 = vpack.c.bf16 %v113, %v111
    %v264 = vpack.c.bf16 %v117, %v115
    %v265 = vpack.c.bf16 %v121, %v119
    %v266 = vpack.c.bf16 %v125, %v123
    %v267 = vpack.c.bf16 %v129, %v127
    %vm268 = vcmask 130048
    %v270 = vsel %vm268, %v244, 0
    %v273 = vsel %vm268, %v245, 0
    %v276 = vsel %vm268, %v246, 0
    %v279 = vsel %vm268, %v247, 0
    %v282 = vsel %vm268, %v248, 0
    %v285 = vsel %vm268, %v249, 0
    %v288 = vsel %vm268, %v250, 0
    %v291 = vsel %vm268, %v251, 0
    %v294 = vsel %vm268, %v252, 0
    %v297 = vsel %vm268, %v253, 0
    %v300 = vsel %vm268, %v254, 0
    %v303 = vsel %vm268, %v255, 0
    %v306 = vsel %vm268, %v256, 0
    %v309 = vsel %vm268, %v257, 0
    %v312 = vsel %vm268, %v258, 0
    %v315 = vsel %vm268, %v259, 0
    %317 = vmatpush.bf16.xpose.msra.mxu0 %v315
    %318 = vmatpush.bf16.xpose.msra.mxu0 %v312
    %319 = vmatpush.bf16.xpose.msra.mxu0 %v309
    %320 = vmatpush.bf16.xpose.msra.mxu0 %v306
    %321 = vmatpush.bf16.xpose.msra.mxu0 %v303
    %322 = vmatpush.bf16.xpose.msra.mxu0 %v300
    %323 = vmatpush.bf16.xpose.msra.mxu0 %v297
    %324 = vmatpush.bf16.xpose.msra.mxu0 %v294
    %325 = vmatmul.bf16.gmra.mxu0 %v270
    %v326 = vpop.f32.mrf.mxu0
    %v327 = vadd.f32 %v212, %v326
    %v328 = vpop.f32.mrf.mxu0
    %v329 = vadd.f32 %v213, %v328
    %330 = vmatmul.bf16.gmra.mxu0 %v273
    %v331 = vpop.f32.mrf.mxu0
    %v332 = vadd.f32 %v214, %v331
    %v333 = vpop.f32.mrf.mxu0
    %v334 = vadd.f32 %v215, %v333
    %335 = vmatmul.bf16.gmra.mxu0 %v276
    %v336 = vpop.f32.mrf.mxu0
    %v337 = vadd.f32 %v216, %v336
    %v338 = vpop.f32.mrf.mxu0
    %v339 = vadd.f32 %v217, %v338
    %340 = vmatmul.bf16.gmra.mxu0 %v279
    %v341 = vpop.f32.mrf.mxu0
    %v342 = vadd.f32 %v218, %v341
    %v343 = vpop.f32.mrf.mxu0
    %v344 = vadd.f32 %v219, %v343
    %345 = vmatmul.bf16.gmra.mxu0 %v282
    %v346 = vpop.f32.mrf.mxu0
    %v347 = vadd.f32 %v220, %v346
    %v348 = vpop.f32.mrf.mxu0
    %v349 = vadd.f32 %v221, %v348
    %350 = vmatmul.bf16.gmra.mxu0 %v285
    %v351 = vpop.f32.mrf.mxu0
    %v352 = vadd.f32 %v222, %v351
    %v353 = vpop.f32.mrf.mxu0
    %v354 = vadd.f32 %v223, %v353
    %355 = vmatmul.bf16.gmra.mxu0 %v288
    %v356 = vpop.f32.mrf.mxu0
    %v357 = vadd.f32 %v224, %v356
    %v358 = vpop.f32.mrf.mxu0
    %v359 = vadd.f32 %v225, %v358
    %360 = vmatmul.bf16.gmra.mxu0 %v291
    %v361 = vpop.f32.mrf.mxu0
    %v362 = vadd.f32 %v226, %v361
    %v363 = vpop.f32.mrf.mxu0
    %v364 = vadd.f32 %v227, %v363
    %365 = vdwg.mxu0
    %366 = vmax.xlane.f32.xlu0 %v327
    %v367 = vpop.xlane.xlu0 %366
    %368 = vmax.xlane.f32.xlu0 %v329
    %v369 = vpop.xlane.xlu0 %368
    %370 = vmax.xlane.f32.xlu0 %v332
    %v371 = vpop.xlane.xlu0 %370
    %372 = vmax.xlane.f32.xlu0 %v334
    %v373 = vpop.xlane.xlu0 %372
    %374 = vmax.xlane.f32.xlu0 %v337
    %v375 = vpop.xlane.xlu0 %374
    %376 = vmax.xlane.f32.xlu0 %v339
    %v377 = vpop.xlane.xlu0 %376
    %378 = vmax.xlane.f32.xlu0 %v342
    %v379 = vpop.xlane.xlu0 %378
    %380 = vmax.xlane.f32.xlu0 %v344
    %v381 = vpop.xlane.xlu0 %380
    %382 = vmax.xlane.f32.xlu0 %v347
    %v383 = vpop.xlane.xlu0 %382
    %384 = vmax.xlane.f32.xlu0 %v349
    %v385 = vpop.xlane.xlu0 %384
    %386 = vmax.xlane.f32.xlu0 %v352
    %v387 = vpop.xlane.xlu0 %386
    %388 = vmax.xlane.f32.xlu0 %v354
    %v389 = vpop.xlane.xlu0 %388
    %390 = vmax.xlane.f32.xlu0 %v357
    %v391 = vpop.xlane.xlu0 %390
    %392 = vmax.xlane.f32.xlu0 %v359
    %v393 = vpop.xlane.xlu0 %392
    %394 = vmax.xlane.f32.xlu0 %v362
    %v395 = vpop.xlane.xlu0 %394
    %396 = vmax.xlane.f32.xlu0 %v364
    %v397 = vpop.xlane.xlu0 %396
    %v398 = vsub.f32 %v327, %v367
    %v399 = vsub.f32 %v329, %v369
    %v400 = vsub.f32 %v332, %v371
    %v401 = vsub.f32 %v334, %v373
    %v402 = vsub.f32 %v337, %v375
    %v403 = vsub.f32 %v339, %v377
    %v404 = vsub.f32 %v342, %v379
    %v405 = vsub.f32 %v344, %v381
    %v406 = vsub.f32 %v347, %v383
    %v407 = vsub.f32 %v349, %v385
    %v408 = vsub.f32 %v352, %v387
    %v409 = vsub.f32 %v354, %v389
    %v410 = vsub.f32 %v357, %v391
    %v411 = vsub.f32 %v359, %v393
    %v412 = vsub.f32 %v362, %v395
    %v413 = vsub.f32 %v364, %v397
    %v414 = vmul.f32 %v398, 1.442695
    %v415 = vpow.pop %v414
    %v416 = vmul.f32 %v399, 1.442695
    %v417 = vpow.pop %v416
    %v418 = vmul.f32 %v400, 1.442695
    %v419 = vpow.pop %v418
    %v420 = vmul.f32 %v401, 1.442695
    %v421 = vpow.pop %v420
    %v422 = vmul.f32 %v402, 1.442695
    %v423 = vpow.pop %v422
    %v424 = vmul.f32 %v403, 1.442695
    %v425 = vpow.pop %v424
    %v426 = vmul.f32 %v404, 1.442695
    %v427 = vpow.pop %v426
    %v428 = vmul.f32 %v405, 1.442695
    %v429 = vpow.pop %v428
    %v430 = vmul.f32 %v406, 1.442695
    %v431 = vpow.pop %v430
    %v432 = vmul.f32 %v407, 1.442695
    %v433 = vpow.pop %v432
    %v434 = vmul.f32 %v408, 1.442695
    %v435 = vpow.pop %v434
    %v436 = vmul.f32 %v409, 1.442695
    %v437 = vpow.pop %v436
    %v438 = vmul.f32 %v410, 1.442695
    %v439 = vpow.pop %v438
    %v440 = vmul.f32 %v411, 1.442695
    %v441 = vpow.pop %v440
    %v442 = vmul.f32 %v412, 1.442695
    %v443 = vpow.pop %v442
    %v444 = vmul.f32 %v413, 1.442695
    %v445 = vpow.pop %v444
    %446 = vadd.xlane.f32.xlu0 %v415
    %v447 = vpop.xlane.xlu0 %446
    %448 = vadd.xlane.f32.xlu0 %v417
    %v449 = vpop.xlane.xlu0 %448
    %450 = vadd.xlane.f32.xlu0 %v419
    %v451 = vpop.xlane.xlu0 %450
    %452 = vadd.xlane.f32.xlu0 %v421
    %v453 = vpop.xlane.xlu0 %452
    %454 = vadd.xlane.f32.xlu0 %v423
    %v455 = vpop.xlane.xlu0 %454
    %456 = vadd.xlane.f32.xlu0 %v425
    %v457 = vpop.xlane.xlu0 %456
    %458 = vadd.xlane.f32.xlu0 %v427
    %v459 = vpop.xlane.xlu0 %458
    %460 = vadd.xlane.f32.xlu0 %v429
    %v461 = vpop.xlane.xlu0 %460
    %462 = vadd.xlane.f32.xlu0 %v431
    %v463 = vpop.xlane.xlu0 %462
    %464 = vadd.xlane.f32.xlu0 %v433
    %v465 = vpop.xlane.xlu0 %464
    %466 = vadd.xlane.f32.xlu0 %v435
    %v467 = vpop.xlane.xlu0 %466
    %468 = vadd.xlane.f32.xlu0 %v437
    %v469 = vpop.xlane.xlu0 %468
    %470 = vadd.xlane.f32.xlu0 %v439
    %v471 = vpop.xlane.xlu0 %470
    %472 = vadd.xlane.f32.xlu0 %v441
    %v473 = vpop.xlane.xlu0 %472
    %474 = vadd.xlane.f32.xlu0 %v443
    %v475 = vpop.xlane.xlu0 %474
    %476 = vadd.xlane.f32.xlu0 %v445
    %v477 = vpop.xlane.xlu0 %476
    %v478 = vrcp.pop %v447
    %v479 = vrcp.pop %v449
    %v480 = vrcp.pop %v451
    %v481 = vrcp.pop %v453
    %v482 = vrcp.pop %v455
    %v483 = vrcp.pop %v457
    %v484 = vrcp.pop %v459
    %v485 = vrcp.pop %v461
    %v486 = vrcp.pop %v463
    %v487 = vrcp.pop %v465
    %v488 = vrcp.pop %v467
    %v489 = vrcp.pop %v469
    %v490 = vrcp.pop %v471
    %v491 = vrcp.pop %v473
    %v492 = vrcp.pop %v475
    %v493 = vrcp.pop %v477
    %v494 = vmul.f32 %v415, %v478
    %v495 = vmul.f32 %v417, %v479
    %v496 = vmul.f32 %v419, %v480
    %v497 = vmul.f32 %v421, %v481
    %v498 = vmul.f32 %v423, %v482
    %v499 = vmul.f32 %v425, %v483
    %v500 = vmul.f32 %v427, %v484
    %v501 = vmul.f32 %v429, %v485
    %v502 = vmul.f32 %v431, %v486
    %v503 = vmul.f32 %v433, %v487
    %v504 = vmul.f32 %v435, %v488
    %v505 = vmul.f32 %v437, %v489
    %v506 = vmul.f32 %v439, %v490
    %v507 = vmul.f32 %v441, %v491
    %v508 = vmul.f32 %v443, %v492
    %v509 = vmul.f32 %v445, %v493
    %v510 = vpack.c.bf16 %v495, %v494
    %v511 = vpack.c.bf16 %v497, %v496
    %v512 = vpack.c.bf16 %v499, %v498
    %v513 = vpack.c.bf16 %v501, %v500
    %v514 = vpack.c.bf16 %v503, %v502
    %v515 = vpack.c.bf16 %v505, %v504
    %v516 = vpack.c.bf16 %v507, %v506
    %v517 = vpack.c.bf16 %v509, %v508
    %518 = vmatpush.bf16.msra.mxu0 %v267
    %519 = vmatpush.bf16.msra.mxu0 %v266
    %520 = vmatpush.bf16.msra.mxu0 %v265
    %521 = vmatpush.bf16.msra.mxu0 %v264
    %522 = vmatpush.bf16.msra.mxu0 %v263
    %523 = vmatpush.bf16.msra.mxu0 %v262
    %524 = vmatpush.bf16.msra.mxu0 %v261
    %525 = vmatpush.bf16.msra.mxu0 %v260
    %526 = vmatmul.bf16.gmra.mxu0 %v510
    %v527 = vpop.f32.mrf.mxu0
    %v528 = vadd.f32 0.0, %v527
    %v529 = vpop.f32.mrf.mxu0
    %v530 = vadd.f32 0.0, %v529
    %531 = vmatmul.bf16.gmra.mxu0 %v511
    %v532 = vpop.f32.mrf.mxu0
    %v533 = vadd.f32 0.0, %v532
    %v534 = vpop.f32.mrf.mxu0
    %v535 = vadd.f32 0.0, %v534
    %536 = vmatmul.bf16.gmra.mxu0 %v512
    %v537 = vpop.f32.mrf.mxu0
    %v538 = vadd.f32 0.0, %v537
    %v539 = vpop.f32.mrf.mxu0
    %v540 = vadd.f32 0.0, %v539
    %541 = vmatmul.bf16.gmra.mxu0 %v513
    %v542 = vpop.f32.mrf.mxu0
    %v543 = vadd.f32 0.0, %v542
    %v544 = vpop.f32.mrf.mxu0
    %v545 = vadd.f32 0.0, %v544
    %546 = vmatmul.bf16.gmra.mxu0 %v514
    %v547 = vpop.f32.mrf.mxu0
    %v548 = vadd.f32 0.0, %v547
    %v549 = vpop.f32.mrf.mxu0
    %v550 = vadd.f32 0.0, %v549
    %551 = vmatmul.bf16.gmra.mxu0 %v515
    %v552 = vpop.f32.mrf.mxu0
    %v553 = vadd.f32 0.0, %v552
    %v554 = vpop.f32.mrf.mxu0
    %v555 = vadd.f32 0.0, %v554
    %556 = vmatmul.bf16.gmra.mxu0 %v516
    %v557 = vpop.f32.mrf.mxu0
    %v558 = vadd.f32 0.0, %v557
    %v559 = vpop.f32.mrf.mxu0
    %v560 = vadd.f32 0.0, %v559
    %561 = vmatmul.bf16.gmra.mxu0 %v517
    %v562 = vpop.f32.mrf.mxu0
    %v563 = vadd.f32 0.0, %v562
    %v564 = vpop.f32.mrf.mxu0
    %v565 = vadd.f32 0.0, %v564
    %566 = vdwg.mxu0
    %575 = vrot.lane.b32.xlu0 %v244, 112
    %v576 = vpop.permute.xlu0 %575
    %577 = vrot.lane.b32.xlu0 %v245, 112
    %v578 = vpop.permute.xlu0 %577
    %579 = vrot.lane.b32.xlu0 %v246, 112
    %v580 = vpop.permute.xlu0 %579
    %581 = vrot.lane.b32.xlu0 %v247, 112
    %v582 = vpop.permute.xlu0 %581
    %583 = vrot.lane.b32.xlu0 %v248, 112
    %v584 = vpop.permute.xlu0 %583
    %585 = vrot.lane.b32.xlu0 %v249, 112
    %v586 = vpop.permute.xlu0 %585
    %587 = vrot.lane.b32.xlu0 %v250, 112
    %v588 = vpop.permute.xlu0 %587
    %589 = vrot.lane.b32.xlu0 %v251, 112
    %v590 = vpop.permute.xlu0 %589
    %599 = vrot.lane.b32.xlu0 %v252, 112
    %v600 = vpop.permute.xlu0 %599
    %601 = vrot.lane.b32.xlu0 %v253, 112
    %v602 = vpop.permute.xlu0 %601
    %603 = vrot.lane.b32.xlu0 %v254, 112
    %v604 = vpop.permute.xlu0 %603
    %605 = vrot.lane.b32.xlu0 %v255, 112
    %v606 = vpop.permute.xlu0 %605
    %607 = vrot.lane.b32.xlu0 %v256, 112
    %v608 = vpop.permute.xlu0 %607
    %609 = vrot.lane.b32.xlu0 %v257, 112
    %v610 = vpop.permute.xlu0 %609
    %611 = vrot.lane.b32.xlu0 %v258, 112
    %v612 = vpop.permute.xlu0 %611
    %613 = vrot.lane.b32.xlu0 %v259, 112
    %v614 = vpop.permute.xlu0 %613
    %v616 = vsel %vm268, %v576, 0
    %v619 = vsel %vm268, %v578, 0
    %v622 = vsel %vm268, %v580, 0
    %v625 = vsel %vm268, %v582, 0
    %v628 = vsel %vm268, %v584, 0
    %v631 = vsel %vm268, %v586, 0
    %v634 = vsel %vm268, %v588, 0
    %v637 = vsel %vm268, %v590, 0
    %v640 = vsel %vm268, %v600, 0
    %v643 = vsel %vm268, %v602, 0
    %v646 = vsel %vm268, %v604, 0
    %v649 = vsel %vm268, %v606, 0
    %v652 = vsel %vm268, %v608, 0
    %v655 = vsel %vm268, %v610, 0
    %v658 = vsel %vm268, %v612, 0
    %v661 = vsel %vm268, %v614, 0
    %663 = vmatpush.bf16.xpose.msra.mxu0 %v661
    %664 = vmatpush.bf16.xpose.msra.mxu0 %v658
    %665 = vmatpush.bf16.xpose.msra.mxu0 %v655
    %666 = vmatpush.bf16.xpose.msra.mxu0 %v652
    %667 = vmatpush.bf16.xpose.msra.mxu0 %v649
    %668 = vmatpush.bf16.xpose.msra.mxu0 %v646
    %669 = vmatpush.bf16.xpose.msra.mxu0 %v643
    %670 = vmatpush.bf16.xpose.msra.mxu0 %v640
    %671 = vmatmul.bf16.gmra.mxu0 %v616
    %v672 = vpop.f32.mrf.mxu0
    %v673 = vadd.f32 %v212, %v672
    %v674 = vpop.f32.mrf.mxu0
    %v675 = vadd.f32 %v213, %v674
    %676 = vmatmul.bf16.gmra.mxu0 %v619
    %v677 = vpop.f32.mrf.mxu0
    %v678 = vadd.f32 %v214, %v677
    %v679 = vpop.f32.mrf.mxu0
    %v680 = vadd.f32 %v215, %v679
    %681 = vmatmul.bf16.gmra.mxu0 %v622
    %v682 = vpop.f32.mrf.mxu0
    %v683 = vadd.f32 %v216, %v682
    %v684 = vpop.f32.mrf.mxu0
    %v685 = vadd.f32 %v217, %v684
    %686 = vmatmul.bf16.gmra.mxu0 %v625
    %v687 = vpop.f32.mrf.mxu0
    %v688 = vadd.f32 %v218, %v687
    %v689 = vpop.f32.mrf.mxu0
    %v690 = vadd.f32 %v219, %v689
    %691 = vmatmul.bf16.gmra.mxu0 %v628
    %v692 = vpop.f32.mrf.mxu0
    %v693 = vadd.f32 %v220, %v692
    %v694 = vpop.f32.mrf.mxu0
    %v695 = vadd.f32 %v221, %v694
    %696 = vmatmul.bf16.gmra.mxu0 %v631
    %v697 = vpop.f32.mrf.mxu0
    %v698 = vadd.f32 %v222, %v697
    %v699 = vpop.f32.mrf.mxu0
    %v700 = vadd.f32 %v223, %v699
    %701 = vmatmul.bf16.gmra.mxu0 %v634
    %v702 = vpop.f32.mrf.mxu0
    %v703 = vadd.f32 %v224, %v702
    %v704 = vpop.f32.mrf.mxu0
    %v705 = vadd.f32 %v225, %v704
    %706 = vmatmul.bf16.gmra.mxu0 %v637
    %v707 = vpop.f32.mrf.mxu0
    %v708 = vadd.f32 %v226, %v707
    %v709 = vpop.f32.mrf.mxu0
    %v710 = vadd.f32 %v227, %v709
    %711 = vdwg.mxu0
    %712 = vmax.xlane.f32.xlu0 %v673
    %v713 = vpop.xlane.xlu0 %712
    %714 = vmax.xlane.f32.xlu0 %v675
    %v715 = vpop.xlane.xlu0 %714
    %716 = vmax.xlane.f32.xlu0 %v678
    %v717 = vpop.xlane.xlu0 %716
    %718 = vmax.xlane.f32.xlu0 %v680
    %v719 = vpop.xlane.xlu0 %718
    %720 = vmax.xlane.f32.xlu0 %v683
    %v721 = vpop.xlane.xlu0 %720
    %722 = vmax.xlane.f32.xlu0 %v685
    %v723 = vpop.xlane.xlu0 %722
    %724 = vmax.xlane.f32.xlu0 %v688
    %v725 = vpop.xlane.xlu0 %724
    %726 = vmax.xlane.f32.xlu0 %v690
    %v727 = vpop.xlane.xlu0 %726
    %728 = vmax.xlane.f32.xlu0 %v693
    %v729 = vpop.xlane.xlu0 %728
    %730 = vmax.xlane.f32.xlu0 %v695
    %v731 = vpop.xlane.xlu0 %730
    %732 = vmax.xlane.f32.xlu0 %v698
    %v733 = vpop.xlane.xlu0 %732
    %734 = vmax.xlane.f32.xlu0 %v700
    %v735 = vpop.xlane.xlu0 %734
    %736 = vmax.xlane.f32.xlu0 %v703
    %v737 = vpop.xlane.xlu0 %736
    %738 = vmax.xlane.f32.xlu0 %v705
    %v739 = vpop.xlane.xlu0 %738
    %740 = vmax.xlane.f32.xlu0 %v708
    %v741 = vpop.xlane.xlu0 %740
    %742 = vmax.xlane.f32.xlu0 %v710
    %v743 = vpop.xlane.xlu0 %742
    %v744 = vsub.f32 %v673, %v713
    %v745 = vsub.f32 %v675, %v715
    %v746 = vsub.f32 %v678, %v717
    %v747 = vsub.f32 %v680, %v719
    %v748 = vsub.f32 %v683, %v721
    %v749 = vsub.f32 %v685, %v723
    %v750 = vsub.f32 %v688, %v725
    %v751 = vsub.f32 %v690, %v727
    %v752 = vsub.f32 %v693, %v729
    %v753 = vsub.f32 %v695, %v731
    %v754 = vsub.f32 %v698, %v733
    %v755 = vsub.f32 %v700, %v735
    %v756 = vsub.f32 %v703, %v737
    %v757 = vsub.f32 %v705, %v739
    %v758 = vsub.f32 %v708, %v741
    %v759 = vsub.f32 %v710, %v743
    %v760 = vmul.f32 %v744, 1.442695
    %v761 = vpow.pop %v760
    %v762 = vmul.f32 %v745, 1.442695
    %v763 = vpow.pop %v762
    %v764 = vmul.f32 %v746, 1.442695
    %v765 = vpow.pop %v764
    %v766 = vmul.f32 %v747, 1.442695
    %v767 = vpow.pop %v766
    %v768 = vmul.f32 %v748, 1.442695
    %v769 = vpow.pop %v768
    %v770 = vmul.f32 %v749, 1.442695
    %v771 = vpow.pop %v770
    %v772 = vmul.f32 %v750, 1.442695
    %v773 = vpow.pop %v772
    %v774 = vmul.f32 %v751, 1.442695
    %v775 = vpow.pop %v774
    %v776 = vmul.f32 %v752, 1.442695
    %v777 = vpow.pop %v776
    %v778 = vmul.f32 %v753, 1.442695
    %v779 = vpow.pop %v778
    %v780 = vmul.f32 %v754, 1.442695
    %v781 = vpow.pop %v780
    %v782 = vmul.f32 %v755, 1.442695
    %v783 = vpow.pop %v782
    %v784 = vmul.f32 %v756, 1.442695
    %v785 = vpow.pop %v784
    %v786 = vmul.f32 %v757, 1.442695
    %v787 = vpow.pop %v786
    %v788 = vmul.f32 %v758, 1.442695
    %v789 = vpow.pop %v788
    %v790 = vmul.f32 %v759, 1.442695
    %v791 = vpow.pop %v790
    %792 = vadd.xlane.f32.xlu0 %v761
    %v793 = vpop.xlane.xlu0 %792
    %794 = vadd.xlane.f32.xlu0 %v763
    %v795 = vpop.xlane.xlu0 %794
    %796 = vadd.xlane.f32.xlu0 %v765
    %v797 = vpop.xlane.xlu0 %796
    %798 = vadd.xlane.f32.xlu0 %v767
    %v799 = vpop.xlane.xlu0 %798
    %800 = vadd.xlane.f32.xlu0 %v769
    %v801 = vpop.xlane.xlu0 %800
    %802 = vadd.xlane.f32.xlu0 %v771
    %v803 = vpop.xlane.xlu0 %802
    %804 = vadd.xlane.f32.xlu0 %v773
    %v805 = vpop.xlane.xlu0 %804
    %806 = vadd.xlane.f32.xlu0 %v775
    %v807 = vpop.xlane.xlu0 %806
    %808 = vadd.xlane.f32.xlu0 %v777
    %v809 = vpop.xlane.xlu0 %808
    %810 = vadd.xlane.f32.xlu0 %v779
    %v811 = vpop.xlane.xlu0 %810
    %812 = vadd.xlane.f32.xlu0 %v781
    %v813 = vpop.xlane.xlu0 %812
    %814 = vadd.xlane.f32.xlu0 %v783
    %v815 = vpop.xlane.xlu0 %814
    %816 = vadd.xlane.f32.xlu0 %v785
    %v817 = vpop.xlane.xlu0 %816
    %818 = vadd.xlane.f32.xlu0 %v787
    %v819 = vpop.xlane.xlu0 %818
    %820 = vadd.xlane.f32.xlu0 %v789
    %v821 = vpop.xlane.xlu0 %820
    %822 = vadd.xlane.f32.xlu0 %v791
    %v823 = vpop.xlane.xlu0 %822
    %v824 = vrcp.pop %v793
    %v825 = vrcp.pop %v795
    %v826 = vrcp.pop %v797
    %v827 = vrcp.pop %v799
    %v828 = vrcp.pop %v801
    %v829 = vrcp.pop %v803
    %v830 = vrcp.pop %v805
    %v831 = vrcp.pop %v807
    %v832 = vrcp.pop %v809
    %v833 = vrcp.pop %v811
    %v834 = vrcp.pop %v813
    %v835 = vrcp.pop %v815
    %v836 = vrcp.pop %v817
    %v837 = vrcp.pop %v819
    %v838 = vrcp.pop %v821
    %v839 = vrcp.pop %v823
    %v840 = vmul.f32 %v761, %v824
    %v841 = vmul.f32 %v763, %v825
    %v842 = vmul.f32 %v765, %v826
    %v843 = vmul.f32 %v767, %v827
    %v844 = vmul.f32 %v769, %v828
    %v845 = vmul.f32 %v771, %v829
    %v846 = vmul.f32 %v773, %v830
    %v847 = vmul.f32 %v775, %v831
    %v848 = vmul.f32 %v777, %v832
    %v849 = vmul.f32 %v779, %v833
    %v850 = vmul.f32 %v781, %v834
    %v851 = vmul.f32 %v783, %v835
    %v852 = vmul.f32 %v785, %v836
    %v853 = vmul.f32 %v787, %v837
    %v854 = vmul.f32 %v789, %v838
    %v855 = vmul.f32 %v791, %v839
    %v856 = vpack.c.bf16 %v841, %v840
    %v857 = vpack.c.bf16 %v843, %v842
    %v858 = vpack.c.bf16 %v845, %v844
    %v859 = vpack.c.bf16 %v847, %v846
    %v860 = vpack.c.bf16 %v849, %v848
    %v861 = vpack.c.bf16 %v851, %v850
    %v862 = vpack.c.bf16 %v853, %v852
    %v863 = vpack.c.bf16 %v855, %v854
    %872 = vrot.lane.b32.xlu0 %v260, 112
    %v873 = vpop.permute.xlu0 %872
    %874 = vrot.lane.b32.xlu0 %v261, 112
    %v875 = vpop.permute.xlu0 %874
    %876 = vrot.lane.b32.xlu0 %v262, 112
    %v877 = vpop.permute.xlu0 %876
    %878 = vrot.lane.b32.xlu0 %v263, 112
    %v879 = vpop.permute.xlu0 %878
    %880 = vrot.lane.b32.xlu0 %v264, 112
    %v881 = vpop.permute.xlu0 %880
    %882 = vrot.lane.b32.xlu0 %v265, 112
    %v883 = vpop.permute.xlu0 %882
    %884 = vrot.lane.b32.xlu0 %v266, 112
    %v885 = vpop.permute.xlu0 %884
    %886 = vrot.lane.b32.xlu0 %v267, 112
    %v887 = vpop.permute.xlu0 %886
    %896 = vmatpush.bf16.msra.mxu0 %v887
    %897 = vmatpush.bf16.msra.mxu0 %v885
    %898 = vmatpush.bf16.msra.mxu0 %v883
    %899 = vmatpush.bf16.msra.mxu0 %v881
    %900 = vmatpush.bf16.msra.mxu0 %v879
    %901 = vmatpush.bf16.msra.mxu0 %v877
    %902 = vmatpush.bf16.msra.mxu0 %v875
    %903 = vmatpush.bf16.msra.mxu0 %v873
    %904 = vmatmul.bf16.gmra.mxu0 %v856
    %v905 = vpop.f32.mrf.mxu0
    %v906 = vadd.f32 0.0, %v905
    %v907 = vpop.f32.mrf.mxu0
    %v908 = vadd.f32 0.0, %v907
    %909 = vmatmul.bf16.gmra.mxu0 %v857
    %v910 = vpop.f32.mrf.mxu0
    %v911 = vadd.f32 0.0, %v910
    %v912 = vpop.f32.mrf.mxu0
    %v913 = vadd.f32 0.0, %v912
    %914 = vmatmul.bf16.gmra.mxu0 %v858
    %v915 = vpop.f32.mrf.mxu0
    %v916 = vadd.f32 0.0, %v915
    %v917 = vpop.f32.mrf.mxu0
    %v918 = vadd.f32 0.0, %v917
    %919 = vmatmul.bf16.gmra.mxu0 %v859
    %v920 = vpop.f32.mrf.mxu0
    %v921 = vadd.f32 0.0, %v920
    %v922 = vpop.f32.mrf.mxu0
    %v923 = vadd.f32 0.0, %v922
    %924 = vmatmul.bf16.gmra.mxu0 %v860
    %v925 = vpop.f32.mrf.mxu0
    %v926 = vadd.f32 0.0, %v925
    %v927 = vpop.f32.mrf.mxu0
    %v928 = vadd.f32 0.0, %v927
    %929 = vmatmul.bf16.gmra.mxu0 %v861
    %v930 = vpop.f32.mrf.mxu0
    %v931 = vadd.f32 0.0, %v930
    %v932 = vpop.f32.mrf.mxu0
    %v933 = vadd.f32 0.0, %v932
    %934 = vmatmul.bf16.gmra.mxu0 %v862
    %v935 = vpop.f32.mrf.mxu0
    %v936 = vadd.f32 0.0, %v935
    %v937 = vpop.f32.mrf.mxu0
    %v938 = vadd.f32 0.0, %v937
    %939 = vmatmul.bf16.gmra.mxu0 %v863
    %v940 = vpop.f32.mrf.mxu0
    %v941 = vadd.f32 0.0, %v940
    %v942 = vpop.f32.mrf.mxu0
    %v943 = vadd.f32 0.0, %v942
    %944 = vdwg.mxu0
    %945 = vrot.lane.b32.xlu0 %v244, 96
    %v946 = vpop.permute.xlu0 %945
    %947 = vrot.lane.b32.xlu0 %v245, 96
    %v948 = vpop.permute.xlu0 %947
    %949 = vrot.lane.b32.xlu0 %v246, 96
    %v950 = vpop.permute.xlu0 %949
    %951 = vrot.lane.b32.xlu0 %v247, 96
    %v952 = vpop.permute.xlu0 %951
    %953 = vrot.lane.b32.xlu0 %v248, 96
    %v954 = vpop.permute.xlu0 %953
    %955 = vrot.lane.b32.xlu0 %v249, 96
    %v956 = vpop.permute.xlu0 %955
    %957 = vrot.lane.b32.xlu0 %v250, 96
    %v958 = vpop.permute.xlu0 %957
    %959 = vrot.lane.b32.xlu0 %v251, 96
    %v960 = vpop.permute.xlu0 %959
    %961 = vrot.lane.b32.xlu0 %v252, 96
    %v962 = vpop.permute.xlu0 %961
    %963 = vrot.lane.b32.xlu0 %v253, 96
    %v964 = vpop.permute.xlu0 %963
    %965 = vrot.lane.b32.xlu0 %v254, 96
    %v966 = vpop.permute.xlu0 %965
    %967 = vrot.lane.b32.xlu0 %v255, 96
    %v968 = vpop.permute.xlu0 %967
    %969 = vrot.lane.b32.xlu0 %v256, 96
    %v970 = vpop.permute.xlu0 %969
    %971 = vrot.lane.b32.xlu0 %v257, 96
    %v972 = vpop.permute.xlu0 %971
    %973 = vrot.lane.b32.xlu0 %v258, 96
    %v974 = vpop.permute.xlu0 %973
    %975 = vrot.lane.b32.xlu0 %v259, 96
    %v976 = vpop.permute.xlu0 %975
    %v978 = vsel %vm268, %v946, 0
    %v981 = vsel %vm268, %v948, 0
    %v984 = vsel %vm268, %v950, 0
    %v987 = vsel %vm268, %v952, 0
    %v990 = vsel %vm268, %v954, 0
    %v993 = vsel %vm268, %v956, 0
    %v996 = vsel %vm268, %v958, 0
    %v999 = vsel %vm268, %v960, 0
    %v1002 = vsel %vm268, %v962, 0
    %v1005 = vsel %vm268, %v964, 0
    %v1008 = vsel %vm268, %v966, 0
    %v1011 = vsel %vm268, %v968, 0
    %v1014 = vsel %vm268, %v970, 0
    %v1017 = vsel %vm268, %v972, 0
    %v1020 = vsel %vm268, %v974, 0
    %v1023 = vsel %vm268, %v976, 0
    %1025 = vmatpush.bf16.xpose.msra.mxu0 %v1023
    %1026 = vmatpush.bf16.xpose.msra.mxu0 %v1020
    %1027 = vmatpush.bf16.xpose.msra.mxu0 %v1017
    %1028 = vmatpush.bf16.xpose.msra.mxu0 %v1014
    %1029 = vmatpush.bf16.xpose.msra.mxu0 %v1011
    %1030 = vmatpush.bf16.xpose.msra.mxu0 %v1008
    %1031 = vmatpush.bf16.xpose.msra.mxu0 %v1005
    %1032 = vmatpush.bf16.xpose.msra.mxu0 %v1002
    %1033 = vmatmul.bf16.gmra.mxu0 %v978
    %v1034 = vpop.f32.mrf.mxu0
    %v1035 = vadd.f32 %v212, %v1034
    %v1036 = vpop.f32.mrf.mxu0
    %v1037 = vadd.f32 %v213, %v1036
    %1038 = vmatmul.bf16.gmra.mxu0 %v981
    %v1039 = vpop.f32.mrf.mxu0
    %v1040 = vadd.f32 %v214, %v1039
    %v1041 = vpop.f32.mrf.mxu0
    %v1042 = vadd.f32 %v215, %v1041
    %1043 = vmatmul.bf16.gmra.mxu0 %v984
    %v1044 = vpop.f32.mrf.mxu0
    %v1045 = vadd.f32 %v216, %v1044
    %v1046 = vpop.f32.mrf.mxu0
    %v1047 = vadd.f32 %v217, %v1046
    %1048 = vmatmul.bf16.gmra.mxu0 %v987
    %v1049 = vpop.f32.mrf.mxu0
    %v1050 = vadd.f32 %v218, %v1049
    %v1051 = vpop.f32.mrf.mxu0
    %v1052 = vadd.f32 %v219, %v1051
    %1053 = vmatmul.bf16.gmra.mxu0 %v990
    %v1054 = vpop.f32.mrf.mxu0
    %v1055 = vadd.f32 %v220, %v1054
    %v1056 = vpop.f32.mrf.mxu0
    %v1057 = vadd.f32 %v221, %v1056
    %1058 = vmatmul.bf16.gmra.mxu0 %v993
    %v1059 = vpop.f32.mrf.mxu0
    %v1060 = vadd.f32 %v222, %v1059
    %v1061 = vpop.f32.mrf.mxu0
    %v1062 = vadd.f32 %v223, %v1061
    %1063 = vmatmul.bf16.gmra.mxu0 %v996
    %v1064 = vpop.f32.mrf.mxu0
    %v1065 = vadd.f32 %v224, %v1064
    %v1066 = vpop.f32.mrf.mxu0
    %v1067 = vadd.f32 %v225, %v1066
    %1068 = vmatmul.bf16.gmra.mxu0 %v999
    %v1069 = vpop.f32.mrf.mxu0
    %v1070 = vadd.f32 %v226, %v1069
    %v1071 = vpop.f32.mrf.mxu0
    %v1072 = vadd.f32 %v227, %v1071
    %1073 = vdwg.mxu0
    %1074 = vmax.xlane.f32.xlu0 %v1035
    %v1075 = vpop.xlane.xlu0 %1074
    %1076 = vmax.xlane.f32.xlu0 %v1037
    %v1077 = vpop.xlane.xlu0 %1076
    %1078 = vmax.xlane.f32.xlu0 %v1040
    %v1079 = vpop.xlane.xlu0 %1078
    %1080 = vmax.xlane.f32.xlu0 %v1042
    %v1081 = vpop.xlane.xlu0 %1080
    %1082 = vmax.xlane.f32.xlu0 %v1045
    %v1083 = vpop.xlane.xlu0 %1082
    %1084 = vmax.xlane.f32.xlu0 %v1047
    %v1085 = vpop.xlane.xlu0 %1084
    %1086 = vmax.xlane.f32.xlu0 %v1050
    %v1087 = vpop.xlane.xlu0 %1086
    %1088 = vmax.xlane.f32.xlu0 %v1052
    %v1089 = vpop.xlane.xlu0 %1088
    %1090 = vmax.xlane.f32.xlu0 %v1055
    %v1091 = vpop.xlane.xlu0 %1090
    %1092 = vmax.xlane.f32.xlu0 %v1057
    %v1093 = vpop.xlane.xlu0 %1092
    %1094 = vmax.xlane.f32.xlu0 %v1060
    %v1095 = vpop.xlane.xlu0 %1094
    %1096 = vmax.xlane.f32.xlu0 %v1062
    %v1097 = vpop.xlane.xlu0 %1096
    %1098 = vmax.xlane.f32.xlu0 %v1065
    %v1099 = vpop.xlane.xlu0 %1098
    %1100 = vmax.xlane.f32.xlu0 %v1067
    %v1101 = vpop.xlane.xlu0 %1100
    %1102 = vmax.xlane.f32.xlu0 %v1070
    %v1103 = vpop.xlane.xlu0 %1102
    %1104 = vmax.xlane.f32.xlu0 %v1072
    %v1105 = vpop.xlane.xlu0 %1104
    %v1106 = vsub.f32 %v1035, %v1075
    %v1107 = vsub.f32 %v1037, %v1077
    %v1108 = vsub.f32 %v1040, %v1079
    %v1109 = vsub.f32 %v1042, %v1081
    %v1110 = vsub.f32 %v1045, %v1083
    %v1111 = vsub.f32 %v1047, %v1085
    %v1112 = vsub.f32 %v1050, %v1087
    %v1113 = vsub.f32 %v1052, %v1089
    %v1114 = vsub.f32 %v1055, %v1091
    %v1115 = vsub.f32 %v1057, %v1093
    %v1116 = vsub.f32 %v1060, %v1095
    %v1117 = vsub.f32 %v1062, %v1097
    %v1118 = vsub.f32 %v1065, %v1099
    %v1119 = vsub.f32 %v1067, %v1101
    %v1120 = vsub.f32 %v1070, %v1103
    %v1121 = vsub.f32 %v1072, %v1105
    %v1122 = vmul.f32 %v1106, 1.442695
    %v1123 = vpow.pop %v1122
    %v1124 = vmul.f32 %v1107, 1.442695
    %v1125 = vpow.pop %v1124
    %v1126 = vmul.f32 %v1108, 1.442695
    %v1127 = vpow.pop %v1126
    %v1128 = vmul.f32 %v1109, 1.442695
    %v1129 = vpow.pop %v1128
    %v1130 = vmul.f32 %v1110, 1.442695
    %v1131 = vpow.pop %v1130
    %v1132 = vmul.f32 %v1111, 1.442695
    %v1133 = vpow.pop %v1132
    %v1134 = vmul.f32 %v1112, 1.442695
    %v1135 = vpow.pop %v1134
    %v1136 = vmul.f32 %v1113, 1.442695
    %v1137 = vpow.pop %v1136
    %v1138 = vmul.f32 %v1114, 1.442695
    %v1139 = vpow.pop %v1138
    %v1140 = vmul.f32 %v1115, 1.442695
    %v1141 = vpow.pop %v1140
    %v1142 = vmul.f32 %v1116, 1.442695
    %v1143 = vpow.pop %v1142
    %v1144 = vmul.f32 %v1117, 1.442695
    %v1145 = vpow.pop %v1144
    %v1146 = vmul.f32 %v1118, 1.442695
    %v1147 = vpow.pop %v1146
    %v1148 = vmul.f32 %v1119, 1.442695
    %v1149 = vpow.pop %v1148
    %v1150 = vmul.f32 %v1120, 1.442695
    %v1151 = vpow.pop %v1150
    %v1152 = vmul.f32 %v1121, 1.442695
    %v1153 = vpow.pop %v1152
    %1154 = vadd.xlane.f32.xlu0 %v1123
    %v1155 = vpop.xlane.xlu0 %1154
    %1156 = vadd.xlane.f32.xlu0 %v1125
    %v1157 = vpop.xlane.xlu0 %1156
    %1158 = vadd.xlane.f32.xlu0 %v1127
    %v1159 = vpop.xlane.xlu0 %1158
    %1160 = vadd.xlane.f32.xlu0 %v1129
    %v1161 = vpop.xlane.xlu0 %1160
    %1162 = vadd.xlane.f32.xlu0 %v1131
    %v1163 = vpop.xlane.xlu0 %1162
    %1164 = vadd.xlane.f32.xlu0 %v1133
    %v1165 = vpop.xlane.xlu0 %1164
    %1166 = vadd.xlane.f32.xlu0 %v1135
    %v1167 = vpop.xlane.xlu0 %1166
    %1168 = vadd.xlane.f32.xlu0 %v1137
    %v1169 = vpop.xlane.xlu0 %1168
    %1170 = vadd.xlane.f32.xlu0 %v1139
    %v1171 = vpop.xlane.xlu0 %1170
    %1172 = vadd.xlane.f32.xlu0 %v1141
    %v1173 = vpop.xlane.xlu0 %1172
    %1174 = vadd.xlane.f32.xlu0 %v1143
    %v1175 = vpop.xlane.xlu0 %1174
    %1176 = vadd.xlane.f32.xlu0 %v1145
    %v1177 = vpop.xlane.xlu0 %1176
    %1178 = vadd.xlane.f32.xlu0 %v1147
    %v1179 = vpop.xlane.xlu0 %1178
    %1180 = vadd.xlane.f32.xlu0 %v1149
    %v1181 = vpop.xlane.xlu0 %1180
    %1182 = vadd.xlane.f32.xlu0 %v1151
    %v1183 = vpop.xlane.xlu0 %1182
    %1184 = vadd.xlane.f32.xlu0 %v1153
    %v1185 = vpop.xlane.xlu0 %1184
    %v1186 = vrcp.pop %v1155
    %v1187 = vrcp.pop %v1157
    %v1188 = vrcp.pop %v1159
    %v1189 = vrcp.pop %v1161
    %v1190 = vrcp.pop %v1163
    %v1191 = vrcp.pop %v1165
    %v1192 = vrcp.pop %v1167
    %v1193 = vrcp.pop %v1169
    %v1194 = vrcp.pop %v1171
    %v1195 = vrcp.pop %v1173
    %v1196 = vrcp.pop %v1175
    %v1197 = vrcp.pop %v1177
    %v1198 = vrcp.pop %v1179
    %v1199 = vrcp.pop %v1181
    %v1200 = vrcp.pop %v1183
    %v1201 = vrcp.pop %v1185
    %v1202 = vmul.f32 %v1123, %v1186
    %v1203 = vmul.f32 %v1125, %v1187
    %v1204 = vmul.f32 %v1127, %v1188
    %v1205 = vmul.f32 %v1129, %v1189
    %v1206 = vmul.f32 %v1131, %v1190
    %v1207 = vmul.f32 %v1133, %v1191
    %v1208 = vmul.f32 %v1135, %v1192
    %v1209 = vmul.f32 %v1137, %v1193
    %v1210 = vmul.f32 %v1139, %v1194
    %v1211 = vmul.f32 %v1141, %v1195
    %v1212 = vmul.f32 %v1143, %v1196
    %v1213 = vmul.f32 %v1145, %v1197
    %v1214 = vmul.f32 %v1147, %v1198
    %v1215 = vmul.f32 %v1149, %v1199
    %v1216 = vmul.f32 %v1151, %v1200
    %v1217 = vmul.f32 %v1153, %v1201
    %v1218 = vpack.c.bf16 %v1203, %v1202
    %v1219 = vpack.c.bf16 %v1205, %v1204
    %v1220 = vpack.c.bf16 %v1207, %v1206
    %v1221 = vpack.c.bf16 %v1209, %v1208
    %v1222 = vpack.c.bf16 %v1211, %v1210
    %v1223 = vpack.c.bf16 %v1213, %v1212
    %v1224 = vpack.c.bf16 %v1215, %v1214
    %v1225 = vpack.c.bf16 %v1217, %v1216
    %1226 = vrot.lane.b32.xlu0 %v260, 96
    %v1227 = vpop.permute.xlu0 %1226
    %1228 = vrot.lane.b32.xlu0 %v261, 96
    %v1229 = vpop.permute.xlu0 %1228
    %1230 = vrot.lane.b32.xlu0 %v262, 96
    %v1231 = vpop.permute.xlu0 %1230
    %1232 = vrot.lane.b32.xlu0 %v263, 96
    %v1233 = vpop.permute.xlu0 %1232
    %1234 = vrot.lane.b32.xlu0 %v264, 96
    %v1235 = vpop.permute.xlu0 %1234
    %1236 = vrot.lane.b32.xlu0 %v265, 96
    %v1237 = vpop.permute.xlu0 %1236
    %1238 = vrot.lane.b32.xlu0 %v266, 96
    %v1239 = vpop.permute.xlu0 %1238
    %1240 = vrot.lane.b32.xlu0 %v267, 96
    %v1241 = vpop.permute.xlu0 %1240
    %1250 = vmatpush.bf16.msra.mxu0 %v1241
    %1251 = vmatpush.bf16.msra.mxu0 %v1239
    %1252 = vmatpush.bf16.msra.mxu0 %v1237
    %1253 = vmatpush.bf16.msra.mxu0 %v1235
    %1254 = vmatpush.bf16.msra.mxu0 %v1233
    %1255 = vmatpush.bf16.msra.mxu0 %v1231
    %1256 = vmatpush.bf16.msra.mxu0 %v1229
    %1257 = vmatpush.bf16.msra.mxu0 %v1227
    %1258 = vmatmul.bf16.gmra.mxu0 %v1218
    %v1259 = vpop.f32.mrf.mxu0
    %v1260 = vadd.f32 0.0, %v1259
    %v1261 = vpop.f32.mrf.mxu0
    %v1262 = vadd.f32 0.0, %v1261
    %1263 = vmatmul.bf16.gmra.mxu0 %v1219
    %v1264 = vpop.f32.mrf.mxu0
    %v1265 = vadd.f32 0.0, %v1264
    %v1266 = vpop.f32.mrf.mxu0
    %v1267 = vadd.f32 0.0, %v1266
    %1268 = vmatmul.bf16.gmra.mxu0 %v1220
    %v1269 = vpop.f32.mrf.mxu0
    %v1270 = vadd.f32 0.0, %v1269
    %v1271 = vpop.f32.mrf.mxu0
    %v1272 = vadd.f32 0.0, %v1271
    %1273 = vmatmul.bf16.gmra.mxu0 %v1221
    %v1274 = vpop.f32.mrf.mxu0
    %v1275 = vadd.f32 0.0, %v1274
    %v1276 = vpop.f32.mrf.mxu0
    %v1277 = vadd.f32 0.0, %v1276
    %1278 = vmatmul.bf16.gmra.mxu0 %v1222
    %v1279 = vpop.f32.mrf.mxu0
    %v1280 = vadd.f32 0.0, %v1279
    %v1281 = vpop.f32.mrf.mxu0
    %v1282 = vadd.f32 0.0, %v1281
    %1283 = vmatmul.bf16.gmra.mxu0 %v1223
    %v1284 = vpop.f32.mrf.mxu0
    %v1285 = vadd.f32 0.0, %v1284
    %v1286 = vpop.f32.mrf.mxu0
    %v1287 = vadd.f32 0.0, %v1286
    %1288 = vmatmul.bf16.gmra.mxu0 %v1224
    %v1289 = vpop.f32.mrf.mxu0
    %v1290 = vadd.f32 0.0, %v1289
    %v1291 = vpop.f32.mrf.mxu0
    %v1292 = vadd.f32 0.0, %v1291
    %1293 = vmatmul.bf16.gmra.mxu0 %v1225
    %v1294 = vpop.f32.mrf.mxu0
    %v1295 = vadd.f32 0.0, %v1294
    %v1296 = vpop.f32.mrf.mxu0
    %v1297 = vadd.f32 0.0, %v1296
    %1298 = vdwg.mxu0
    %1299 = vrot.lane.b32.xlu0 %v244, 80
    %v1300 = vpop.permute.xlu0 %1299
    %1301 = vrot.lane.b32.xlu0 %v245, 80
    %v1302 = vpop.permute.xlu0 %1301
    %1303 = vrot.lane.b32.xlu0 %v246, 80
    %v1304 = vpop.permute.xlu0 %1303
    %1305 = vrot.lane.b32.xlu0 %v247, 80
    %v1306 = vpop.permute.xlu0 %1305
    %1307 = vrot.lane.b32.xlu0 %v248, 80
    %v1308 = vpop.permute.xlu0 %1307
    %1309 = vrot.lane.b32.xlu0 %v249, 80
    %v1310 = vpop.permute.xlu0 %1309
    %1311 = vrot.lane.b32.xlu0 %v250, 80
    %v1312 = vpop.permute.xlu0 %1311
    %1313 = vrot.lane.b32.xlu0 %v251, 80
    %v1314 = vpop.permute.xlu0 %1313
    %1315 = vrot.lane.b32.xlu0 %v252, 80
    %v1316 = vpop.permute.xlu0 %1315
    %1317 = vrot.lane.b32.xlu0 %v253, 80
    %v1318 = vpop.permute.xlu0 %1317
    %1319 = vrot.lane.b32.xlu0 %v254, 80
    %v1320 = vpop.permute.xlu0 %1319
    %1321 = vrot.lane.b32.xlu0 %v255, 80
    %v1322 = vpop.permute.xlu0 %1321
    %1323 = vrot.lane.b32.xlu0 %v256, 80
    %v1324 = vpop.permute.xlu0 %1323
    %1325 = vrot.lane.b32.xlu0 %v257, 80
    %v1326 = vpop.permute.xlu0 %1325
    %1327 = vrot.lane.b32.xlu0 %v258, 80
    %v1328 = vpop.permute.xlu0 %1327
    %1329 = vrot.lane.b32.xlu0 %v259, 80
    %v1330 = vpop.permute.xlu0 %1329
    %v1332 = vsel %vm268, %v1300, 0
    %v1335 = vsel %vm268, %v1302, 0
    %v1338 = vsel %vm268, %v1304, 0
    %v1341 = vsel %vm268, %v1306, 0
    %v1344 = vsel %vm268, %v1308, 0
    %v1347 = vsel %vm268, %v1310, 0
    %v1350 = vsel %vm268, %v1312, 0
    %v1353 = vsel %vm268, %v1314, 0
    %v1356 = vsel %vm268, %v1316, 0
    %v1359 = vsel %vm268, %v1318, 0
    %v1362 = vsel %vm268, %v1320, 0
    %v1365 = vsel %vm268, %v1322, 0
    %v1368 = vsel %vm268, %v1324, 0
    %v1371 = vsel %vm268, %v1326, 0
    %v1374 = vsel %vm268, %v1328, 0
    %v1377 = vsel %vm268, %v1330, 0
    %1379 = vmatpush.bf16.xpose.msra.mxu0 %v1377
    %1380 = vmatpush.bf16.xpose.msra.mxu0 %v1374
    %1381 = vmatpush.bf16.xpose.msra.mxu0 %v1371
    %1382 = vmatpush.bf16.xpose.msra.mxu0 %v1368
    %1383 = vmatpush.bf16.xpose.msra.mxu0 %v1365
    %1384 = vmatpush.bf16.xpose.msra.mxu0 %v1362
    %1385 = vmatpush.bf16.xpose.msra.mxu0 %v1359
    %1386 = vmatpush.bf16.xpose.msra.mxu0 %v1356
    %1387 = vmatmul.bf16.gmra.mxu0 %v1332
    %v1388 = vpop.f32.mrf.mxu0
    %v1389 = vadd.f32 %v212, %v1388
    %v1390 = vpop.f32.mrf.mxu0
    %v1391 = vadd.f32 %v213, %v1390
    %1392 = vmatmul.bf16.gmra.mxu0 %v1335
    %v1393 = vpop.f32.mrf.mxu0
    %v1394 = vadd.f32 %v214, %v1393
    %v1395 = vpop.f32.mrf.mxu0
    %v1396 = vadd.f32 %v215, %v1395
    %1397 = vmatmul.bf16.gmra.mxu0 %v1338
    %v1398 = vpop.f32.mrf.mxu0
    %v1399 = vadd.f32 %v216, %v1398
    %v1400 = vpop.f32.mrf.mxu0
    %v1401 = vadd.f32 %v217, %v1400
    %1402 = vmatmul.bf16.gmra.mxu0 %v1341
    %v1403 = vpop.f32.mrf.mxu0
    %v1404 = vadd.f32 %v218, %v1403
    %v1405 = vpop.f32.mrf.mxu0
    %v1406 = vadd.f32 %v219, %v1405
    %1407 = vmatmul.bf16.gmra.mxu0 %v1344
    %v1408 = vpop.f32.mrf.mxu0
    %v1409 = vadd.f32 %v220, %v1408
    %v1410 = vpop.f32.mrf.mxu0
    %v1411 = vadd.f32 %v221, %v1410
    %1412 = vmatmul.bf16.gmra.mxu0 %v1347
    %v1413 = vpop.f32.mrf.mxu0
    %v1414 = vadd.f32 %v222, %v1413
    %v1415 = vpop.f32.mrf.mxu0
    %v1416 = vadd.f32 %v223, %v1415
    %1417 = vmatmul.bf16.gmra.mxu0 %v1350
    %v1418 = vpop.f32.mrf.mxu0
    %v1419 = vadd.f32 %v224, %v1418
    %v1420 = vpop.f32.mrf.mxu0
    %v1421 = vadd.f32 %v225, %v1420
    %1422 = vmatmul.bf16.gmra.mxu0 %v1353
    %v1423 = vpop.f32.mrf.mxu0
    %v1424 = vadd.f32 %v226, %v1423
    %v1425 = vpop.f32.mrf.mxu0
    %v1426 = vadd.f32 %v227, %v1425
    %1427 = vdwg.mxu0
    %1428 = vmax.xlane.f32.xlu0 %v1389
    %v1429 = vpop.xlane.xlu0 %1428
    %1430 = vmax.xlane.f32.xlu0 %v1391
    %v1431 = vpop.xlane.xlu0 %1430
    %1432 = vmax.xlane.f32.xlu0 %v1394
    %v1433 = vpop.xlane.xlu0 %1432
    %1434 = vmax.xlane.f32.xlu0 %v1396
    %v1435 = vpop.xlane.xlu0 %1434
    %1436 = vmax.xlane.f32.xlu0 %v1399
    %v1437 = vpop.xlane.xlu0 %1436
    %1438 = vmax.xlane.f32.xlu0 %v1401
    %v1439 = vpop.xlane.xlu0 %1438
    %1440 = vmax.xlane.f32.xlu0 %v1404
    %v1441 = vpop.xlane.xlu0 %1440
    %1442 = vmax.xlane.f32.xlu0 %v1406
    %v1443 = vpop.xlane.xlu0 %1442
    %1444 = vmax.xlane.f32.xlu0 %v1409
    %v1445 = vpop.xlane.xlu0 %1444
    %1446 = vmax.xlane.f32.xlu0 %v1411
    %v1447 = vpop.xlane.xlu0 %1446
    %1448 = vmax.xlane.f32.xlu0 %v1414
    %v1449 = vpop.xlane.xlu0 %1448
    %1450 = vmax.xlane.f32.xlu0 %v1416
    %v1451 = vpop.xlane.xlu0 %1450
    %1452 = vmax.xlane.f32.xlu0 %v1419
    %v1453 = vpop.xlane.xlu0 %1452
    %1454 = vmax.xlane.f32.xlu0 %v1421
    %v1455 = vpop.xlane.xlu0 %1454
    %1456 = vmax.xlane.f32.xlu0 %v1424
    %v1457 = vpop.xlane.xlu0 %1456
    %1458 = vmax.xlane.f32.xlu0 %v1426
    %v1459 = vpop.xlane.xlu0 %1458
    %v1460 = vsub.f32 %v1389, %v1429
    %v1461 = vsub.f32 %v1391, %v1431
    %v1462 = vsub.f32 %v1394, %v1433
    %v1463 = vsub.f32 %v1396, %v1435
    %v1464 = vsub.f32 %v1399, %v1437
    %v1465 = vsub.f32 %v1401, %v1439
    %v1466 = vsub.f32 %v1404, %v1441
    %v1467 = vsub.f32 %v1406, %v1443
    %v1468 = vsub.f32 %v1409, %v1445
    %v1469 = vsub.f32 %v1411, %v1447
    %v1470 = vsub.f32 %v1414, %v1449
    %v1471 = vsub.f32 %v1416, %v1451
    %v1472 = vsub.f32 %v1419, %v1453
    %v1473 = vsub.f32 %v1421, %v1455
    %v1474 = vsub.f32 %v1424, %v1457
    %v1475 = vsub.f32 %v1426, %v1459
    %v1476 = vmul.f32 %v1460, 1.442695
    %v1477 = vpow.pop %v1476
    %v1478 = vmul.f32 %v1461, 1.442695
    %v1479 = vpow.pop %v1478
    %v1480 = vmul.f32 %v1462, 1.442695
    %v1481 = vpow.pop %v1480
    %v1482 = vmul.f32 %v1463, 1.442695
    %v1483 = vpow.pop %v1482
    %v1484 = vmul.f32 %v1464, 1.442695
    %v1485 = vpow.pop %v1484
    %v1486 = vmul.f32 %v1465, 1.442695
    %v1487 = vpow.pop %v1486
    %v1488 = vmul.f32 %v1466, 1.442695
    %v1489 = vpow.pop %v1488
    %v1490 = vmul.f32 %v1467, 1.442695
    %v1491 = vpow.pop %v1490
    %v1492 = vmul.f32 %v1468, 1.442695
    %v1493 = vpow.pop %v1492
    %v1494 = vmul.f32 %v1469, 1.442695
    %v1495 = vpow.pop %v1494
    %v1496 = vmul.f32 %v1470, 1.442695
    %v1497 = vpow.pop %v1496
    %v1498 = vmul.f32 %v1471, 1.442695
    %v1499 = vpow.pop %v1498
    %v1500 = vmul.f32 %v1472, 1.442695
    %v1501 = vpow.pop %v1500
    %v1502 = vmul.f32 %v1473, 1.442695
    %v1503 = vpow.pop %v1502
    %v1504 = vmul.f32 %v1474, 1.442695
    %v1505 = vpow.pop %v1504
    %v1506 = vmul.f32 %v1475, 1.442695
    %v1507 = vpow.pop %v1506
    %1508 = vadd.xlane.f32.xlu0 %v1477
    %v1509 = vpop.xlane.xlu0 %1508
    %1510 = vadd.xlane.f32.xlu0 %v1479
    %v1511 = vpop.xlane.xlu0 %1510
    %1512 = vadd.xlane.f32.xlu0 %v1481
    %v1513 = vpop.xlane.xlu0 %1512
    %1514 = vadd.xlane.f32.xlu0 %v1483
    %v1515 = vpop.xlane.xlu0 %1514
    %1516 = vadd.xlane.f32.xlu0 %v1485
    %v1517 = vpop.xlane.xlu0 %1516
    %1518 = vadd.xlane.f32.xlu0 %v1487
    %v1519 = vpop.xlane.xlu0 %1518
    %1520 = vadd.xlane.f32.xlu0 %v1489
    %v1521 = vpop.xlane.xlu0 %1520
    %1522 = vadd.xlane.f32.xlu0 %v1491
    %v1523 = vpop.xlane.xlu0 %1522
    %1524 = vadd.xlane.f32.xlu0 %v1493
    %v1525 = vpop.xlane.xlu0 %1524
    %1526 = vadd.xlane.f32.xlu0 %v1495
    %v1527 = vpop.xlane.xlu0 %1526
    %1528 = vadd.xlane.f32.xlu0 %v1497
    %v1529 = vpop.xlane.xlu0 %1528
    %1530 = vadd.xlane.f32.xlu0 %v1499
    %v1531 = vpop.xlane.xlu0 %1530
    %1532 = vadd.xlane.f32.xlu0 %v1501
    %v1533 = vpop.xlane.xlu0 %1532
    %1534 = vadd.xlane.f32.xlu0 %v1503
    %v1535 = vpop.xlane.xlu0 %1534
    %1536 = vadd.xlane.f32.xlu0 %v1505
    %v1537 = vpop.xlane.xlu0 %1536
    %1538 = vadd.xlane.f32.xlu0 %v1507
    %v1539 = vpop.xlane.xlu0 %1538
    %v1540 = vrcp.pop %v1509
    %v1541 = vrcp.pop %v1511
    %v1542 = vrcp.pop %v1513
    %v1543 = vrcp.pop %v1515
    %v1544 = vrcp.pop %v1517
    %v1545 = vrcp.pop %v1519
    %v1546 = vrcp.pop %v1521
    %v1547 = vrcp.pop %v1523
    %v1548 = vrcp.pop %v1525
    %v1549 = vrcp.pop %v1527
    %v1550 = vrcp.pop %v1529
    %v1551 = vrcp.pop %v1531
    %v1552 = vrcp.pop %v1533
    %v1553 = vrcp.pop %v1535
    %v1554 = vrcp.pop %v1537
    %v1555 = vrcp.pop %v1539
    %v1556 = vmul.f32 %v1477, %v1540
    %v1557 = vmul.f32 %v1479, %v1541
    %v1558 = vmul.f32 %v1481, %v1542
    %v1559 = vmul.f32 %v1483, %v1543
    %v1560 = vmul.f32 %v1485, %v1544
    %v1561 = vmul.f32 %v1487, %v1545
    %v1562 = vmul.f32 %v1489, %v1546
    %v1563 = vmul.f32 %v1491, %v1547
    %v1564 = vmul.f32 %v1493, %v1548
    %v1565 = vmul.f32 %v1495, %v1549
    %v1566 = vmul.f32 %v1497, %v1550
    %v1567 = vmul.f32 %v1499, %v1551
    %v1568 = vmul.f32 %v1501, %v1552
    %v1569 = vmul.f32 %v1503, %v1553
    %v1570 = vmul.f32 %v1505, %v1554
    %v1571 = vmul.f32 %v1507, %v1555
    %v1572 = vpack.c.bf16 %v1557, %v1556
    %v1573 = vpack.c.bf16 %v1559, %v1558
    %v1574 = vpack.c.bf16 %v1561, %v1560
    %v1575 = vpack.c.bf16 %v1563, %v1562
    %v1576 = vpack.c.bf16 %v1565, %v1564
    %v1577 = vpack.c.bf16 %v1567, %v1566
    %v1578 = vpack.c.bf16 %v1569, %v1568
    %v1579 = vpack.c.bf16 %v1571, %v1570
    %1580 = vrot.lane.b32.xlu0 %v260, 80
    %v1581 = vpop.permute.xlu0 %1580
    %1582 = vrot.lane.b32.xlu0 %v261, 80
    %v1583 = vpop.permute.xlu0 %1582
    %1584 = vrot.lane.b32.xlu0 %v262, 80
    %v1585 = vpop.permute.xlu0 %1584
    %1586 = vrot.lane.b32.xlu0 %v263, 80
    %v1587 = vpop.permute.xlu0 %1586
    %1588 = vrot.lane.b32.xlu0 %v264, 80
    %v1589 = vpop.permute.xlu0 %1588
    %1590 = vrot.lane.b32.xlu0 %v265, 80
    %v1591 = vpop.permute.xlu0 %1590
    %1592 = vrot.lane.b32.xlu0 %v266, 80
    %v1593 = vpop.permute.xlu0 %1592
    %1594 = vrot.lane.b32.xlu0 %v267, 80
    %v1595 = vpop.permute.xlu0 %1594
    %1604 = vmatpush.bf16.msra.mxu0 %v1595
    %1605 = vmatpush.bf16.msra.mxu0 %v1593
    %1606 = vmatpush.bf16.msra.mxu0 %v1591
    %1607 = vmatpush.bf16.msra.mxu0 %v1589
    %1608 = vmatpush.bf16.msra.mxu0 %v1587
    %1609 = vmatpush.bf16.msra.mxu0 %v1585
    %1610 = vmatpush.bf16.msra.mxu0 %v1583
    %1611 = vmatpush.bf16.msra.mxu0 %v1581
    %1612 = vmatmul.bf16.gmra.mxu0 %v1572
    %v1613 = vpop.f32.mrf.mxu0
    %v1614 = vadd.f32 0.0, %v1613
    %v1615 = vpop.f32.mrf.mxu0
    %v1616 = vadd.f32 0.0, %v1615
    %1617 = vmatmul.bf16.gmra.mxu0 %v1573
    %v1618 = vpop.f32.mrf.mxu0
    %v1619 = vadd.f32 0.0, %v1618
    %v1620 = vpop.f32.mrf.mxu0
    %v1621 = vadd.f32 0.0, %v1620
    %1622 = vmatmul.bf16.gmra.mxu0 %v1574
    %v1623 = vpop.f32.mrf.mxu0
    %v1624 = vadd.f32 0.0, %v1623
    %v1625 = vpop.f32.mrf.mxu0
    %v1626 = vadd.f32 0.0, %v1625
    %1627 = vmatmul.bf16.gmra.mxu0 %v1575
    %v1628 = vpop.f32.mrf.mxu0
    %v1629 = vadd.f32 0.0, %v1628
    %v1630 = vpop.f32.mrf.mxu0
    %v1631 = vadd.f32 0.0, %v1630
    %1632 = vmatmul.bf16.gmra.mxu0 %v1576
    %v1633 = vpop.f32.mrf.mxu0
    %v1634 = vadd.f32 0.0, %v1633
    %v1635 = vpop.f32.mrf.mxu0
    %v1636 = vadd.f32 0.0, %v1635
    %1637 = vmatmul.bf16.gmra.mxu0 %v1577
    %v1638 = vpop.f32.mrf.mxu0
    %v1639 = vadd.f32 0.0, %v1638
    %v1640 = vpop.f32.mrf.mxu0
    %v1641 = vadd.f32 0.0, %v1640
    %1642 = vmatmul.bf16.gmra.mxu0 %v1578
    %v1643 = vpop.f32.mrf.mxu0
    %v1644 = vadd.f32 0.0, %v1643
    %v1645 = vpop.f32.mrf.mxu0
    %v1646 = vadd.f32 0.0, %v1645
    %1647 = vmatmul.bf16.gmra.mxu0 %v1579
    %v1648 = vpop.f32.mrf.mxu0
    %v1649 = vadd.f32 0.0, %v1648
    %v1650 = vpop.f32.mrf.mxu0
    %v1651 = vadd.f32 0.0, %v1650
    %1652 = vdwg.mxu0
    %1653 = vrot.lane.b32.xlu0 %v244, 64
    %v1654 = vpop.permute.xlu0 %1653
    %1655 = vrot.lane.b32.xlu0 %v245, 64
    %v1656 = vpop.permute.xlu0 %1655
    %1657 = vrot.lane.b32.xlu0 %v246, 64
    %v1658 = vpop.permute.xlu0 %1657
    %1659 = vrot.lane.b32.xlu0 %v247, 64
    %v1660 = vpop.permute.xlu0 %1659
    %1661 = vrot.lane.b32.xlu0 %v248, 64
    %v1662 = vpop.permute.xlu0 %1661
    %1663 = vrot.lane.b32.xlu0 %v249, 64
    %v1664 = vpop.permute.xlu0 %1663
    %1665 = vrot.lane.b32.xlu0 %v250, 64
    %v1666 = vpop.permute.xlu0 %1665
    %1667 = vrot.lane.b32.xlu0 %v251, 64
    %v1668 = vpop.permute.xlu0 %1667
    %1669 = vrot.lane.b32.xlu0 %v252, 64
    %v1670 = vpop.permute.xlu0 %1669
    %1671 = vrot.lane.b32.xlu0 %v253, 64
    %v1672 = vpop.permute.xlu0 %1671
    %1673 = vrot.lane.b32.xlu0 %v254, 64
    %v1674 = vpop.permute.xlu0 %1673
    %1675 = vrot.lane.b32.xlu0 %v255, 64
    %v1676 = vpop.permute.xlu0 %1675
    %1677 = vrot.lane.b32.xlu0 %v256, 64
    %v1678 = vpop.permute.xlu0 %1677
    %1679 = vrot.lane.b32.xlu0 %v257, 64
    %v1680 = vpop.permute.xlu0 %1679
    %1681 = vrot.lane.b32.xlu0 %v258, 64
    %v1682 = vpop.permute.xlu0 %1681
    %1683 = vrot.lane.b32.xlu0 %v259, 64
    %v1684 = vpop.permute.xlu0 %1683
    %v1686 = vsel %vm268, %v1654, 0
    %v1689 = vsel %vm268, %v1656, 0
    %v1692 = vsel %vm268, %v1658, 0
    %v1695 = vsel %vm268, %v1660, 0
    %v1698 = vsel %vm268, %v1662, 0
    %v1701 = vsel %vm268, %v1664, 0
    %v1704 = vsel %vm268, %v1666, 0
    %v1707 = vsel %vm268, %v1668, 0
    %v1710 = vsel %vm268, %v1670, 0
    %v1713 = vsel %vm268, %v1672, 0
    %v1716 = vsel %vm268, %v1674, 0
    %v1719 = vsel %vm268, %v1676, 0
    %v1722 = vsel %vm268, %v1678, 0
    %v1725 = vsel %vm268, %v1680, 0
    %v1728 = vsel %vm268, %v1682, 0
    %v1731 = vsel %vm268, %v1684, 0
    %1733 = vmatpush.bf16.xpose.msra.mxu0 %v1731
    %1734 = vmatpush.bf16.xpose.msra.mxu0 %v1728
    %1735 = vmatpush.bf16.xpose.msra.mxu0 %v1725
    %1736 = vmatpush.bf16.xpose.msra.mxu0 %v1722
    %1737 = vmatpush.bf16.xpose.msra.mxu0 %v1719
    %1738 = vmatpush.bf16.xpose.msra.mxu0 %v1716
    %1739 = vmatpush.bf16.xpose.msra.mxu0 %v1713
    %1740 = vmatpush.bf16.xpose.msra.mxu0 %v1710
    %1741 = vmatmul.bf16.gmra.mxu0 %v1686
    %v1742 = vpop.f32.mrf.mxu0
    %v1743 = vadd.f32 %v212, %v1742
    %v1744 = vpop.f32.mrf.mxu0
    %v1745 = vadd.f32 %v213, %v1744
    %1746 = vmatmul.bf16.gmra.mxu0 %v1689
    %v1747 = vpop.f32.mrf.mxu0
    %v1748 = vadd.f32 %v214, %v1747
    %v1749 = vpop.f32.mrf.mxu0
    %v1750 = vadd.f32 %v215, %v1749
    %1751 = vmatmul.bf16.gmra.mxu0 %v1692
    %v1752 = vpop.f32.mrf.mxu0
    %v1753 = vadd.f32 %v216, %v1752
    %v1754 = vpop.f32.mrf.mxu0
    %v1755 = vadd.f32 %v217, %v1754
    %1756 = vmatmul.bf16.gmra.mxu0 %v1695
    %v1757 = vpop.f32.mrf.mxu0
    %v1758 = vadd.f32 %v218, %v1757
    %v1759 = vpop.f32.mrf.mxu0
    %v1760 = vadd.f32 %v219, %v1759
    %1761 = vmatmul.bf16.gmra.mxu0 %v1698
    %v1762 = vpop.f32.mrf.mxu0
    %v1763 = vadd.f32 %v220, %v1762
    %v1764 = vpop.f32.mrf.mxu0
    %v1765 = vadd.f32 %v221, %v1764
    %1766 = vmatmul.bf16.gmra.mxu0 %v1701
    %v1767 = vpop.f32.mrf.mxu0
    %v1768 = vadd.f32 %v222, %v1767
    %v1769 = vpop.f32.mrf.mxu0
    %v1770 = vadd.f32 %v223, %v1769
    %1771 = vmatmul.bf16.gmra.mxu0 %v1704
    %v1772 = vpop.f32.mrf.mxu0
    %v1773 = vadd.f32 %v224, %v1772
    %v1774 = vpop.f32.mrf.mxu0
    %v1775 = vadd.f32 %v225, %v1774
    %1776 = vmatmul.bf16.gmra.mxu0 %v1707
    %v1777 = vpop.f32.mrf.mxu0
    %v1778 = vadd.f32 %v226, %v1777
    %v1779 = vpop.f32.mrf.mxu0
    %v1780 = vadd.f32 %v227, %v1779
    %1781 = vdwg.mxu0
    %1782 = vmax.xlane.f32.xlu0 %v1743
    %v1783 = vpop.xlane.xlu0 %1782
    %1784 = vmax.xlane.f32.xlu0 %v1745
    %v1785 = vpop.xlane.xlu0 %1784
    %1786 = vmax.xlane.f32.xlu0 %v1748
    %v1787 = vpop.xlane.xlu0 %1786
    %1788 = vmax.xlane.f32.xlu0 %v1750
    %v1789 = vpop.xlane.xlu0 %1788
    %1790 = vmax.xlane.f32.xlu0 %v1753
    %v1791 = vpop.xlane.xlu0 %1790
    %1792 = vmax.xlane.f32.xlu0 %v1755
    %v1793 = vpop.xlane.xlu0 %1792
    %1794 = vmax.xlane.f32.xlu0 %v1758
    %v1795 = vpop.xlane.xlu0 %1794
    %1796 = vmax.xlane.f32.xlu0 %v1760
    %v1797 = vpop.xlane.xlu0 %1796
    %1798 = vmax.xlane.f32.xlu0 %v1763
    %v1799 = vpop.xlane.xlu0 %1798
    %1800 = vmax.xlane.f32.xlu0 %v1765
    %v1801 = vpop.xlane.xlu0 %1800
    %1802 = vmax.xlane.f32.xlu0 %v1768
    %v1803 = vpop.xlane.xlu0 %1802
    %1804 = vmax.xlane.f32.xlu0 %v1770
    %v1805 = vpop.xlane.xlu0 %1804
    %1806 = vmax.xlane.f32.xlu0 %v1773
    %v1807 = vpop.xlane.xlu0 %1806
    %1808 = vmax.xlane.f32.xlu0 %v1775
    %v1809 = vpop.xlane.xlu0 %1808
    %1810 = vmax.xlane.f32.xlu0 %v1778
    %v1811 = vpop.xlane.xlu0 %1810
    %1812 = vmax.xlane.f32.xlu0 %v1780
    %v1813 = vpop.xlane.xlu0 %1812
    %v1814 = vsub.f32 %v1743, %v1783
    %v1815 = vsub.f32 %v1745, %v1785
    %v1816 = vsub.f32 %v1748, %v1787
    %v1817 = vsub.f32 %v1750, %v1789
    %v1818 = vsub.f32 %v1753, %v1791
    %v1819 = vsub.f32 %v1755, %v1793
    %v1820 = vsub.f32 %v1758, %v1795
    %v1821 = vsub.f32 %v1760, %v1797
    %v1822 = vsub.f32 %v1763, %v1799
    %v1823 = vsub.f32 %v1765, %v1801
    %v1824 = vsub.f32 %v1768, %v1803
    %v1825 = vsub.f32 %v1770, %v1805
    %v1826 = vsub.f32 %v1773, %v1807
    %v1827 = vsub.f32 %v1775, %v1809
    %v1828 = vsub.f32 %v1778, %v1811
    %v1829 = vsub.f32 %v1780, %v1813
    %v1830 = vmul.f32 %v1814, 1.442695
    %v1831 = vpow.pop %v1830
    %v1832 = vmul.f32 %v1815, 1.442695
    %v1833 = vpow.pop %v1832
    %v1834 = vmul.f32 %v1816, 1.442695
    %v1835 = vpow.pop %v1834
    %v1836 = vmul.f32 %v1817, 1.442695
    %v1837 = vpow.pop %v1836
    %v1838 = vmul.f32 %v1818, 1.442695
    %v1839 = vpow.pop %v1838
    %v1840 = vmul.f32 %v1819, 1.442695
    %v1841 = vpow.pop %v1840
    %v1842 = vmul.f32 %v1820, 1.442695
    %v1843 = vpow.pop %v1842
    %v1844 = vmul.f32 %v1821, 1.442695
    %v1845 = vpow.pop %v1844
    %v1846 = vmul.f32 %v1822, 1.442695
    %v1847 = vpow.pop %v1846
    %v1848 = vmul.f32 %v1823, 1.442695
    %v1849 = vpow.pop %v1848
    %v1850 = vmul.f32 %v1824, 1.442695
    %v1851 = vpow.pop %v1850
    %v1852 = vmul.f32 %v1825, 1.442695
    %v1853 = vpow.pop %v1852
    %v1854 = vmul.f32 %v1826, 1.442695
    %v1855 = vpow.pop %v1854
    %v1856 = vmul.f32 %v1827, 1.442695
    %v1857 = vpow.pop %v1856
    %v1858 = vmul.f32 %v1828, 1.442695
    %v1859 = vpow.pop %v1858
    %v1860 = vmul.f32 %v1829, 1.442695
    %v1861 = vpow.pop %v1860
    %1862 = vadd.xlane.f32.xlu0 %v1831
    %v1863 = vpop.xlane.xlu0 %1862
    %1864 = vadd.xlane.f32.xlu0 %v1833
    %v1865 = vpop.xlane.xlu0 %1864
    %1866 = vadd.xlane.f32.xlu0 %v1835
    %v1867 = vpop.xlane.xlu0 %1866
    %1868 = vadd.xlane.f32.xlu0 %v1837
    %v1869 = vpop.xlane.xlu0 %1868
    %1870 = vadd.xlane.f32.xlu0 %v1839
    %v1871 = vpop.xlane.xlu0 %1870
    %1872 = vadd.xlane.f32.xlu0 %v1841
    %v1873 = vpop.xlane.xlu0 %1872
    %1874 = vadd.xlane.f32.xlu0 %v1843
    %v1875 = vpop.xlane.xlu0 %1874
    %1876 = vadd.xlane.f32.xlu0 %v1845
    %v1877 = vpop.xlane.xlu0 %1876
    %1878 = vadd.xlane.f32.xlu0 %v1847
    %v1879 = vpop.xlane.xlu0 %1878
    %1880 = vadd.xlane.f32.xlu0 %v1849
    %v1881 = vpop.xlane.xlu0 %1880
    %1882 = vadd.xlane.f32.xlu0 %v1851
    %v1883 = vpop.xlane.xlu0 %1882
    %1884 = vadd.xlane.f32.xlu0 %v1853
    %v1885 = vpop.xlane.xlu0 %1884
    %1886 = vadd.xlane.f32.xlu0 %v1855
    %v1887 = vpop.xlane.xlu0 %1886
    %1888 = vadd.xlane.f32.xlu0 %v1857
    %v1889 = vpop.xlane.xlu0 %1888
    %1890 = vadd.xlane.f32.xlu0 %v1859
    %v1891 = vpop.xlane.xlu0 %1890
    %1892 = vadd.xlane.f32.xlu0 %v1861
    %v1893 = vpop.xlane.xlu0 %1892
    %v1894 = vrcp.pop %v1863
    %v1895 = vrcp.pop %v1865
    %v1896 = vrcp.pop %v1867
    %v1897 = vrcp.pop %v1869
    %v1898 = vrcp.pop %v1871
    %v1899 = vrcp.pop %v1873
    %v1900 = vrcp.pop %v1875
    %v1901 = vrcp.pop %v1877
    %v1902 = vrcp.pop %v1879
    %v1903 = vrcp.pop %v1881
    %v1904 = vrcp.pop %v1883
    %v1905 = vrcp.pop %v1885
    %v1906 = vrcp.pop %v1887
    %v1907 = vrcp.pop %v1889
    %v1908 = vrcp.pop %v1891
    %v1909 = vrcp.pop %v1893
    %v1910 = vmul.f32 %v1831, %v1894
    %v1911 = vmul.f32 %v1833, %v1895
    %v1912 = vmul.f32 %v1835, %v1896
    %v1913 = vmul.f32 %v1837, %v1897
    %v1914 = vmul.f32 %v1839, %v1898
    %v1915 = vmul.f32 %v1841, %v1899
    %v1916 = vmul.f32 %v1843, %v1900
    %v1917 = vmul.f32 %v1845, %v1901
    %v1918 = vmul.f32 %v1847, %v1902
    %v1919 = vmul.f32 %v1849, %v1903
    %v1920 = vmul.f32 %v1851, %v1904
    %v1921 = vmul.f32 %v1853, %v1905
    %v1922 = vmul.f32 %v1855, %v1906
    %v1923 = vmul.f32 %v1857, %v1907
    %v1924 = vmul.f32 %v1859, %v1908
    %v1925 = vmul.f32 %v1861, %v1909
    %v1926 = vpack.c.bf16 %v1911, %v1910
    %v1927 = vpack.c.bf16 %v1913, %v1912
    %v1928 = vpack.c.bf16 %v1915, %v1914
    %v1929 = vpack.c.bf16 %v1917, %v1916
    %v1930 = vpack.c.bf16 %v1919, %v1918
    %v1931 = vpack.c.bf16 %v1921, %v1920
    %v1932 = vpack.c.bf16 %v1923, %v1922
    %v1933 = vpack.c.bf16 %v1925, %v1924
    %1934 = vrot.lane.b32.xlu0 %v260, 64
    %v1935 = vpop.permute.xlu0 %1934
    %1936 = vrot.lane.b32.xlu0 %v261, 64
    %v1937 = vpop.permute.xlu0 %1936
    %1938 = vrot.lane.b32.xlu0 %v262, 64
    %v1939 = vpop.permute.xlu0 %1938
    %1940 = vrot.lane.b32.xlu0 %v263, 64
    %v1941 = vpop.permute.xlu0 %1940
    %1942 = vrot.lane.b32.xlu0 %v264, 64
    %v1943 = vpop.permute.xlu0 %1942
    %1944 = vrot.lane.b32.xlu0 %v265, 64
    %v1945 = vpop.permute.xlu0 %1944
    %1946 = vrot.lane.b32.xlu0 %v266, 64
    %v1947 = vpop.permute.xlu0 %1946
    %1948 = vrot.lane.b32.xlu0 %v267, 64
    %v1949 = vpop.permute.xlu0 %1948
    %1958 = vmatpush.bf16.msra.mxu0 %v1949
    %1959 = vmatpush.bf16.msra.mxu0 %v1947
    %1960 = vmatpush.bf16.msra.mxu0 %v1945
    %1961 = vmatpush.bf16.msra.mxu0 %v1943
    %1962 = vmatpush.bf16.msra.mxu0 %v1941
    %1963 = vmatpush.bf16.msra.mxu0 %v1939
    %1964 = vmatpush.bf16.msra.mxu0 %v1937
    %1965 = vmatpush.bf16.msra.mxu0 %v1935
    %1966 = vmatmul.bf16.gmra.mxu0 %v1926
    %v1967 = vpop.f32.mrf.mxu0
    %v1968 = vadd.f32 0.0, %v1967
    %v1969 = vpop.f32.mrf.mxu0
    %v1970 = vadd.f32 0.0, %v1969
    %1971 = vmatmul.bf16.gmra.mxu0 %v1927
    %v1972 = vpop.f32.mrf.mxu0
    %v1973 = vadd.f32 0.0, %v1972
    %v1974 = vpop.f32.mrf.mxu0
    %v1975 = vadd.f32 0.0, %v1974
    %1976 = vmatmul.bf16.gmra.mxu0 %v1928
    %v1977 = vpop.f32.mrf.mxu0
    %v1978 = vadd.f32 0.0, %v1977
    %v1979 = vpop.f32.mrf.mxu0
    %v1980 = vadd.f32 0.0, %v1979
    %1981 = vmatmul.bf16.gmra.mxu0 %v1929
    %v1982 = vpop.f32.mrf.mxu0
    %v1983 = vadd.f32 0.0, %v1982
    %v1984 = vpop.f32.mrf.mxu0
    %v1985 = vadd.f32 0.0, %v1984
    %1986 = vmatmul.bf16.gmra.mxu0 %v1930
    %v1987 = vpop.f32.mrf.mxu0
    %v1988 = vadd.f32 0.0, %v1987
    %v1989 = vpop.f32.mrf.mxu0
    %v1990 = vadd.f32 0.0, %v1989
    %1991 = vmatmul.bf16.gmra.mxu0 %v1931
    %v1992 = vpop.f32.mrf.mxu0
    %v1993 = vadd.f32 0.0, %v1992
    %v1994 = vpop.f32.mrf.mxu0
    %v1995 = vadd.f32 0.0, %v1994
    %1996 = vmatmul.bf16.gmra.mxu0 %v1932
    %v1997 = vpop.f32.mrf.mxu0
    %v1998 = vadd.f32 0.0, %v1997
    %v1999 = vpop.f32.mrf.mxu0
    %v2000 = vadd.f32 0.0, %v1999
    %2001 = vmatmul.bf16.gmra.mxu0 %v1933
    %v2002 = vpop.f32.mrf.mxu0
    %v2003 = vadd.f32 0.0, %v2002
    %v2004 = vpop.f32.mrf.mxu0
    %v2005 = vadd.f32 0.0, %v2004
    %2006 = vdwg.mxu0
    %2007 = vrot.lane.b32.xlu0 %v244, 48
    %v2008 = vpop.permute.xlu0 %2007
    %2009 = vrot.lane.b32.xlu0 %v245, 48
    %v2010 = vpop.permute.xlu0 %2009
    %2011 = vrot.lane.b32.xlu0 %v246, 48
    %v2012 = vpop.permute.xlu0 %2011
    %2013 = vrot.lane.b32.xlu0 %v247, 48
    %v2014 = vpop.permute.xlu0 %2013
    %2015 = vrot.lane.b32.xlu0 %v248, 48
    %v2016 = vpop.permute.xlu0 %2015
    %2017 = vrot.lane.b32.xlu0 %v249, 48
    %v2018 = vpop.permute.xlu0 %2017
    %2019 = vrot.lane.b32.xlu0 %v250, 48
    %v2020 = vpop.permute.xlu0 %2019
    %2021 = vrot.lane.b32.xlu0 %v251, 48
    %v2022 = vpop.permute.xlu0 %2021
    %2023 = vrot.lane.b32.xlu0 %v252, 48
    %v2024 = vpop.permute.xlu0 %2023
    %2025 = vrot.lane.b32.xlu0 %v253, 48
    %v2026 = vpop.permute.xlu0 %2025
    %2027 = vrot.lane.b32.xlu0 %v254, 48
    %v2028 = vpop.permute.xlu0 %2027
    %2029 = vrot.lane.b32.xlu0 %v255, 48
    %v2030 = vpop.permute.xlu0 %2029
    %2031 = vrot.lane.b32.xlu0 %v256, 48
    %v2032 = vpop.permute.xlu0 %2031
    %2033 = vrot.lane.b32.xlu0 %v257, 48
    %v2034 = vpop.permute.xlu0 %2033
    %2035 = vrot.lane.b32.xlu0 %v258, 48
    %v2036 = vpop.permute.xlu0 %2035
    %2037 = vrot.lane.b32.xlu0 %v259, 48
    %v2038 = vpop.permute.xlu0 %2037
    %v2040 = vsel %vm268, %v2008, 0
    %v2043 = vsel %vm268, %v2010, 0
    %v2046 = vsel %vm268, %v2012, 0
    %v2049 = vsel %vm268, %v2014, 0
    %v2052 = vsel %vm268, %v2016, 0
    %v2055 = vsel %vm268, %v2018, 0
    %v2058 = vsel %vm268, %v2020, 0
    %v2061 = vsel %vm268, %v2022, 0
    %v2064 = vsel %vm268, %v2024, 0
    %v2067 = vsel %vm268, %v2026, 0
    %v2070 = vsel %vm268, %v2028, 0
    %v2073 = vsel %vm268, %v2030, 0
    %v2076 = vsel %vm268, %v2032, 0
    %v2079 = vsel %vm268, %v2034, 0
    %v2082 = vsel %vm268, %v2036, 0
    %v2085 = vsel %vm268, %v2038, 0
    %2087 = vmatpush.bf16.xpose.msra.mxu0 %v2085
    %2088 = vmatpush.bf16.xpose.msra.mxu0 %v2082
    %2089 = vmatpush.bf16.xpose.msra.mxu0 %v2079
    %2090 = vmatpush.bf16.xpose.msra.mxu0 %v2076
    %2091 = vmatpush.bf16.xpose.msra.mxu0 %v2073
    %2092 = vmatpush.bf16.xpose.msra.mxu0 %v2070
    %2093 = vmatpush.bf16.xpose.msra.mxu0 %v2067
    %2094 = vmatpush.bf16.xpose.msra.mxu0 %v2064
    %2095 = vmatmul.bf16.gmra.mxu0 %v2040
    %v2096 = vpop.f32.mrf.mxu0
    %v2097 = vadd.f32 %v212, %v2096
    %v2098 = vpop.f32.mrf.mxu0
    %v2099 = vadd.f32 %v213, %v2098
    %2100 = vmatmul.bf16.gmra.mxu0 %v2043
    %v2101 = vpop.f32.mrf.mxu0
    %v2102 = vadd.f32 %v214, %v2101
    %v2103 = vpop.f32.mrf.mxu0
    %v2104 = vadd.f32 %v215, %v2103
    %2105 = vmatmul.bf16.gmra.mxu0 %v2046
    %v2106 = vpop.f32.mrf.mxu0
    %v2107 = vadd.f32 %v216, %v2106
    %v2108 = vpop.f32.mrf.mxu0
    %v2109 = vadd.f32 %v217, %v2108
    %2110 = vmatmul.bf16.gmra.mxu0 %v2049
    %v2111 = vpop.f32.mrf.mxu0
    %v2112 = vadd.f32 %v218, %v2111
    %v2113 = vpop.f32.mrf.mxu0
    %v2114 = vadd.f32 %v219, %v2113
    %2115 = vmatmul.bf16.gmra.mxu0 %v2052
    %v2116 = vpop.f32.mrf.mxu0
    %v2117 = vadd.f32 %v220, %v2116
    %v2118 = vpop.f32.mrf.mxu0
    %v2119 = vadd.f32 %v221, %v2118
    %2120 = vmatmul.bf16.gmra.mxu0 %v2055
    %v2121 = vpop.f32.mrf.mxu0
    %v2122 = vadd.f32 %v222, %v2121
    %v2123 = vpop.f32.mrf.mxu0
    %v2124 = vadd.f32 %v223, %v2123
    %2125 = vmatmul.bf16.gmra.mxu0 %v2058
    %v2126 = vpop.f32.mrf.mxu0
    %v2127 = vadd.f32 %v224, %v2126
    %v2128 = vpop.f32.mrf.mxu0
    %v2129 = vadd.f32 %v225, %v2128
    %2130 = vmatmul.bf16.gmra.mxu0 %v2061
    %v2131 = vpop.f32.mrf.mxu0
    %v2132 = vadd.f32 %v226, %v2131
    %v2133 = vpop.f32.mrf.mxu0
    %v2134 = vadd.f32 %v227, %v2133
    %2135 = vdwg.mxu0
    %2136 = vmax.xlane.f32.xlu0 %v2097
    %v2137 = vpop.xlane.xlu0 %2136
    %2138 = vmax.xlane.f32.xlu0 %v2099
    %v2139 = vpop.xlane.xlu0 %2138
    %2140 = vmax.xlane.f32.xlu0 %v2102
    %v2141 = vpop.xlane.xlu0 %2140
    %2142 = vmax.xlane.f32.xlu0 %v2104
    %v2143 = vpop.xlane.xlu0 %2142
    %2144 = vmax.xlane.f32.xlu0 %v2107
    %v2145 = vpop.xlane.xlu0 %2144
    %2146 = vmax.xlane.f32.xlu0 %v2109
    %v2147 = vpop.xlane.xlu0 %2146
    %2148 = vmax.xlane.f32.xlu0 %v2112
    %v2149 = vpop.xlane.xlu0 %2148
    %2150 = vmax.xlane.f32.xlu0 %v2114
    %v2151 = vpop.xlane.xlu0 %2150
    %2152 = vmax.xlane.f32.xlu0 %v2117
    %v2153 = vpop.xlane.xlu0 %2152
    %2154 = vmax.xlane.f32.xlu0 %v2119
    %v2155 = vpop.xlane.xlu0 %2154
    %2156 = vmax.xlane.f32.xlu0 %v2122
    %v2157 = vpop.xlane.xlu0 %2156
    %2158 = vmax.xlane.f32.xlu0 %v2124
    %v2159 = vpop.xlane.xlu0 %2158
    %2160 = vmax.xlane.f32.xlu0 %v2127
    %v2161 = vpop.xlane.xlu0 %2160
    %2162 = vmax.xlane.f32.xlu0 %v2129
    %v2163 = vpop.xlane.xlu0 %2162
    %2164 = vmax.xlane.f32.xlu0 %v2132
    %v2165 = vpop.xlane.xlu0 %2164
    %2166 = vmax.xlane.f32.xlu0 %v2134
    %v2167 = vpop.xlane.xlu0 %2166
    %v2168 = vsub.f32 %v2097, %v2137
    %v2169 = vsub.f32 %v2099, %v2139
    %v2170 = vsub.f32 %v2102, %v2141
    %v2171 = vsub.f32 %v2104, %v2143
    %v2172 = vsub.f32 %v2107, %v2145
    %v2173 = vsub.f32 %v2109, %v2147
    %v2174 = vsub.f32 %v2112, %v2149
    %v2175 = vsub.f32 %v2114, %v2151
    %v2176 = vsub.f32 %v2117, %v2153
    %v2177 = vsub.f32 %v2119, %v2155
    %v2178 = vsub.f32 %v2122, %v2157
    %v2179 = vsub.f32 %v2124, %v2159
    %v2180 = vsub.f32 %v2127, %v2161
    %v2181 = vsub.f32 %v2129, %v2163
    %v2182 = vsub.f32 %v2132, %v2165
    %v2183 = vsub.f32 %v2134, %v2167
    %v2184 = vmul.f32 %v2168, 1.442695
    %v2185 = vpow.pop %v2184
    %v2186 = vmul.f32 %v2169, 1.442695
    %v2187 = vpow.pop %v2186
    %v2188 = vmul.f32 %v2170, 1.442695
    %v2189 = vpow.pop %v2188
    %v2190 = vmul.f32 %v2171, 1.442695
    %v2191 = vpow.pop %v2190
    %v2192 = vmul.f32 %v2172, 1.442695
    %v2193 = vpow.pop %v2192
    %v2194 = vmul.f32 %v2173, 1.442695
    %v2195 = vpow.pop %v2194
    %v2196 = vmul.f32 %v2174, 1.442695
    %v2197 = vpow.pop %v2196
    %v2198 = vmul.f32 %v2175, 1.442695
    %v2199 = vpow.pop %v2198
    %v2200 = vmul.f32 %v2176, 1.442695
    %v2201 = vpow.pop %v2200
    %v2202 = vmul.f32 %v2177, 1.442695
    %v2203 = vpow.pop %v2202
    %v2204 = vmul.f32 %v2178, 1.442695
    %v2205 = vpow.pop %v2204
    %v2206 = vmul.f32 %v2179, 1.442695
    %v2207 = vpow.pop %v2206
    %v2208 = vmul.f32 %v2180, 1.442695
    %v2209 = vpow.pop %v2208
    %v2210 = vmul.f32 %v2181, 1.442695
    %v2211 = vpow.pop %v2210
    %v2212 = vmul.f32 %v2182, 1.442695
    %v2213 = vpow.pop %v2212
    %v2214 = vmul.f32 %v2183, 1.442695
    %v2215 = vpow.pop %v2214
    %2216 = vadd.xlane.f32.xlu0 %v2185
    %v2217 = vpop.xlane.xlu0 %2216
    %2218 = vadd.xlane.f32.xlu0 %v2187
    %v2219 = vpop.xlane.xlu0 %2218
    %2220 = vadd.xlane.f32.xlu0 %v2189
    %v2221 = vpop.xlane.xlu0 %2220
    %2222 = vadd.xlane.f32.xlu0 %v2191
    %v2223 = vpop.xlane.xlu0 %2222
    %2224 = vadd.xlane.f32.xlu0 %v2193
    %v2225 = vpop.xlane.xlu0 %2224
    %2226 = vadd.xlane.f32.xlu0 %v2195
    %v2227 = vpop.xlane.xlu0 %2226
    %2228 = vadd.xlane.f32.xlu0 %v2197
    %v2229 = vpop.xlane.xlu0 %2228
    %2230 = vadd.xlane.f32.xlu0 %v2199
    %v2231 = vpop.xlane.xlu0 %2230
    %2232 = vadd.xlane.f32.xlu0 %v2201
    %v2233 = vpop.xlane.xlu0 %2232
    %2234 = vadd.xlane.f32.xlu0 %v2203
    %v2235 = vpop.xlane.xlu0 %2234
    %2236 = vadd.xlane.f32.xlu0 %v2205
    %v2237 = vpop.xlane.xlu0 %2236
    %2238 = vadd.xlane.f32.xlu0 %v2207
    %v2239 = vpop.xlane.xlu0 %2238
    %2240 = vadd.xlane.f32.xlu0 %v2209
    %v2241 = vpop.xlane.xlu0 %2240
    %2242 = vadd.xlane.f32.xlu0 %v2211
    %v2243 = vpop.xlane.xlu0 %2242
    %2244 = vadd.xlane.f32.xlu0 %v2213
    %v2245 = vpop.xlane.xlu0 %2244
    %2246 = vadd.xlane.f32.xlu0 %v2215
    %v2247 = vpop.xlane.xlu0 %2246
    %v2248 = vrcp.pop %v2217
    %v2249 = vrcp.pop %v2219
    %v2250 = vrcp.pop %v2221
    %v2251 = vrcp.pop %v2223
    %v2252 = vrcp.pop %v2225
    %v2253 = vrcp.pop %v2227
    %v2254 = vrcp.pop %v2229
    %v2255 = vrcp.pop %v2231
    %v2256 = vrcp.pop %v2233
    %v2257 = vrcp.pop %v2235
    %v2258 = vrcp.pop %v2237
    %v2259 = vrcp.pop %v2239
    %v2260 = vrcp.pop %v2241
    %v2261 = vrcp.pop %v2243
    %v2262 = vrcp.pop %v2245
    %v2263 = vrcp.pop %v2247
    %v2264 = vmul.f32 %v2185, %v2248
    %v2265 = vmul.f32 %v2187, %v2249
    %v2266 = vmul.f32 %v2189, %v2250
    %v2267 = vmul.f32 %v2191, %v2251
    %v2268 = vmul.f32 %v2193, %v2252
    %v2269 = vmul.f32 %v2195, %v2253
    %v2270 = vmul.f32 %v2197, %v2254
    %v2271 = vmul.f32 %v2199, %v2255
    %v2272 = vmul.f32 %v2201, %v2256
    %v2273 = vmul.f32 %v2203, %v2257
    %v2274 = vmul.f32 %v2205, %v2258
    %v2275 = vmul.f32 %v2207, %v2259
    %v2276 = vmul.f32 %v2209, %v2260
    %v2277 = vmul.f32 %v2211, %v2261
    %v2278 = vmul.f32 %v2213, %v2262
    %v2279 = vmul.f32 %v2215, %v2263
    %v2280 = vpack.c.bf16 %v2265, %v2264
    %v2281 = vpack.c.bf16 %v2267, %v2266
    %v2282 = vpack.c.bf16 %v2269, %v2268
    %v2283 = vpack.c.bf16 %v2271, %v2270
    %v2284 = vpack.c.bf16 %v2273, %v2272
    %v2285 = vpack.c.bf16 %v2275, %v2274
    %v2286 = vpack.c.bf16 %v2277, %v2276
    %v2287 = vpack.c.bf16 %v2279, %v2278
    %2288 = vrot.lane.b32.xlu0 %v260, 48
    %v2289 = vpop.permute.xlu0 %2288
    %2290 = vrot.lane.b32.xlu0 %v261, 48
    %v2291 = vpop.permute.xlu0 %2290
    %2292 = vrot.lane.b32.xlu0 %v262, 48
    %v2293 = vpop.permute.xlu0 %2292
    %2294 = vrot.lane.b32.xlu0 %v263, 48
    %v2295 = vpop.permute.xlu0 %2294
    %2296 = vrot.lane.b32.xlu0 %v264, 48
    %v2297 = vpop.permute.xlu0 %2296
    %2298 = vrot.lane.b32.xlu0 %v265, 48
    %v2299 = vpop.permute.xlu0 %2298
    %2300 = vrot.lane.b32.xlu0 %v266, 48
    %v2301 = vpop.permute.xlu0 %2300
    %2302 = vrot.lane.b32.xlu0 %v267, 48
    %v2303 = vpop.permute.xlu0 %2302
    %2312 = vmatpush.bf16.msra.mxu0 %v2303
    %2313 = vmatpush.bf16.msra.mxu0 %v2301
    %2314 = vmatpush.bf16.msra.mxu0 %v2299
    %2315 = vmatpush.bf16.msra.mxu0 %v2297
    %2316 = vmatpush.bf16.msra.mxu0 %v2295
    %2317 = vmatpush.bf16.msra.mxu0 %v2293
    %2318 = vmatpush.bf16.msra.mxu0 %v2291
    %2319 = vmatpush.bf16.msra.mxu0 %v2289
    %2320 = vmatmul.bf16.gmra.mxu0 %v2280
    %v2321 = vpop.f32.mrf.mxu0
    %v2322 = vadd.f32 0.0, %v2321
    %v2323 = vpop.f32.mrf.mxu0
    %v2324 = vadd.f32 0.0, %v2323
    %2325 = vmatmul.bf16.gmra.mxu0 %v2281
    %v2326 = vpop.f32.mrf.mxu0
    %v2327 = vadd.f32 0.0, %v2326
    %v2328 = vpop.f32.mrf.mxu0
    %v2329 = vadd.f32 0.0, %v2328
    %2330 = vmatmul.bf16.gmra.mxu0 %v2282
    %v2331 = vpop.f32.mrf.mxu0
    %v2332 = vadd.f32 0.0, %v2331
    %v2333 = vpop.f32.mrf.mxu0
    %v2334 = vadd.f32 0.0, %v2333
    %2335 = vmatmul.bf16.gmra.mxu0 %v2283
    %v2336 = vpop.f32.mrf.mxu0
    %v2337 = vadd.f32 0.0, %v2336
    %v2338 = vpop.f32.mrf.mxu0
    %v2339 = vadd.f32 0.0, %v2338
    %2340 = vmatmul.bf16.gmra.mxu0 %v2284
    %v2341 = vpop.f32.mrf.mxu0
    %v2342 = vadd.f32 0.0, %v2341
    %v2343 = vpop.f32.mrf.mxu0
    %v2344 = vadd.f32 0.0, %v2343
    %2345 = vmatmul.bf16.gmra.mxu0 %v2285
    %v2346 = vpop.f32.mrf.mxu0
    %v2347 = vadd.f32 0.0, %v2346
    %v2348 = vpop.f32.mrf.mxu0
    %v2349 = vadd.f32 0.0, %v2348
    %2350 = vmatmul.bf16.gmra.mxu0 %v2286
    %v2351 = vpop.f32.mrf.mxu0
    %v2352 = vadd.f32 0.0, %v2351
    %v2353 = vpop.f32.mrf.mxu0
    %v2354 = vadd.f32 0.0, %v2353
    %2355 = vmatmul.bf16.gmra.mxu0 %v2287
    %v2356 = vpop.f32.mrf.mxu0
    %v2357 = vadd.f32 0.0, %v2356
    %v2358 = vpop.f32.mrf.mxu0
    %v2359 = vadd.f32 0.0, %v2358
    %2360 = vdwg.mxu0
    %2361 = vrot.lane.b32.xlu0 %v244, 32
    %v2362 = vpop.permute.xlu0 %2361
    %2363 = vrot.lane.b32.xlu0 %v245, 32
    %v2364 = vpop.permute.xlu0 %2363
    %2365 = vrot.lane.b32.xlu0 %v246, 32
    %v2366 = vpop.permute.xlu0 %2365
    %2367 = vrot.lane.b32.xlu0 %v247, 32
    %v2368 = vpop.permute.xlu0 %2367
    %2369 = vrot.lane.b32.xlu0 %v248, 32
    %v2370 = vpop.permute.xlu0 %2369
    %2371 = vrot.lane.b32.xlu0 %v249, 32
    %v2372 = vpop.permute.xlu0 %2371
    %2373 = vrot.lane.b32.xlu0 %v250, 32
    %v2374 = vpop.permute.xlu0 %2373
    %2375 = vrot.lane.b32.xlu0 %v251, 32
    %v2376 = vpop.permute.xlu0 %2375
    %2377 = vrot.lane.b32.xlu0 %v252, 32
    %v2378 = vpop.permute.xlu0 %2377
    %2379 = vrot.lane.b32.xlu0 %v253, 32
    %v2380 = vpop.permute.xlu0 %2379
    %2381 = vrot.lane.b32.xlu0 %v254, 32
    %v2382 = vpop.permute.xlu0 %2381
    %2383 = vrot.lane.b32.xlu0 %v255, 32
    %v2384 = vpop.permute.xlu0 %2383
    %2385 = vrot.lane.b32.xlu0 %v256, 32
    %v2386 = vpop.permute.xlu0 %2385
    %2387 = vrot.lane.b32.xlu0 %v257, 32
    %v2388 = vpop.permute.xlu0 %2387
    %2389 = vrot.lane.b32.xlu0 %v258, 32
    %v2390 = vpop.permute.xlu0 %2389
    %2391 = vrot.lane.b32.xlu0 %v259, 32
    %v2392 = vpop.permute.xlu0 %2391
    %v2394 = vsel %vm268, %v2362, 0
    %v2397 = vsel %vm268, %v2364, 0
    %v2400 = vsel %vm268, %v2366, 0
    %v2403 = vsel %vm268, %v2368, 0
    %v2406 = vsel %vm268, %v2370, 0
    %v2409 = vsel %vm268, %v2372, 0
    %v2412 = vsel %vm268, %v2374, 0
    %v2415 = vsel %vm268, %v2376, 0
    %v2418 = vsel %vm268, %v2378, 0
    %v2421 = vsel %vm268, %v2380, 0
    %v2424 = vsel %vm268, %v2382, 0
    %v2427 = vsel %vm268, %v2384, 0
    %v2430 = vsel %vm268, %v2386, 0
    %v2433 = vsel %vm268, %v2388, 0
    %v2436 = vsel %vm268, %v2390, 0
    %v2439 = vsel %vm268, %v2392, 0
    %2441 = vmatpush.bf16.xpose.msra.mxu0 %v2439
    %2442 = vmatpush.bf16.xpose.msra.mxu0 %v2436
    %2443 = vmatpush.bf16.xpose.msra.mxu0 %v2433
    %2444 = vmatpush.bf16.xpose.msra.mxu0 %v2430
    %2445 = vmatpush.bf16.xpose.msra.mxu0 %v2427
    %2446 = vmatpush.bf16.xpose.msra.mxu0 %v2424
    %2447 = vmatpush.bf16.xpose.msra.mxu0 %v2421
    %2448 = vmatpush.bf16.xpose.msra.mxu0 %v2418
    %2449 = vmatmul.bf16.gmra.mxu0 %v2394
    %v2450 = vpop.f32.mrf.mxu0
    %v2451 = vadd.f32 %v212, %v2450
    %v2452 = vpop.f32.mrf.mxu0
    %v2453 = vadd.f32 %v213, %v2452
    %2454 = vmatmul.bf16.gmra.mxu0 %v2397
    %v2455 = vpop.f32.mrf.mxu0
    %v2456 = vadd.f32 %v214, %v2455
    %v2457 = vpop.f32.mrf.mxu0
    %v2458 = vadd.f32 %v215, %v2457
    %2459 = vmatmul.bf16.gmra.mxu0 %v2400
    %v2460 = vpop.f32.mrf.mxu0
    %v2461 = vadd.f32 %v216, %v2460
    %v2462 = vpop.f32.mrf.mxu0
    %v2463 = vadd.f32 %v217, %v2462
    %2464 = vmatmul.bf16.gmra.mxu0 %v2403
    %v2465 = vpop.f32.mrf.mxu0
    %v2466 = vadd.f32 %v218, %v2465
    %v2467 = vpop.f32.mrf.mxu0
    %v2468 = vadd.f32 %v219, %v2467
    %2469 = vmatmul.bf16.gmra.mxu0 %v2406
    %v2470 = vpop.f32.mrf.mxu0
    %v2471 = vadd.f32 %v220, %v2470
    %v2472 = vpop.f32.mrf.mxu0
    %v2473 = vadd.f32 %v221, %v2472
    %2474 = vmatmul.bf16.gmra.mxu0 %v2409
    %v2475 = vpop.f32.mrf.mxu0
    %v2476 = vadd.f32 %v222, %v2475
    %v2477 = vpop.f32.mrf.mxu0
    %v2478 = vadd.f32 %v223, %v2477
    %2479 = vmatmul.bf16.gmra.mxu0 %v2412
    %v2480 = vpop.f32.mrf.mxu0
    %v2481 = vadd.f32 %v224, %v2480
    %v2482 = vpop.f32.mrf.mxu0
    %v2483 = vadd.f32 %v225, %v2482
    %2484 = vmatmul.bf16.gmra.mxu0 %v2415
    %v2485 = vpop.f32.mrf.mxu0
    %v2486 = vadd.f32 %v226, %v2485
    %v2487 = vpop.f32.mrf.mxu0
    %v2488 = vadd.f32 %v227, %v2487
    %2489 = vdwg.mxu0
    %2490 = vmax.xlane.f32.xlu0 %v2451
    %v2491 = vpop.xlane.xlu0 %2490
    %2492 = vmax.xlane.f32.xlu0 %v2453
    %v2493 = vpop.xlane.xlu0 %2492
    %2494 = vmax.xlane.f32.xlu0 %v2456
    %v2495 = vpop.xlane.xlu0 %2494
    %2496 = vmax.xlane.f32.xlu0 %v2458
    %v2497 = vpop.xlane.xlu0 %2496
    %2498 = vmax.xlane.f32.xlu0 %v2461
    %v2499 = vpop.xlane.xlu0 %2498
    %2500 = vmax.xlane.f32.xlu0 %v2463
    %v2501 = vpop.xlane.xlu0 %2500
    %2502 = vmax.xlane.f32.xlu0 %v2466
    %v2503 = vpop.xlane.xlu0 %2502
    %2504 = vmax.xlane.f32.xlu0 %v2468
    %v2505 = vpop.xlane.xlu0 %2504
    %2506 = vmax.xlane.f32.xlu0 %v2471
    %v2507 = vpop.xlane.xlu0 %2506
    %2508 = vmax.xlane.f32.xlu0 %v2473
    %v2509 = vpop.xlane.xlu0 %2508
    %2510 = vmax.xlane.f32.xlu0 %v2476
    %v2511 = vpop.xlane.xlu0 %2510
    %2512 = vmax.xlane.f32.xlu0 %v2478
    %v2513 = vpop.xlane.xlu0 %2512
    %2514 = vmax.xlane.f32.xlu0 %v2481
    %v2515 = vpop.xlane.xlu0 %2514
    %2516 = vmax.xlane.f32.xlu0 %v2483
    %v2517 = vpop.xlane.xlu0 %2516
    %2518 = vmax.xlane.f32.xlu0 %v2486
    %v2519 = vpop.xlane.xlu0 %2518
    %2520 = vmax.xlane.f32.xlu0 %v2488
    %v2521 = vpop.xlane.xlu0 %2520
    %v2522 = vsub.f32 %v2451, %v2491
    %v2523 = vsub.f32 %v2453, %v2493
    %v2524 = vsub.f32 %v2456, %v2495
    %v2525 = vsub.f32 %v2458, %v2497
    %v2526 = vsub.f32 %v2461, %v2499
    %v2527 = vsub.f32 %v2463, %v2501
    %v2528 = vsub.f32 %v2466, %v2503
    %v2529 = vsub.f32 %v2468, %v2505
    %v2530 = vsub.f32 %v2471, %v2507
    %v2531 = vsub.f32 %v2473, %v2509
    %v2532 = vsub.f32 %v2476, %v2511
    %v2533 = vsub.f32 %v2478, %v2513
    %v2534 = vsub.f32 %v2481, %v2515
    %v2535 = vsub.f32 %v2483, %v2517
    %v2536 = vsub.f32 %v2486, %v2519
    %v2537 = vsub.f32 %v2488, %v2521
    %v2538 = vmul.f32 %v2522, 1.442695
    %v2539 = vpow.pop %v2538
    %v2540 = vmul.f32 %v2523, 1.442695
    %v2541 = vpow.pop %v2540
    %v2542 = vmul.f32 %v2524, 1.442695
    %v2543 = vpow.pop %v2542
    %v2544 = vmul.f32 %v2525, 1.442695
    %v2545 = vpow.pop %v2544
    %v2546 = vmul.f32 %v2526, 1.442695
    %v2547 = vpow.pop %v2546
    %v2548 = vmul.f32 %v2527, 1.442695
    %v2549 = vpow.pop %v2548
    %v2550 = vmul.f32 %v2528, 1.442695
    %v2551 = vpow.pop %v2550
    %v2552 = vmul.f32 %v2529, 1.442695
    %v2553 = vpow.pop %v2552
    %v2554 = vmul.f32 %v2530, 1.442695
    %v2555 = vpow.pop %v2554
    %v2556 = vmul.f32 %v2531, 1.442695
    %v2557 = vpow.pop %v2556
    %v2558 = vmul.f32 %v2532, 1.442695
    %v2559 = vpow.pop %v2558
    %v2560 = vmul.f32 %v2533, 1.442695
    %v2561 = vpow.pop %v2560
    %v2562 = vmul.f32 %v2534, 1.442695
    %v2563 = vpow.pop %v2562
    %v2564 = vmul.f32 %v2535, 1.442695
    %v2565 = vpow.pop %v2564
    %v2566 = vmul.f32 %v2536, 1.442695
    %v2567 = vpow.pop %v2566
    %v2568 = vmul.f32 %v2537, 1.442695
    %v2569 = vpow.pop %v2568
    %2570 = vadd.xlane.f32.xlu0 %v2539
    %v2571 = vpop.xlane.xlu0 %2570
    %2572 = vadd.xlane.f32.xlu0 %v2541
    %v2573 = vpop.xlane.xlu0 %2572
    %2574 = vadd.xlane.f32.xlu0 %v2543
    %v2575 = vpop.xlane.xlu0 %2574
    %2576 = vadd.xlane.f32.xlu0 %v2545
    %v2577 = vpop.xlane.xlu0 %2576
    %2578 = vadd.xlane.f32.xlu0 %v2547
    %v2579 = vpop.xlane.xlu0 %2578
    %2580 = vadd.xlane.f32.xlu0 %v2549
    %v2581 = vpop.xlane.xlu0 %2580
    %2582 = vadd.xlane.f32.xlu0 %v2551
    %v2583 = vpop.xlane.xlu0 %2582
    %2584 = vadd.xlane.f32.xlu0 %v2553
    %v2585 = vpop.xlane.xlu0 %2584
    %2586 = vadd.xlane.f32.xlu0 %v2555
    %v2587 = vpop.xlane.xlu0 %2586
    %2588 = vadd.xlane.f32.xlu0 %v2557
    %v2589 = vpop.xlane.xlu0 %2588
    %2590 = vadd.xlane.f32.xlu0 %v2559
    %v2591 = vpop.xlane.xlu0 %2590
    %2592 = vadd.xlane.f32.xlu0 %v2561
    %v2593 = vpop.xlane.xlu0 %2592
    %2594 = vadd.xlane.f32.xlu0 %v2563
    %v2595 = vpop.xlane.xlu0 %2594
    %2596 = vadd.xlane.f32.xlu0 %v2565
    %v2597 = vpop.xlane.xlu0 %2596
    %2598 = vadd.xlane.f32.xlu0 %v2567
    %v2599 = vpop.xlane.xlu0 %2598
    %2600 = vadd.xlane.f32.xlu0 %v2569
    %v2601 = vpop.xlane.xlu0 %2600
    %v2602 = vrcp.pop %v2571
    %v2603 = vrcp.pop %v2573
    %v2604 = vrcp.pop %v2575
    %v2605 = vrcp.pop %v2577
    %v2606 = vrcp.pop %v2579
    %v2607 = vrcp.pop %v2581
    %v2608 = vrcp.pop %v2583
    %v2609 = vrcp.pop %v2585
    %v2610 = vrcp.pop %v2587
    %v2611 = vrcp.pop %v2589
    %v2612 = vrcp.pop %v2591
    %v2613 = vrcp.pop %v2593
    %v2614 = vrcp.pop %v2595
    %v2615 = vrcp.pop %v2597
    %v2616 = vrcp.pop %v2599
    %v2617 = vrcp.pop %v2601
    %v2618 = vmul.f32 %v2539, %v2602
    %v2619 = vmul.f32 %v2541, %v2603
    %v2620 = vmul.f32 %v2543, %v2604
    %v2621 = vmul.f32 %v2545, %v2605
    %v2622 = vmul.f32 %v2547, %v2606
    %v2623 = vmul.f32 %v2549, %v2607
    %v2624 = vmul.f32 %v2551, %v2608
    %v2625 = vmul.f32 %v2553, %v2609
    %v2626 = vmul.f32 %v2555, %v2610
    %v2627 = vmul.f32 %v2557, %v2611
    %v2628 = vmul.f32 %v2559, %v2612
    %v2629 = vmul.f32 %v2561, %v2613
    %v2630 = vmul.f32 %v2563, %v2614
    %v2631 = vmul.f32 %v2565, %v2615
    %v2632 = vmul.f32 %v2567, %v2616
    %v2633 = vmul.f32 %v2569, %v2617
    %v2634 = vpack.c.bf16 %v2619, %v2618
    %v2635 = vpack.c.bf16 %v2621, %v2620
    %v2636 = vpack.c.bf16 %v2623, %v2622
    %v2637 = vpack.c.bf16 %v2625, %v2624
    %v2638 = vpack.c.bf16 %v2627, %v2626
    %v2639 = vpack.c.bf16 %v2629, %v2628
    %v2640 = vpack.c.bf16 %v2631, %v2630
    %v2641 = vpack.c.bf16 %v2633, %v2632
    %2642 = vrot.lane.b32.xlu0 %v260, 32
    %v2643 = vpop.permute.xlu0 %2642
    %2644 = vrot.lane.b32.xlu0 %v261, 32
    %v2645 = vpop.permute.xlu0 %2644
    %2646 = vrot.lane.b32.xlu0 %v262, 32
    %v2647 = vpop.permute.xlu0 %2646
    %2648 = vrot.lane.b32.xlu0 %v263, 32
    %v2649 = vpop.permute.xlu0 %2648
    %2650 = vrot.lane.b32.xlu0 %v264, 32
    %v2651 = vpop.permute.xlu0 %2650
    %2652 = vrot.lane.b32.xlu0 %v265, 32
    %v2653 = vpop.permute.xlu0 %2652
    %2654 = vrot.lane.b32.xlu0 %v266, 32
    %v2655 = vpop.permute.xlu0 %2654
    %2656 = vrot.lane.b32.xlu0 %v267, 32
    %v2657 = vpop.permute.xlu0 %2656
    %2666 = vmatpush.bf16.msra.mxu0 %v2657
    %2667 = vmatpush.bf16.msra.mxu0 %v2655
    %2668 = vmatpush.bf16.msra.mxu0 %v2653
    %2669 = vmatpush.bf16.msra.mxu0 %v2651
    %2670 = vmatpush.bf16.msra.mxu0 %v2649
    %2671 = vmatpush.bf16.msra.mxu0 %v2647
    %2672 = vmatpush.bf16.msra.mxu0 %v2645
    %2673 = vmatpush.bf16.msra.mxu0 %v2643
    %2674 = vmatmul.bf16.gmra.mxu0 %v2634
    %v2675 = vpop.f32.mrf.mxu0
    %v2676 = vadd.f32 0.0, %v2675
    %v2677 = vpop.f32.mrf.mxu0
    %v2678 = vadd.f32 0.0, %v2677
    %2679 = vmatmul.bf16.gmra.mxu0 %v2635
    %v2680 = vpop.f32.mrf.mxu0
    %v2681 = vadd.f32 0.0, %v2680
    %v2682 = vpop.f32.mrf.mxu0
    %v2683 = vadd.f32 0.0, %v2682
    %2684 = vmatmul.bf16.gmra.mxu0 %v2636
    %v2685 = vpop.f32.mrf.mxu0
    %v2686 = vadd.f32 0.0, %v2685
    %v2687 = vpop.f32.mrf.mxu0
    %v2688 = vadd.f32 0.0, %v2687
    %2689 = vmatmul.bf16.gmra.mxu0 %v2637
    %v2690 = vpop.f32.mrf.mxu0
    %v2691 = vadd.f32 0.0, %v2690
    %v2692 = vpop.f32.mrf.mxu0
    %v2693 = vadd.f32 0.0, %v2692
    %2694 = vmatmul.bf16.gmra.mxu0 %v2638
    %v2695 = vpop.f32.mrf.mxu0
    %v2696 = vadd.f32 0.0, %v2695
    %v2697 = vpop.f32.mrf.mxu0
    %v2698 = vadd.f32 0.0, %v2697
    %2699 = vmatmul.bf16.gmra.mxu0 %v2639
    %v2700 = vpop.f32.mrf.mxu0
    %v2701 = vadd.f32 0.0, %v2700
    %v2702 = vpop.f32.mrf.mxu0
    %v2703 = vadd.f32 0.0, %v2702
    %2704 = vmatmul.bf16.gmra.mxu0 %v2640
    %v2705 = vpop.f32.mrf.mxu0
    %v2706 = vadd.f32 0.0, %v2705
    %v2707 = vpop.f32.mrf.mxu0
    %v2708 = vadd.f32 0.0, %v2707
    %2709 = vmatmul.bf16.gmra.mxu0 %v2641
    %v2710 = vpop.f32.mrf.mxu0
    %v2711 = vadd.f32 0.0, %v2710
    %v2712 = vpop.f32.mrf.mxu0
    %v2713 = vadd.f32 0.0, %v2712
    %2714 = vdwg.mxu0
    %2715 = vrot.lane.b32.xlu0 %v244, 16
    %v2716 = vpop.permute.xlu0 %2715
    %2717 = vrot.lane.b32.xlu0 %v245, 16
    %v2718 = vpop.permute.xlu0 %2717
    %2719 = vrot.lane.b32.xlu0 %v246, 16
    %v2720 = vpop.permute.xlu0 %2719
    %2721 = vrot.lane.b32.xlu0 %v247, 16
    %v2722 = vpop.permute.xlu0 %2721
    %2723 = vrot.lane.b32.xlu0 %v248, 16
    %v2724 = vpop.permute.xlu0 %2723
    %2725 = vrot.lane.b32.xlu0 %v249, 16
    %v2726 = vpop.permute.xlu0 %2725
    %2727 = vrot.lane.b32.xlu0 %v250, 16
    %v2728 = vpop.permute.xlu0 %2727
    %2729 = vrot.lane.b32.xlu0 %v251, 16
    %v2730 = vpop.permute.xlu0 %2729
    %2731 = vrot.lane.b32.xlu0 %v252, 16
    %v2732 = vpop.permute.xlu0 %2731
    %2733 = vrot.lane.b32.xlu0 %v253, 16
    %v2734 = vpop.permute.xlu0 %2733
    %2735 = vrot.lane.b32.xlu0 %v254, 16
    %v2736 = vpop.permute.xlu0 %2735
    %2737 = vrot.lane.b32.xlu0 %v255, 16
    %v2738 = vpop.permute.xlu0 %2737
    %2739 = vrot.lane.b32.xlu0 %v256, 16
    %v2740 = vpop.permute.xlu0 %2739
    %2741 = vrot.lane.b32.xlu0 %v257, 16
    %v2742 = vpop.permute.xlu0 %2741
    %2743 = vrot.lane.b32.xlu0 %v258, 16
    %v2744 = vpop.permute.xlu0 %2743
    %2745 = vrot.lane.b32.xlu0 %v259, 16
    %v2746 = vpop.permute.xlu0 %2745
    %v2748 = vsel %vm268, %v2716, 0
    %v2751 = vsel %vm268, %v2718, 0
    %v2754 = vsel %vm268, %v2720, 0
    %v2757 = vsel %vm268, %v2722, 0
    %v2760 = vsel %vm268, %v2724, 0
    %v2763 = vsel %vm268, %v2726, 0
    %v2766 = vsel %vm268, %v2728, 0
    %v2769 = vsel %vm268, %v2730, 0
    %v2772 = vsel %vm268, %v2732, 0
    %v2775 = vsel %vm268, %v2734, 0
    %v2778 = vsel %vm268, %v2736, 0
    %v2781 = vsel %vm268, %v2738, 0
    %v2784 = vsel %vm268, %v2740, 0
    %v2787 = vsel %vm268, %v2742, 0
    %v2790 = vsel %vm268, %v2744, 0
    %v2793 = vsel %vm268, %v2746, 0
    %2795 = vmatpush.bf16.xpose.msra.mxu0 %v2793
    %2796 = vmatpush.bf16.xpose.msra.mxu0 %v2790
    %2797 = vmatpush.bf16.xpose.msra.mxu0 %v2787
    %2798 = vmatpush.bf16.xpose.msra.mxu0 %v2784
    %2799 = vmatpush.bf16.xpose.msra.mxu0 %v2781
    %2800 = vmatpush.bf16.xpose.msra.mxu0 %v2778
    %2801 = vmatpush.bf16.xpose.msra.mxu0 %v2775
    %2802 = vmatpush.bf16.xpose.msra.mxu0 %v2772
    %2803 = vmatmul.bf16.gmra.mxu0 %v2748
    %v2804 = vpop.f32.mrf.mxu0
    %v2805 = vadd.f32 %v212, %v2804
    %v2806 = vpop.f32.mrf.mxu0
    %v2807 = vadd.f32 %v213, %v2806
    %2808 = vmatmul.bf16.gmra.mxu0 %v2751
    %v2809 = vpop.f32.mrf.mxu0
    %v2810 = vadd.f32 %v214, %v2809
    %v2811 = vpop.f32.mrf.mxu0
    %v2812 = vadd.f32 %v215, %v2811
    %2813 = vmatmul.bf16.gmra.mxu0 %v2754
    %v2814 = vpop.f32.mrf.mxu0
    %v2815 = vadd.f32 %v216, %v2814
    %v2816 = vpop.f32.mrf.mxu0
    %v2817 = vadd.f32 %v217, %v2816
    %2818 = vmatmul.bf16.gmra.mxu0 %v2757
    %v2819 = vpop.f32.mrf.mxu0
    %v2820 = vadd.f32 %v218, %v2819
    %v2821 = vpop.f32.mrf.mxu0
    %v2822 = vadd.f32 %v219, %v2821
    %2823 = vmatmul.bf16.gmra.mxu0 %v2760
    %v2824 = vpop.f32.mrf.mxu0
    %v2825 = vadd.f32 %v220, %v2824
    %v2826 = vpop.f32.mrf.mxu0
    %v2827 = vadd.f32 %v221, %v2826
    %2828 = vmatmul.bf16.gmra.mxu0 %v2763
    %v2829 = vpop.f32.mrf.mxu0
    %v2830 = vadd.f32 %v222, %v2829
    %v2831 = vpop.f32.mrf.mxu0
    %v2832 = vadd.f32 %v223, %v2831
    %2833 = vmatmul.bf16.gmra.mxu0 %v2766
    %v2834 = vpop.f32.mrf.mxu0
    %v2835 = vadd.f32 %v224, %v2834
    %v2836 = vpop.f32.mrf.mxu0
    %v2837 = vadd.f32 %v225, %v2836
    %2838 = vmatmul.bf16.gmra.mxu0 %v2769
    %v2839 = vpop.f32.mrf.mxu0
    %v2840 = vadd.f32 %v226, %v2839
    %v2841 = vpop.f32.mrf.mxu0
    %v2842 = vadd.f32 %v227, %v2841
    %2843 = vdwg.mxu0
    %2844 = vmax.xlane.f32.xlu0 %v2805
    %v2845 = vpop.xlane.xlu0 %2844
    %2846 = vmax.xlane.f32.xlu0 %v2807
    %v2847 = vpop.xlane.xlu0 %2846
    %2848 = vmax.xlane.f32.xlu0 %v2810
    %v2849 = vpop.xlane.xlu0 %2848
    %2850 = vmax.xlane.f32.xlu0 %v2812
    %v2851 = vpop.xlane.xlu0 %2850
    %2852 = vmax.xlane.f32.xlu0 %v2815
    %v2853 = vpop.xlane.xlu0 %2852
    %2854 = vmax.xlane.f32.xlu0 %v2817
    %v2855 = vpop.xlane.xlu0 %2854
    %2856 = vmax.xlane.f32.xlu0 %v2820
    %v2857 = vpop.xlane.xlu0 %2856
    %2858 = vmax.xlane.f32.xlu0 %v2822
    %v2859 = vpop.xlane.xlu0 %2858
    %2860 = vmax.xlane.f32.xlu0 %v2825
    %v2861 = vpop.xlane.xlu0 %2860
    %2862 = vmax.xlane.f32.xlu0 %v2827
    %v2863 = vpop.xlane.xlu0 %2862
    %2864 = vmax.xlane.f32.xlu0 %v2830
    %v2865 = vpop.xlane.xlu0 %2864
    %2866 = vmax.xlane.f32.xlu0 %v2832
    %v2867 = vpop.xlane.xlu0 %2866
    %2868 = vmax.xlane.f32.xlu0 %v2835
    %v2869 = vpop.xlane.xlu0 %2868
    %2870 = vmax.xlane.f32.xlu0 %v2837
    %v2871 = vpop.xlane.xlu0 %2870
    %2872 = vmax.xlane.f32.xlu0 %v2840
    %v2873 = vpop.xlane.xlu0 %2872
    %2874 = vmax.xlane.f32.xlu0 %v2842
    %v2875 = vpop.xlane.xlu0 %2874
    %v2876 = vsub.f32 %v2805, %v2845
    %v2877 = vsub.f32 %v2807, %v2847
    %v2878 = vsub.f32 %v2810, %v2849
    %v2879 = vsub.f32 %v2812, %v2851
    %v2880 = vsub.f32 %v2815, %v2853
    %v2881 = vsub.f32 %v2817, %v2855
    %v2882 = vsub.f32 %v2820, %v2857
    %v2883 = vsub.f32 %v2822, %v2859
    %v2884 = vsub.f32 %v2825, %v2861
    %v2885 = vsub.f32 %v2827, %v2863
    %v2886 = vsub.f32 %v2830, %v2865
    %v2887 = vsub.f32 %v2832, %v2867
    %v2888 = vsub.f32 %v2835, %v2869
    %v2889 = vsub.f32 %v2837, %v2871
    %v2890 = vsub.f32 %v2840, %v2873
    %v2891 = vsub.f32 %v2842, %v2875
    %v2892 = vmul.f32 %v2876, 1.442695
    %v2893 = vpow.pop %v2892
    %v2894 = vmul.f32 %v2877, 1.442695
    %v2895 = vpow.pop %v2894
    %v2896 = vmul.f32 %v2878, 1.442695
    %v2897 = vpow.pop %v2896
    %v2898 = vmul.f32 %v2879, 1.442695
    %v2899 = vpow.pop %v2898
    %v2900 = vmul.f32 %v2880, 1.442695
    %v2901 = vpow.pop %v2900
    %v2902 = vmul.f32 %v2881, 1.442695
    %v2903 = vpow.pop %v2902
    %v2904 = vmul.f32 %v2882, 1.442695
    %v2905 = vpow.pop %v2904
    %v2906 = vmul.f32 %v2883, 1.442695
    %v2907 = vpow.pop %v2906
    %v2908 = vmul.f32 %v2884, 1.442695
    %v2909 = vpow.pop %v2908
    %v2910 = vmul.f32 %v2885, 1.442695
    %v2911 = vpow.pop %v2910
    %v2912 = vmul.f32 %v2886, 1.442695
    %v2913 = vpow.pop %v2912
    %v2914 = vmul.f32 %v2887, 1.442695
    %v2915 = vpow.pop %v2914
    %v2916 = vmul.f32 %v2888, 1.442695
    %v2917 = vpow.pop %v2916
    %v2918 = vmul.f32 %v2889, 1.442695
    %v2919 = vpow.pop %v2918
    %v2920 = vmul.f32 %v2890, 1.442695
    %v2921 = vpow.pop %v2920
    %v2922 = vmul.f32 %v2891, 1.442695
    %v2923 = vpow.pop %v2922
    %2924 = vadd.xlane.f32.xlu0 %v2893
    %v2925 = vpop.xlane.xlu0 %2924
    %2926 = vadd.xlane.f32.xlu0 %v2895
    %v2927 = vpop.xlane.xlu0 %2926
    %2928 = vadd.xlane.f32.xlu0 %v2897
    %v2929 = vpop.xlane.xlu0 %2928
    %2930 = vadd.xlane.f32.xlu0 %v2899
    %v2931 = vpop.xlane.xlu0 %2930
    %2932 = vadd.xlane.f32.xlu0 %v2901
    %v2933 = vpop.xlane.xlu0 %2932
    %2934 = vadd.xlane.f32.xlu0 %v2903
    %v2935 = vpop.xlane.xlu0 %2934
    %2936 = vadd.xlane.f32.xlu0 %v2905
    %v2937 = vpop.xlane.xlu0 %2936
    %2938 = vadd.xlane.f32.xlu0 %v2907
    %v2939 = vpop.xlane.xlu0 %2938
    %2940 = vadd.xlane.f32.xlu0 %v2909
    %v2941 = vpop.xlane.xlu0 %2940
    %2942 = vadd.xlane.f32.xlu0 %v2911
    %v2943 = vpop.xlane.xlu0 %2942
    %2944 = vadd.xlane.f32.xlu0 %v2913
    %v2945 = vpop.xlane.xlu0 %2944
    %2946 = vadd.xlane.f32.xlu0 %v2915
    %v2947 = vpop.xlane.xlu0 %2946
    %2948 = vadd.xlane.f32.xlu0 %v2917
    %v2949 = vpop.xlane.xlu0 %2948
    %2950 = vadd.xlane.f32.xlu0 %v2919
    %v2951 = vpop.xlane.xlu0 %2950
    %2952 = vadd.xlane.f32.xlu0 %v2921
    %v2953 = vpop.xlane.xlu0 %2952
    %2954 = vadd.xlane.f32.xlu0 %v2923
    %v2955 = vpop.xlane.xlu0 %2954
    %v2956 = vrcp.pop %v2925
    %v2957 = vrcp.pop %v2927
    %v2958 = vrcp.pop %v2929
    %v2959 = vrcp.pop %v2931
    %v2960 = vrcp.pop %v2933
    %v2961 = vrcp.pop %v2935
    %v2962 = vrcp.pop %v2937
    %v2963 = vrcp.pop %v2939
    %v2964 = vrcp.pop %v2941
    %v2965 = vrcp.pop %v2943
    %v2966 = vrcp.pop %v2945
    %v2967 = vrcp.pop %v2947
    %v2968 = vrcp.pop %v2949
    %v2969 = vrcp.pop %v2951
    %v2970 = vrcp.pop %v2953
    %v2971 = vrcp.pop %v2955
    %v2972 = vmul.f32 %v2893, %v2956
    %v2973 = vmul.f32 %v2895, %v2957
    %v2974 = vmul.f32 %v2897, %v2958
    %v2975 = vmul.f32 %v2899, %v2959
    %v2976 = vmul.f32 %v2901, %v2960
    %v2977 = vmul.f32 %v2903, %v2961
    %v2978 = vmul.f32 %v2905, %v2962
    %v2979 = vmul.f32 %v2907, %v2963
    %v2980 = vmul.f32 %v2909, %v2964
    %v2981 = vmul.f32 %v2911, %v2965
    %v2982 = vmul.f32 %v2913, %v2966
    %v2983 = vmul.f32 %v2915, %v2967
    %v2984 = vmul.f32 %v2917, %v2968
    %v2985 = vmul.f32 %v2919, %v2969
    %v2986 = vmul.f32 %v2921, %v2970
    %v2987 = vmul.f32 %v2923, %v2971
    %v2988 = vpack.c.bf16 %v2973, %v2972
    %v2989 = vpack.c.bf16 %v2975, %v2974
    %v2990 = vpack.c.bf16 %v2977, %v2976
    %v2991 = vpack.c.bf16 %v2979, %v2978
    %v2992 = vpack.c.bf16 %v2981, %v2980
    %v2993 = vpack.c.bf16 %v2983, %v2982
    %v2994 = vpack.c.bf16 %v2985, %v2984
    %v2995 = vpack.c.bf16 %v2987, %v2986
    %2996 = vrot.lane.b32.xlu0 %v260, 16
    %v2997 = vpop.permute.xlu0 %2996
    %2998 = vrot.lane.b32.xlu0 %v261, 16
    %v2999 = vpop.permute.xlu0 %2998
    %3000 = vrot.lane.b32.xlu0 %v262, 16
    %v3001 = vpop.permute.xlu0 %3000
    %3002 = vrot.lane.b32.xlu0 %v263, 16
    %v3003 = vpop.permute.xlu0 %3002
    %3004 = vrot.lane.b32.xlu0 %v264, 16
    %v3005 = vpop.permute.xlu0 %3004
    %3006 = vrot.lane.b32.xlu0 %v265, 16
    %v3007 = vpop.permute.xlu0 %3006
    %3008 = vrot.lane.b32.xlu0 %v266, 16
    %v3009 = vpop.permute.xlu0 %3008
    %3010 = vrot.lane.b32.xlu0 %v267, 16
    %v3011 = vpop.permute.xlu0 %3010
    %3020 = vmatpush.bf16.msra.mxu0 %v3011
    %3021 = vmatpush.bf16.msra.mxu0 %v3009
    %3022 = vmatpush.bf16.msra.mxu0 %v3007
    %3023 = vmatpush.bf16.msra.mxu0 %v3005
    %3024 = vmatpush.bf16.msra.mxu0 %v3003
    %3025 = vmatpush.bf16.msra.mxu0 %v3001
    %3026 = vmatpush.bf16.msra.mxu0 %v2999
    %3027 = vmatpush.bf16.msra.mxu0 %v2997
    %3028 = vmatmul.bf16.gmra.mxu0 %v2988
    %v3029 = vpop.f32.mrf.mxu0
    %v3030 = vadd.f32 0.0, %v3029
    %v3031 = vpop.f32.mrf.mxu0
    %v3032 = vadd.f32 0.0, %v3031
    %3033 = vmatmul.bf16.gmra.mxu0 %v2989
    %v3034 = vpop.f32.mrf.mxu0
    %v3035 = vadd.f32 0.0, %v3034
    %v3036 = vpop.f32.mrf.mxu0
    %v3037 = vadd.f32 0.0, %v3036
    %3038 = vmatmul.bf16.gmra.mxu0 %v2990
    %v3039 = vpop.f32.mrf.mxu0
    %v3040 = vadd.f32 0.0, %v3039
    %v3041 = vpop.f32.mrf.mxu0
    %v3042 = vadd.f32 0.0, %v3041
    %3043 = vmatmul.bf16.gmra.mxu0 %v2991
    %v3044 = vpop.f32.mrf.mxu0
    %v3045 = vadd.f32 0.0, %v3044
    %v3046 = vpop.f32.mrf.mxu0
    %v3047 = vadd.f32 0.0, %v3046
    %3048 = vmatmul.bf16.gmra.mxu0 %v2992
    %v3049 = vpop.f32.mrf.mxu0
    %v3050 = vadd.f32 0.0, %v3049
    %v3051 = vpop.f32.mrf.mxu0
    %v3052 = vadd.f32 0.0, %v3051
    %3053 = vmatmul.bf16.gmra.mxu0 %v2993
    %v3054 = vpop.f32.mrf.mxu0
    %v3055 = vadd.f32 0.0, %v3054
    %v3056 = vpop.f32.mrf.mxu0
    %v3057 = vadd.f32 0.0, %v3056
    %3058 = vmatmul.bf16.gmra.mxu0 %v2994
    %v3059 = vpop.f32.mrf.mxu0
    %v3060 = vadd.f32 0.0, %v3059
    %v3061 = vpop.f32.mrf.mxu0
    %v3062 = vadd.f32 0.0, %v3061
    %3063 = vmatmul.bf16.gmra.mxu0 %v2995
    %v3064 = vpop.f32.mrf.mxu0
    %v3065 = vadd.f32 0.0, %v3064
    %v3066 = vpop.f32.mrf.mxu0
    %v3067 = vadd.f32 0.0, %v3066
    %3068 = vdwg.mxu0
    %3085 = vrot.lane.b32.xlu0 %v906, 16
    %v3086 = vpop.permute.xlu0 %3085
    %3087 = vrot.lane.b32.xlu0 %v908, 16
    %v3088 = vpop.permute.xlu0 %3087
    %3089 = vrot.lane.b32.xlu0 %v911, 16
    %v3090 = vpop.permute.xlu0 %3089
    %3091 = vrot.lane.b32.xlu0 %v913, 16
    %v3092 = vpop.permute.xlu0 %3091
    %3093 = vrot.lane.b32.xlu0 %v916, 16
    %v3094 = vpop.permute.xlu0 %3093
    %3095 = vrot.lane.b32.xlu0 %v918, 16
    %v3096 = vpop.permute.xlu0 %3095
    %3097 = vrot.lane.b32.xlu0 %v921, 16
    %v3098 = vpop.permute.xlu0 %3097
    %3099 = vrot.lane.b32.xlu0 %v923, 16
    %v3100 = vpop.permute.xlu0 %3099
    %3101 = vrot.lane.b32.xlu0 %v926, 16
    %v3102 = vpop.permute.xlu0 %3101
    %3103 = vrot.lane.b32.xlu0 %v928, 16
    %v3104 = vpop.permute.xlu0 %3103
    %3105 = vrot.lane.b32.xlu0 %v931, 16
    %v3106 = vpop.permute.xlu0 %3105
    %3107 = vrot.lane.b32.xlu0 %v933, 16
    %v3108 = vpop.permute.xlu0 %3107
    %3109 = vrot.lane.b32.xlu0 %v936, 16
    %v3110 = vpop.permute.xlu0 %3109
    %3111 = vrot.lane.b32.xlu0 %v938, 16
    %v3112 = vpop.permute.xlu0 %3111
    %3113 = vrot.lane.b32.xlu0 %v941, 16
    %v3114 = vpop.permute.xlu0 %3113
    %3115 = vrot.lane.b32.xlu0 %v943, 16
    %v3116 = vpop.permute.xlu0 %3115
    %3149 = vrot.lane.b32.xlu0 %v1260, 32
    %v3150 = vpop.permute.xlu0 %3149
    %3151 = vrot.lane.b32.xlu0 %v1262, 32
    %v3152 = vpop.permute.xlu0 %3151
    %3153 = vrot.lane.b32.xlu0 %v1265, 32
    %v3154 = vpop.permute.xlu0 %3153
    %3155 = vrot.lane.b32.xlu0 %v1267, 32
    %v3156 = vpop.permute.xlu0 %3155
    %3157 = vrot.lane.b32.xlu0 %v1270, 32
    %v3158 = vpop.permute.xlu0 %3157
    %3159 = vrot.lane.b32.xlu0 %v1272, 32
    %v3160 = vpop.permute.xlu0 %3159
    %3161 = vrot.lane.b32.xlu0 %v1275, 32
    %v3162 = vpop.permute.xlu0 %3161
    %3163 = vrot.lane.b32.xlu0 %v1277, 32
    %v3164 = vpop.permute.xlu0 %3163
    %3165 = vrot.lane.b32.xlu0 %v1280, 32
    %v3166 = vpop.permute.xlu0 %3165
    %3167 = vrot.lane.b32.xlu0 %v1282, 32
    %v3168 = vpop.permute.xlu0 %3167
    %3169 = vrot.lane.b32.xlu0 %v1285, 32
    %v3170 = vpop.permute.xlu0 %3169
    %3171 = vrot.lane.b32.xlu0 %v1287, 32
    %v3172 = vpop.permute.xlu0 %3171
    %3173 = vrot.lane.b32.xlu0 %v1290, 32
    %v3174 = vpop.permute.xlu0 %3173
    %3175 = vrot.lane.b32.xlu0 %v1292, 32
    %v3176 = vpop.permute.xlu0 %3175
    %3177 = vrot.lane.b32.xlu0 %v1295, 32
    %v3178 = vpop.permute.xlu0 %3177
    %3179 = vrot.lane.b32.xlu0 %v1297, 32
    %v3180 = vpop.permute.xlu0 %3179
    %3213 = vrot.lane.b32.xlu0 %v1614, 48
    %v3214 = vpop.permute.xlu0 %3213
    %3215 = vrot.lane.b32.xlu0 %v1616, 48
    %v3216 = vpop.permute.xlu0 %3215
    %3217 = vrot.lane.b32.xlu0 %v1619, 48
    %v3218 = vpop.permute.xlu0 %3217
    %3219 = vrot.lane.b32.xlu0 %v1621, 48
    %v3220 = vpop.permute.xlu0 %3219
    %3221 = vrot.lane.b32.xlu0 %v1624, 48
    %v3222 = vpop.permute.xlu0 %3221
    %3223 = vrot.lane.b32.xlu0 %v1626, 48
    %v3224 = vpop.permute.xlu0 %3223
    %3225 = vrot.lane.b32.xlu0 %v1629, 48
    %v3226 = vpop.permute.xlu0 %3225
    %3227 = vrot.lane.b32.xlu0 %v1631, 48
    %v3228 = vpop.permute.xlu0 %3227
    %3229 = vrot.lane.b32.xlu0 %v1634, 48
    %v3230 = vpop.permute.xlu0 %3229
    %3231 = vrot.lane.b32.xlu0 %v1636, 48
    %v3232 = vpop.permute.xlu0 %3231
    %3233 = vrot.lane.b32.xlu0 %v1639, 48
    %v3234 = vpop.permute.xlu0 %3233
    %3235 = vrot.lane.b32.xlu0 %v1641, 48
    %v3236 = vpop.permute.xlu0 %3235
    %3237 = vrot.lane.b32.xlu0 %v1644, 48
    %v3238 = vpop.permute.xlu0 %3237
    %3239 = vrot.lane.b32.xlu0 %v1646, 48
    %v3240 = vpop.permute.xlu0 %3239
    %3241 = vrot.lane.b32.xlu0 %v1649, 48
    %v3242 = vpop.permute.xlu0 %3241
    %3243 = vrot.lane.b32.xlu0 %v1651, 48
    %v3244 = vpop.permute.xlu0 %3243
    %3277 = vrot.lane.b32.xlu0 %v1968, 64
    %v3278 = vpop.permute.xlu0 %3277
    %3279 = vrot.lane.b32.xlu0 %v1970, 64
    %v3280 = vpop.permute.xlu0 %3279
    %3281 = vrot.lane.b32.xlu0 %v1973, 64
    %v3282 = vpop.permute.xlu0 %3281
    %3283 = vrot.lane.b32.xlu0 %v1975, 64
    %v3284 = vpop.permute.xlu0 %3283
    %3285 = vrot.lane.b32.xlu0 %v1978, 64
    %v3286 = vpop.permute.xlu0 %3285
    %3287 = vrot.lane.b32.xlu0 %v1980, 64
    %v3288 = vpop.permute.xlu0 %3287
    %3289 = vrot.lane.b32.xlu0 %v1983, 64
    %v3290 = vpop.permute.xlu0 %3289
    %3291 = vrot.lane.b32.xlu0 %v1985, 64
    %v3292 = vpop.permute.xlu0 %3291
    %3293 = vrot.lane.b32.xlu0 %v1988, 64
    %v3294 = vpop.permute.xlu0 %3293
    %3295 = vrot.lane.b32.xlu0 %v1990, 64
    %v3296 = vpop.permute.xlu0 %3295
    %3297 = vrot.lane.b32.xlu0 %v1993, 64
    %v3298 = vpop.permute.xlu0 %3297
    %3299 = vrot.lane.b32.xlu0 %v1995, 64
    %v3300 = vpop.permute.xlu0 %3299
    %3301 = vrot.lane.b32.xlu0 %v1998, 64
    %v3302 = vpop.permute.xlu0 %3301
    %3303 = vrot.lane.b32.xlu0 %v2000, 64
    %v3304 = vpop.permute.xlu0 %3303
    %3305 = vrot.lane.b32.xlu0 %v2003, 64
    %v3306 = vpop.permute.xlu0 %3305
    %3307 = vrot.lane.b32.xlu0 %v2005, 64
    %v3308 = vpop.permute.xlu0 %3307
    %3341 = vrot.lane.b32.xlu0 %v2322, 80
    %v3342 = vpop.permute.xlu0 %3341
    %3343 = vrot.lane.b32.xlu0 %v2324, 80
    %v3344 = vpop.permute.xlu0 %3343
    %3345 = vrot.lane.b32.xlu0 %v2327, 80
    %v3346 = vpop.permute.xlu0 %3345
    %3347 = vrot.lane.b32.xlu0 %v2329, 80
    %v3348 = vpop.permute.xlu0 %3347
    %3349 = vrot.lane.b32.xlu0 %v2332, 80
    %v3350 = vpop.permute.xlu0 %3349
    %3351 = vrot.lane.b32.xlu0 %v2334, 80
    %v3352 = vpop.permute.xlu0 %3351
    %3353 = vrot.lane.b32.xlu0 %v2337, 80
    %v3354 = vpop.permute.xlu0 %3353
    %3355 = vrot.lane.b32.xlu0 %v2339, 80
    %v3356 = vpop.permute.xlu0 %3355
    %3357 = vrot.lane.b32.xlu0 %v2342, 80
    %v3358 = vpop.permute.xlu0 %3357
    %3359 = vrot.lane.b32.xlu0 %v2344, 80
    %v3360 = vpop.permute.xlu0 %3359
    %3361 = vrot.lane.b32.xlu0 %v2347, 80
    %v3362 = vpop.permute.xlu0 %3361
    %3363 = vrot.lane.b32.xlu0 %v2349, 80
    %v3364 = vpop.permute.xlu0 %3363
    %3365 = vrot.lane.b32.xlu0 %v2352, 80
    %v3366 = vpop.permute.xlu0 %3365
    %3367 = vrot.lane.b32.xlu0 %v2354, 80
    %v3368 = vpop.permute.xlu0 %3367
    %3369 = vrot.lane.b32.xlu0 %v2357, 80
    %v3370 = vpop.permute.xlu0 %3369
    %3371 = vrot.lane.b32.xlu0 %v2359, 80
    %v3372 = vpop.permute.xlu0 %3371
    %3405 = vrot.lane.b32.xlu0 %v2676, 96
    %v3406 = vpop.permute.xlu0 %3405
    %3407 = vrot.lane.b32.xlu0 %v2678, 96
    %v3408 = vpop.permute.xlu0 %3407
    %3409 = vrot.lane.b32.xlu0 %v2681, 96
    %v3410 = vpop.permute.xlu0 %3409
    %3411 = vrot.lane.b32.xlu0 %v2683, 96
    %v3412 = vpop.permute.xlu0 %3411
    %3413 = vrot.lane.b32.xlu0 %v2686, 96
    %v3414 = vpop.permute.xlu0 %3413
    %3415 = vrot.lane.b32.xlu0 %v2688, 96
    %v3416 = vpop.permute.xlu0 %3415
    %3417 = vrot.lane.b32.xlu0 %v2691, 96
    %v3418 = vpop.permute.xlu0 %3417
    %3419 = vrot.lane.b32.xlu0 %v2693, 96
    %v3420 = vpop.permute.xlu0 %3419
    %3421 = vrot.lane.b32.xlu0 %v2696, 96
    %v3422 = vpop.permute.xlu0 %3421
    %3423 = vrot.lane.b32.xlu0 %v2698, 96
    %v3424 = vpop.permute.xlu0 %3423
    %3425 = vrot.lane.b32.xlu0 %v2701, 96
    %v3426 = vpop.permute.xlu0 %3425
    %3427 = vrot.lane.b32.xlu0 %v2703, 96
    %v3428 = vpop.permute.xlu0 %3427
    %3429 = vrot.lane.b32.xlu0 %v2706, 96
    %v3430 = vpop.permute.xlu0 %3429
    %3431 = vrot.lane.b32.xlu0 %v2708, 96
    %v3432 = vpop.permute.xlu0 %3431
    %3433 = vrot.lane.b32.xlu0 %v2711, 96
    %v3434 = vpop.permute.xlu0 %3433
    %3435 = vrot.lane.b32.xlu0 %v2713, 96
    %v3436 = vpop.permute.xlu0 %3435
    %3469 = vrot.lane.b32.xlu0 %v3030, 112
    %v3470 = vpop.permute.xlu0 %3469
    %3471 = vrot.lane.b32.xlu0 %v3032, 112
    %v3472 = vpop.permute.xlu0 %3471
    %3473 = vrot.lane.b32.xlu0 %v3035, 112
    %v3474 = vpop.permute.xlu0 %3473
    %3475 = vrot.lane.b32.xlu0 %v3037, 112
    %v3476 = vpop.permute.xlu0 %3475
    %3477 = vrot.lane.b32.xlu0 %v3040, 112
    %v3478 = vpop.permute.xlu0 %3477
    %3479 = vrot.lane.b32.xlu0 %v3042, 112
    %v3480 = vpop.permute.xlu0 %3479
    %3481 = vrot.lane.b32.xlu0 %v3045, 112
    %v3482 = vpop.permute.xlu0 %3481
    %3483 = vrot.lane.b32.xlu0 %v3047, 112
    %v3484 = vpop.permute.xlu0 %3483
    %3485 = vrot.lane.b32.xlu0 %v3050, 112
    %v3486 = vpop.permute.xlu0 %3485
    %3487 = vrot.lane.b32.xlu0 %v3052, 112
    %v3488 = vpop.permute.xlu0 %3487
    %3489 = vrot.lane.b32.xlu0 %v3055, 112
    %v3490 = vpop.permute.xlu0 %3489
    %3491 = vrot.lane.b32.xlu0 %v3057, 112
    %v3492 = vpop.permute.xlu0 %3491
    %3493 = vrot.lane.b32.xlu0 %v3060, 112
    %v3494 = vpop.permute.xlu0 %3493
    %3495 = vrot.lane.b32.xlu0 %v3062, 112
    %v3496 = vpop.permute.xlu0 %3495
    %3497 = vrot.lane.b32.xlu0 %v3065, 112
    %v3498 = vpop.permute.xlu0 %3497
    %3499 = vrot.lane.b32.xlu0 %v3067, 112
    %v3500 = vpop.permute.xlu0 %3499
    %v3517 = vsel %vm268, %v528, %v3086
    %v3518 = vsel %vm268, %v530, %v3088
    %v3519 = vsel %vm268, %v533, %v3090
    %v3520 = vsel %vm268, %v535, %v3092
    %v3521 = vsel %vm268, %v538, %v3094
    %v3522 = vsel %vm268, %v540, %v3096
    %v3523 = vsel %vm268, %v543, %v3098
    %v3524 = vsel %vm268, %v545, %v3100
    %v3525 = vsel %vm268, %v548, %v3102
    %v3526 = vsel %vm268, %v550, %v3104
    %v3527 = vsel %vm268, %v553, %v3106
    %v3528 = vsel %vm268, %v555, %v3108
    %v3529 = vsel %vm268, %v558, %v3110
    %v3530 = vsel %vm268, %v560, %v3112
    %v3531 = vsel %vm268, %v563, %v3114
    %v3532 = vsel %vm268, %v565, %v3116
    %vm3533 = vcmask 261120
    %v3534 = vsel %vm3533, %v3517, %v3150
    %v3535 = vsel %vm3533, %v3518, %v3152
    %v3536 = vsel %vm3533, %v3519, %v3154
    %v3537 = vsel %vm3533, %v3520, %v3156
    %v3538 = vsel %vm3533, %v3521, %v3158
    %v3539 = vsel %vm3533, %v3522, %v3160
    %v3540 = vsel %vm3533, %v3523, %v3162
    %v3541 = vsel %vm3533, %v3524, %v3164
    %v3542 = vsel %vm3533, %v3525, %v3166
    %v3543 = vsel %vm3533, %v3526, %v3168
    %v3544 = vsel %vm3533, %v3527, %v3170
    %v3545 = vsel %vm3533, %v3528, %v3172
    %v3546 = vsel %vm3533, %v3529, %v3174
    %v3547 = vsel %vm3533, %v3530, %v3176
    %v3548 = vsel %vm3533, %v3531, %v3178
    %v3549 = vsel %vm3533, %v3532, %v3180
    %vm3550 = vcmask 392192
    %v3551 = vsel %vm3550, %v3534, %v3214
    %v3552 = vsel %vm3550, %v3535, %v3216
    %v3553 = vsel %vm3550, %v3536, %v3218
    %v3554 = vsel %vm3550, %v3537, %v3220
    %v3555 = vsel %vm3550, %v3538, %v3222
    %v3556 = vsel %vm3550, %v3539, %v3224
    %v3557 = vsel %vm3550, %v3540, %v3226
    %v3558 = vsel %vm3550, %v3541, %v3228
    %v3559 = vsel %vm3550, %v3542, %v3230
    %v3560 = vsel %vm3550, %v3543, %v3232
    %v3561 = vsel %vm3550, %v3544, %v3234
    %v3562 = vsel %vm3550, %v3545, %v3236
    %v3563 = vsel %vm3550, %v3546, %v3238
    %v3564 = vsel %vm3550, %v3547, %v3240
    %v3565 = vsel %vm3550, %v3548, %v3242
    %v3566 = vsel %vm3550, %v3549, %v3244
    %vm3567 = vcmask 523264
    %v3568 = vsel %vm3567, %v3551, %v3278
    %v3569 = vsel %vm3567, %v3552, %v3280
    %v3570 = vsel %vm3567, %v3553, %v3282
    %v3571 = vsel %vm3567, %v3554, %v3284
    %v3572 = vsel %vm3567, %v3555, %v3286
    %v3573 = vsel %vm3567, %v3556, %v3288
    %v3574 = vsel %vm3567, %v3557, %v3290
    %v3575 = vsel %vm3567, %v3558, %v3292
    %v3576 = vsel %vm3567, %v3559, %v3294
    %v3577 = vsel %vm3567, %v3560, %v3296
    %v3578 = vsel %vm3567, %v3561, %v3298
    %v3579 = vsel %vm3567, %v3562, %v3300
    %v3580 = vsel %vm3567, %v3563, %v3302
    %v3581 = vsel %vm3567, %v3564, %v3304
    %v3582 = vsel %vm3567, %v3565, %v3306
    %v3583 = vsel %vm3567, %v3566, %v3308
    %vm3584 = vcmask 654336
    %v3585 = vsel %vm3584, %v3568, %v3342
    %v3586 = vsel %vm3584, %v3569, %v3344
    %v3587 = vsel %vm3584, %v3570, %v3346
    %v3588 = vsel %vm3584, %v3571, %v3348
    %v3589 = vsel %vm3584, %v3572, %v3350
    %v3590 = vsel %vm3584, %v3573, %v3352
    %v3591 = vsel %vm3584, %v3574, %v3354
    %v3592 = vsel %vm3584, %v3575, %v3356
    %v3593 = vsel %vm3584, %v3576, %v3358
    %v3594 = vsel %vm3584, %v3577, %v3360
    %v3595 = vsel %vm3584, %v3578, %v3362
    %v3596 = vsel %vm3584, %v3579, %v3364
    %v3597 = vsel %vm3584, %v3580, %v3366
    %v3598 = vsel %vm3584, %v3581, %v3368
    %v3599 = vsel %vm3584, %v3582, %v3370
    %v3600 = vsel %vm3584, %v3583, %v3372
    %vm3601 = vcmask 785408
    %v3602 = vsel %vm3601, %v3585, %v3406
    %v3603 = vsel %vm3601, %v3586, %v3408
    %v3604 = vsel %vm3601, %v3587, %v3410
    %v3605 = vsel %vm3601, %v3588, %v3412
    %v3606 = vsel %vm3601, %v3589, %v3414
    %v3607 = vsel %vm3601, %v3590, %v3416
    %v3608 = vsel %vm3601, %v3591, %v3418
    %v3609 = vsel %vm3601, %v3592, %v3420
    %v3610 = vsel %vm3601, %v3593, %v3422
    %v3611 = vsel %vm3601, %v3594, %v3424
    %v3612 = vsel %vm3601, %v3595, %v3426
    %v3613 = vsel %vm3601, %v3596, %v3428
    %v3614 = vsel %vm3601, %v3597, %v3430
    %v3615 = vsel %vm3601, %v3598, %v3432
    %v3616 = vsel %vm3601, %v3599, %v3434
    %v3617 = vsel %vm3601, %v3600, %v3436
    %vm3618 = vcmask 916480
    %v3619 = vsel %vm3618, %v3602, %v3470
    %v3620 = vsel %vm3618, %v3603, %v3472
    %v3621 = vsel %vm3618, %v3604, %v3474
    %v3622 = vsel %vm3618, %v3605, %v3476
    %v3623 = vsel %vm3618, %v3606, %v3478
    %v3624 = vsel %vm3618, %v3607, %v3480
    %v3625 = vsel %vm3618, %v3608, %v3482
    %v3626 = vsel %vm3618, %v3609, %v3484
    %v3627 = vsel %vm3618, %v3610, %v3486
    %v3628 = vsel %vm3618, %v3611, %v3488
    %v3629 = vsel %vm3618, %v3612, %v3490
    %v3630 = vsel %vm3618, %v3613, %v3492
    %v3631 = vsel %vm3618, %v3614, %v3494
    %v3632 = vsel %vm3618, %v3615, %v3496
    %v3633 = vsel %vm3618, %v3616, %v3498
    %v3634 = vsel %vm3618, %v3617, %v3500
    %v3635 = vpack.c.bf16 %v3620, %v3619
    %v3636 = vpack.c.bf16 %v3622, %v3621
    %v3637 = vpack.c.bf16 %v3624, %v3623
    %v3638 = vpack.c.bf16 %v3626, %v3625
    %v3639 = vpack.c.bf16 %v3628, %v3627
    %v3640 = vpack.c.bf16 %v3630, %v3629
    %v3641 = vpack.c.bf16 %v3632, %v3631
    %v3642 = vpack.c.bf16 %v3634, %v3633
    %v3643 = vld [vmem:[%s5] sm:$0xf]
    %v3644 = vld [vmem:[%s5 + $0x4] sm:$0xf]
    %v3645 = vld [vmem:[%s5 + $0x8] sm:$0xf]
    %v3646 = vld [vmem:[%s5 + $0xc] sm:$0xf]
    %v3647 = vld [vmem:[%s5 + $0x10] sm:$0xf]
    %v3648 = vld [vmem:[%s5 + $0x14] sm:$0xf]
    %v3649 = vld [vmem:[%s5 + $0x18] sm:$0xf]
    %v3650 = vld [vmem:[%s5 + $0x1c] sm:$0xf]
    %v3651 = vld [vmem:[%s5 + $0x20] sm:$0xf]
    %v3652 = vld [vmem:[%s5 + $0x24] sm:$0xf]
    %v3653 = vld [vmem:[%s5 + $0x28] sm:$0xf]
    %v3654 = vld [vmem:[%s5 + $0x2c] sm:$0xf]
    %v3655 = vld [vmem:[%s5 + $0x30] sm:$0xf]
    %v3656 = vld [vmem:[%s5 + $0x34] sm:$0xf]
    %v3657 = vld [vmem:[%s5 + $0x38] sm:$0xf]
    %v3658 = vld [vmem:[%s5 + $0x3c] sm:$0xf]
    %v3659 = vld [vmem:[%s6] sm:$0x1]
    %v3661 = vperm.slane %v3659, 0
    %v3679 = vunpack.c.l.b16 %v3643
    %v3680 = vunpack.c.l.b16 %v3644
    %v3681 = vunpack.c.l.b16 %v3645
    %v3682 = vunpack.c.l.b16 %v3646
    %v3683 = vunpack.c.l.b16 %v3647
    %v3684 = vunpack.c.l.b16 %v3648
    %v3685 = vunpack.c.l.b16 %v3649
    %v3686 = vunpack.c.l.b16 %v3650
    %v3687 = vunpack.c.l.b16 %v3651
    %v3688 = vunpack.c.l.b16 %v3652
    %v3689 = vunpack.c.l.b16 %v3653
    %v3690 = vunpack.c.l.b16 %v3654
    %v3691 = vunpack.c.l.b16 %v3655
    %v3692 = vunpack.c.l.b16 %v3656
    %v3693 = vunpack.c.l.b16 %v3657
    %v3694 = vunpack.c.l.b16 %v3658
    %v3695 = vpack.c.b16 %v3680, %v3679
    %v3696 = vpack.c.b16 %v3682, %v3681
    %v3697 = vpack.c.b16 %v3684, %v3683
    %v3698 = vpack.c.b16 %v3686, %v3685
    %v3699 = vpack.c.b16 %v3688, %v3687
    %v3700 = vpack.c.b16 %v3690, %v3689
    %v3701 = vpack.c.b16 %v3692, %v3691
    %v3702 = vpack.c.b16 %v3694, %v3693
    %3711 = vmatpush.bf16.msra.mxu0 %v3702
    %3712 = vmatpush.bf16.msra.mxu0 %v3701
    %3713 = vmatpush.bf16.msra.mxu0 %v3700
    %3714 = vmatpush.bf16.msra.mxu0 %v3699
    %3715 = vmatpush.bf16.msra.mxu0 %v3698
    %3716 = vmatpush.bf16.msra.mxu0 %v3697
    %3717 = vmatpush.bf16.msra.mxu0 %v3696
    %3718 = vmatpush.bf16.msra.mxu0 %v3695
    %3719 = vmatmul.bf16.gmra.mxu0 %v3635
    %v3720 = vpop.f32.mrf.mxu0
    %v3721 = vadd.f32 %v3661, %v3720
    %v3722 = vpop.f32.mrf.mxu0
    %v3723 = vadd.f32 %v3661, %v3722
    %3724 = vmatmul.bf16.gmra.mxu0 %v3636
    %v3725 = vpop.f32.mrf.mxu0
    %v3726 = vadd.f32 %v3661, %v3725
    %v3727 = vpop.f32.mrf.mxu0
    %v3728 = vadd.f32 %v3661, %v3727
    %3729 = vmatmul.bf16.gmra.mxu0 %v3637
    %v3730 = vpop.f32.mrf.mxu0
    %v3731 = vadd.f32 %v3661, %v3730
    %v3732 = vpop.f32.mrf.mxu0
    %v3733 = vadd.f32 %v3661, %v3732
    %3734 = vmatmul.bf16.gmra.mxu0 %v3638
    %v3735 = vpop.f32.mrf.mxu0
    %v3736 = vadd.f32 %v3661, %v3735
    %v3737 = vpop.f32.mrf.mxu0
    %v3738 = vadd.f32 %v3661, %v3737
    %3739 = vmatmul.bf16.gmra.mxu0 %v3639
    %v3740 = vpop.f32.mrf.mxu0
    %v3741 = vadd.f32 %v3661, %v3740
    %v3742 = vpop.f32.mrf.mxu0
    %v3743 = vadd.f32 %v3661, %v3742
    %3744 = vmatmul.bf16.gmra.mxu0 %v3640
    %v3745 = vpop.f32.mrf.mxu0
    %v3746 = vadd.f32 %v3661, %v3745
    %v3747 = vpop.f32.mrf.mxu0
    %v3748 = vadd.f32 %v3661, %v3747
    %3749 = vmatmul.bf16.gmra.mxu0 %v3641
    %v3750 = vpop.f32.mrf.mxu0
    %v3751 = vadd.f32 %v3661, %v3750
    %v3752 = vpop.f32.mrf.mxu0
    %v3753 = vadd.f32 %v3661, %v3752
    %3754 = vmatmul.bf16.gmra.mxu0 %v3642
    %v3755 = vpop.f32.mrf.mxu0
    %v3756 = vadd.f32 %v3661, %v3755
    %v3757 = vpop.f32.mrf.mxu0
    %v3758 = vadd.f32 %v3661, %v3757
    %3759 = vdwg.mxu0
    %v3760 = vld [vmem:[%s2] sm:$0xff]
    %v3761 = vld [vmem:[%s2 + $0x8] sm:$0xff]
    %v3762 = vld [vmem:[%s2 + $0x10] sm:$0xff]
    %v3763 = vld [vmem:[%s2 + $0x18] sm:$0xff]
    %v3764 = vld [vmem:[%s2 + $0x20] sm:$0xff]
    %v3765 = vld [vmem:[%s2 + $0x28] sm:$0xff]
    %v3766 = vld [vmem:[%s2 + $0x30] sm:$0xff]
    %v3767 = vld [vmem:[%s2 + $0x38] sm:$0xff]
    %v3768 = vld [vmem:[%s2 + $0x40] sm:$0xff]
    %v3769 = vld [vmem:[%s2 + $0x48] sm:$0xff]
    %v3770 = vld [vmem:[%s2 + $0x50] sm:$0xff]
    %v3771 = vld [vmem:[%s2 + $0x58] sm:$0xff]
    %v3772 = vld [vmem:[%s2 + $0x60] sm:$0xff]
    %v3773 = vld [vmem:[%s2 + $0x68] sm:$0xff]
    %v3774 = vld [vmem:[%s2 + $0x70] sm:$0xff]
    %v3775 = vld [vmem:[%s2 + $0x78] sm:$0xff]
    %v3776 = vadd.f32 %v3760, %v3721
    %v3777 = vadd.f32 %v3761, %v3723
    %v3778 = vadd.f32 %v3762, %v3726
    %v3779 = vadd.f32 %v3763, %v3728
    %v3780 = vadd.f32 %v3764, %v3731
    %v3781 = vadd.f32 %v3765, %v3733
    %v3782 = vadd.f32 %v3766, %v3736
    %v3783 = vadd.f32 %v3767, %v3738
    %v3784 = vadd.f32 %v3768, %v3741
    %v3785 = vadd.f32 %v3769, %v3743
    %v3786 = vadd.f32 %v3770, %v3746
    %v3787 = vadd.f32 %v3771, %v3748
    %v3788 = vadd.f32 %v3772, %v3751
    %v3789 = vadd.f32 %v3773, %v3753
    %v3790 = vadd.f32 %v3774, %v3756
    %v3791 = vadd.f32 %v3775, %v3758
    %3792 = vadd.xlane.f32.xlu0 %v3776
    %v3793 = vpop.xlane.xlu0 %3792
    %3794 = vadd.xlane.f32.xlu0 %v3777
    %v3795 = vpop.xlane.xlu0 %3794
    %3796 = vadd.xlane.f32.xlu0 %v3778
    %v3797 = vpop.xlane.xlu0 %3796
    %3798 = vadd.xlane.f32.xlu0 %v3779
    %v3799 = vpop.xlane.xlu0 %3798
    %3800 = vadd.xlane.f32.xlu0 %v3780
    %v3801 = vpop.xlane.xlu0 %3800
    %3802 = vadd.xlane.f32.xlu0 %v3781
    %v3803 = vpop.xlane.xlu0 %3802
    %3804 = vadd.xlane.f32.xlu0 %v3782
    %v3805 = vpop.xlane.xlu0 %3804
    %3806 = vadd.xlane.f32.xlu0 %v3783
    %v3807 = vpop.xlane.xlu0 %3806
    %3808 = vadd.xlane.f32.xlu0 %v3784
    %v3809 = vpop.xlane.xlu0 %3808
    %3810 = vadd.xlane.f32.xlu0 %v3785
    %v3811 = vpop.xlane.xlu0 %3810
    %3812 = vadd.xlane.f32.xlu0 %v3786
    %v3813 = vpop.xlane.xlu0 %3812
    %3814 = vadd.xlane.f32.xlu0 %v3787
    %v3815 = vpop.xlane.xlu0 %3814
    %3816 = vadd.xlane.f32.xlu0 %v3788
    %v3817 = vpop.xlane.xlu0 %3816
    %3818 = vadd.xlane.f32.xlu0 %v3789
    %v3819 = vpop.xlane.xlu0 %3818
    %3820 = vadd.xlane.f32.xlu0 %v3790
    %v3821 = vpop.xlane.xlu0 %3820
    %3822 = vadd.xlane.f32.xlu0 %v3791
    %v3823 = vpop.xlane.xlu0 %3822
    %v3824 = vrcp.pop 128.0
    %v3825 = vmul.f32 128.0, %v3824
    %v3826 = vsub.f32 1.0, %v3825
    %v3827 = vmul.f32 %v3824, %v3826
    %v3828 = vadd.f32 %v3824, %v3827
    %vm3829 = vweird.f32 %v3824
    %v3830 = vsel %vm3829, %v3824, %v3828
    %v3831 = vmul.f32 %v3793, %v3830
    %v3832 = vmul.f32 %v3795, %v3830
    %v3833 = vmul.f32 %v3797, %v3830
    %v3834 = vmul.f32 %v3799, %v3830
    %v3835 = vmul.f32 %v3801, %v3830
    %v3836 = vmul.f32 %v3803, %v3830
    %v3837 = vmul.f32 %v3805, %v3830
    %v3838 = vmul.f32 %v3807, %v3830
    %v3839 = vmul.f32 %v3809, %v3830
    %v3840 = vmul.f32 %v3811, %v3830
    %v3841 = vmul.f32 %v3813, %v3830
    %v3842 = vmul.f32 %v3815, %v3830
    %v3843 = vmul.f32 %v3817, %v3830
    %v3844 = vmul.f32 %v3819, %v3830
    %v3845 = vmul.f32 %v3821, %v3830
    %v3846 = vmul.f32 %v3823, %v3830
    %v3847 = vsub.f32 %v3776, %v3831
    %v3848 = vsub.f32 %v3777, %v3832
    %v3849 = vsub.f32 %v3778, %v3833
    %v3850 = vsub.f32 %v3779, %v3834
    %v3851 = vsub.f32 %v3780, %v3835
    %v3852 = vsub.f32 %v3781, %v3836
    %v3853 = vsub.f32 %v3782, %v3837
    %v3854 = vsub.f32 %v3783, %v3838
    %v3855 = vsub.f32 %v3784, %v3839
    %v3856 = vsub.f32 %v3785, %v3840
    %v3857 = vsub.f32 %v3786, %v3841
    %v3858 = vsub.f32 %v3787, %v3842
    %v3859 = vsub.f32 %v3788, %v3843
    %v3860 = vsub.f32 %v3789, %v3844
    %v3861 = vsub.f32 %v3790, %v3845
    %v3862 = vsub.f32 %v3791, %v3846
    %v3863 = vmul.f32 %v3847, %v3847
    %v3864 = vmul.f32 %v3848, %v3848
    %v3865 = vmul.f32 %v3849, %v3849
    %v3866 = vmul.f32 %v3850, %v3850
    %v3867 = vmul.f32 %v3851, %v3851
    %v3868 = vmul.f32 %v3852, %v3852
    %v3869 = vmul.f32 %v3853, %v3853
    %v3870 = vmul.f32 %v3854, %v3854
    %v3871 = vmul.f32 %v3855, %v3855
    %v3872 = vmul.f32 %v3856, %v3856
    %v3873 = vmul.f32 %v3857, %v3857
    %v3874 = vmul.f32 %v3858, %v3858
    %v3875 = vmul.f32 %v3859, %v3859
    %v3876 = vmul.f32 %v3860, %v3860
    %v3877 = vmul.f32 %v3861, %v3861
    %v3878 = vmul.f32 %v3862, %v3862
    %3879 = vadd.xlane.f32.xlu0 %v3863
    %v3880 = vpop.xlane.xlu0 %3879
    %3881 = vadd.xlane.f32.xlu0 %v3864
    %v3882 = vpop.xlane.xlu0 %3881
    %3883 = vadd.xlane.f32.xlu0 %v3865
    %v3884 = vpop.xlane.xlu0 %3883
    %3885 = vadd.xlane.f32.xlu0 %v3866
    %v3886 = vpop.xlane.xlu0 %3885
    %3887 = vadd.xlane.f32.xlu0 %v3867
    %v3888 = vpop.xlane.xlu0 %3887
    %3889 = vadd.xlane.f32.xlu0 %v3868
    %v3890 = vpop.xlane.xlu0 %3889
    %3891 = vadd.xlane.f32.xlu0 %v3869
    %v3892 = vpop.xlane.xlu0 %3891
    %3893 = vadd.xlane.f32.xlu0 %v3870
    %v3894 = vpop.xlane.xlu0 %3893
    %3895 = vadd.xlane.f32.xlu0 %v3871
    %v3896 = vpop.xlane.xlu0 %3895
    %3897 = vadd.xlane.f32.xlu0 %v3872
    %v3898 = vpop.xlane.xlu0 %3897
    %3899 = vadd.xlane.f32.xlu0 %v3873
    %v3900 = vpop.xlane.xlu0 %3899
    %3901 = vadd.xlane.f32.xlu0 %v3874
    %v3902 = vpop.xlane.xlu0 %3901
    %3903 = vadd.xlane.f32.xlu0 %v3875
    %v3904 = vpop.xlane.xlu0 %3903
    %3905 = vadd.xlane.f32.xlu0 %v3876
    %v3906 = vpop.xlane.xlu0 %3905
    %3907 = vadd.xlane.f32.xlu0 %v3877
    %v3908 = vpop.xlane.xlu0 %3907
    %3909 = vadd.xlane.f32.xlu0 %v3878
    %v3910 = vpop.xlane.xlu0 %3909
    %v3911 = vmul.f32 %v3880, %v3830
    %v3912 = vmul.f32 %v3882, %v3830
    %v3913 = vmul.f32 %v3884, %v3830
    %v3914 = vmul.f32 %v3886, %v3830
    %v3915 = vmul.f32 %v3888, %v3830
    %v3916 = vmul.f32 %v3890, %v3830
    %v3917 = vmul.f32 %v3892, %v3830
    %v3918 = vmul.f32 %v3894, %v3830
    %v3919 = vmul.f32 %v3896, %v3830
    %v3920 = vmul.f32 %v3898, %v3830
    %v3921 = vmul.f32 %v3900, %v3830
    %v3922 = vmul.f32 %v3902, %v3830
    %v3923 = vmul.f32 %v3904, %v3830
    %v3924 = vmul.f32 %v3906, %v3830
    %v3925 = vmul.f32 %v3908, %v3830
    %v3926 = vmul.f32 %v3910, %v3830
    %v3927 = vadd.f32 %v3911, 1e-05
    %v3928 = vadd.f32 %v3912, 1e-05
    %v3929 = vadd.f32 %v3913, 1e-05
    %v3930 = vadd.f32 %v3914, 1e-05
    %v3931 = vadd.f32 %v3915, 1e-05
    %v3932 = vadd.f32 %v3916, 1e-05
    %v3933 = vadd.f32 %v3917, 1e-05
    %v3934 = vadd.f32 %v3918, 1e-05
    %v3935 = vadd.f32 %v3919, 1e-05
    %v3936 = vadd.f32 %v3920, 1e-05
    %v3937 = vadd.f32 %v3921, 1e-05
    %v3938 = vadd.f32 %v3922, 1e-05
    %v3939 = vadd.f32 %v3923, 1e-05
    %v3940 = vadd.f32 %v3924, 1e-05
    %v3941 = vadd.f32 %v3925, 1e-05
    %v3942 = vadd.f32 %v3926, 1e-05
    %v3943 = vrsqrt.pop %v3927
    %v3944 = vmul.f32 %v3943, %v3927
    %v3945 = vmul.f32 %v3944, %v3943
    %v3946 = vmul.f32 0.5, %v3945
    %v3947 = vsub.f32 1.5, %v3946
    %v3948 = vmul.f32 %v3943, %v3947
    %vm3949 = vweird.f32 %v3927
    %vm3950 = vweird.f32 %v3943
    %vm3951 = vmor %vm3949, %vm3950
    %v3952 = vsel %vm3951, %v3943, %v3948
    %v3953 = vrsqrt.pop %v3928
    %v3954 = vmul.f32 %v3953, %v3928
    %v3955 = vmul.f32 %v3954, %v3953
    %v3956 = vmul.f32 0.5, %v3955
    %v3957 = vsub.f32 1.5, %v3956
    %v3958 = vmul.f32 %v3953, %v3957
    %vm3959 = vweird.f32 %v3928
    %vm3960 = vweird.f32 %v3953
    %vm3961 = vmor %vm3959, %vm3960
    %v3962 = vsel %vm3961, %v3953, %v3958
    %v3963 = vrsqrt.pop %v3929
    %v3964 = vmul.f32 %v3963, %v3929
    %v3965 = vmul.f32 %v3964, %v3963
    %v3966 = vmul.f32 0.5, %v3965
    %v3967 = vsub.f32 1.5, %v3966
    %v3968 = vmul.f32 %v3963, %v3967
    %vm3969 = vweird.f32 %v3929
    %vm3970 = vweird.f32 %v3963
    %vm3971 = vmor %vm3969, %vm3970
    %v3972 = vsel %vm3971, %v3963, %v3968
    %v3973 = vrsqrt.pop %v3930
    %v3974 = vmul.f32 %v3973, %v3930
    %v3975 = vmul.f32 %v3974, %v3973
    %v3976 = vmul.f32 0.5, %v3975
    %v3977 = vsub.f32 1.5, %v3976
    %v3978 = vmul.f32 %v3973, %v3977
    %vm3979 = vweird.f32 %v3930
    %vm3980 = vweird.f32 %v3973
    %vm3981 = vmor %vm3979, %vm3980
    %v3982 = vsel %vm3981, %v3973, %v3978
    %v3983 = vrsqrt.pop %v3931
    %v3984 = vmul.f32 %v3983, %v3931
    %v3985 = vmul.f32 %v3984, %v3983
    %v3986 = vmul.f32 0.5, %v3985
    %v3987 = vsub.f32 1.5, %v3986
    %v3988 = vmul.f32 %v3983, %v3987
    %vm3989 = vweird.f32 %v3931
    %vm3990 = vweird.f32 %v3983
    %vm3991 = vmor %vm3989, %vm3990
    %v3992 = vsel %vm3991, %v3983, %v3988
    %v3993 = vrsqrt.pop %v3932
    %v3994 = vmul.f32 %v3993, %v3932
    %v3995 = vmul.f32 %v3994, %v3993
    %v3996 = vmul.f32 0.5, %v3995
    %v3997 = vsub.f32 1.5, %v3996
    %v3998 = vmul.f32 %v3993, %v3997
    %vm3999 = vweird.f32 %v3932
    %vm4000 = vweird.f32 %v3993
    %vm4001 = vmor %vm3999, %vm4000
    %v4002 = vsel %vm4001, %v3993, %v3998
    %v4003 = vrsqrt.pop %v3933
    %v4004 = vmul.f32 %v4003, %v3933
    %v4005 = vmul.f32 %v4004, %v4003
    %v4006 = vmul.f32 0.5, %v4005
    %v4007 = vsub.f32 1.5, %v4006
    %v4008 = vmul.f32 %v4003, %v4007
    %vm4009 = vweird.f32 %v3933
    %vm4010 = vweird.f32 %v4003
    %vm4011 = vmor %vm4009, %vm4010
    %v4012 = vsel %vm4011, %v4003, %v4008
    %v4013 = vrsqrt.pop %v3934
    %v4014 = vmul.f32 %v4013, %v3934
    %v4015 = vmul.f32 %v4014, %v4013
    %v4016 = vmul.f32 0.5, %v4015
    %v4017 = vsub.f32 1.5, %v4016
    %v4018 = vmul.f32 %v4013, %v4017
    %vm4019 = vweird.f32 %v3934
    %vm4020 = vweird.f32 %v4013
    %vm4021 = vmor %vm4019, %vm4020
    %v4022 = vsel %vm4021, %v4013, %v4018
    %v4023 = vrsqrt.pop %v3935
    %v4024 = vmul.f32 %v4023, %v3935
    %v4025 = vmul.f32 %v4024, %v4023
    %v4026 = vmul.f32 0.5, %v4025
    %v4027 = vsub.f32 1.5, %v4026
    %v4028 = vmul.f32 %v4023, %v4027
    %vm4029 = vweird.f32 %v3935
    %vm4030 = vweird.f32 %v4023
    %vm4031 = vmor %vm4029, %vm4030
    %v4032 = vsel %vm4031, %v4023, %v4028
    %v4033 = vrsqrt.pop %v3936
    %v4034 = vmul.f32 %v4033, %v3936
    %v4035 = vmul.f32 %v4034, %v4033
    %v4036 = vmul.f32 0.5, %v4035
    %v4037 = vsub.f32 1.5, %v4036
    %v4038 = vmul.f32 %v4033, %v4037
    %vm4039 = vweird.f32 %v3936
    %vm4040 = vweird.f32 %v4033
    %vm4041 = vmor %vm4039, %vm4040
    %v4042 = vsel %vm4041, %v4033, %v4038
    %v4043 = vrsqrt.pop %v3937
    %v4044 = vmul.f32 %v4043, %v3937
    %v4045 = vmul.f32 %v4044, %v4043
    %v4046 = vmul.f32 0.5, %v4045
    %v4047 = vsub.f32 1.5, %v4046
    %v4048 = vmul.f32 %v4043, %v4047
    %vm4049 = vweird.f32 %v3937
    %vm4050 = vweird.f32 %v4043
    %vm4051 = vmor %vm4049, %vm4050
    %v4052 = vsel %vm4051, %v4043, %v4048
    %v4053 = vrsqrt.pop %v3938
    %v4054 = vmul.f32 %v4053, %v3938
    %v4055 = vmul.f32 %v4054, %v4053
    %v4056 = vmul.f32 0.5, %v4055
    %v4057 = vsub.f32 1.5, %v4056
    %v4058 = vmul.f32 %v4053, %v4057
    %vm4059 = vweird.f32 %v3938
    %vm4060 = vweird.f32 %v4053
    %vm4061 = vmor %vm4059, %vm4060
    %v4062 = vsel %vm4061, %v4053, %v4058
    %v4063 = vrsqrt.pop %v3939
    %v4064 = vmul.f32 %v4063, %v3939
    %v4065 = vmul.f32 %v4064, %v4063
    %v4066 = vmul.f32 0.5, %v4065
    %v4067 = vsub.f32 1.5, %v4066
    %v4068 = vmul.f32 %v4063, %v4067
    %vm4069 = vweird.f32 %v3939
    %vm4070 = vweird.f32 %v4063
    %vm4071 = vmor %vm4069, %vm4070
    %v4072 = vsel %vm4071, %v4063, %v4068
    %v4073 = vrsqrt.pop %v3940
    %v4074 = vmul.f32 %v4073, %v3940
    %v4075 = vmul.f32 %v4074, %v4073
    %v4076 = vmul.f32 0.5, %v4075
    %v4077 = vsub.f32 1.5, %v4076
    %v4078 = vmul.f32 %v4073, %v4077
    %vm4079 = vweird.f32 %v3940
    %vm4080 = vweird.f32 %v4073
    %vm4081 = vmor %vm4079, %vm4080
    %v4082 = vsel %vm4081, %v4073, %v4078
    %v4083 = vrsqrt.pop %v3941
    %v4084 = vmul.f32 %v4083, %v3941
    %v4085 = vmul.f32 %v4084, %v4083
    %v4086 = vmul.f32 0.5, %v4085
    %v4087 = vsub.f32 1.5, %v4086
    %v4088 = vmul.f32 %v4083, %v4087
    %vm4089 = vweird.f32 %v3941
    %vm4090 = vweird.f32 %v4083
    %vm4091 = vmor %vm4089, %vm4090
    %v4092 = vsel %vm4091, %v4083, %v4088
    %v4093 = vrsqrt.pop %v3942
    %v4094 = vmul.f32 %v4093, %v3942
    %v4095 = vmul.f32 %v4094, %v4093
    %v4096 = vmul.f32 0.5, %v4095
    %v4097 = vsub.f32 1.5, %v4096
    %v4098 = vmul.f32 %v4093, %v4097
    %vm4099 = vweird.f32 %v3942
    %vm4100 = vweird.f32 %v4093
    %vm4101 = vmor %vm4099, %vm4100
    %v4102 = vsel %vm4101, %v4093, %v4098
    %v4103 = vmul.f32 %v3847, %v3952
    %v4104 = vmul.f32 %v3848, %v3962
    %v4105 = vmul.f32 %v3849, %v3972
    %v4106 = vmul.f32 %v3850, %v3982
    %v4107 = vmul.f32 %v3851, %v3992
    %v4108 = vmul.f32 %v3852, %v4002
    %v4109 = vmul.f32 %v3853, %v4012
    %v4110 = vmul.f32 %v3854, %v4022
    %v4111 = vmul.f32 %v3855, %v4032
    %v4112 = vmul.f32 %v3856, %v4042
    %v4113 = vmul.f32 %v3857, %v4052
    %v4114 = vmul.f32 %v3858, %v4062
    %v4115 = vmul.f32 %v3859, %v4072
    %v4116 = vmul.f32 %v3860, %v4082
    %v4117 = vmul.f32 %v3861, %v4092
    %v4118 = vmul.f32 %v3862, %v4102
    %v4119 = vld [vmem:[%s7] sm:$0x1]
    %v4121 = vperm.slane %v4119, 0
    %v4123 = vmul.f32 %v4103, %v4121
    %v4124 = vmul.f32 %v4104, %v4121
    %v4125 = vmul.f32 %v4105, %v4121
    %v4126 = vmul.f32 %v4106, %v4121
    %v4127 = vmul.f32 %v4107, %v4121
    %v4128 = vmul.f32 %v4108, %v4121
    %v4129 = vmul.f32 %v4109, %v4121
    %v4130 = vmul.f32 %v4110, %v4121
    %v4131 = vmul.f32 %v4111, %v4121
    %v4132 = vmul.f32 %v4112, %v4121
    %v4133 = vmul.f32 %v4113, %v4121
    %v4134 = vmul.f32 %v4114, %v4121
    %v4135 = vmul.f32 %v4115, %v4121
    %v4136 = vmul.f32 %v4116, %v4121
    %v4137 = vmul.f32 %v4117, %v4121
    %v4138 = vmul.f32 %v4118, %v4121
    %v4139 = vld [vmem:[%s8] sm:$0x1]
    %v4141 = vperm.slane %v4139, 0
    %v4143 = vadd.f32 %v4123, %v4141
    %v4144 = vadd.f32 %v4124, %v4141
    %v4145 = vadd.f32 %v4125, %v4141
    %v4146 = vadd.f32 %v4126, %v4141
    %v4147 = vadd.f32 %v4127, %v4141
    %v4148 = vadd.f32 %v4128, %v4141
    %v4149 = vadd.f32 %v4129, %v4141
    %v4150 = vadd.f32 %v4130, %v4141
    %v4151 = vadd.f32 %v4131, %v4141
    %v4152 = vadd.f32 %v4132, %v4141
    %v4153 = vadd.f32 %v4133, %v4141
    %v4154 = vadd.f32 %v4134, %v4141
    %v4155 = vadd.f32 %v4135, %v4141
    %v4156 = vadd.f32 %v4136, %v4141
    %v4157 = vadd.f32 %v4137, %v4141
    %v4158 = vadd.f32 %v4138, %v4141
    %v4159 = vpack.c.bf16 %v4144, %v4143
    %v4160 = vpack.c.bf16 %v4146, %v4145
    %v4161 = vpack.c.bf16 %v4148, %v4147
    %v4162 = vpack.c.bf16 %v4150, %v4149
    %v4163 = vpack.c.bf16 %v4152, %v4151
    %v4164 = vpack.c.bf16 %v4154, %v4153
    %v4165 = vpack.c.bf16 %v4156, %v4155
    %v4166 = vpack.c.bf16 %v4158, %v4157
    %v4167 = vld [vmem:[#allocation2] sm:$0xff]
    %v4168 = vld [vmem:[#allocation2 + $0x8] sm:$0xff]
    %v4169 = vld [vmem:[#allocation2 + $0x10] sm:$0xff]
    %v4170 = vld [vmem:[#allocation2 + $0x18] sm:$0xff]
    %v4171 = vld [vmem:[#allocation2 + $0x20] sm:$0xff]
    %v4172 = vld [vmem:[#allocation2 + $0x28] sm:$0xff]
    %v4173 = vld [vmem:[#allocation2 + $0x30] sm:$0xff]
    %v4174 = vld [vmem:[#allocation2 + $0x38] sm:$0xff]
    %v4175 = vld [vmem:[#allocation2 + $0x40] sm:$0xff]
    %v4176 = vld [vmem:[#allocation2 + $0x48] sm:$0xff]
    %v4177 = vld [vmem:[#allocation2 + $0x50] sm:$0xff]
    %v4178 = vld [vmem:[#allocation2 + $0x58] sm:$0xff]
    %v4179 = vld [vmem:[#allocation2 + $0x60] sm:$0xff]
    %v4180 = vld [vmem:[#allocation2 + $0x68] sm:$0xff]
    %v4181 = vld [vmem:[#allocation2 + $0x70] sm:$0xff]
    %v4182 = vld [vmem:[#allocation2 + $0x78] sm:$0xff]
    %v4183 = vld [vmem:[%s10] sm:$0x3]
    %v4185 = vperm.slane %v4183, 0
    %v4186 = vperm.slane %v4183, 1
    %v4205 = vunpack.c.l.b16 %v4167
    %v4206 = vunpack.c.h.b16 %v4167
    %v4207 = vunpack.c.l.b16 %v4168
    %v4208 = vunpack.c.h.b16 %v4168
    %v4209 = vunpack.c.l.b16 %v4169
    %v4210 = vunpack.c.h.b16 %v4169
    %v4211 = vunpack.c.l.b16 %v4170
    %v4212 = vunpack.c.h.b16 %v4170
    %v4213 = vunpack.c.l.b16 %v4171
    %v4214 = vunpack.c.h.b16 %v4171
    %v4215 = vunpack.c.l.b16 %v4172
    %v4216 = vunpack.c.h.b16 %v4172
    %v4217 = vunpack.c.l.b16 %v4173
    %v4218 = vunpack.c.h.b16 %v4173
    %v4219 = vunpack.c.l.b16 %v4174
    %v4220 = vunpack.c.h.b16 %v4174
    %v4221 = vunpack.c.l.b16 %v4175
    %v4222 = vunpack.c.h.b16 %v4175
    %v4223 = vunpack.c.l.b16 %v4176
    %v4224 = vunpack.c.h.b16 %v4176
    %v4225 = vunpack.c.l.b16 %v4177
    %v4226 = vunpack.c.h.b16 %v4177
    %v4227 = vunpack.c.l.b16 %v4178
    %v4228 = vunpack.c.h.b16 %v4178
    %v4229 = vunpack.c.l.b16 %v4179
    %v4230 = vunpack.c.h.b16 %v4179
    %v4231 = vunpack.c.l.b16 %v4180
    %v4232 = vunpack.c.h.b16 %v4180
    %v4233 = vunpack.c.l.b16 %v4181
    %v4234 = vunpack.c.h.b16 %v4181
    %v4235 = vunpack.c.l.b16 %v4182
    %v4236 = vunpack.c.h.b16 %v4182
    %v4237 = vpack.c.b16 %v4207, %v4205
    %v4238 = vpack.c.b16 %v4208, %v4206
    %v4239 = vpack.c.b16 %v4211, %v4209
    %v4240 = vpack.c.b16 %v4212, %v4210
    %v4241 = vpack.c.b16 %v4215, %v4213
    %v4242 = vpack.c.b16 %v4216, %v4214
    %v4243 = vpack.c.b16 %v4219, %v4217
    %v4244 = vpack.c.b16 %v4220, %v4218
    %v4245 = vpack.c.b16 %v4223, %v4221
    %v4246 = vpack.c.b16 %v4224, %v4222
    %v4247 = vpack.c.b16 %v4227, %v4225
    %v4248 = vpack.c.b16 %v4228, %v4226
    %v4249 = vpack.c.b16 %v4231, %v4229
    %v4250 = vpack.c.b16 %v4232, %v4230
    %v4251 = vpack.c.b16 %v4235, %v4233
    %v4252 = vpack.c.b16 %v4236, %v4234
    %4269 = vmatpush.bf16.msra.mxu0 %v4251
    %4270 = vmatpush.bf16.msra.mxu0 %v4249
    %4271 = vmatpush.bf16.msra.mxu0 %v4247
    %4272 = vmatpush.bf16.msra.mxu0 %v4245
    %4273 = vmatpush.bf16.msra.mxu0 %v4243
    %4274 = vmatpush.bf16.msra.mxu0 %v4241
    %4275 = vmatpush.bf16.msra.mxu0 %v4239
    %4276 = vmatpush.bf16.msra.mxu0 %v4237
    %4277 = vmatmul.bf16.gmra.mxu0 %v4159
    %v4278 = vpop.f32.mrf.mxu0
    %v4279 = vadd.f32 %v4185, %v4278
    %v4280 = vpop.f32.mrf.mxu0
    %v4281 = vadd.f32 %v4185, %v4280
    %4282 = vmatmul.bf16.gmra.mxu0 %v4160
    %v4283 = vpop.f32.mrf.mxu0
    %v4284 = vadd.f32 %v4185, %v4283
    %v4285 = vpop.f32.mrf.mxu0
    %v4286 = vadd.f32 %v4185, %v4285
    %4287 = vmatmul.bf16.gmra.mxu0 %v4161
    %v4288 = vpop.f32.mrf.mxu0
    %v4289 = vadd.f32 %v4185, %v4288
    %v4290 = vpop.f32.mrf.mxu0
    %v4291 = vadd.f32 %v4185, %v4290
    %4292 = vmatmul.bf16.gmra.mxu0 %v4162
    %v4293 = vpop.f32.mrf.mxu0
    %v4294 = vadd.f32 %v4185, %v4293
    %v4295 = vpop.f32.mrf.mxu0
    %v4296 = vadd.f32 %v4185, %v4295
    %4297 = vmatmul.bf16.gmra.mxu0 %v4163
    %v4298 = vpop.f32.mrf.mxu0
    %v4299 = vadd.f32 %v4185, %v4298
    %v4300 = vpop.f32.mrf.mxu0
    %v4301 = vadd.f32 %v4185, %v4300
    %4302 = vmatmul.bf16.gmra.mxu0 %v4164
    %v4303 = vpop.f32.mrf.mxu0
    %v4304 = vadd.f32 %v4185, %v4303
    %v4305 = vpop.f32.mrf.mxu0
    %v4306 = vadd.f32 %v4185, %v4305
    %4307 = vmatmul.bf16.gmra.mxu0 %v4165
    %v4308 = vpop.f32.mrf.mxu0
    %v4309 = vadd.f32 %v4185, %v4308
    %v4310 = vpop.f32.mrf.mxu0
    %v4311 = vadd.f32 %v4185, %v4310
    %4312 = vmatmul.bf16.gmra.mxu0 %v4166
    %v4313 = vpop.f32.mrf.mxu0
    %v4314 = vadd.f32 %v4185, %v4313
    %v4315 = vpop.f32.mrf.mxu0
    %v4316 = vadd.f32 %v4185, %v4315
    %4317 = vdwg.mxu0
    %4318 = vmatpush.bf16.msra.mxu0 %v4252
    %4319 = vmatpush.bf16.msra.mxu0 %v4250
    %4320 = vmatpush.bf16.msra.mxu0 %v4248
    %4321 = vmatpush.bf16.msra.mxu0 %v4246
    %4322 = vmatpush.bf16.msra.mxu0 %v4244
    %4323 = vmatpush.bf16.msra.mxu0 %v4242
    %4324 = vmatpush.bf16.msra.mxu0 %v4240
    %4325 = vmatpush.bf16.msra.mxu0 %v4238
    %4326 = vmatmul.bf16.gmra.mxu0 %v4159
    %v4327 = vpop.f32.mrf.mxu0
    %v4328 = vadd.f32 %v4186, %v4327
    %v4329 = vpop.f32.mrf.mxu0
    %v4330 = vadd.f32 %v4186, %v4329
    %4331 = vmatmul.bf16.gmra.mxu0 %v4160
    %v4332 = vpop.f32.mrf.mxu0
    %v4333 = vadd.f32 %v4186, %v4332
    %v4334 = vpop.f32.mrf.mxu0
    %v4335 = vadd.f32 %v4186, %v4334
    %4336 = vmatmul.bf16.gmra.mxu0 %v4161
    %v4337 = vpop.f32.mrf.mxu0
    %v4338 = vadd.f32 %v4186, %v4337
    %v4339 = vpop.f32.mrf.mxu0
    %v4340 = vadd.f32 %v4186, %v4339
    %4341 = vmatmul.bf16.gmra.mxu0 %v4162
    %v4342 = vpop.f32.mrf.mxu0
    %v4343 = vadd.f32 %v4186, %v4342
    %v4344 = vpop.f32.mrf.mxu0
    %v4345 = vadd.f32 %v4186, %v4344
    %4346 = vmatmul.bf16.gmra.mxu0 %v4163
    %v4347 = vpop.f32.mrf.mxu0
    %v4348 = vadd.f32 %v4186, %v4347
    %v4349 = vpop.f32.mrf.mxu0
    %v4350 = vadd.f32 %v4186, %v4349
    %4351 = vmatmul.bf16.gmra.mxu0 %v4164
    %v4352 = vpop.f32.mrf.mxu0
    %v4353 = vadd.f32 %v4186, %v4352
    %v4354 = vpop.f32.mrf.mxu0
    %v4355 = vadd.f32 %v4186, %v4354
    %4356 = vmatmul.bf16.gmra.mxu0 %v4165
    %v4357 = vpop.f32.mrf.mxu0
    %v4358 = vadd.f32 %v4186, %v4357
    %v4359 = vpop.f32.mrf.mxu0
    %v4360 = vadd.f32 %v4186, %v4359
    %4361 = vmatmul.bf16.gmra.mxu0 %v4166
    %v4362 = vpop.f32.mrf.mxu0
    %v4363 = vadd.f32 %v4186, %v4362
    %v4364 = vpop.f32.mrf.mxu0
    %v4365 = vadd.f32 %v4186, %v4364
    %4366 = vdwg.mxu0
    %v4367 = vmax.f32 %v4279, 0.0
    %v4368 = vmax.f32 %v4328, 0.0
    %v4369 = vmax.f32 %v4281, 0.0
    %v4370 = vmax.f32 %v4330, 0.0
    %v4371 = vmax.f32 %v4284, 0.0
    %v4372 = vmax.f32 %v4333, 0.0
    %v4373 = vmax.f32 %v4286, 0.0
    %v4374 = vmax.f32 %v4335, 0.0
    %v4375 = vmax.f32 %v4289, 0.0
    %v4376 = vmax.f32 %v4338, 0.0
    %v4377 = vmax.f32 %v4291, 0.0
    %v4378 = vmax.f32 %v4340, 0.0
    %v4379 = vmax.f32 %v4294, 0.0
    %v4380 = vmax.f32 %v4343, 0.0
    %v4381 = vmax.f32 %v4296, 0.0
    %v4382 = vmax.f32 %v4345, 0.0
    %v4383 = vmax.f32 %v4299, 0.0
    %v4384 = vmax.f32 %v4348, 0.0
    %v4385 = vmax.f32 %v4301, 0.0
    %v4386 = vmax.f32 %v4350, 0.0
    %v4387 = vmax.f32 %v4304, 0.0
    %v4388 = vmax.f32 %v4353, 0.0
    %v4389 = vmax.f32 %v4306, 0.0
    %v4390 = vmax.f32 %v4355, 0.0
    %v4391 = vmax.f32 %v4309, 0.0
    %v4392 = vmax.f32 %v4358, 0.0
    %v4393 = vmax.f32 %v4311, 0.0
    %v4394 = vmax.f32 %v4360, 0.0
    %v4395 = vmax.f32 %v4314, 0.0
    %v4396 = vmax.f32 %v4363, 0.0
    %v4397 = vmax.f32 %v4316, 0.0
    %v4398 = vmax.f32 %v4365, 0.0
    %v4399 = vpack.c.bf16 %v4369, %v4367
    %v4400 = vpack.c.bf16 %v4370, %v4368
    %v4401 = vpack.c.bf16 %v4373, %v4371
    %v4402 = vpack.c.bf16 %v4374, %v4372
    %v4403 = vpack.c.bf16 %v4377, %v4375
    %v4404 = vpack.c.bf16 %v4378, %v4376
    %v4405 = vpack.c.bf16 %v4381, %v4379
    %v4406 = vpack.c.bf16 %v4382, %v4380
    %v4407 = vpack.c.bf16 %v4385, %v4383
    %v4408 = vpack.c.bf16 %v4386, %v4384
    %v4409 = vpack.c.bf16 %v4389, %v4387
    %v4410 = vpack.c.bf16 %v4390, %v4388
    %v4411 = vpack.c.bf16 %v4393, %v4391
    %v4412 = vpack.c.bf16 %v4394, %v4392
    %v4413 = vpack.c.bf16 %v4397, %v4395
    %v4414 = vpack.c.bf16 %v4398, %v4396
    %v4415 = vld [vmem:[#allocation4] sm:$0xf]
    %v4416 = vld [vmem:[#allocation4 + $0x4] sm:$0xf]
    %v4417 = vld [vmem:[#allocation4 + $0x8] sm:$0xf]
    %v4418 = vld [vmem:[#allocation4 + $0xc] sm:$0xf]
    %v4419 = vld [vmem:[#allocation4 + $0x10] sm:$0xf]
    %v4420 = vld [vmem:[#allocation4 + $0x14] sm:$0xf]
    %v4421 = vld [vmem:[#allocation4 + $0x18] sm:$0xf]
    %v4422 = vld [vmem:[#allocation4 + $0x1c] sm:$0xf]
    %v4423 = vld [vmem:[#allocation4 + $0x20] sm:$0xf]
    %v4424 = vld [vmem:[#allocation4 + $0x24] sm:$0xf]
    %v4425 = vld [vmem:[#allocation4 + $0x28] sm:$0xf]
    %v4426 = vld [vmem:[#allocation4 + $0x2c] sm:$0xf]
    %v4427 = vld [vmem:[#allocation4 + $0x30] sm:$0xf]
    %v4428 = vld [vmem:[#allocation4 + $0x34] sm:$0xf]
    %v4429 = vld [vmem:[#allocation4 + $0x38] sm:$0xf]
    %v4430 = vld [vmem:[#allocation4 + $0x3c] sm:$0xf]
    %v4431 = vld [vmem:[#allocation4 + $0x40] sm:$0xf]
    %v4432 = vld [vmem:[#allocation4 + $0x44] sm:$0xf]
    %v4433 = vld [vmem:[#allocation4 + $0x48] sm:$0xf]
    %v4434 = vld [vmem:[#allocation4 + $0x4c] sm:$0xf]
    %v4435 = vld [vmem:[#allocation4 + $0x50] sm:$0xf]
    %v4436 = vld [vmem:[#allocation4 + $0x54] sm:$0xf]
    %v4437 = vld [vmem:[#allocation4 + $0x58] sm:$0xf]
    %v4438 = vld [vmem:[#allocation4 + $0x5c] sm:$0xf]
    %v4439 = vld [vmem:[#allocation4 + $0x60] sm:$0xf]
    %v4440 = vld [vmem:[#allocation4 + $0x64] sm:$0xf]
    %v4441 = vld [vmem:[#allocation4 + $0x68] sm:$0xf]
    %v4442 = vld [vmem:[#allocation4 + $0x6c] sm:$0xf]
    %v4443 = vld [vmem:[#allocation4 + $0x70] sm:$0xf]
    %v4444 = vld [vmem:[#allocation4 + $0x74] sm:$0xf]
    %v4445 = vld [vmem:[#allocation4 + $0x78] sm:$0xf]
    %v4446 = vld [vmem:[#allocation4 + $0x7c] sm:$0xf]
    %v4447 = vld [vmem:[%s12] sm:$0x1]
    %v4449 = vperm.slane %v4447, 0
    %v4483 = vunpack.c.l.b16 %v4415
    %v4484 = vunpack.c.l.b16 %v4416
    %v4485 = vunpack.c.l.b16 %v4417
    %v4486 = vunpack.c.l.b16 %v4418
    %v4487 = vunpack.c.l.b16 %v4419
    %v4488 = vunpack.c.l.b16 %v4420
    %v4489 = vunpack.c.l.b16 %v4421
    %v4490 = vunpack.c.l.b16 %v4422
    %v4491 = vunpack.c.l.b16 %v4423
    %v4492 = vunpack.c.l.b16 %v4424
    %v4493 = vunpack.c.l.b16 %v4425
    %v4494 = vunpack.c.l.b16 %v4426
    %v4495 = vunpack.c.l.b16 %v4427
    %v4496 = vunpack.c.l.b16 %v4428
    %v4497 = vunpack.c.l.b16 %v4429
    %v4498 = vunpack.c.l.b16 %v4430
    %v4499 = vunpack.c.l.b16 %v4431
    %v4500 = vunpack.c.l.b16 %v4432
    %v4501 = vunpack.c.l.b16 %v4433
    %v4502 = vunpack.c.l.b16 %v4434
    %v4503 = vunpack.c.l.b16 %v4435
    %v4504 = vunpack.c.l.b16 %v4436
    %v4505 = vunpack.c.l.b16 %v4437
    %v4506 = vunpack.c.l.b16 %v4438
    %v4507 = vunpack.c.l.b16 %v4439
    %v4508 = vunpack.c.l.b16 %v4440
    %v4509 = vunpack.c.l.b16 %v4441
    %v4510 = vunpack.c.l.b16 %v4442
    %v4511 = vunpack.c.l.b16 %v4443
    %v4512 = vunpack.c.l.b16 %v4444
    %v4513 = vunpack.c.l.b16 %v4445
    %v4514 = vunpack.c.l.b16 %v4446
    %v4515 = vpack.c.b16 %v4484, %v4483
    %v4516 = vpack.c.b16 %v4486, %v4485
    %v4517 = vpack.c.b16 %v4488, %v4487
    %v4518 = vpack.c.b16 %v4490, %v4489
    %v4519 = vpack.c.b16 %v4492, %v4491
    %v4520 = vpack.c.b16 %v4494, %v4493
    %v4521 = vpack.c.b16 %v4496, %v4495
    %v4522 = vpack.c.b16 %v4498, %v4497
    %v4523 = vpack.c.b16 %v4500, %v4499
    %v4524 = vpack.c.b16 %v4502, %v4501
    %v4525 = vpack.c.b16 %v4504, %v4503
    %v4526 = vpack.c.b16 %v4506, %v4505
    %v4527 = vpack.c.b16 %v4508, %v4507
    %v4528 = vpack.c.b16 %v4510, %v4509
    %v4529 = vpack.c.b16 %v4512, %v4511
    %v4530 = vpack.c.b16 %v4514, %v4513
    %4547 = vmatpush.bf16.msra.mxu0 %v4522
    %4548 = vmatpush.bf16.msra.mxu0 %v4521
    %4549 = vmatpush.bf16.msra.mxu0 %v4520
    %4550 = vmatpush.bf16.msra.mxu0 %v4519
    %4551 = vmatpush.bf16.msra.mxu0 %v4518
    %4552 = vmatpush.bf16.msra.mxu0 %v4517
    %4553 = vmatpush.bf16.msra.mxu0 %v4516
    %4554 = vmatpush.bf16.msra.mxu0 %v4515
    %4555 = vmatmul.bf16.gmra.mxu0 %v4399
    %v4556 = vpop.f32.mrf.mxu0
    %v4557 = vadd.f32 %v4449, %v4556
    %v4558 = vpop.f32.mrf.mxu0
    %v4559 = vadd.f32 %v4449, %v4558
    %4560 = vmatmul.bf16.gmra.mxu0 %v4401
    %v4561 = vpop.f32.mrf.mxu0
    %v4562 = vadd.f32 %v4449, %v4561
    %v4563 = vpop.f32.mrf.mxu0
    %v4564 = vadd.f32 %v4449, %v4563
    %4565 = vmatmul.bf16.gmra.mxu0 %v4403
    %v4566 = vpop.f32.mrf.mxu0
    %v4567 = vadd.f32 %v4449, %v4566
    %v4568 = vpop.f32.mrf.mxu0
    %v4569 = vadd.f32 %v4449, %v4568
    %4570 = vmatmul.bf16.gmra.mxu0 %v4405
    %v4571 = vpop.f32.mrf.mxu0
    %v4572 = vadd.f32 %v4449, %v4571
    %v4573 = vpop.f32.mrf.mxu0
    %v4574 = vadd.f32 %v4449, %v4573
    %4575 = vmatmul.bf16.gmra.mxu0 %v4407
    %v4576 = vpop.f32.mrf.mxu0
    %v4577 = vadd.f32 %v4449, %v4576
    %v4578 = vpop.f32.mrf.mxu0
    %v4579 = vadd.f32 %v4449, %v4578
    %4580 = vmatmul.bf16.gmra.mxu0 %v4409
    %v4581 = vpop.f32.mrf.mxu0
    %v4582 = vadd.f32 %v4449, %v4581
    %v4583 = vpop.f32.mrf.mxu0
    %v4584 = vadd.f32 %v4449, %v4583
    %4585 = vmatmul.bf16.gmra.mxu0 %v4411
    %v4586 = vpop.f32.mrf.mxu0
    %v4587 = vadd.f32 %v4449, %v4586
    %v4588 = vpop.f32.mrf.mxu0
    %v4589 = vadd.f32 %v4449, %v4588
    %4590 = vmatmul.bf16.gmra.mxu0 %v4413
    %v4591 = vpop.f32.mrf.mxu0
    %v4592 = vadd.f32 %v4449, %v4591
    %v4593 = vpop.f32.mrf.mxu0
    %v4594 = vadd.f32 %v4449, %v4593
    %4595 = vdwg.mxu0
    %4596 = vmatpush.bf16.msra.mxu0 %v4530
    %4597 = vmatpush.bf16.msra.mxu0 %v4529
    %4598 = vmatpush.bf16.msra.mxu0 %v4528
    %4599 = vmatpush.bf16.msra.mxu0 %v4527
    %4600 = vmatpush.bf16.msra.mxu0 %v4526
    %4601 = vmatpush.bf16.msra.mxu0 %v4525
    %4602 = vmatpush.bf16.msra.mxu0 %v4524
    %4603 = vmatpush.bf16.msra.mxu0 %v4523
    %4604 = vmatmul.bf16.gmra.mxu0 %v4400
    %v4605 = vpop.f32.mrf.mxu0
    %v4606 = vadd.f32 %v4557, %v4605
    %v4607 = vpop.f32.mrf.mxu0
    %v4608 = vadd.f32 %v4559, %v4607
    %4609 = vmatmul.bf16.gmra.mxu0 %v4402
    %v4610 = vpop.f32.mrf.mxu0
    %v4611 = vadd.f32 %v4562, %v4610
    %v4612 = vpop.f32.mrf.mxu0
    %v4613 = vadd.f32 %v4564, %v4612
    %4614 = vmatmul.bf16.gmra.mxu0 %v4404
    %v4615 = vpop.f32.mrf.mxu0
    %v4616 = vadd.f32 %v4567, %v4615
    %v4617 = vpop.f32.mrf.mxu0
    %v4618 = vadd.f32 %v4569, %v4617
    %4619 = vmatmul.bf16.gmra.mxu0 %v4406
    %v4620 = vpop.f32.mrf.mxu0
    %v4621 = vadd.f32 %v4572, %v4620
    %v4622 = vpop.f32.mrf.mxu0
    %v4623 = vadd.f32 %v4574, %v4622
    %4624 = vmatmul.bf16.gmra.mxu0 %v4408
    %v4625 = vpop.f32.mrf.mxu0
    %v4626 = vadd.f32 %v4577, %v4625
    %v4627 = vpop.f32.mrf.mxu0
    %v4628 = vadd.f32 %v4579, %v4627
    %4629 = vmatmul.bf16.gmra.mxu0 %v4410
    %v4630 = vpop.f32.mrf.mxu0
    %v4631 = vadd.f32 %v4582, %v4630
    %v4632 = vpop.f32.mrf.mxu0
    %v4633 = vadd.f32 %v4584, %v4632
    %4634 = vmatmul.bf16.gmra.mxu0 %v4412
    %v4635 = vpop.f32.mrf.mxu0
    %v4636 = vadd.f32 %v4587, %v4635
    %v4637 = vpop.f32.mrf.mxu0
    %v4638 = vadd.f32 %v4589, %v4637
    %4639 = vmatmul.bf16.gmra.mxu0 %v4414
    %v4640 = vpop.f32.mrf.mxu0
    %v4641 = vadd.f32 %v4592, %v4640
    %v4642 = vpop.f32.mrf.mxu0
    %v4643 = vadd.f32 %v4594, %v4642
    %4644 = vdwg.mxu0
    %v4645 = vadd.f32 %v4143, %v4606
    %v4646 = vadd.f32 %v4144, %v4608
    %v4647 = vadd.f32 %v4145, %v4611
    %v4648 = vadd.f32 %v4146, %v4613
    %v4649 = vadd.f32 %v4147, %v4616
    %v4650 = vadd.f32 %v4148, %v4618
    %v4651 = vadd.f32 %v4149, %v4621
    %v4652 = vadd.f32 %v4150, %v4623
    %v4653 = vadd.f32 %v4151, %v4626
    %v4654 = vadd.f32 %v4152, %v4628
    %v4655 = vadd.f32 %v4153, %v4631
    %v4656 = vadd.f32 %v4154, %v4633
    %v4657 = vadd.f32 %v4155, %v4636
    %v4658 = vadd.f32 %v4156, %v4638
    %v4659 = vadd.f32 %v4157, %v4641
    %v4660 = vadd.f32 %v4158, %v4643
    %4661 = vadd.xlane.f32.xlu0 %v4645
    %v4662 = vpop.xlane.xlu0 %4661
    %4663 = vadd.xlane.f32.xlu0 %v4646
    %v4664 = vpop.xlane.xlu0 %4663
    %4665 = vadd.xlane.f32.xlu0 %v4647
    %v4666 = vpop.xlane.xlu0 %4665
    %4667 = vadd.xlane.f32.xlu0 %v4648
    %v4668 = vpop.xlane.xlu0 %4667
    %4669 = vadd.xlane.f32.xlu0 %v4649
    %v4670 = vpop.xlane.xlu0 %4669
    %4671 = vadd.xlane.f32.xlu0 %v4650
    %v4672 = vpop.xlane.xlu0 %4671
    %4673 = vadd.xlane.f32.xlu0 %v4651
    %v4674 = vpop.xlane.xlu0 %4673
    %4675 = vadd.xlane.f32.xlu0 %v4652
    %v4676 = vpop.xlane.xlu0 %4675
    %4677 = vadd.xlane.f32.xlu0 %v4653
    %v4678 = vpop.xlane.xlu0 %4677
    %4679 = vadd.xlane.f32.xlu0 %v4654
    %v4680 = vpop.xlane.xlu0 %4679
    %4681 = vadd.xlane.f32.xlu0 %v4655
    %v4682 = vpop.xlane.xlu0 %4681
    %4683 = vadd.xlane.f32.xlu0 %v4656
    %v4684 = vpop.xlane.xlu0 %4683
    %4685 = vadd.xlane.f32.xlu0 %v4657
    %v4686 = vpop.xlane.xlu0 %4685
    %4687 = vadd.xlane.f32.xlu0 %v4658
    %v4688 = vpop.xlane.xlu0 %4687
    %4689 = vadd.xlane.f32.xlu0 %v4659
    %v4690 = vpop.xlane.xlu0 %4689
    %4691 = vadd.xlane.f32.xlu0 %v4660
    %v4692 = vpop.xlane.xlu0 %4691
    %v4693 = vmul.f32 %v4662, %v3830
    %v4694 = vmul.f32 %v4664, %v3830
    %v4695 = vmul.f32 %v4666, %v3830
    %v4696 = vmul.f32 %v4668, %v3830
    %v4697 = vmul.f32 %v4670, %v3830
    %v4698 = vmul.f32 %v4672, %v3830
    %v4699 = vmul.f32 %v4674, %v3830
    %v4700 = vmul.f32 %v4676, %v3830
    %v4701 = vmul.f32 %v4678, %v3830
    %v4702 = vmul.f32 %v4680, %v3830
    %v4703 = vmul.f32 %v4682, %v3830
    %v4704 = vmul.f32 %v4684, %v3830
    %v4705 = vmul.f32 %v4686, %v3830
    %v4706 = vmul.f32 %v4688, %v3830
    %v4707 = vmul.f32 %v4690, %v3830
    %v4708 = vmul.f32 %v4692, %v3830
    %v4709 = vsub.f32 %v4645, %v4693
    %v4710 = vsub.f32 %v4646, %v4694
    %v4711 = vsub.f32 %v4647, %v4695
    %v4712 = vsub.f32 %v4648, %v4696
    %v4713 = vsub.f32 %v4649, %v4697
    %v4714 = vsub.f32 %v4650, %v4698
    %v4715 = vsub.f32 %v4651, %v4699
    %v4716 = vsub.f32 %v4652, %v4700
    %v4717 = vsub.f32 %v4653, %v4701
    %v4718 = vsub.f32 %v4654, %v4702
    %v4719 = vsub.f32 %v4655, %v4703
    %v4720 = vsub.f32 %v4656, %v4704
    %v4721 = vsub.f32 %v4657, %v4705
    %v4722 = vsub.f32 %v4658, %v4706
    %v4723 = vsub.f32 %v4659, %v4707
    %v4724 = vsub.f32 %v4660, %v4708
    %v4725 = vmul.f32 %v4709, %v4709
    %v4726 = vmul.f32 %v4710, %v4710
    %v4727 = vmul.f32 %v4711, %v4711
    %v4728 = vmul.f32 %v4712, %v4712
    %v4729 = vmul.f32 %v4713, %v4713
    %v4730 = vmul.f32 %v4714, %v4714
    %v4731 = vmul.f32 %v4715, %v4715
    %v4732 = vmul.f32 %v4716, %v4716
    %v4733 = vmul.f32 %v4717, %v4717
    %v4734 = vmul.f32 %v4718, %v4718
    %v4735 = vmul.f32 %v4719, %v4719
    %v4736 = vmul.f32 %v4720, %v4720
    %v4737 = vmul.f32 %v4721, %v4721
    %v4738 = vmul.f32 %v4722, %v4722
    %v4739 = vmul.f32 %v4723, %v4723
    %v4740 = vmul.f32 %v4724, %v4724
    %4741 = vadd.xlane.f32.xlu0 %v4725
    %v4742 = vpop.xlane.xlu0 %4741
    %4743 = vadd.xlane.f32.xlu0 %v4726
    %v4744 = vpop.xlane.xlu0 %4743
    %4745 = vadd.xlane.f32.xlu0 %v4727
    %v4746 = vpop.xlane.xlu0 %4745
    %4747 = vadd.xlane.f32.xlu0 %v4728
    %v4748 = vpop.xlane.xlu0 %4747
    %4749 = vadd.xlane.f32.xlu0 %v4729
    %v4750 = vpop.xlane.xlu0 %4749
    %4751 = vadd.xlane.f32.xlu0 %v4730
    %v4752 = vpop.xlane.xlu0 %4751
    %4753 = vadd.xlane.f32.xlu0 %v4731
    %v4754 = vpop.xlane.xlu0 %4753
    %4755 = vadd.xlane.f32.xlu0 %v4732
    %v4756 = vpop.xlane.xlu0 %4755
    %4757 = vadd.xlane.f32.xlu0 %v4733
    %v4758 = vpop.xlane.xlu0 %4757
    %4759 = vadd.xlane.f32.xlu0 %v4734
    %v4760 = vpop.xlane.xlu0 %4759
    %4761 = vadd.xlane.f32.xlu0 %v4735
    %v4762 = vpop.xlane.xlu0 %4761
    %4763 = vadd.xlane.f32.xlu0 %v4736
    %v4764 = vpop.xlane.xlu0 %4763
    %4765 = vadd.xlane.f32.xlu0 %v4737
    %v4766 = vpop.xlane.xlu0 %4765
    %4767 = vadd.xlane.f32.xlu0 %v4738
    %v4768 = vpop.xlane.xlu0 %4767
    %4769 = vadd.xlane.f32.xlu0 %v4739
    %v4770 = vpop.xlane.xlu0 %4769
    %4771 = vadd.xlane.f32.xlu0 %v4740
    %v4772 = vpop.xlane.xlu0 %4771
    %v4773 = vmul.f32 %v4742, %v3830
    %v4774 = vmul.f32 %v4744, %v3830
    %v4775 = vmul.f32 %v4746, %v3830
    %v4776 = vmul.f32 %v4748, %v3830
    %v4777 = vmul.f32 %v4750, %v3830
    %v4778 = vmul.f32 %v4752, %v3830
    %v4779 = vmul.f32 %v4754, %v3830
    %v4780 = vmul.f32 %v4756, %v3830
    %v4781 = vmul.f32 %v4758, %v3830
    %v4782 = vmul.f32 %v4760, %v3830
    %v4783 = vmul.f32 %v4762, %v3830
    %v4784 = vmul.f32 %v4764, %v3830
    %v4785 = vmul.f32 %v4766, %v3830
    %v4786 = vmul.f32 %v4768, %v3830
    %v4787 = vmul.f32 %v4770, %v3830
    %v4788 = vmul.f32 %v4772, %v3830
    %v4789 = vadd.f32 %v4773, 1e-05
    %v4790 = vadd.f32 %v4774, 1e-05
    %v4791 = vadd.f32 %v4775, 1e-05
    %v4792 = vadd.f32 %v4776, 1e-05
    %v4793 = vadd.f32 %v4777, 1e-05
    %v4794 = vadd.f32 %v4778, 1e-05
    %v4795 = vadd.f32 %v4779, 1e-05
    %v4796 = vadd.f32 %v4780, 1e-05
    %v4797 = vadd.f32 %v4781, 1e-05
    %v4798 = vadd.f32 %v4782, 1e-05
    %v4799 = vadd.f32 %v4783, 1e-05
    %v4800 = vadd.f32 %v4784, 1e-05
    %v4801 = vadd.f32 %v4785, 1e-05
    %v4802 = vadd.f32 %v4786, 1e-05
    %v4803 = vadd.f32 %v4787, 1e-05
    %v4804 = vadd.f32 %v4788, 1e-05
    %v4805 = vrsqrt.pop %v4789
    %v4806 = vmul.f32 %v4805, %v4789
    %v4807 = vmul.f32 %v4806, %v4805
    %v4808 = vmul.f32 0.5, %v4807
    %v4809 = vsub.f32 1.5, %v4808
    %v4810 = vmul.f32 %v4805, %v4809
    %vm4811 = vweird.f32 %v4789
    %vm4812 = vweird.f32 %v4805
    %vm4813 = vmor %vm4811, %vm4812
    %v4814 = vsel %vm4813, %v4805, %v4810
    %v4815 = vrsqrt.pop %v4790
    %v4816 = vmul.f32 %v4815, %v4790
    %v4817 = vmul.f32 %v4816, %v4815
    %v4818 = vmul.f32 0.5, %v4817
    %v4819 = vsub.f32 1.5, %v4818
    %v4820 = vmul.f32 %v4815, %v4819
    %vm4821 = vweird.f32 %v4790
    %vm4822 = vweird.f32 %v4815
    %vm4823 = vmor %vm4821, %vm4822
    %v4824 = vsel %vm4823, %v4815, %v4820
    %v4825 = vrsqrt.pop %v4791
    %v4826 = vmul.f32 %v4825, %v4791
    %v4827 = vmul.f32 %v4826, %v4825
    %v4828 = vmul.f32 0.5, %v4827
    %v4829 = vsub.f32 1.5, %v4828
    %v4830 = vmul.f32 %v4825, %v4829
    %vm4831 = vweird.f32 %v4791
    %vm4832 = vweird.f32 %v4825
    %vm4833 = vmor %vm4831, %vm4832
    %v4834 = vsel %vm4833, %v4825, %v4830
    %v4835 = vrsqrt.pop %v4792
    %v4836 = vmul.f32 %v4835, %v4792
    %v4837 = vmul.f32 %v4836, %v4835
    %v4838 = vmul.f32 0.5, %v4837
    %v4839 = vsub.f32 1.5, %v4838
    %v4840 = vmul.f32 %v4835, %v4839
    %vm4841 = vweird.f32 %v4792
    %vm4842 = vweird.f32 %v4835
    %vm4843 = vmor %vm4841, %vm4842
    %v4844 = vsel %vm4843, %v4835, %v4840
    %v4845 = vrsqrt.pop %v4793
    %v4846 = vmul.f32 %v4845, %v4793
    %v4847 = vmul.f32 %v4846, %v4845
    %v4848 = vmul.f32 0.5, %v4847
    %v4849 = vsub.f32 1.5, %v4848
    %v4850 = vmul.f32 %v4845, %v4849
    %vm4851 = vweird.f32 %v4793
    %vm4852 = vweird.f32 %v4845
    %vm4853 = vmor %vm4851, %vm4852
    %v4854 = vsel %vm4853, %v4845, %v4850
    %v4855 = vrsqrt.pop %v4794
    %v4856 = vmul.f32 %v4855, %v4794
    %v4857 = vmul.f32 %v4856, %v4855
    %v4858 = vmul.f32 0.5, %v4857
    %v4859 = vsub.f32 1.5, %v4858
    %v4860 = vmul.f32 %v4855, %v4859
    %vm4861 = vweird.f32 %v4794
    %vm4862 = vweird.f32 %v4855
    %vm4863 = vmor %vm4861, %vm4862
    %v4864 = vsel %vm4863, %v4855, %v4860
    %v4865 = vrsqrt.pop %v4795
    %v4866 = vmul.f32 %v4865, %v4795
    %v4867 = vmul.f32 %v4866, %v4865
    %v4868 = vmul.f32 0.5, %v4867
    %v4869 = vsub.f32 1.5, %v4868
    %v4870 = vmul.f32 %v4865, %v4869
    %vm4871 = vweird.f32 %v4795
    %vm4872 = vweird.f32 %v4865
    %vm4873 = vmor %vm4871, %vm4872
    %v4874 = vsel %vm4873, %v4865, %v4870
    %v4875 = vrsqrt.pop %v4796
    %v4876 = vmul.f32 %v4875, %v4796
    %v4877 = vmul.f32 %v4876, %v4875
    %v4878 = vmul.f32 0.5, %v4877
    %v4879 = vsub.f32 1.5, %v4878
    %v4880 = vmul.f32 %v4875, %v4879
    %vm4881 = vweird.f32 %v4796
    %vm4882 = vweird.f32 %v4875
    %vm4883 = vmor %vm4881, %vm4882
    %v4884 = vsel %vm4883, %v4875, %v4880
    %v4885 = vrsqrt.pop %v4797
    %v4886 = vmul.f32 %v4885, %v4797
    %v4887 = vmul.f32 %v4886, %v4885
    %v4888 = vmul.f32 0.5, %v4887
    %v4889 = vsub.f32 1.5, %v4888
    %v4890 = vmul.f32 %v4885, %v4889
    %vm4891 = vweird.f32 %v4797
    %vm4892 = vweird.f32 %v4885
    %vm4893 = vmor %vm4891, %vm4892
    %v4894 = vsel %vm4893, %v4885, %v4890
    %v4895 = vrsqrt.pop %v4798
    %v4896 = vmul.f32 %v4895, %v4798
    %v4897 = vmul.f32 %v4896, %v4895
    %v4898 = vmul.f32 0.5, %v4897
    %v4899 = vsub.f32 1.5, %v4898
    %v4900 = vmul.f32 %v4895, %v4899
    %vm4901 = vweird.f32 %v4798
    %vm4902 = vweird.f32 %v4895
    %vm4903 = vmor %vm4901, %vm4902
    %v4904 = vsel %vm4903, %v4895, %v4900
    %v4905 = vrsqrt.pop %v4799
    %v4906 = vmul.f32 %v4905, %v4799
    %v4907 = vmul.f32 %v4906, %v4905
    %v4908 = vmul.f32 0.5, %v4907
    %v4909 = vsub.f32 1.5, %v4908
    %v4910 = vmul.f32 %v4905, %v4909
    %vm4911 = vweird.f32 %v4799
    %vm4912 = vweird.f32 %v4905
    %vm4913 = vmor %vm4911, %vm4912
    %v4914 = vsel %vm4913, %v4905, %v4910
    %v4915 = vrsqrt.pop %v4800
    %v4916 = vmul.f32 %v4915, %v4800
    %v4917 = vmul.f32 %v4916, %v4915
    %v4918 = vmul.f32 0.5, %v4917
    %v4919 = vsub.f32 1.5, %v4918
    %v4920 = vmul.f32 %v4915, %v4919
    %vm4921 = vweird.f32 %v4800
    %vm4922 = vweird.f32 %v4915
    %vm4923 = vmor %vm4921, %vm4922
    %v4924 = vsel %vm4923, %v4915, %v4920
    %v4925 = vrsqrt.pop %v4801
    %v4926 = vmul.f32 %v4925, %v4801
    %v4927 = vmul.f32 %v4926, %v4925
    %v4928 = vmul.f32 0.5, %v4927
    %v4929 = vsub.f32 1.5, %v4928
    %v4930 = vmul.f32 %v4925, %v4929
    %vm4931 = vweird.f32 %v4801
    %vm4932 = vweird.f32 %v4925
    %vm4933 = vmor %vm4931, %vm4932
    %v4934 = vsel %vm4933, %v4925, %v4930
    %v4935 = vrsqrt.pop %v4802
    %v4936 = vmul.f32 %v4935, %v4802
    %v4937 = vmul.f32 %v4936, %v4935
    %v4938 = vmul.f32 0.5, %v4937
    %v4939 = vsub.f32 1.5, %v4938
    %v4940 = vmul.f32 %v4935, %v4939
    %vm4941 = vweird.f32 %v4802
    %vm4942 = vweird.f32 %v4935
    %vm4943 = vmor %vm4941, %vm4942
    %v4944 = vsel %vm4943, %v4935, %v4940
    %v4945 = vrsqrt.pop %v4803
    %v4946 = vmul.f32 %v4945, %v4803
    %v4947 = vmul.f32 %v4946, %v4945
    %v4948 = vmul.f32 0.5, %v4947
    %v4949 = vsub.f32 1.5, %v4948
    %v4950 = vmul.f32 %v4945, %v4949
    %vm4951 = vweird.f32 %v4803
    %vm4952 = vweird.f32 %v4945
    %vm4953 = vmor %vm4951, %vm4952
    %v4954 = vsel %vm4953, %v4945, %v4950
    %v4955 = vrsqrt.pop %v4804
    %v4956 = vmul.f32 %v4955, %v4804
    %v4957 = vmul.f32 %v4956, %v4955
    %v4958 = vmul.f32 0.5, %v4957
    %v4959 = vsub.f32 1.5, %v4958
    %v4960 = vmul.f32 %v4955, %v4959
    %vm4961 = vweird.f32 %v4804
    %vm4962 = vweird.f32 %v4955
    %vm4963 = vmor %vm4961, %vm4962
    %v4964 = vsel %vm4963, %v4955, %v4960
    %v4965 = vmul.f32 %v4709, %v4814
    %v4966 = vmul.f32 %v4710, %v4824
    %v4967 = vmul.f32 %v4711, %v4834
    %v4968 = vmul.f32 %v4712, %v4844
    %v4969 = vmul.f32 %v4713, %v4854
    %v4970 = vmul.f32 %v4714, %v4864
    %v4971 = vmul.f32 %v4715, %v4874
    %v4972 = vmul.f32 %v4716, %v4884
    %v4973 = vmul.f32 %v4717, %v4894
    %v4974 = vmul.f32 %v4718, %v4904
    %v4975 = vmul.f32 %v4719, %v4914
    %v4976 = vmul.f32 %v4720, %v4924
    %v4977 = vmul.f32 %v4721, %v4934
    %v4978 = vmul.f32 %v4722, %v4944
    %v4979 = vmul.f32 %v4723, %v4954
    %v4980 = vmul.f32 %v4724, %v4964
    %v4981 = vld [vmem:[%s13] sm:$0x1]
    %v4983 = vperm.slane %v4981, 0
    %v4985 = vmul.f32 %v4965, %v4983
    %v4986 = vmul.f32 %v4966, %v4983
    %v4987 = vmul.f32 %v4967, %v4983
    %v4988 = vmul.f32 %v4968, %v4983
    %v4989 = vmul.f32 %v4969, %v4983
    %v4990 = vmul.f32 %v4970, %v4983
    %v4991 = vmul.f32 %v4971, %v4983
    %v4992 = vmul.f32 %v4972, %v4983
    %v4993 = vmul.f32 %v4973, %v4983
    %v4994 = vmul.f32 %v4974, %v4983
    %v4995 = vmul.f32 %v4975, %v4983
    %v4996 = vmul.f32 %v4976, %v4983
    %v4997 = vmul.f32 %v4977, %v4983
    %v4998 = vmul.f32 %v4978, %v4983
    %v4999 = vmul.f32 %v4979, %v4983
    %v5000 = vmul.f32 %v4980, %v4983
    %v5001 = vld [vmem:[%s14] sm:$0x1]
    %v5003 = vperm.slane %v5001, 0
    %v5005 = vadd.f32 %v4985, %v5003
    %v5006 = vadd.f32 %v4986, %v5003
    %v5007 = vadd.f32 %v4987, %v5003
    %v5008 = vadd.f32 %v4988, %v5003
    %v5009 = vadd.f32 %v4989, %v5003
    %v5010 = vadd.f32 %v4990, %v5003
    %v5011 = vadd.f32 %v4991, %v5003
    %v5012 = vadd.f32 %v4992, %v5003
    %v5013 = vadd.f32 %v4993, %v5003
    %v5014 = vadd.f32 %v4994, %v5003
    %v5015 = vadd.f32 %v4995, %v5003
    %v5016 = vadd.f32 %v4996, %v5003
    %v5017 = vadd.f32 %v4997, %v5003
    %v5018 = vadd.f32 %v4998, %v5003
    %v5019 = vadd.f32 %v4999, %v5003
    %v5020 = vadd.f32 %v5000, %v5003
    %5021 = vst [vmem:[%s15] sm:$0xff] %v5005
    %5022 = vst [vmem:[%s15 + $0x8] sm:$0xff] %v5006
    %5023 = vst [vmem:[%s15 + $0x10] sm:$0xff] %v5007
    %5024 = vst [vmem:[%s15 + $0x18] sm:$0xff] %v5008
    %5025 = vst [vmem:[%s15 + $0x20] sm:$0xff] %v5009
    %5026 = vst [vmem:[%s15 + $0x28] sm:$0xff] %v5010
    %5027 = vst [vmem:[%s15 + $0x30] sm:$0xff] %v5011
    %5028 = vst [vmem:[%s15 + $0x38] sm:$0xff] %v5012
    %5029 = vst [vmem:[%s15 + $0x40] sm:$0xff] %v5013
    %5030 = vst [vmem:[%s15 + $0x48] sm:$0xff] %v5014
    %5031 = vst [vmem:[%s15 + $0x50] sm:$0xff] %v5015
    %5032 = vst [vmem:[%s15 + $0x58] sm:$0xff] %v5016
    %5033 = vst [vmem:[%s15 + $0x60] sm:$0xff] %v5017
    %5034 = vst [vmem:[%s15 + $0x68] sm:$0xff] %v5018
    %5035 = vst [vmem:[%s15 + $0x70] sm:$0xff] %v5019
    %5036 = vst [vmem:[%s15 + $0x78] sm:$0xff] %v5020
    // Predicated region
    $region70: #{graph_transformer_forward.6} parent=1 // pred_check
      _
    $region71: #{graph_transformer_forward.6} parent=1 // pred_check_branch
      %5038 = sbr.rel (0) target = $region73
    $region72: #{graph_transformer_forward.6} parent=1 // pred_region
      _
    $region73: #{graph_transformer_forward.6} parent=1 // pred_fallthru
      _
    // Predicated region
    $region74: #{graph_transformer_forward.6} parent=1 // pred_check
      _
    $region75: #{graph_transformer_forward.6} parent=1 // pred_check_branch
      %5040 = sbr.rel (0) target = $region77
    $region76: #{graph_transformer_forward.6} parent=1 // pred_region
      _
    $region77: #{graph_transformer_forward.6} parent=1 // pred_fallthru
      _
    %5041 = vsyncpa [#allocation3], 1
    %5042 = vsyncpa [#allocation5], 1

// kernel: graph_transformer_forward.8
$region0: #{graph_transformer_forward.8}
  #allocation0 [shape = 'u32[]', space=smem, size = 0x4, offset = 0x4, fixed_abs, tag = 'smem constant byte address 0x4 - core index']
  #allocation1 [shape = 'u32[72,128]{1,0:T(1,128)}', space=vmem, size = 0x9000, scoped, tag = 'internal scratch']
  %s0 = inlined_call_operand.vmem [shape: f32[128,384], index: 0, kind: input, shape index: {}, may-alias: {0,1}]
  %s1 = inlined_call_operand.vmem [shape: f32[128,384], index: 1, kind: input, shape index: {}, may-alias: {0,1}]
  %s2 = inlined_call_operand.vmem [shape: f32[128,128], index: 2, kind: input, shape index: {}]
  %s3 = inlined_call_operand.vmem [shape: s32[128,1], index: 3, kind: input, shape index: {}]
  %s4 = inlined_call_operand.vmem [shape: s32[1,128], index: 4, kind: input, shape index: {}]
  %s5 = inlined_call_operand.hbm [shape: bf16[128,128], index: 5, kind: input, shape index: {}]
  %s6 = inlined_call_operand.vmem [shape: f32[1,128], index: 6, kind: input, shape index: {}]
  %s7 = inlined_call_operand.vmem [shape: f32[1,128], index: 7, kind: input, shape index: {}]
  %s8 = inlined_call_operand.vmem [shape: f32[1,128], index: 8, kind: input, shape index: {}]
  %s9 = inlined_call_operand.hbm [shape: bf16[128,256], index: 9, kind: input, shape index: {}]
  %s10 = inlined_call_operand.vmem [shape: f32[1,256], index: 10, kind: input, shape index: {}]
  %s11 = inlined_call_operand.hbm [shape: bf16[256,128], index: 11, kind: input, shape index: {}]
  %s12 = inlined_call_operand.vmem [shape: f32[1,128], index: 12, kind: input, shape index: {}]
  %s13 = inlined_call_operand.vmem [shape: f32[1,128], index: 13, kind: input, shape index: {}]
  %s14 = inlined_call_operand.vmem [shape: f32[1,128], index: 14, kind: input, shape index: {}]
  %s15 = inlined_call_operand.vmem [shape: f32[128,128], index: 15, kind: output, shape index: {}]
  %s16 = sld [smem:[#allocation0]]
  $region82: #{graph_transformer_forward.8} parent=0
    _
  %s18 = ssub.s32 1, %s16
  %s19 = scalar_select 0, %s18, %s16
  $region1: #{graph_transformer_forward.8} parent=0
    #allocation2 [shape = 'u8[32768]{0}', space=vmem, size = 0x8000, scoped, tag = 'input window, operand 5, single buffered']
    #allocation3 [shape = 's32[1]{0}', space=sflag, size = 0x4, scoped, tag = 'scoped memory for graph_transformer_forward.8']
    #allocation4 [shape = 'u8[65536]{0}', space=vmem, size = 0x10000, scoped, tag = 'input window, operand 9, single buffered']
    #allocation5 [shape = 's32[1]{0}', space=sflag, size = 0x4, scoped, tag = 'scoped memory for graph_transformer_forward.8']
    #allocation6 [shape = 'u8[65536]{0}', space=vmem, size = 0x10000, scoped, tag = 'input window, operand 11, single buffered']
    %20 = vsyncpa [#allocation3], 0
    %21 = vsyncpa [#allocation5], 0
    // Predicated region
    $region2: #{graph_transformer_forward.8} parent=1 // pred_check
      _
    $region3: #{graph_transformer_forward.8} parent=1 // pred_check_branch
      %23 = sbr.rel (0) target = $region5
    $region4: #{graph_transformer_forward.8} parent=1 // pred_region
      _
    $region5: #{graph_transformer_forward.8} parent=1 // pred_fallthru
      _
    // Predicated region
    $region6: #{graph_transformer_forward.8} parent=1 // pred_check
      _
    $region7: #{graph_transformer_forward.8} parent=1 // pred_check_branch
      %25 = sbr.rel (0) target = $region9
    $region8: #{graph_transformer_forward.8} parent=1 // pred_region
      _
    $region9: #{graph_transformer_forward.8} parent=1 // pred_fallthru
      _
    // Predicated region
    $region10: #{graph_transformer_forward.8} parent=1 // pred_check
      _
    $region11: #{graph_transformer_forward.8} parent=1 // pred_check_branch
      %27 = sbr.rel (0) target = $region13
    $region12: #{graph_transformer_forward.8} parent=1 // pred_region
      _
    $region13: #{graph_transformer_forward.8} parent=1 // pred_fallthru
      _
    // Predicated region
    $region14: #{graph_transformer_forward.8} parent=1 // pred_check
      _
    $region15: #{graph_transformer_forward.8} parent=1 // pred_check_branch
      %29 = sbr.rel (0) target = $region17
    $region16: #{graph_transformer_forward.8} parent=1 // pred_region
      _
    $region17: #{graph_transformer_forward.8} parent=1 // pred_fallthru
      _
    // Predicated region
    $region18: #{graph_transformer_forward.8} parent=1 // pred_check
      _
    $region19: #{graph_transformer_forward.8} parent=1 // pred_check_branch
      %31 = sbr.rel (0) target = $region21
    $region20: #{graph_transformer_forward.8} parent=1 // pred_region
      _
    $region21: #{graph_transformer_forward.8} parent=1 // pred_fallthru
      _
    // Predicated region
    $region22: #{graph_transformer_forward.8} parent=1 // pred_check
      _
    $region23: #{graph_transformer_forward.8} parent=1 // pred_check_branch
      %33 = sbr.rel (0) target = $region25
    $region24: #{graph_transformer_forward.8} parent=1 // pred_region
      %35 = vsyncadd [#allocation3], 0
      %s36 = sshll.u32 %s5, 4
      %s37 = int_to_ptr.hbm [resolvable:$true] %s36
      %s38 = sshll.u32 [#allocation2], 4
      %s39 = int_to_ptr.vmem [resolvable:$true] %s38
      %44 = dma.hbm_to_vmem [thread:$0]  %s37, 1024, %s39, [#allocation3], 64, 64, 4
    $region25: #{graph_transformer_forward.8} parent=1 // pred_fallthru
      _
    // Predicated region
    $region26: #{graph_transformer_forward.8} parent=1 // pred_check
      _
    $region27: #{graph_transformer_forward.8} parent=1 // pred_check_branch
      %46 = sbr.rel (0) target = $region29
    $region28: #{graph_transformer_forward.8} parent=1 // pred_region
      _
    $region29: #{graph_transformer_forward.8} parent=1 // pred_fallthru
      _
    // Predicated region
    $region30: #{graph_transformer_forward.8} parent=1 // pred_check
      _
    $region31: #{graph_transformer_forward.8} parent=1 // pred_check_branch
      %48 = sbr.rel (0) target = $region33
    $region32: #{graph_transformer_forward.8} parent=1 // pred_region
      _
    $region33: #{graph_transformer_forward.8} parent=1 // pred_fallthru
      _
    // Predicated region
    $region34: #{graph_transformer_forward.8} parent=1 // pred_check
      _
    $region35: #{graph_transformer_forward.8} parent=1 // pred_check_branch
      %50 = sbr.rel (0) target = $region37
    $region36: #{graph_transformer_forward.8} parent=1 // pred_region
      _
    $region37: #{graph_transformer_forward.8} parent=1 // pred_fallthru
      _
    // Predicated region
    $region38: #{graph_transformer_forward.8} parent=1 // pred_check
      _
    $region39: #{graph_transformer_forward.8} parent=1 // pred_check_branch
      %52 = sbr.rel (0) target = $region41
    $region40: #{graph_transformer_forward.8} parent=1 // pred_region
      %54 = vsyncadd [#allocation5], 0
      %s55 = sshll.u32 %s9, 4
      %s56 = int_to_ptr.hbm [resolvable:$true] %s55
      %s57 = sshll.u32 [#allocation4], 4
      %s58 = int_to_ptr.vmem [resolvable:$true] %s57
      %63 = dma.hbm_to_vmem [thread:$0]  %s56, 2048, %s58, [#allocation5], 128, 128, 8
    $region41: #{graph_transformer_forward.8} parent=1 // pred_fallthru
      _
    // Predicated region
    $region42: #{graph_transformer_forward.8} parent=1 // pred_check
      _
    $region43: #{graph_transformer_forward.8} parent=1 // pred_check_branch
      %65 = sbr.rel (0) target = $region45
    $region44: #{graph_transformer_forward.8} parent=1 // pred_region
      _
    $region45: #{graph_transformer_forward.8} parent=1 // pred_fallthru
      _
    // Predicated region
    $region46: #{graph_transformer_forward.8} parent=1 // pred_check
      _
    $region47: #{graph_transformer_forward.8} parent=1 // pred_check_branch
      %67 = sbr.rel (0) target = $region49
    $region48: #{graph_transformer_forward.8} parent=1 // pred_region
      %69 = vsyncadd [#allocation5], 0
      %s70 = sshll.u32 %s11, 4
      %s71 = int_to_ptr.hbm [resolvable:$true] %s70
      %s72 = sshll.u32 [#allocation6], 4
      %s73 = int_to_ptr.vmem [resolvable:$true] %s72
      %78 = dma.hbm_to_vmem [thread:$0]  %s71, 2048, %s73, [#allocation5], 64, 64, 4
    $region49: #{graph_transformer_forward.8} parent=1 // pred_fallthru
      _
    // Predicated region
    $region50: #{graph_transformer_forward.8} parent=1 // pred_check
      _
    $region51: #{graph_transformer_forward.8} parent=1 // pred_check_branch
      %80 = sbr.rel (0) target = $region53
    $region52: #{graph_transformer_forward.8} parent=1 // pred_region
      _
    $region53: #{graph_transformer_forward.8} parent=1 // pred_fallthru
      _
    // Predicated region
    $region54: #{graph_transformer_forward.8} parent=1 // pred_check
      _
    $region55: #{graph_transformer_forward.8} parent=1 // pred_check_branch
      %82 = sbr.rel (0) target = $region57
    $region56: #{graph_transformer_forward.8} parent=1 // pred_region
      _
    $region57: #{graph_transformer_forward.8} parent=1 // pred_fallthru
      _
    // Predicated region
    $region58: #{graph_transformer_forward.8} parent=1 // pred_check
      _
    $region59: #{graph_transformer_forward.8} parent=1 // pred_check_branch
      %84 = sbr.rel (0) target = $region61
    $region60: #{graph_transformer_forward.8} parent=1 // pred_region
      _
    $region61: #{graph_transformer_forward.8} parent=1 // pred_fallthru
      _
    // Predicated region
    $region62: #{graph_transformer_forward.8} parent=1 // pred_check
      _
    $region63: #{graph_transformer_forward.8} parent=1 // pred_check_branch
      %86 = sbr.rel (0) target = $region65
    $region64: #{graph_transformer_forward.8} parent=1 // pred_region
      %88 = dma.done [#allocation3], 1024
    $region65: #{graph_transformer_forward.8} parent=1 // pred_fallthru
      _
    // Predicated region
    $region66: #{graph_transformer_forward.8} parent=1 // pred_check
      _
    $region67: #{graph_transformer_forward.8} parent=1 // pred_check_branch
      %90 = sbr.rel (0) target = $region69
    $region68: #{graph_transformer_forward.8} parent=1 // pred_region
      %92 = dma.done [#allocation5], 2048
    $region69: #{graph_transformer_forward.8} parent=1 // pred_fallthru
      _
    // Predicated region
    $region70: #{graph_transformer_forward.8} parent=1 // pred_check
      _
    $region71: #{graph_transformer_forward.8} parent=1 // pred_check_branch
      %94 = sbr.rel (0) target = $region73
    $region72: #{graph_transformer_forward.8} parent=1 // pred_region
      %96 = dma.done [#allocation5], 2048
    $region73: #{graph_transformer_forward.8} parent=1 // pred_fallthru
      _
    %v97 = vld [vmem:[%s0] sm:$0xff]
    %v98 = vld [vmem:[%s0 + $0x18] sm:$0xff]
    %v99 = vld [vmem:[%s0 + $0x30] sm:$0xff]
    %v100 = vld [vmem:[%s0 + $0x48] sm:$0xff]
    %v101 = vld [vmem:[%s0 + $0x60] sm:$0xff]
    %v102 = vld [vmem:[%s0 + $0x78] sm:$0xff]
    %v103 = vld [vmem:[%s0 + $0x90] sm:$0xff]
    %v104 = vld [vmem:[%s0 + $0xa8] sm:$0xff]
    %v105 = vld [vmem:[%s0 + $0xc0] sm:$0xff]
    %v106 = vld [vmem:[%s0 + $0xd8] sm:$0xff]
    %v107 = vld [vmem:[%s0 + $0xf0] sm:$0xff]
    %v108 = vld [vmem:[%s0 + $0x108] sm:$0xff]
    %v109 = vld [vmem:[%s0 + $0x120] sm:$0xff]
    %v110 = vld [vmem:[%s0 + $0x138] sm:$0xff]
    %v111 = vld [vmem:[%s0 + $0x150] sm:$0xff]
    %v112 = vld [vmem:[%s0 + $0x168] sm:$0xff]
    %v113 = vld [vmem:[%s1 + $0x8] sm:$0xff]
    %v114 = vld [vmem:[%s1 + $0x10] sm:$0xff]
    %v115 = vld [vmem:[%s1 + $0x20] sm:$0xff]
    %v116 = vld [vmem:[%s1 + $0x28] sm:$0xff]
    %v117 = vld [vmem:[%s1 + $0x38] sm:$0xff]
    %v118 = vld [vmem:[%s1 + $0x40] sm:$0xff]
    %v119 = vld [vmem:[%s1 + $0x50] sm:$0xff]
    %v120 = vld [vmem:[%s1 + $0x58] sm:$0xff]
    %v121 = vld [vmem:[%s1 + $0x68] sm:$0xff]
    %v122 = vld [vmem:[%s1 + $0x70] sm:$0xff]
    %v123 = vld [vmem:[%s1 + $0x80] sm:$0xff]
    %v124 = vld [vmem:[%s1 + $0x88] sm:$0xff]
    %v125 = vld [vmem:[%s1 + $0x98] sm:$0xff]
    %v126 = vld [vmem:[%s1 + $0xa0] sm:$0xff]
    %v127 = vld [vmem:[%s1 + $0xb0] sm:$0xff]
    %v128 = vld [vmem:[%s1 + $0xb8] sm:$0xff]
    %v129 = vld [vmem:[%s1 + $0xc8] sm:$0xff]
    %v130 = vld [vmem:[%s1 + $0xd0] sm:$0xff]
    %v131 = vld [vmem:[%s1 + $0xe0] sm:$0xff]
    %v132 = vld [vmem:[%s1 + $0xe8] sm:$0xff]
    %v133 = vld [vmem:[%s1 + $0xf8] sm:$0xff]
    %v134 = vld [vmem:[%s1 + $0x100] sm:$0xff]
    %v135 = vld [vmem:[%s1 + $0x110] sm:$0xff]
    %v136 = vld [vmem:[%s1 + $0x118] sm:$0xff]
    %v137 = vld [vmem:[%s1 + $0x128] sm:$0xff]
    %v138 = vld [vmem:[%s1 + $0x130] sm:$0xff]
    %v139 = vld [vmem:[%s1 + $0x140] sm:$0xff]
    %v140 = vld [vmem:[%s1 + $0x148] sm:$0xff]
    %v141 = vld [vmem:[%s1 + $0x158] sm:$0xff]
    %v142 = vld [vmem:[%s1 + $0x160] sm:$0xff]
    %v143 = vld [vmem:[%s1 + $0x170] sm:$0xff]
    %v144 = vld [vmem:[%s1 + $0x178] sm:$0xff]
    %v145 = vld [vmem:[%s3] sm:$0xff]
    %v146 = vld [vmem:[%s3 + $0x8] sm:$0xff]
    %v147 = vld [vmem:[%s3 + $0x10] sm:$0xff]
    %v148 = vld [vmem:[%s3 + $0x18] sm:$0xff]
    %v149 = vld [vmem:[%s3 + $0x20] sm:$0xff]
    %v150 = vld [vmem:[%s3 + $0x28] sm:$0xff]
    %v151 = vld [vmem:[%s3 + $0x30] sm:$0xff]
    %v152 = vld [vmem:[%s3 + $0x38] sm:$0xff]
    %v153 = vld [vmem:[%s3 + $0x40] sm:$0xff]
    %v154 = vld [vmem:[%s3 + $0x48] sm:$0xff]
    %v155 = vld [vmem:[%s3 + $0x50] sm:$0xff]
    %v156 = vld [vmem:[%s3 + $0x58] sm:$0xff]
    %v157 = vld [vmem:[%s3 + $0x60] sm:$0xff]
    %v158 = vld [vmem:[%s3 + $0x68] sm:$0xff]
    %v159 = vld [vmem:[%s3 + $0x70] sm:$0xff]
    %v160 = vld [vmem:[%s3 + $0x78] sm:$0xff]
    %v161 = vld [vmem:[%s4] sm:$0x1]
    %162 = vset.pattern.permute.xlu0 0
    %163 = vperm.xlu0 %162, %v145
    %v164 = vpop.permute.xlu0 %163
    %165 = vset.pattern.permute.xlu0 0
    %166 = vperm.xlu0 %165, %v146
    %v167 = vpop.permute.xlu0 %166
    %168 = vset.pattern.permute.xlu0 0
    %169 = vperm.xlu0 %168, %v147
    %v170 = vpop.permute.xlu0 %169
    %171 = vset.pattern.permute.xlu0 0
    %172 = vperm.xlu0 %171, %v148
    %v173 = vpop.permute.xlu0 %172
    %174 = vset.pattern.permute.xlu0 0
    %175 = vperm.xlu0 %174, %v149
    %v176 = vpop.permute.xlu0 %175
    %177 = vset.pattern.permute.xlu0 0
    %178 = vperm.xlu0 %177, %v150
    %v179 = vpop.permute.xlu0 %178
    %180 = vset.pattern.permute.xlu0 0
    %181 = vperm.xlu0 %180, %v151
    %v182 = vpop.permute.xlu0 %181
    %183 = vset.pattern.permute.xlu0 0
    %184 = vperm.xlu0 %183, %v152
    %v185 = vpop.permute.xlu0 %184
    %186 = vset.pattern.permute.xlu0 0
    %187 = vperm.xlu0 %186, %v153
    %v188 = vpop.permute.xlu0 %187
    %189 = vset.pattern.permute.xlu0 0
    %190 = vperm.xlu0 %189, %v154
    %v191 = vpop.permute.xlu0 %190
    %192 = vset.pattern.permute.xlu0 0
    %193 = vperm.xlu0 %192, %v155
    %v194 = vpop.permute.xlu0 %193
    %195 = vset.pattern.permute.xlu0 0
    %196 = vperm.xlu0 %195, %v156
    %v197 = vpop.permute.xlu0 %196
    %198 = vset.pattern.permute.xlu0 0
    %199 = vperm.xlu0 %198, %v157
    %v200 = vpop.permute.xlu0 %199
    %201 = vset.pattern.permute.xlu0 0
    %202 = vperm.xlu0 %201, %v158
    %v203 = vpop.permute.xlu0 %202
    %204 = vset.pattern.permute.xlu0 0
    %205 = vperm.xlu0 %204, %v159
    %v206 = vpop.permute.xlu0 %205
    %207 = vset.pattern.permute.xlu0 0
    %208 = vperm.xlu0 %207, %v160
    %v209 = vpop.permute.xlu0 %208
    %v210 = vperm.slane %v161, 0
    %vm211 = vcmp.eq.s32.totalorder %v164, %v210
    %vm212 = vcmp.eq.s32.totalorder %v167, %v210
    %vm213 = vcmp.eq.s32.totalorder %v170, %v210
    %vm214 = vcmp.eq.s32.totalorder %v173, %v210
    %vm215 = vcmp.eq.s32.totalorder %v176, %v210
    %vm216 = vcmp.eq.s32.totalorder %v179, %v210
    %vm217 = vcmp.eq.s32.totalorder %v182, %v210
    %vm218 = vcmp.eq.s32.totalorder %v185, %v210
    %vm219 = vcmp.eq.s32.totalorder %v188, %v210
    %vm220 = vcmp.eq.s32.totalorder %v191, %v210
    %vm221 = vcmp.eq.s32.totalorder %v194, %v210
    %vm222 = vcmp.eq.s32.totalorder %v197, %v210
    %vm223 = vcmp.eq.s32.totalorder %v200, %v210
    %vm224 = vcmp.eq.s32.totalorder %v203, %v210
    %vm225 = vcmp.eq.s32.totalorder %v206, %v210
    %vm226 = vcmp.eq.s32.totalorder %v209, %v210
    %v227 = vsel %vm211, 0.0, -1e+09
    %v228 = vsel %vm212, 0.0, -1e+09
    %v229 = vsel %vm213, 0.0, -1e+09
    %v230 = vsel %vm214, 0.0, -1e+09
    %v231 = vsel %vm215, 0.0, -1e+09
    %v232 = vsel %vm216, 0.0, -1e+09
    %v233 = vsel %vm217, 0.0, -1e+09
    %v234 = vsel %vm218, 0.0, -1e+09
    %v235 = vsel %vm219, 0.0, -1e+09
    %v236 = vsel %vm220, 0.0, -1e+09
    %v237 = vsel %vm221, 0.0, -1e+09
    %v238 = vsel %vm222, 0.0, -1e+09
    %v239 = vsel %vm223, 0.0, -1e+09
    %v240 = vsel %vm224, 0.0, -1e+09
    %v241 = vsel %vm225, 0.0, -1e+09
    %v242 = vsel %vm226, 0.0, -1e+09
    %v243 = vmul.f32 %v97, 0.25
    %v244 = vmul.f32 %v98, 0.25
    %v245 = vmul.f32 %v99, 0.25
    %v246 = vmul.f32 %v100, 0.25
    %v247 = vmul.f32 %v101, 0.25
    %v248 = vmul.f32 %v102, 0.25
    %v249 = vmul.f32 %v103, 0.25
    %v250 = vmul.f32 %v104, 0.25
    %v251 = vmul.f32 %v105, 0.25
    %v252 = vmul.f32 %v106, 0.25
    %v253 = vmul.f32 %v107, 0.25
    %v254 = vmul.f32 %v108, 0.25
    %v255 = vmul.f32 %v109, 0.25
    %v256 = vmul.f32 %v110, 0.25
    %v257 = vmul.f32 %v111, 0.25
    %v258 = vmul.f32 %v112, 0.25
    %v259 = vpack.c.bf16 %v244, %v243
    %v260 = vpack.c.bf16 %v246, %v245
    %v261 = vpack.c.bf16 %v248, %v247
    %v262 = vpack.c.bf16 %v250, %v249
    %v263 = vpack.c.bf16 %v252, %v251
    %v264 = vpack.c.bf16 %v254, %v253
    %v265 = vpack.c.bf16 %v256, %v255
    %v266 = vpack.c.bf16 %v258, %v257
    %v267 = vpack.c.bf16 %v115, %v113
    %v268 = vpack.c.bf16 %v119, %v117
    %v269 = vpack.c.bf16 %v123, %v121
    %v270 = vpack.c.bf16 %v127, %v125
    %v271 = vpack.c.bf16 %v131, %v129
    %v272 = vpack.c.bf16 %v135, %v133
    %v273 = vpack.c.bf16 %v139, %v137
    %v274 = vpack.c.bf16 %v143, %v141
    %v275 = vpack.c.bf16 %v116, %v114
    %v276 = vpack.c.bf16 %v120, %v118
    %v277 = vpack.c.bf16 %v124, %v122
    %v278 = vpack.c.bf16 %v128, %v126
    %v279 = vpack.c.bf16 %v132, %v130
    %v280 = vpack.c.bf16 %v136, %v134
    %v281 = vpack.c.bf16 %v140, %v138
    %v282 = vpack.c.bf16 %v144, %v142
    %vm283 = vcmask 130048
    %v285 = vsel %vm283, %v259, 0
    %v288 = vsel %vm283, %v260, 0
    %v291 = vsel %vm283, %v261, 0
    %v294 = vsel %vm283, %v262, 0
    %v297 = vsel %vm283, %v263, 0
    %v300 = vsel %vm283, %v264, 0
    %v303 = vsel %vm283, %v265, 0
    %v306 = vsel %vm283, %v266, 0
    %v309 = vsel %vm283, %v267, 0
    %v312 = vsel %vm283, %v268, 0
    %v315 = vsel %vm283, %v269, 0
    %v318 = vsel %vm283, %v270, 0
    %v321 = vsel %vm283, %v271, 0
    %v324 = vsel %vm283, %v272, 0
    %v327 = vsel %vm283, %v273, 0
    %v330 = vsel %vm283, %v274, 0
    %332 = vmatpush.bf16.xpose.msra.mxu0 %v330
    %333 = vmatpush.bf16.xpose.msra.mxu0 %v327
    %334 = vmatpush.bf16.xpose.msra.mxu0 %v324
    %335 = vmatpush.bf16.xpose.msra.mxu0 %v321
    %336 = vmatpush.bf16.xpose.msra.mxu0 %v318
    %337 = vmatpush.bf16.xpose.msra.mxu0 %v315
    %338 = vmatpush.bf16.xpose.msra.mxu0 %v312
    %339 = vmatpush.bf16.xpose.msra.mxu0 %v309
    %340 = vmatmul.bf16.gmra.mxu0 %v285
    %v341 = vpop.f32.mrf.mxu0
    %v342 = vadd.f32 %v227, %v341
    %v343 = vpop.f32.mrf.mxu0
    %v344 = vadd.f32 %v228, %v343
    %345 = vmatmul.bf16.gmra.mxu0 %v288
    %v346 = vpop.f32.mrf.mxu0
    %v347 = vadd.f32 %v229, %v346
    %v348 = vpop.f32.mrf.mxu0
    %v349 = vadd.f32 %v230, %v348
    %350 = vmatmul.bf16.gmra.mxu0 %v291
    %v351 = vpop.f32.mrf.mxu0
    %v352 = vadd.f32 %v231, %v351
    %v353 = vpop.f32.mrf.mxu0
    %v354 = vadd.f32 %v232, %v353
    %355 = vmatmul.bf16.gmra.mxu0 %v294
    %v356 = vpop.f32.mrf.mxu0
    %v357 = vadd.f32 %v233, %v356
    %v358 = vpop.f32.mrf.mxu0
    %v359 = vadd.f32 %v234, %v358
    %360 = vmatmul.bf16.gmra.mxu0 %v297
    %v361 = vpop.f32.mrf.mxu0
    %v362 = vadd.f32 %v235, %v361
    %v363 = vpop.f32.mrf.mxu0
    %v364 = vadd.f32 %v236, %v363
    %365 = vmatmul.bf16.gmra.mxu0 %v300
    %v366 = vpop.f32.mrf.mxu0
    %v367 = vadd.f32 %v237, %v366
    %v368 = vpop.f32.mrf.mxu0
    %v369 = vadd.f32 %v238, %v368
    %370 = vmatmul.bf16.gmra.mxu0 %v303
    %v371 = vpop.f32.mrf.mxu0
    %v372 = vadd.f32 %v239, %v371
    %v373 = vpop.f32.mrf.mxu0
    %v374 = vadd.f32 %v240, %v373
    %375 = vmatmul.bf16.gmra.mxu0 %v306
    %v376 = vpop.f32.mrf.mxu0
    %v377 = vadd.f32 %v241, %v376
    %v378 = vpop.f32.mrf.mxu0
    %v379 = vadd.f32 %v242, %v378
    %380 = vdwg.mxu0
    %381 = vmax.xlane.f32.xlu0 %v342
    %v382 = vpop.xlane.xlu0 %381
    %383 = vmax.xlane.f32.xlu0 %v344
    %v384 = vpop.xlane.xlu0 %383
    %385 = vmax.xlane.f32.xlu0 %v347
    %v386 = vpop.xlane.xlu0 %385
    %387 = vmax.xlane.f32.xlu0 %v349
    %v388 = vpop.xlane.xlu0 %387
    %389 = vmax.xlane.f32.xlu0 %v352
    %v390 = vpop.xlane.xlu0 %389
    %391 = vmax.xlane.f32.xlu0 %v354
    %v392 = vpop.xlane.xlu0 %391
    %393 = vmax.xlane.f32.xlu0 %v357
    %v394 = vpop.xlane.xlu0 %393
    %395 = vmax.xlane.f32.xlu0 %v359
    %v396 = vpop.xlane.xlu0 %395
    %397 = vmax.xlane.f32.xlu0 %v362
    %v398 = vpop.xlane.xlu0 %397
    %399 = vmax.xlane.f32.xlu0 %v364
    %v400 = vpop.xlane.xlu0 %399
    %401 = vmax.xlane.f32.xlu0 %v367
    %v402 = vpop.xlane.xlu0 %401
    %403 = vmax.xlane.f32.xlu0 %v369
    %v404 = vpop.xlane.xlu0 %403
    %405 = vmax.xlane.f32.xlu0 %v372
    %v406 = vpop.xlane.xlu0 %405
    %407 = vmax.xlane.f32.xlu0 %v374
    %v408 = vpop.xlane.xlu0 %407
    %409 = vmax.xlane.f32.xlu0 %v377
    %v410 = vpop.xlane.xlu0 %409
    %411 = vmax.xlane.f32.xlu0 %v379
    %v412 = vpop.xlane.xlu0 %411
    %v413 = vsub.f32 %v342, %v382
    %v414 = vsub.f32 %v344, %v384
    %v415 = vsub.f32 %v347, %v386
    %v416 = vsub.f32 %v349, %v388
    %v417 = vsub.f32 %v352, %v390
    %v418 = vsub.f32 %v354, %v392
    %v419 = vsub.f32 %v357, %v394
    %v420 = vsub.f32 %v359, %v396
    %v421 = vsub.f32 %v362, %v398
    %v422 = vsub.f32 %v364, %v400
    %v423 = vsub.f32 %v367, %v402
    %v424 = vsub.f32 %v369, %v404
    %v425 = vsub.f32 %v372, %v406
    %v426 = vsub.f32 %v374, %v408
    %v427 = vsub.f32 %v377, %v410
    %v428 = vsub.f32 %v379, %v412
    %v429 = vmul.f32 %v413, 1.442695
    %v430 = vpow.pop %v429
    %v431 = vmul.f32 %v414, 1.442695
    %v432 = vpow.pop %v431
    %v433 = vmul.f32 %v415, 1.442695
    %v434 = vpow.pop %v433
    %v435 = vmul.f32 %v416, 1.442695
    %v436 = vpow.pop %v435
    %v437 = vmul.f32 %v417, 1.442695
    %v438 = vpow.pop %v437
    %v439 = vmul.f32 %v418, 1.442695
    %v440 = vpow.pop %v439
    %v441 = vmul.f32 %v419, 1.442695
    %v442 = vpow.pop %v441
    %v443 = vmul.f32 %v420, 1.442695
    %v444 = vpow.pop %v443
    %v445 = vmul.f32 %v421, 1.442695
    %v446 = vpow.pop %v445
    %v447 = vmul.f32 %v422, 1.442695
    %v448 = vpow.pop %v447
    %v449 = vmul.f32 %v423, 1.442695
    %v450 = vpow.pop %v449
    %v451 = vmul.f32 %v424, 1.442695
    %v452 = vpow.pop %v451
    %v453 = vmul.f32 %v425, 1.442695
    %v454 = vpow.pop %v453
    %v455 = vmul.f32 %v426, 1.442695
    %v456 = vpow.pop %v455
    %v457 = vmul.f32 %v427, 1.442695
    %v458 = vpow.pop %v457
    %v459 = vmul.f32 %v428, 1.442695
    %v460 = vpow.pop %v459
    %461 = vadd.xlane.f32.xlu0 %v430
    %v462 = vpop.xlane.xlu0 %461
    %463 = vadd.xlane.f32.xlu0 %v432
    %v464 = vpop.xlane.xlu0 %463
    %465 = vadd.xlane.f32.xlu0 %v434
    %v466 = vpop.xlane.xlu0 %465
    %467 = vadd.xlane.f32.xlu0 %v436
    %v468 = vpop.xlane.xlu0 %467
    %469 = vadd.xlane.f32.xlu0 %v438
    %v470 = vpop.xlane.xlu0 %469
    %471 = vadd.xlane.f32.xlu0 %v440
    %v472 = vpop.xlane.xlu0 %471
    %473 = vadd.xlane.f32.xlu0 %v442
    %v474 = vpop.xlane.xlu0 %473
    %475 = vadd.xlane.f32.xlu0 %v444
    %v476 = vpop.xlane.xlu0 %475
    %477 = vadd.xlane.f32.xlu0 %v446
    %v478 = vpop.xlane.xlu0 %477
    %479 = vadd.xlane.f32.xlu0 %v448
    %v480 = vpop.xlane.xlu0 %479
    %481 = vadd.xlane.f32.xlu0 %v450
    %v482 = vpop.xlane.xlu0 %481
    %483 = vadd.xlane.f32.xlu0 %v452
    %v484 = vpop.xlane.xlu0 %483
    %485 = vadd.xlane.f32.xlu0 %v454
    %v486 = vpop.xlane.xlu0 %485
    %487 = vadd.xlane.f32.xlu0 %v456
    %v488 = vpop.xlane.xlu0 %487
    %489 = vadd.xlane.f32.xlu0 %v458
    %v490 = vpop.xlane.xlu0 %489
    %491 = vadd.xlane.f32.xlu0 %v460
    %v492 = vpop.xlane.xlu0 %491
    %v493 = vrcp.pop %v462
    %v494 = vrcp.pop %v464
    %v495 = vrcp.pop %v466
    %v496 = vrcp.pop %v468
    %v497 = vrcp.pop %v470
    %v498 = vrcp.pop %v472
    %v499 = vrcp.pop %v474
    %v500 = vrcp.pop %v476
    %v501 = vrcp.pop %v478
    %v502 = vrcp.pop %v480
    %v503 = vrcp.pop %v482
    %v504 = vrcp.pop %v484
    %v505 = vrcp.pop %v486
    %v506 = vrcp.pop %v488
    %v507 = vrcp.pop %v490
    %v508 = vrcp.pop %v492
    %v509 = vmul.f32 %v430, %v493
    %v510 = vmul.f32 %v432, %v494
    %v511 = vmul.f32 %v434, %v495
    %v512 = vmul.f32 %v436, %v496
    %v513 = vmul.f32 %v438, %v497
    %v514 = vmul.f32 %v440, %v498
    %v515 = vmul.f32 %v442, %v499
    %v516 = vmul.f32 %v444, %v500
    %v517 = vmul.f32 %v446, %v501
    %v518 = vmul.f32 %v448, %v502
    %v519 = vmul.f32 %v450, %v503
    %v520 = vmul.f32 %v452, %v504
    %v521 = vmul.f32 %v454, %v505
    %v522 = vmul.f32 %v456, %v506
    %v523 = vmul.f32 %v458, %v507
    %v524 = vmul.f32 %v460, %v508
    %v525 = vpack.c.bf16 %v510, %v509
    %v526 = vpack.c.bf16 %v512, %v511
    %v527 = vpack.c.bf16 %v514, %v513
    %v528 = vpack.c.bf16 %v516, %v515
    %v529 = vpack.c.bf16 %v518, %v517
    %v530 = vpack.c.bf16 %v520, %v519
    %v531 = vpack.c.bf16 %v522, %v521
    %v532 = vpack.c.bf16 %v524, %v523
    %533 = vmatpush.bf16.msra.mxu0 %v282
    %534 = vmatpush.bf16.msra.mxu0 %v281
    %535 = vmatpush.bf16.msra.mxu0 %v280
    %536 = vmatpush.bf16.msra.mxu0 %v279
    %537 = vmatpush.bf16.msra.mxu0 %v278
    %538 = vmatpush.bf16.msra.mxu0 %v277
    %539 = vmatpush.bf16.msra.mxu0 %v276
    %540 = vmatpush.bf16.msra.mxu0 %v275
    %541 = vmatmul.bf16.gmra.mxu0 %v525
    %v542 = vpop.f32.mrf.mxu0
    %v543 = vadd.f32 0.0, %v542
    %v544 = vpop.f32.mrf.mxu0
    %v545 = vadd.f32 0.0, %v544
    %546 = vmatmul.bf16.gmra.mxu0 %v526
    %v547 = vpop.f32.mrf.mxu0
    %v548 = vadd.f32 0.0, %v547
    %v549 = vpop.f32.mrf.mxu0
    %v550 = vadd.f32 0.0, %v549
    %551 = vmatmul.bf16.gmra.mxu0 %v527
    %v552 = vpop.f32.mrf.mxu0
    %v553 = vadd.f32 0.0, %v552
    %v554 = vpop.f32.mrf.mxu0
    %v555 = vadd.f32 0.0, %v554
    %556 = vmatmul.bf16.gmra.mxu0 %v528
    %v557 = vpop.f32.mrf.mxu0
    %v558 = vadd.f32 0.0, %v557
    %v559 = vpop.f32.mrf.mxu0
    %v560 = vadd.f32 0.0, %v559
    %561 = vmatmul.bf16.gmra.mxu0 %v529
    %v562 = vpop.f32.mrf.mxu0
    %v563 = vadd.f32 0.0, %v562
    %v564 = vpop.f32.mrf.mxu0
    %v565 = vadd.f32 0.0, %v564
    %566 = vmatmul.bf16.gmra.mxu0 %v530
    %v567 = vpop.f32.mrf.mxu0
    %v568 = vadd.f32 0.0, %v567
    %v569 = vpop.f32.mrf.mxu0
    %v570 = vadd.f32 0.0, %v569
    %571 = vmatmul.bf16.gmra.mxu0 %v531
    %v572 = vpop.f32.mrf.mxu0
    %v573 = vadd.f32 0.0, %v572
    %v574 = vpop.f32.mrf.mxu0
    %v575 = vadd.f32 0.0, %v574
    %576 = vmatmul.bf16.gmra.mxu0 %v532
    %v577 = vpop.f32.mrf.mxu0
    %v578 = vadd.f32 0.0, %v577
    %v579 = vpop.f32.mrf.mxu0
    %v580 = vadd.f32 0.0, %v579
    %581 = vdwg.mxu0
    %590 = vrot.lane.b32.xlu0 %v259, 112
    %v591 = vpop.permute.xlu0 %590
    %592 = vrot.lane.b32.xlu0 %v260, 112
    %v593 = vpop.permute.xlu0 %592
    %594 = vrot.lane.b32.xlu0 %v261, 112
    %v595 = vpop.permute.xlu0 %594
    %596 = vrot.lane.b32.xlu0 %v262, 112
    %v597 = vpop.permute.xlu0 %596
    %598 = vrot.lane.b32.xlu0 %v263, 112
    %v599 = vpop.permute.xlu0 %598
    %600 = vrot.lane.b32.xlu0 %v264, 112
    %v601 = vpop.permute.xlu0 %600
    %602 = vrot.lane.b32.xlu0 %v265, 112
    %v603 = vpop.permute.xlu0 %602
    %604 = vrot.lane.b32.xlu0 %v266, 112
    %v605 = vpop.permute.xlu0 %604
    %614 = vrot.lane.b32.xlu0 %v267, 112
    %v615 = vpop.permute.xlu0 %614
    %616 = vrot.lane.b32.xlu0 %v268, 112
    %v617 = vpop.permute.xlu0 %616
    %618 = vrot.lane.b32.xlu0 %v269, 112
    %v619 = vpop.permute.xlu0 %618
    %620 = vrot.lane.b32.xlu0 %v270, 112
    %v621 = vpop.permute.xlu0 %620
    %622 = vrot.lane.b32.xlu0 %v271, 112
    %v623 = vpop.permute.xlu0 %622
    %624 = vrot.lane.b32.xlu0 %v272, 112
    %v625 = vpop.permute.xlu0 %624
    %626 = vrot.lane.b32.xlu0 %v273, 112
    %v627 = vpop.permute.xlu0 %626
    %628 = vrot.lane.b32.xlu0 %v274, 112
    %v629 = vpop.permute.xlu0 %628
    %v631 = vsel %vm283, %v591, 0
    %v634 = vsel %vm283, %v593, 0
    %v637 = vsel %vm283, %v595, 0
    %v640 = vsel %vm283, %v597, 0
    %v643 = vsel %vm283, %v599, 0
    %v646 = vsel %vm283, %v601, 0
    %v649 = vsel %vm283, %v603, 0
    %v652 = vsel %vm283, %v605, 0
    %v655 = vsel %vm283, %v615, 0
    %v658 = vsel %vm283, %v617, 0
    %v661 = vsel %vm283, %v619, 0
    %v664 = vsel %vm283, %v621, 0
    %v667 = vsel %vm283, %v623, 0
    %v670 = vsel %vm283, %v625, 0
    %v673 = vsel %vm283, %v627, 0
    %v676 = vsel %vm283, %v629, 0
    %678 = vmatpush.bf16.xpose.msra.mxu0 %v676
    %679 = vmatpush.bf16.xpose.msra.mxu0 %v673
    %680 = vmatpush.bf16.xpose.msra.mxu0 %v670
    %681 = vmatpush.bf16.xpose.msra.mxu0 %v667
    %682 = vmatpush.bf16.xpose.msra.mxu0 %v664
    %683 = vmatpush.bf16.xpose.msra.mxu0 %v661
    %684 = vmatpush.bf16.xpose.msra.mxu0 %v658
    %685 = vmatpush.bf16.xpose.msra.mxu0 %v655
    %686 = vmatmul.bf16.gmra.mxu0 %v631
    %v687 = vpop.f32.mrf.mxu0
    %v688 = vadd.f32 %v227, %v687
    %v689 = vpop.f32.mrf.mxu0
    %v690 = vadd.f32 %v228, %v689
    %691 = vmatmul.bf16.gmra.mxu0 %v634
    %v692 = vpop.f32.mrf.mxu0
    %v693 = vadd.f32 %v229, %v692
    %v694 = vpop.f32.mrf.mxu0
    %v695 = vadd.f32 %v230, %v694
    %696 = vmatmul.bf16.gmra.mxu0 %v637
    %v697 = vpop.f32.mrf.mxu0
    %v698 = vadd.f32 %v231, %v697
    %v699 = vpop.f32.mrf.mxu0
    %v700 = vadd.f32 %v232, %v699
    %701 = vmatmul.bf16.gmra.mxu0 %v640
    %v702 = vpop.f32.mrf.mxu0
    %v703 = vadd.f32 %v233, %v702
    %v704 = vpop.f32.mrf.mxu0
    %v705 = vadd.f32 %v234, %v704
    %706 = vmatmul.bf16.gmra.mxu0 %v643
    %v707 = vpop.f32.mrf.mxu0
    %v708 = vadd.f32 %v235, %v707
    %v709 = vpop.f32.mrf.mxu0
    %v710 = vadd.f32 %v236, %v709
    %711 = vmatmul.bf16.gmra.mxu0 %v646
    %v712 = vpop.f32.mrf.mxu0
    %v713 = vadd.f32 %v237, %v712
    %v714 = vpop.f32.mrf.mxu0
    %v715 = vadd.f32 %v238, %v714
    %716 = vmatmul.bf16.gmra.mxu0 %v649
    %v717 = vpop.f32.mrf.mxu0
    %v718 = vadd.f32 %v239, %v717
    %v719 = vpop.f32.mrf.mxu0
    %v720 = vadd.f32 %v240, %v719
    %721 = vmatmul.bf16.gmra.mxu0 %v652
    %v722 = vpop.f32.mrf.mxu0
    %v723 = vadd.f32 %v241, %v722
    %v724 = vpop.f32.mrf.mxu0
    %v725 = vadd.f32 %v242, %v724
    %726 = vdwg.mxu0
    %727 = vmax.xlane.f32.xlu0 %v688
    %v728 = vpop.xlane.xlu0 %727
    %729 = vmax.xlane.f32.xlu0 %v690
    %v730 = vpop.xlane.xlu0 %729
    %731 = vmax.xlane.f32.xlu0 %v693
    %v732 = vpop.xlane.xlu0 %731
    %733 = vmax.xlane.f32.xlu0 %v695
    %v734 = vpop.xlane.xlu0 %733
    %735 = vmax.xlane.f32.xlu0 %v698
    %v736 = vpop.xlane.xlu0 %735
    %737 = vmax.xlane.f32.xlu0 %v700
    %v738 = vpop.xlane.xlu0 %737
    %739 = vmax.xlane.f32.xlu0 %v703
    %v740 = vpop.xlane.xlu0 %739
    %741 = vmax.xlane.f32.xlu0 %v705
    %v742 = vpop.xlane.xlu0 %741
    %743 = vmax.xlane.f32.xlu0 %v708
    %v744 = vpop.xlane.xlu0 %743
    %745 = vmax.xlane.f32.xlu0 %v710
    %v746 = vpop.xlane.xlu0 %745
    %747 = vmax.xlane.f32.xlu0 %v713
    %v748 = vpop.xlane.xlu0 %747
    %749 = vmax.xlane.f32.xlu0 %v715
    %v750 = vpop.xlane.xlu0 %749
    %751 = vmax.xlane.f32.xlu0 %v718
    %v752 = vpop.xlane.xlu0 %751
    %753 = vmax.xlane.f32.xlu0 %v720
    %v754 = vpop.xlane.xlu0 %753
    %755 = vmax.xlane.f32.xlu0 %v723
    %v756 = vpop.xlane.xlu0 %755
    %757 = vmax.xlane.f32.xlu0 %v725
    %v758 = vpop.xlane.xlu0 %757
    %v759 = vsub.f32 %v688, %v728
    %v760 = vsub.f32 %v690, %v730
    %v761 = vsub.f32 %v693, %v732
    %v762 = vsub.f32 %v695, %v734
    %v763 = vsub.f32 %v698, %v736
    %v764 = vsub.f32 %v700, %v738
    %v765 = vsub.f32 %v703, %v740
    %v766 = vsub.f32 %v705, %v742
    %v767 = vsub.f32 %v708, %v744
    %v768 = vsub.f32 %v710, %v746
    %v769 = vsub.f32 %v713, %v748
    %v770 = vsub.f32 %v715, %v750
    %v771 = vsub.f32 %v718, %v752
    %v772 = vsub.f32 %v720, %v754
    %v773 = vsub.f32 %v723, %v756
    %v774 = vsub.f32 %v725, %v758
    %v775 = vmul.f32 %v759, 1.442695
    %v776 = vpow.pop %v775
    %v777 = vmul.f32 %v760, 1.442695
    %v778 = vpow.pop %v777
    %v779 = vmul.f32 %v761, 1.442695
    %v780 = vpow.pop %v779
    %v781 = vmul.f32 %v762, 1.442695
    %v782 = vpow.pop %v781
    %v783 = vmul.f32 %v763, 1.442695
    %v784 = vpow.pop %v783
    %v785 = vmul.f32 %v764, 1.442695
    %v786 = vpow.pop %v785
    %v787 = vmul.f32 %v765, 1.442695
    %v788 = vpow.pop %v787
    %v789 = vmul.f32 %v766, 1.442695
    %v790 = vpow.pop %v789
    %v791 = vmul.f32 %v767, 1.442695
    %v792 = vpow.pop %v791
    %v793 = vmul.f32 %v768, 1.442695
    %v794 = vpow.pop %v793
    %v795 = vmul.f32 %v769, 1.442695
    %v796 = vpow.pop %v795
    %v797 = vmul.f32 %v770, 1.442695
    %v798 = vpow.pop %v797
    %v799 = vmul.f32 %v771, 1.442695
    %v800 = vpow.pop %v799
    %v801 = vmul.f32 %v772, 1.442695
    %v802 = vpow.pop %v801
    %v803 = vmul.f32 %v773, 1.442695
    %v804 = vpow.pop %v803
    %v805 = vmul.f32 %v774, 1.442695
    %v806 = vpow.pop %v805
    %807 = vadd.xlane.f32.xlu0 %v776
    %v808 = vpop.xlane.xlu0 %807
    %809 = vadd.xlane.f32.xlu0 %v778
    %v810 = vpop.xlane.xlu0 %809
    %811 = vadd.xlane.f32.xlu0 %v780
    %v812 = vpop.xlane.xlu0 %811
    %813 = vadd.xlane.f32.xlu0 %v782
    %v814 = vpop.xlane.xlu0 %813
    %815 = vadd.xlane.f32.xlu0 %v784
    %v816 = vpop.xlane.xlu0 %815
    %817 = vadd.xlane.f32.xlu0 %v786
    %v818 = vpop.xlane.xlu0 %817
    %819 = vadd.xlane.f32.xlu0 %v788
    %v820 = vpop.xlane.xlu0 %819
    %821 = vadd.xlane.f32.xlu0 %v790
    %v822 = vpop.xlane.xlu0 %821
    %823 = vadd.xlane.f32.xlu0 %v792
    %v824 = vpop.xlane.xlu0 %823
    %825 = vadd.xlane.f32.xlu0 %v794
    %v826 = vpop.xlane.xlu0 %825
    %827 = vadd.xlane.f32.xlu0 %v796
    %v828 = vpop.xlane.xlu0 %827
    %829 = vadd.xlane.f32.xlu0 %v798
    %v830 = vpop.xlane.xlu0 %829
    %831 = vadd.xlane.f32.xlu0 %v800
    %v832 = vpop.xlane.xlu0 %831
    %833 = vadd.xlane.f32.xlu0 %v802
    %v834 = vpop.xlane.xlu0 %833
    %835 = vadd.xlane.f32.xlu0 %v804
    %v836 = vpop.xlane.xlu0 %835
    %837 = vadd.xlane.f32.xlu0 %v806
    %v838 = vpop.xlane.xlu0 %837
    %v839 = vrcp.pop %v808
    %v840 = vrcp.pop %v810
    %v841 = vrcp.pop %v812
    %v842 = vrcp.pop %v814
    %v843 = vrcp.pop %v816
    %v844 = vrcp.pop %v818
    %v845 = vrcp.pop %v820
    %v846 = vrcp.pop %v822
    %v847 = vrcp.pop %v824
    %v848 = vrcp.pop %v826
    %v849 = vrcp.pop %v828
    %v850 = vrcp.pop %v830
    %v851 = vrcp.pop %v832
    %v852 = vrcp.pop %v834
    %v853 = vrcp.pop %v836
    %v854 = vrcp.pop %v838
    %v855 = vmul.f32 %v776, %v839
    %v856 = vmul.f32 %v778, %v840
    %v857 = vmul.f32 %v780, %v841
    %v858 = vmul.f32 %v782, %v842
    %v859 = vmul.f32 %v784, %v843
    %v860 = vmul.f32 %v786, %v844
    %v861 = vmul.f32 %v788, %v845
    %v862 = vmul.f32 %v790, %v846
    %v863 = vmul.f32 %v792, %v847
    %v864 = vmul.f32 %v794, %v848
    %v865 = vmul.f32 %v796, %v849
    %v866 = vmul.f32 %v798, %v850
    %v867 = vmul.f32 %v800, %v851
    %v868 = vmul.f32 %v802, %v852
    %v869 = vmul.f32 %v804, %v853
    %v870 = vmul.f32 %v806, %v854
    %v871 = vpack.c.bf16 %v856, %v855
    %v872 = vpack.c.bf16 %v858, %v857
    %v873 = vpack.c.bf16 %v860, %v859
    %v874 = vpack.c.bf16 %v862, %v861
    %v875 = vpack.c.bf16 %v864, %v863
    %v876 = vpack.c.bf16 %v866, %v865
    %v877 = vpack.c.bf16 %v868, %v867
    %v878 = vpack.c.bf16 %v870, %v869
    %887 = vrot.lane.b32.xlu0 %v275, 112
    %v888 = vpop.permute.xlu0 %887
    %889 = vrot.lane.b32.xlu0 %v276, 112
    %v890 = vpop.permute.xlu0 %889
    %891 = vrot.lane.b32.xlu0 %v277, 112
    %v892 = vpop.permute.xlu0 %891
    %893 = vrot.lane.b32.xlu0 %v278, 112
    %v894 = vpop.permute.xlu0 %893
    %895 = vrot.lane.b32.xlu0 %v279, 112
    %v896 = vpop.permute.xlu0 %895
    %897 = vrot.lane.b32.xlu0 %v280, 112
    %v898 = vpop.permute.xlu0 %897
    %899 = vrot.lane.b32.xlu0 %v281, 112
    %v900 = vpop.permute.xlu0 %899
    %901 = vrot.lane.b32.xlu0 %v282, 112
    %v902 = vpop.permute.xlu0 %901
    %911 = vmatpush.bf16.msra.mxu0 %v902
    %912 = vmatpush.bf16.msra.mxu0 %v900
    %913 = vmatpush.bf16.msra.mxu0 %v898
    %914 = vmatpush.bf16.msra.mxu0 %v896
    %915 = vmatpush.bf16.msra.mxu0 %v894
    %916 = vmatpush.bf16.msra.mxu0 %v892
    %917 = vmatpush.bf16.msra.mxu0 %v890
    %918 = vmatpush.bf16.msra.mxu0 %v888
    %919 = vmatmul.bf16.gmra.mxu0 %v871
    %v920 = vpop.f32.mrf.mxu0
    %v921 = vadd.f32 0.0, %v920
    %v922 = vpop.f32.mrf.mxu0
    %v923 = vadd.f32 0.0, %v922
    %924 = vmatmul.bf16.gmra.mxu0 %v872
    %v925 = vpop.f32.mrf.mxu0
    %v926 = vadd.f32 0.0, %v925
    %v927 = vpop.f32.mrf.mxu0
    %v928 = vadd.f32 0.0, %v927
    %929 = vmatmul.bf16.gmra.mxu0 %v873
    %v930 = vpop.f32.mrf.mxu0
    %v931 = vadd.f32 0.0, %v930
    %v932 = vpop.f32.mrf.mxu0
    %v933 = vadd.f32 0.0, %v932
    %934 = vmatmul.bf16.gmra.mxu0 %v874
    %v935 = vpop.f32.mrf.mxu0
    %v936 = vadd.f32 0.0, %v935
    %v937 = vpop.f32.mrf.mxu0
    %v938 = vadd.f32 0.0, %v937
    %939 = vmatmul.bf16.gmra.mxu0 %v875
    %v940 = vpop.f32.mrf.mxu0
    %v941 = vadd.f32 0.0, %v940
    %v942 = vpop.f32.mrf.mxu0
    %v943 = vadd.f32 0.0, %v942
    %944 = vmatmul.bf16.gmra.mxu0 %v876
    %v945 = vpop.f32.mrf.mxu0
    %v946 = vadd.f32 0.0, %v945
    %v947 = vpop.f32.mrf.mxu0
    %v948 = vadd.f32 0.0, %v947
    %949 = vmatmul.bf16.gmra.mxu0 %v877
    %v950 = vpop.f32.mrf.mxu0
    %v951 = vadd.f32 0.0, %v950
    %v952 = vpop.f32.mrf.mxu0
    %v953 = vadd.f32 0.0, %v952
    %954 = vmatmul.bf16.gmra.mxu0 %v878
    %v955 = vpop.f32.mrf.mxu0
    %v956 = vadd.f32 0.0, %v955
    %v957 = vpop.f32.mrf.mxu0
    %v958 = vadd.f32 0.0, %v957
    %959 = vdwg.mxu0
    %960 = vrot.lane.b32.xlu0 %v259, 96
    %v961 = vpop.permute.xlu0 %960
    %962 = vrot.lane.b32.xlu0 %v260, 96
    %v963 = vpop.permute.xlu0 %962
    %964 = vrot.lane.b32.xlu0 %v261, 96
    %v965 = vpop.permute.xlu0 %964
    %966 = vrot.lane.b32.xlu0 %v262, 96
    %v967 = vpop.permute.xlu0 %966
    %968 = vrot.lane.b32.xlu0 %v263, 96
    %v969 = vpop.permute.xlu0 %968
    %970 = vrot.lane.b32.xlu0 %v264, 96
    %v971 = vpop.permute.xlu0 %970
    %972 = vrot.lane.b32.xlu0 %v265, 96
    %v973 = vpop.permute.xlu0 %972
    %974 = vrot.lane.b32.xlu0 %v266, 96
    %v975 = vpop.permute.xlu0 %974
    %976 = vrot.lane.b32.xlu0 %v267, 96
    %v977 = vpop.permute.xlu0 %976
    %978 = vrot.lane.b32.xlu0 %v268, 96
    %v979 = vpop.permute.xlu0 %978
    %980 = vrot.lane.b32.xlu0 %v269, 96
    %v981 = vpop.permute.xlu0 %980
    %982 = vrot.lane.b32.xlu0 %v270, 96
    %v983 = vpop.permute.xlu0 %982
    %984 = vrot.lane.b32.xlu0 %v271, 96
    %v985 = vpop.permute.xlu0 %984
    %986 = vrot.lane.b32.xlu0 %v272, 96
    %v987 = vpop.permute.xlu0 %986
    %988 = vrot.lane.b32.xlu0 %v273, 96
    %v989 = vpop.permute.xlu0 %988
    %990 = vrot.lane.b32.xlu0 %v274, 96
    %v991 = vpop.permute.xlu0 %990
    %v993 = vsel %vm283, %v961, 0
    %v996 = vsel %vm283, %v963, 0
    %v999 = vsel %vm283, %v965, 0
    %v1002 = vsel %vm283, %v967, 0
    %v1005 = vsel %vm283, %v969, 0
    %v1008 = vsel %vm283, %v971, 0
    %v1011 = vsel %vm283, %v973, 0
    %v1014 = vsel %vm283, %v975, 0
    %v1017 = vsel %vm283, %v977, 0
    %v1020 = vsel %vm283, %v979, 0
    %v1023 = vsel %vm283, %v981, 0
    %v1026 = vsel %vm283, %v983, 0
    %v1029 = vsel %vm283, %v985, 0
    %v1032 = vsel %vm283, %v987, 0
    %v1035 = vsel %vm283, %v989, 0
    %v1038 = vsel %vm283, %v991, 0
    %1040 = vmatpush.bf16.xpose.msra.mxu0 %v1038
    %1041 = vmatpush.bf16.xpose.msra.mxu0 %v1035
    %1042 = vmatpush.bf16.xpose.msra.mxu0 %v1032
    %1043 = vmatpush.bf16.xpose.msra.mxu0 %v1029
    %1044 = vmatpush.bf16.xpose.msra.mxu0 %v1026
    %1045 = vmatpush.bf16.xpose.msra.mxu0 %v1023
    %1046 = vmatpush.bf16.xpose.msra.mxu0 %v1020
    %1047 = vmatpush.bf16.xpose.msra.mxu0 %v1017
    %1048 = vmatmul.bf16.gmra.mxu0 %v993
    %v1049 = vpop.f32.mrf.mxu0
    %v1050 = vadd.f32 %v227, %v1049
    %v1051 = vpop.f32.mrf.mxu0
    %v1052 = vadd.f32 %v228, %v1051
    %1053 = vmatmul.bf16.gmra.mxu0 %v996
    %v1054 = vpop.f32.mrf.mxu0
    %v1055 = vadd.f32 %v229, %v1054
    %v1056 = vpop.f32.mrf.mxu0
    %v1057 = vadd.f32 %v230, %v1056
    %1058 = vmatmul.bf16.gmra.mxu0 %v999
    %v1059 = vpop.f32.mrf.mxu0
    %v1060 = vadd.f32 %v231, %v1059
    %v1061 = vpop.f32.mrf.mxu0
    %v1062 = vadd.f32 %v232, %v1061
    %1063 = vmatmul.bf16.gmra.mxu0 %v1002
    %v1064 = vpop.f32.mrf.mxu0
    %v1065 = vadd.f32 %v233, %v1064
    %v1066 = vpop.f32.mrf.mxu0
    %v1067 = vadd.f32 %v234, %v1066
    %1068 = vmatmul.bf16.gmra.mxu0 %v1005
    %v1069 = vpop.f32.mrf.mxu0
    %v1070 = vadd.f32 %v235, %v1069
    %v1071 = vpop.f32.mrf.mxu0
    %v1072 = vadd.f32 %v236, %v1071
    %1073 = vmatmul.bf16.gmra.mxu0 %v1008
    %v1074 = vpop.f32.mrf.mxu0
    %v1075 = vadd.f32 %v237, %v1074
    %v1076 = vpop.f32.mrf.mxu0
    %v1077 = vadd.f32 %v238, %v1076
    %1078 = vmatmul.bf16.gmra.mxu0 %v1011
    %v1079 = vpop.f32.mrf.mxu0
    %v1080 = vadd.f32 %v239, %v1079
    %v1081 = vpop.f32.mrf.mxu0
    %v1082 = vadd.f32 %v240, %v1081
    %1083 = vmatmul.bf16.gmra.mxu0 %v1014
    %v1084 = vpop.f32.mrf.mxu0
    %v1085 = vadd.f32 %v241, %v1084
    %v1086 = vpop.f32.mrf.mxu0
    %v1087 = vadd.f32 %v242, %v1086
    %1088 = vdwg.mxu0
    %1089 = vmax.xlane.f32.xlu0 %v1050
    %v1090 = vpop.xlane.xlu0 %1089
    %1091 = vmax.xlane.f32.xlu0 %v1052
    %v1092 = vpop.xlane.xlu0 %1091
    %1093 = vmax.xlane.f32.xlu0 %v1055
    %v1094 = vpop.xlane.xlu0 %1093
    %1095 = vmax.xlane.f32.xlu0 %v1057
    %v1096 = vpop.xlane.xlu0 %1095
    %1097 = vmax.xlane.f32.xlu0 %v1060
    %v1098 = vpop.xlane.xlu0 %1097
    %1099 = vmax.xlane.f32.xlu0 %v1062
    %v1100 = vpop.xlane.xlu0 %1099
    %1101 = vmax.xlane.f32.xlu0 %v1065
    %v1102 = vpop.xlane.xlu0 %1101
    %1103 = vmax.xlane.f32.xlu0 %v1067
    %v1104 = vpop.xlane.xlu0 %1103
    %1105 = vmax.xlane.f32.xlu0 %v1070
    %v1106 = vpop.xlane.xlu0 %1105
    %1107 = vmax.xlane.f32.xlu0 %v1072
    %v1108 = vpop.xlane.xlu0 %1107
    %1109 = vmax.xlane.f32.xlu0 %v1075
    %v1110 = vpop.xlane.xlu0 %1109
    %1111 = vmax.xlane.f32.xlu0 %v1077
    %v1112 = vpop.xlane.xlu0 %1111
    %1113 = vmax.xlane.f32.xlu0 %v1080
    %v1114 = vpop.xlane.xlu0 %1113
    %1115 = vmax.xlane.f32.xlu0 %v1082
    %v1116 = vpop.xlane.xlu0 %1115
    %1117 = vmax.xlane.f32.xlu0 %v1085
    %v1118 = vpop.xlane.xlu0 %1117
    %1119 = vmax.xlane.f32.xlu0 %v1087
    %v1120 = vpop.xlane.xlu0 %1119
    %v1121 = vsub.f32 %v1050, %v1090
    %v1122 = vsub.f32 %v1052, %v1092
    %v1123 = vsub.f32 %v1055, %v1094
    %v1124 = vsub.f32 %v1057, %v1096
    %v1125 = vsub.f32 %v1060, %v1098
    %v1126 = vsub.f32 %v1062, %v1100
    %v1127 = vsub.f32 %v1065, %v1102
    %v1128 = vsub.f32 %v1067, %v1104
    %v1129 = vsub.f32 %v1070, %v1106
    %v1130 = vsub.f32 %v1072, %v1108
    %v1131 = vsub.f32 %v1075, %v1110
    %v1132 = vsub.f32 %v1077, %v1112
    %v1133 = vsub.f32 %v1080, %v1114
    %v1134 = vsub.f32 %v1082, %v1116
    %v1135 = vsub.f32 %v1085, %v1118
    %v1136 = vsub.f32 %v1087, %v1120
    %v1137 = vmul.f32 %v1121, 1.442695
    %v1138 = vpow.pop %v1137
    %v1139 = vmul.f32 %v1122, 1.442695
    %v1140 = vpow.pop %v1139
    %v1141 = vmul.f32 %v1123, 1.442695
    %v1142 = vpow.pop %v1141
    %v1143 = vmul.f32 %v1124, 1.442695
    %v1144 = vpow.pop %v1143
    %v1145 = vmul.f32 %v1125, 1.442695
    %v1146 = vpow.pop %v1145
    %v1147 = vmul.f32 %v1126, 1.442695
    %v1148 = vpow.pop %v1147
    %v1149 = vmul.f32 %v1127, 1.442695
    %v1150 = vpow.pop %v1149
    %v1151 = vmul.f32 %v1128, 1.442695
    %v1152 = vpow.pop %v1151
    %v1153 = vmul.f32 %v1129, 1.442695
    %v1154 = vpow.pop %v1153
    %v1155 = vmul.f32 %v1130, 1.442695
    %v1156 = vpow.pop %v1155
    %v1157 = vmul.f32 %v1131, 1.442695
    %v1158 = vpow.pop %v1157
    %v1159 = vmul.f32 %v1132, 1.442695
    %v1160 = vpow.pop %v1159
    %v1161 = vmul.f32 %v1133, 1.442695
    %v1162 = vpow.pop %v1161
    %v1163 = vmul.f32 %v1134, 1.442695
    %v1164 = vpow.pop %v1163
    %v1165 = vmul.f32 %v1135, 1.442695
    %v1166 = vpow.pop %v1165
    %v1167 = vmul.f32 %v1136, 1.442695
    %v1168 = vpow.pop %v1167
    %1169 = vadd.xlane.f32.xlu0 %v1138
    %v1170 = vpop.xlane.xlu0 %1169
    %1171 = vadd.xlane.f32.xlu0 %v1140
    %v1172 = vpop.xlane.xlu0 %1171
    %1173 = vadd.xlane.f32.xlu0 %v1142
    %v1174 = vpop.xlane.xlu0 %1173
    %1175 = vadd.xlane.f32.xlu0 %v1144
    %v1176 = vpop.xlane.xlu0 %1175
    %1177 = vadd.xlane.f32.xlu0 %v1146
    %v1178 = vpop.xlane.xlu0 %1177
    %1179 = vadd.xlane.f32.xlu0 %v1148
    %v1180 = vpop.xlane.xlu0 %1179
    %1181 = vadd.xlane.f32.xlu0 %v1150
    %v1182 = vpop.xlane.xlu0 %1181
    %1183 = vadd.xlane.f32.xlu0 %v1152
    %v1184 = vpop.xlane.xlu0 %1183
    %1185 = vadd.xlane.f32.xlu0 %v1154
    %v1186 = vpop.xlane.xlu0 %1185
    %1187 = vadd.xlane.f32.xlu0 %v1156
    %v1188 = vpop.xlane.xlu0 %1187
    %1189 = vadd.xlane.f32.xlu0 %v1158
    %v1190 = vpop.xlane.xlu0 %1189
    %1191 = vadd.xlane.f32.xlu0 %v1160
    %v1192 = vpop.xlane.xlu0 %1191
    %1193 = vadd.xlane.f32.xlu0 %v1162
    %v1194 = vpop.xlane.xlu0 %1193
    %1195 = vadd.xlane.f32.xlu0 %v1164
    %v1196 = vpop.xlane.xlu0 %1195
    %1197 = vadd.xlane.f32.xlu0 %v1166
    %v1198 = vpop.xlane.xlu0 %1197
    %1199 = vadd.xlane.f32.xlu0 %v1168
    %v1200 = vpop.xlane.xlu0 %1199
    %v1201 = vrcp.pop %v1170
    %v1202 = vrcp.pop %v1172
    %v1203 = vrcp.pop %v1174
    %v1204 = vrcp.pop %v1176
    %v1205 = vrcp.pop %v1178
    %v1206 = vrcp.pop %v1180
    %v1207 = vrcp.pop %v1182
    %v1208 = vrcp.pop %v1184
    %v1209 = vrcp.pop %v1186
    %v1210 = vrcp.pop %v1188
    %v1211 = vrcp.pop %v1190
    %v1212 = vrcp.pop %v1192
    %v1213 = vrcp.pop %v1194
    %v1214 = vrcp.pop %v1196
    %v1215 = vrcp.pop %v1198
    %v1216 = vrcp.pop %v1200
    %v1217 = vmul.f32 %v1138, %v1201
    %v1218 = vmul.f32 %v1140, %v1202
    %v1219 = vmul.f32 %v1142, %v1203
    %v1220 = vmul.f32 %v1144, %v1204
    %v1221 = vmul.f32 %v1146, %v1205
    %v1222 = vmul.f32 %v1148, %v1206
    %v1223 = vmul.f32 %v1150, %v1207
    %v1224 = vmul.f32 %v1152, %v1208
    %v1225 = vmul.f32 %v1154, %v1209
    %v1226 = vmul.f32 %v1156, %v1210
    %v1227 = vmul.f32 %v1158, %v1211
    %v1228 = vmul.f32 %v1160, %v1212
    %v1229 = vmul.f32 %v1162, %v1213
    %v1230 = vmul.f32 %v1164, %v1214
    %v1231 = vmul.f32 %v1166, %v1215
    %v1232 = vmul.f32 %v1168, %v1216
    %v1233 = vpack.c.bf16 %v1218, %v1217
    %v1234 = vpack.c.bf16 %v1220, %v1219
    %v1235 = vpack.c.bf16 %v1222, %v1221
    %v1236 = vpack.c.bf16 %v1224, %v1223
    %v1237 = vpack.c.bf16 %v1226, %v1225
    %v1238 = vpack.c.bf16 %v1228, %v1227
    %v1239 = vpack.c.bf16 %v1230, %v1229
    %v1240 = vpack.c.bf16 %v1232, %v1231
    %1241 = vrot.lane.b32.xlu0 %v275, 96
    %v1242 = vpop.permute.xlu0 %1241
    %1243 = vrot.lane.b32.xlu0 %v276, 96
    %v1244 = vpop.permute.xlu0 %1243
    %1245 = vrot.lane.b32.xlu0 %v277, 96
    %v1246 = vpop.permute.xlu0 %1245
    %1247 = vrot.lane.b32.xlu0 %v278, 96
    %v1248 = vpop.permute.xlu0 %1247
    %1249 = vrot.lane.b32.xlu0 %v279, 96
    %v1250 = vpop.permute.xlu0 %1249
    %1251 = vrot.lane.b32.xlu0 %v280, 96
    %v1252 = vpop.permute.xlu0 %1251
    %1253 = vrot.lane.b32.xlu0 %v281, 96
    %v1254 = vpop.permute.xlu0 %1253
    %1255 = vrot.lane.b32.xlu0 %v282, 96
    %v1256 = vpop.permute.xlu0 %1255
    %1265 = vmatpush.bf16.msra.mxu0 %v1256
    %1266 = vmatpush.bf16.msra.mxu0 %v1254
    %1267 = vmatpush.bf16.msra.mxu0 %v1252
    %1268 = vmatpush.bf16.msra.mxu0 %v1250
    %1269 = vmatpush.bf16.msra.mxu0 %v1248
    %1270 = vmatpush.bf16.msra.mxu0 %v1246
    %1271 = vmatpush.bf16.msra.mxu0 %v1244
    %1272 = vmatpush.bf16.msra.mxu0 %v1242
    %1273 = vmatmul.bf16.gmra.mxu0 %v1233
    %v1274 = vpop.f32.mrf.mxu0
    %v1275 = vadd.f32 0.0, %v1274
    %v1276 = vpop.f32.mrf.mxu0
    %v1277 = vadd.f32 0.0, %v1276
    %1278 = vmatmul.bf16.gmra.mxu0 %v1234
    %v1279 = vpop.f32.mrf.mxu0
    %v1280 = vadd.f32 0.0, %v1279
    %v1281 = vpop.f32.mrf.mxu0
    %v1282 = vadd.f32 0.0, %v1281
    %1283 = vmatmul.bf16.gmra.mxu0 %v1235
    %v1284 = vpop.f32.mrf.mxu0
    %v1285 = vadd.f32 0.0, %v1284
    %v1286 = vpop.f32.mrf.mxu0
    %v1287 = vadd.f32 0.0, %v1286
    %1288 = vmatmul.bf16.gmra.mxu0 %v1236
    %v1289 = vpop.f32.mrf.mxu0
    %v1290 = vadd.f32 0.0, %v1289
    %v1291 = vpop.f32.mrf.mxu0
    %v1292 = vadd.f32 0.0, %v1291
    %1293 = vmatmul.bf16.gmra.mxu0 %v1237
    %v1294 = vpop.f32.mrf.mxu0
    %v1295 = vadd.f32 0.0, %v1294
    %v1296 = vpop.f32.mrf.mxu0
    %v1297 = vadd.f32 0.0, %v1296
    %1298 = vmatmul.bf16.gmra.mxu0 %v1238
    %v1299 = vpop.f32.mrf.mxu0
    %v1300 = vadd.f32 0.0, %v1299
    %v1301 = vpop.f32.mrf.mxu0
    %v1302 = vadd.f32 0.0, %v1301
    %1303 = vmatmul.bf16.gmra.mxu0 %v1239
    %v1304 = vpop.f32.mrf.mxu0
    %v1305 = vadd.f32 0.0, %v1304
    %v1306 = vpop.f32.mrf.mxu0
    %v1307 = vadd.f32 0.0, %v1306
    %1308 = vmatmul.bf16.gmra.mxu0 %v1240
    %v1309 = vpop.f32.mrf.mxu0
    %v1310 = vadd.f32 0.0, %v1309
    %v1311 = vpop.f32.mrf.mxu0
    %v1312 = vadd.f32 0.0, %v1311
    %1313 = vdwg.mxu0
    %1314 = vrot.lane.b32.xlu0 %v259, 80
    %v1315 = vpop.permute.xlu0 %1314
    %1316 = vrot.lane.b32.xlu0 %v260, 80
    %v1317 = vpop.permute.xlu0 %1316
    %1318 = vrot.lane.b32.xlu0 %v261, 80
    %v1319 = vpop.permute.xlu0 %1318
    %1320 = vrot.lane.b32.xlu0 %v262, 80
    %v1321 = vpop.permute.xlu0 %1320
    %1322 = vrot.lane.b32.xlu0 %v263, 80
    %v1323 = vpop.permute.xlu0 %1322
    %1324 = vrot.lane.b32.xlu0 %v264, 80
    %v1325 = vpop.permute.xlu0 %1324
    %1326 = vrot.lane.b32.xlu0 %v265, 80
    %v1327 = vpop.permute.xlu0 %1326
    %1328 = vrot.lane.b32.xlu0 %v266, 80
    %v1329 = vpop.permute.xlu0 %1328
    %1330 = vrot.lane.b32.xlu0 %v267, 80
    %v1331 = vpop.permute.xlu0 %1330
    %1332 = vrot.lane.b32.xlu0 %v268, 80
    %v1333 = vpop.permute.xlu0 %1332
    %1334 = vrot.lane.b32.xlu0 %v269, 80
    %v1335 = vpop.permute.xlu0 %1334
    %1336 = vrot.lane.b32.xlu0 %v270, 80
    %v1337 = vpop.permute.xlu0 %1336
    %1338 = vrot.lane.b32.xlu0 %v271, 80
    %v1339 = vpop.permute.xlu0 %1338
    %1340 = vrot.lane.b32.xlu0 %v272, 80
    %v1341 = vpop.permute.xlu0 %1340
    %1342 = vrot.lane.b32.xlu0 %v273, 80
    %v1343 = vpop.permute.xlu0 %1342
    %1344 = vrot.lane.b32.xlu0 %v274, 80
    %v1345 = vpop.permute.xlu0 %1344
    %v1347 = vsel %vm283, %v1315, 0
    %v1350 = vsel %vm283, %v1317, 0
    %v1353 = vsel %vm283, %v1319, 0
    %v1356 = vsel %vm283, %v1321, 0
    %v1359 = vsel %vm283, %v1323, 0
    %v1362 = vsel %vm283, %v1325, 0
    %v1365 = vsel %vm283, %v1327, 0
    %v1368 = vsel %vm283, %v1329, 0
    %v1371 = vsel %vm283, %v1331, 0
    %v1374 = vsel %vm283, %v1333, 0
    %v1377 = vsel %vm283, %v1335, 0
    %v1380 = vsel %vm283, %v1337, 0
    %v1383 = vsel %vm283, %v1339, 0
    %v1386 = vsel %vm283, %v1341, 0
    %v1389 = vsel %vm283, %v1343, 0
    %v1392 = vsel %vm283, %v1345, 0
    %1394 = vmatpush.bf16.xpose.msra.mxu0 %v1392
    %1395 = vmatpush.bf16.xpose.msra.mxu0 %v1389
    %1396 = vmatpush.bf16.xpose.msra.mxu0 %v1386
    %1397 = vmatpush.bf16.xpose.msra.mxu0 %v1383
    %1398 = vmatpush.bf16.xpose.msra.mxu0 %v1380
    %1399 = vmatpush.bf16.xpose.msra.mxu0 %v1377
    %1400 = vmatpush.bf16.xpose.msra.mxu0 %v1374
    %1401 = vmatpush.bf16.xpose.msra.mxu0 %v1371
    %1402 = vmatmul.bf16.gmra.mxu0 %v1347
    %v1403 = vpop.f32.mrf.mxu0
    %v1404 = vadd.f32 %v227, %v1403
    %v1405 = vpop.f32.mrf.mxu0
    %v1406 = vadd.f32 %v228, %v1405
    %1407 = vmatmul.bf16.gmra.mxu0 %v1350
    %v1408 = vpop.f32.mrf.mxu0
    %v1409 = vadd.f32 %v229, %v1408
    %v1410 = vpop.f32.mrf.mxu0
    %v1411 = vadd.f32 %v230, %v1410
    %1412 = vmatmul.bf16.gmra.mxu0 %v1353
    %v1413 = vpop.f32.mrf.mxu0
    %v1414 = vadd.f32 %v231, %v1413
    %v1415 = vpop.f32.mrf.mxu0
    %v1416 = vadd.f32 %v232, %v1415
    %1417 = vmatmul.bf16.gmra.mxu0 %v1356
    %v1418 = vpop.f32.mrf.mxu0
    %v1419 = vadd.f32 %v233, %v1418
    %v1420 = vpop.f32.mrf.mxu0
    %v1421 = vadd.f32 %v234, %v1420
    %1422 = vmatmul.bf16.gmra.mxu0 %v1359
    %v1423 = vpop.f32.mrf.mxu0
    %v1424 = vadd.f32 %v235, %v1423
    %v1425 = vpop.f32.mrf.mxu0
    %v1426 = vadd.f32 %v236, %v1425
    %1427 = vmatmul.bf16.gmra.mxu0 %v1362
    %v1428 = vpop.f32.mrf.mxu0
    %v1429 = vadd.f32 %v237, %v1428
    %v1430 = vpop.f32.mrf.mxu0
    %v1431 = vadd.f32 %v238, %v1430
    %1432 = vmatmul.bf16.gmra.mxu0 %v1365
    %v1433 = vpop.f32.mrf.mxu0
    %v1434 = vadd.f32 %v239, %v1433
    %v1435 = vpop.f32.mrf.mxu0
    %v1436 = vadd.f32 %v240, %v1435
    %1437 = vmatmul.bf16.gmra.mxu0 %v1368
    %v1438 = vpop.f32.mrf.mxu0
    %v1439 = vadd.f32 %v241, %v1438
    %v1440 = vpop.f32.mrf.mxu0
    %v1441 = vadd.f32 %v242, %v1440
    %1442 = vdwg.mxu0
    %1443 = vmax.xlane.f32.xlu0 %v1404
    %v1444 = vpop.xlane.xlu0 %1443
    %1445 = vmax.xlane.f32.xlu0 %v1406
    %v1446 = vpop.xlane.xlu0 %1445
    %1447 = vmax.xlane.f32.xlu0 %v1409
    %v1448 = vpop.xlane.xlu0 %1447
    %1449 = vmax.xlane.f32.xlu0 %v1411
    %v1450 = vpop.xlane.xlu0 %1449
    %1451 = vmax.xlane.f32.xlu0 %v1414
    %v1452 = vpop.xlane.xlu0 %1451
    %1453 = vmax.xlane.f32.xlu0 %v1416
    %v1454 = vpop.xlane.xlu0 %1453
    %1455 = vmax.xlane.f32.xlu0 %v1419
    %v1456 = vpop.xlane.xlu0 %1455
    %1457 = vmax.xlane.f32.xlu0 %v1421
    %v1458 = vpop.xlane.xlu0 %1457
    %1459 = vmax.xlane.f32.xlu0 %v1424
    %v1460 = vpop.xlane.xlu0 %1459
    %1461 = vmax.xlane.f32.xlu0 %v1426
    %v1462 = vpop.xlane.xlu0 %1461
    %1463 = vmax.xlane.f32.xlu0 %v1429
    %v1464 = vpop.xlane.xlu0 %1463
    %1465 = vmax.xlane.f32.xlu0 %v1431
    %v1466 = vpop.xlane.xlu0 %1465
    %1467 = vmax.xlane.f32.xlu0 %v1434
    %v1468 = vpop.xlane.xlu0 %1467
    %1469 = vmax.xlane.f32.xlu0 %v1436
    %v1470 = vpop.xlane.xlu0 %1469
    %1471 = vmax.xlane.f32.xlu0 %v1439
    %v1472 = vpop.xlane.xlu0 %1471
    %1473 = vmax.xlane.f32.xlu0 %v1441
    %v1474 = vpop.xlane.xlu0 %1473
    %v1475 = vsub.f32 %v1404, %v1444
    %v1476 = vsub.f32 %v1406, %v1446
    %v1477 = vsub.f32 %v1409, %v1448
    %v1478 = vsub.f32 %v1411, %v1450
    %v1479 = vsub.f32 %v1414, %v1452
    %v1480 = vsub.f32 %v1416, %v1454
    %v1481 = vsub.f32 %v1419, %v1456
    %v1482 = vsub.f32 %v1421, %v1458
    %v1483 = vsub.f32 %v1424, %v1460
    %v1484 = vsub.f32 %v1426, %v1462
    %v1485 = vsub.f32 %v1429, %v1464
    %v1486 = vsub.f32 %v1431, %v1466
    %v1487 = vsub.f32 %v1434, %v1468
    %v1488 = vsub.f32 %v1436, %v1470
    %v1489 = vsub.f32 %v1439, %v1472
    %v1490 = vsub.f32 %v1441, %v1474
    %v1491 = vmul.f32 %v1475, 1.442695
    %v1492 = vpow.pop %v1491
    %v1493 = vmul.f32 %v1476, 1.442695
    %v1494 = vpow.pop %v1493
    %v1495 = vmul.f32 %v1477, 1.442695
    %v1496 = vpow.pop %v1495
    %v1497 = vmul.f32 %v1478, 1.442695
    %v1498 = vpow.pop %v1497
    %v1499 = vmul.f32 %v1479, 1.442695
    %v1500 = vpow.pop %v1499
    %v1501 = vmul.f32 %v1480, 1.442695
    %v1502 = vpow.pop %v1501
    %v1503 = vmul.f32 %v1481, 1.442695
    %v1504 = vpow.pop %v1503
    %v1505 = vmul.f32 %v1482, 1.442695
    %v1506 = vpow.pop %v1505
    %v1507 = vmul.f32 %v1483, 1.442695
    %v1508 = vpow.pop %v1507
    %v1509 = vmul.f32 %v1484, 1.442695
    %v1510 = vpow.pop %v1509
    %v1511 = vmul.f32 %v1485, 1.442695
    %v1512 = vpow.pop %v1511
    %v1513 = vmul.f32 %v1486, 1.442695
    %v1514 = vpow.pop %v1513
    %v1515 = vmul.f32 %v1487, 1.442695
    %v1516 = vpow.pop %v1515
    %v1517 = vmul.f32 %v1488, 1.442695
    %v1518 = vpow.pop %v1517
    %v1519 = vmul.f32 %v1489, 1.442695
    %v1520 = vpow.pop %v1519
    %v1521 = vmul.f32 %v1490, 1.442695
    %v1522 = vpow.pop %v1521
    %1523 = vadd.xlane.f32.xlu0 %v1492
    %v1524 = vpop.xlane.xlu0 %1523
    %1525 = vadd.xlane.f32.xlu0 %v1494
    %v1526 = vpop.xlane.xlu0 %1525
    %1527 = vadd.xlane.f32.xlu0 %v1496
    %v1528 = vpop.xlane.xlu0 %1527
    %1529 = vadd.xlane.f32.xlu0 %v1498
    %v1530 = vpop.xlane.xlu0 %1529
    %1531 = vadd.xlane.f32.xlu0 %v1500
    %v1532 = vpop.xlane.xlu0 %1531
    %1533 = vadd.xlane.f32.xlu0 %v1502
    %v1534 = vpop.xlane.xlu0 %1533
    %1535 = vadd.xlane.f32.xlu0 %v1504
    %v1536 = vpop.xlane.xlu0 %1535
    %1537 = vadd.xlane.f32.xlu0 %v1506
    %v1538 = vpop.xlane.xlu0 %1537
    %1539 = vadd.xlane.f32.xlu0 %v1508
    %v1540 = vpop.xlane.xlu0 %1539
    %1541 = vadd.xlane.f32.xlu0 %v1510
    %v1542 = vpop.xlane.xlu0 %1541
    %1543 = vadd.xlane.f32.xlu0 %v1512
    %v1544 = vpop.xlane.xlu0 %1543
    %1545 = vadd.xlane.f32.xlu0 %v1514
    %v1546 = vpop.xlane.xlu0 %1545
    %1547 = vadd.xlane.f32.xlu0 %v1516
    %v1548 = vpop.xlane.xlu0 %1547
    %1549 = vadd.xlane.f32.xlu0 %v1518
    %v1550 = vpop.xlane.xlu0 %1549
    %1551 = vadd.xlane.f32.xlu0 %v1520
    %v1552 = vpop.xlane.xlu0 %1551
    %1553 = vadd.xlane.f32.xlu0 %v1522
    %v1554 = vpop.xlane.xlu0 %1553
    %v1555 = vrcp.pop %v1524
    %v1556 = vrcp.pop %v1526
    %v1557 = vrcp.pop %v1528
    %v1558 = vrcp.pop %v1530
    %v1559 = vrcp.pop %v1532
    %v1560 = vrcp.pop %v1534
    %v1561 = vrcp.pop %v1536
    %v1562 = vrcp.pop %v1538
    %v1563 = vrcp.pop %v1540
    %v1564 = vrcp.pop %v1542
    %v1565 = vrcp.pop %v1544
    %v1566 = vrcp.pop %v1546
    %v1567 = vrcp.pop %v1548
    %v1568 = vrcp.pop %v1550
    %v1569 = vrcp.pop %v1552
    %v1570 = vrcp.pop %v1554
    %v1571 = vmul.f32 %v1492, %v1555
    %v1572 = vmul.f32 %v1494, %v1556
    %v1573 = vmul.f32 %v1496, %v1557
    %v1574 = vmul.f32 %v1498, %v1558
    %v1575 = vmul.f32 %v1500, %v1559
    %v1576 = vmul.f32 %v1502, %v1560
    %v1577 = vmul.f32 %v1504, %v1561
    %v1578 = vmul.f32 %v1506, %v1562
    %v1579 = vmul.f32 %v1508, %v1563
    %v1580 = vmul.f32 %v1510, %v1564
    %v1581 = vmul.f32 %v1512, %v1565
    %v1582 = vmul.f32 %v1514, %v1566
    %v1583 = vmul.f32 %v1516, %v1567
    %v1584 = vmul.f32 %v1518, %v1568
    %v1585 = vmul.f32 %v1520, %v1569
    %v1586 = vmul.f32 %v1522, %v1570
    %v1587 = vpack.c.bf16 %v1572, %v1571
    %v1588 = vpack.c.bf16 %v1574, %v1573
    %v1589 = vpack.c.bf16 %v1576, %v1575
    %v1590 = vpack.c.bf16 %v1578, %v1577
    %v1591 = vpack.c.bf16 %v1580, %v1579
    %v1592 = vpack.c.bf16 %v1582, %v1581
    %v1593 = vpack.c.bf16 %v1584, %v1583
    %v1594 = vpack.c.bf16 %v1586, %v1585
    %1595 = vrot.lane.b32.xlu0 %v275, 80
    %v1596 = vpop.permute.xlu0 %1595
    %1597 = vrot.lane.b32.xlu0 %v276, 80
    %v1598 = vpop.permute.xlu0 %1597
    %1599 = vrot.lane.b32.xlu0 %v277, 80
    %v1600 = vpop.permute.xlu0 %1599
    %1601 = vrot.lane.b32.xlu0 %v278, 80
    %v1602 = vpop.permute.xlu0 %1601
    %1603 = vrot.lane.b32.xlu0 %v279, 80
    %v1604 = vpop.permute.xlu0 %1603
    %1605 = vrot.lane.b32.xlu0 %v280, 80
    %v1606 = vpop.permute.xlu0 %1605
    %1607 = vrot.lane.b32.xlu0 %v281, 80
    %v1608 = vpop.permute.xlu0 %1607
    %1609 = vrot.lane.b32.xlu0 %v282, 80
    %v1610 = vpop.permute.xlu0 %1609
    %1619 = vmatpush.bf16.msra.mxu0 %v1610
    %1620 = vmatpush.bf16.msra.mxu0 %v1608
    %1621 = vmatpush.bf16.msra.mxu0 %v1606
    %1622 = vmatpush.bf16.msra.mxu0 %v1604
    %1623 = vmatpush.bf16.msra.mxu0 %v1602
    %1624 = vmatpush.bf16.msra.mxu0 %v1600
    %1625 = vmatpush.bf16.msra.mxu0 %v1598
    %1626 = vmatpush.bf16.msra.mxu0 %v1596
    %1627 = vmatmul.bf16.gmra.mxu0 %v1587
    %v1628 = vpop.f32.mrf.mxu0
    %v1629 = vadd.f32 0.0, %v1628
    %v1630 = vpop.f32.mrf.mxu0
    %v1631 = vadd.f32 0.0, %v1630
    %1632 = vmatmul.bf16.gmra.mxu0 %v1588
    %v1633 = vpop.f32.mrf.mxu0
    %v1634 = vadd.f32 0.0, %v1633
    %v1635 = vpop.f32.mrf.mxu0
    %v1636 = vadd.f32 0.0, %v1635
    %1637 = vmatmul.bf16.gmra.mxu0 %v1589
    %v1638 = vpop.f32.mrf.mxu0
    %v1639 = vadd.f32 0.0, %v1638
    %v1640 = vpop.f32.mrf.mxu0
    %v1641 = vadd.f32 0.0, %v1640
    %1642 = vmatmul.bf16.gmra.mxu0 %v1590
    %v1643 = vpop.f32.mrf.mxu0
    %v1644 = vadd.f32 0.0, %v1643
    %v1645 = vpop.f32.mrf.mxu0
    %v1646 = vadd.f32 0.0, %v1645
    %1647 = vmatmul.bf16.gmra.mxu0 %v1591
    %v1648 = vpop.f32.mrf.mxu0
    %v1649 = vadd.f32 0.0, %v1648
    %v1650 = vpop.f32.mrf.mxu0
    %v1651 = vadd.f32 0.0, %v1650
    %1652 = vmatmul.bf16.gmra.mxu0 %v1592
    %v1653 = vpop.f32.mrf.mxu0
    %v1654 = vadd.f32 0.0, %v1653
    %v1655 = vpop.f32.mrf.mxu0
    %v1656 = vadd.f32 0.0, %v1655
    %1657 = vmatmul.bf16.gmra.mxu0 %v1593
    %v1658 = vpop.f32.mrf.mxu0
    %v1659 = vadd.f32 0.0, %v1658
    %v1660 = vpop.f32.mrf.mxu0
    %v1661 = vadd.f32 0.0, %v1660
    %1662 = vmatmul.bf16.gmra.mxu0 %v1594
    %v1663 = vpop.f32.mrf.mxu0
    %v1664 = vadd.f32 0.0, %v1663
    %v1665 = vpop.f32.mrf.mxu0
    %v1666 = vadd.f32 0.0, %v1665
    %1667 = vdwg.mxu0
    %1668 = vrot.lane.b32.xlu0 %v259, 64
    %v1669 = vpop.permute.xlu0 %1668
    %1670 = vrot.lane.b32.xlu0 %v260, 64
    %v1671 = vpop.permute.xlu0 %1670
    %1672 = vrot.lane.b32.xlu0 %v261, 64
    %v1673 = vpop.permute.xlu0 %1672
    %1674 = vrot.lane.b32.xlu0 %v262, 64
    %v1675 = vpop.permute.xlu0 %1674
    %1676 = vrot.lane.b32.xlu0 %v263, 64
    %v1677 = vpop.permute.xlu0 %1676
    %1678 = vrot.lane.b32.xlu0 %v264, 64
    %v1679 = vpop.permute.xlu0 %1678
    %1680 = vrot.lane.b32.xlu0 %v265, 64
    %v1681 = vpop.permute.xlu0 %1680
    %1682 = vrot.lane.b32.xlu0 %v266, 64
    %v1683 = vpop.permute.xlu0 %1682
    %1684 = vrot.lane.b32.xlu0 %v267, 64
    %v1685 = vpop.permute.xlu0 %1684
    %1686 = vrot.lane.b32.xlu0 %v268, 64
    %v1687 = vpop.permute.xlu0 %1686
    %1688 = vrot.lane.b32.xlu0 %v269, 64
    %v1689 = vpop.permute.xlu0 %1688
    %1690 = vrot.lane.b32.xlu0 %v270, 64
    %v1691 = vpop.permute.xlu0 %1690
    %1692 = vrot.lane.b32.xlu0 %v271, 64
    %v1693 = vpop.permute.xlu0 %1692
    %1694 = vrot.lane.b32.xlu0 %v272, 64
    %v1695 = vpop.permute.xlu0 %1694
    %1696 = vrot.lane.b32.xlu0 %v273, 64
    %v1697 = vpop.permute.xlu0 %1696
    %1698 = vrot.lane.b32.xlu0 %v274, 64
    %v1699 = vpop.permute.xlu0 %1698
    %v1701 = vsel %vm283, %v1669, 0
    %v1704 = vsel %vm283, %v1671, 0
    %v1707 = vsel %vm283, %v1673, 0
    %v1710 = vsel %vm283, %v1675, 0
    %v1713 = vsel %vm283, %v1677, 0
    %v1716 = vsel %vm283, %v1679, 0
    %v1719 = vsel %vm283, %v1681, 0
    %v1722 = vsel %vm283, %v1683, 0
    %v1725 = vsel %vm283, %v1685, 0
    %v1728 = vsel %vm283, %v1687, 0
    %v1731 = vsel %vm283, %v1689, 0
    %v1734 = vsel %vm283, %v1691, 0
    %v1737 = vsel %vm283, %v1693, 0
    %v1740 = vsel %vm283, %v1695, 0
    %v1743 = vsel %vm283, %v1697, 0
    %v1746 = vsel %vm283, %v1699, 0
    %1748 = vmatpush.bf16.xpose.msra.mxu0 %v1746
    %1749 = vmatpush.bf16.xpose.msra.mxu0 %v1743
    %1750 = vmatpush.bf16.xpose.msra.mxu0 %v1740
    %1751 = vmatpush.bf16.xpose.msra.mxu0 %v1737
    %1752 = vmatpush.bf16.xpose.msra.mxu0 %v1734
    %1753 = vmatpush.bf16.xpose.msra.mxu0 %v1731
    %1754 = vmatpush.bf16.xpose.msra.mxu0 %v1728
    %1755 = vmatpush.bf16.xpose.msra.mxu0 %v1725
    %1756 = vmatmul.bf16.gmra.mxu0 %v1701
    %v1757 = vpop.f32.mrf.mxu0
    %v1758 = vadd.f32 %v227, %v1757
    %v1759 = vpop.f32.mrf.mxu0
    %v1760 = vadd.f32 %v228, %v1759
    %1761 = vmatmul.bf16.gmra.mxu0 %v1704
    %v1762 = vpop.f32.mrf.mxu0
    %v1763 = vadd.f32 %v229, %v1762
    %v1764 = vpop.f32.mrf.mxu0
    %v1765 = vadd.f32 %v230, %v1764
    %1766 = vmatmul.bf16.gmra.mxu0 %v1707
    %v1767 = vpop.f32.mrf.mxu0
    %v1768 = vadd.f32 %v231, %v1767
    %v1769 = vpop.f32.mrf.mxu0
    %v1770 = vadd.f32 %v232, %v1769
    %1771 = vmatmul.bf16.gmra.mxu0 %v1710
    %v1772 = vpop.f32.mrf.mxu0
    %v1773 = vadd.f32 %v233, %v1772
    %v1774 = vpop.f32.mrf.mxu0
    %v1775 = vadd.f32 %v234, %v1774
    %1776 = vmatmul.bf16.gmra.mxu0 %v1713
    %v1777 = vpop.f32.mrf.mxu0
    %v1778 = vadd.f32 %v235, %v1777
    %v1779 = vpop.f32.mrf.mxu0
    %v1780 = vadd.f32 %v236, %v1779
    %1781 = vmatmul.bf16.gmra.mxu0 %v1716
    %v1782 = vpop.f32.mrf.mxu0
    %v1783 = vadd.f32 %v237, %v1782
    %v1784 = vpop.f32.mrf.mxu0
    %v1785 = vadd.f32 %v238, %v1784
    %1786 = vmatmul.bf16.gmra.mxu0 %v1719
    %v1787 = vpop.f32.mrf.mxu0
    %v1788 = vadd.f32 %v239, %v1787
    %v1789 = vpop.f32.mrf.mxu0
    %v1790 = vadd.f32 %v240, %v1789
    %1791 = vmatmul.bf16.gmra.mxu0 %v1722
    %v1792 = vpop.f32.mrf.mxu0
    %v1793 = vadd.f32 %v241, %v1792
    %v1794 = vpop.f32.mrf.mxu0
    %v1795 = vadd.f32 %v242, %v1794
    %1796 = vdwg.mxu0
    %1797 = vmax.xlane.f32.xlu0 %v1758
    %v1798 = vpop.xlane.xlu0 %1797
    %1799 = vmax.xlane.f32.xlu0 %v1760
    %v1800 = vpop.xlane.xlu0 %1799
    %1801 = vmax.xlane.f32.xlu0 %v1763
    %v1802 = vpop.xlane.xlu0 %1801
    %1803 = vmax.xlane.f32.xlu0 %v1765
    %v1804 = vpop.xlane.xlu0 %1803
    %1805 = vmax.xlane.f32.xlu0 %v1768
    %v1806 = vpop.xlane.xlu0 %1805
    %1807 = vmax.xlane.f32.xlu0 %v1770
    %v1808 = vpop.xlane.xlu0 %1807
    %1809 = vmax.xlane.f32.xlu0 %v1773
    %v1810 = vpop.xlane.xlu0 %1809
    %1811 = vmax.xlane.f32.xlu0 %v1775
    %v1812 = vpop.xlane.xlu0 %1811
    %1813 = vmax.xlane.f32.xlu0 %v1778
    %v1814 = vpop.xlane.xlu0 %1813
    %1815 = vmax.xlane.f32.xlu0 %v1780
    %v1816 = vpop.xlane.xlu0 %1815
    %1817 = vmax.xlane.f32.xlu0 %v1783
    %v1818 = vpop.xlane.xlu0 %1817
    %1819 = vmax.xlane.f32.xlu0 %v1785
    %v1820 = vpop.xlane.xlu0 %1819
    %1821 = vmax.xlane.f32.xlu0 %v1788
    %v1822 = vpop.xlane.xlu0 %1821
    %1823 = vmax.xlane.f32.xlu0 %v1790
    %v1824 = vpop.xlane.xlu0 %1823
    %1825 = vmax.xlane.f32.xlu0 %v1793
    %v1826 = vpop.xlane.xlu0 %1825
    %1827 = vmax.xlane.f32.xlu0 %v1795
    %v1828 = vpop.xlane.xlu0 %1827
    %v1829 = vsub.f32 %v1758, %v1798
    %v1830 = vsub.f32 %v1760, %v1800
    %v1831 = vsub.f32 %v1763, %v1802
    %v1832 = vsub.f32 %v1765, %v1804
    %v1833 = vsub.f32 %v1768, %v1806
    %v1834 = vsub.f32 %v1770, %v1808
    %v1835 = vsub.f32 %v1773, %v1810
    %v1836 = vsub.f32 %v1775, %v1812
    %v1837 = vsub.f32 %v1778, %v1814
    %v1838 = vsub.f32 %v1780, %v1816
    %v1839 = vsub.f32 %v1783, %v1818
    %v1840 = vsub.f32 %v1785, %v1820
    %v1841 = vsub.f32 %v1788, %v1822
    %v1842 = vsub.f32 %v1790, %v1824
    %v1843 = vsub.f32 %v1793, %v1826
    %v1844 = vsub.f32 %v1795, %v1828
    %v1845 = vmul.f32 %v1829, 1.442695
    %v1846 = vpow.pop %v1845
    %v1847 = vmul.f32 %v1830, 1.442695
    %v1848 = vpow.pop %v1847
    %v1849 = vmul.f32 %v1831, 1.442695
    %v1850 = vpow.pop %v1849
    %v1851 = vmul.f32 %v1832, 1.442695
    %v1852 = vpow.pop %v1851
    %v1853 = vmul.f32 %v1833, 1.442695
    %v1854 = vpow.pop %v1853
    %v1855 = vmul.f32 %v1834, 1.442695
    %v1856 = vpow.pop %v1855
    %v1857 = vmul.f32 %v1835, 1.442695
    %v1858 = vpow.pop %v1857
    %v1859 = vmul.f32 %v1836, 1.442695
    %v1860 = vpow.pop %v1859
    %v1861 = vmul.f32 %v1837, 1.442695
    %v1862 = vpow.pop %v1861
    %v1863 = vmul.f32 %v1838, 1.442695
    %v1864 = vpow.pop %v1863
    %v1865 = vmul.f32 %v1839, 1.442695
    %v1866 = vpow.pop %v1865
    %v1867 = vmul.f32 %v1840, 1.442695
    %v1868 = vpow.pop %v1867
    %v1869 = vmul.f32 %v1841, 1.442695
    %v1870 = vpow.pop %v1869
    %v1871 = vmul.f32 %v1842, 1.442695
    %v1872 = vpow.pop %v1871
    %v1873 = vmul.f32 %v1843, 1.442695
    %v1874 = vpow.pop %v1873
    %v1875 = vmul.f32 %v1844, 1.442695
    %v1876 = vpow.pop %v1875
    %1877 = vadd.xlane.f32.xlu0 %v1846
    %v1878 = vpop.xlane.xlu0 %1877
    %1879 = vadd.xlane.f32.xlu0 %v1848
    %v1880 = vpop.xlane.xlu0 %1879
    %1881 = vadd.xlane.f32.xlu0 %v1850
    %v1882 = vpop.xlane.xlu0 %1881
    %1883 = vadd.xlane.f32.xlu0 %v1852
    %v1884 = vpop.xlane.xlu0 %1883
    %1885 = vadd.xlane.f32.xlu0 %v1854
    %v1886 = vpop.xlane.xlu0 %1885
    %1887 = vadd.xlane.f32.xlu0 %v1856
    %v1888 = vpop.xlane.xlu0 %1887
    %1889 = vadd.xlane.f32.xlu0 %v1858
    %v1890 = vpop.xlane.xlu0 %1889
    %1891 = vadd.xlane.f32.xlu0 %v1860
    %v1892 = vpop.xlane.xlu0 %1891
    %1893 = vadd.xlane.f32.xlu0 %v1862
    %v1894 = vpop.xlane.xlu0 %1893
    %1895 = vadd.xlane.f32.xlu0 %v1864
    %v1896 = vpop.xlane.xlu0 %1895
    %1897 = vadd.xlane.f32.xlu0 %v1866
    %v1898 = vpop.xlane.xlu0 %1897
    %1899 = vadd.xlane.f32.xlu0 %v1868
    %v1900 = vpop.xlane.xlu0 %1899
    %1901 = vadd.xlane.f32.xlu0 %v1870
    %v1902 = vpop.xlane.xlu0 %1901
    %1903 = vadd.xlane.f32.xlu0 %v1872
    %v1904 = vpop.xlane.xlu0 %1903
    %1905 = vadd.xlane.f32.xlu0 %v1874
    %v1906 = vpop.xlane.xlu0 %1905
    %1907 = vadd.xlane.f32.xlu0 %v1876
    %v1908 = vpop.xlane.xlu0 %1907
    %v1909 = vrcp.pop %v1878
    %v1910 = vrcp.pop %v1880
    %v1911 = vrcp.pop %v1882
    %v1912 = vrcp.pop %v1884
    %v1913 = vrcp.pop %v1886
    %v1914 = vrcp.pop %v1888
    %v1915 = vrcp.pop %v1890
    %v1916 = vrcp.pop %v1892
    %v1917 = vrcp.pop %v1894
    %v1918 = vrcp.pop %v1896
    %v1919 = vrcp.pop %v1898
    %v1920 = vrcp.pop %v1900
    %v1921 = vrcp.pop %v1902
    %v1922 = vrcp.pop %v1904
    %v1923 = vrcp.pop %v1906
    %v1924 = vrcp.pop %v1908
    %v1925 = vmul.f32 %v1846, %v1909
    %v1926 = vmul.f32 %v1848, %v1910
    %v1927 = vmul.f32 %v1850, %v1911
    %v1928 = vmul.f32 %v1852, %v1912
    %v1929 = vmul.f32 %v1854, %v1913
    %v1930 = vmul.f32 %v1856, %v1914
    %v1931 = vmul.f32 %v1858, %v1915
    %v1932 = vmul.f32 %v1860, %v1916
    %v1933 = vmul.f32 %v1862, %v1917
    %v1934 = vmul.f32 %v1864, %v1918
    %v1935 = vmul.f32 %v1866, %v1919
    %v1936 = vmul.f32 %v1868, %v1920
    %v1937 = vmul.f32 %v1870, %v1921
    %v1938 = vmul.f32 %v1872, %v1922
    %v1939 = vmul.f32 %v1874, %v1923
    %v1940 = vmul.f32 %v1876, %v1924
    %v1941 = vpack.c.bf16 %v1926, %v1925
    %v1942 = vpack.c.bf16 %v1928, %v1927
    %v1943 = vpack.c.bf16 %v1930, %v1929
    %v1944 = vpack.c.bf16 %v1932, %v1931
    %v1945 = vpack.c.bf16 %v1934, %v1933
    %v1946 = vpack.c.bf16 %v1936, %v1935
    %v1947 = vpack.c.bf16 %v1938, %v1937
    %v1948 = vpack.c.bf16 %v1940, %v1939
    %1949 = vrot.lane.b32.xlu0 %v275, 64
    %v1950 = vpop.permute.xlu0 %1949
    %1951 = vrot.lane.b32.xlu0 %v276, 64
    %v1952 = vpop.permute.xlu0 %1951
    %1953 = vrot.lane.b32.xlu0 %v277, 64
    %v1954 = vpop.permute.xlu0 %1953
    %1955 = vrot.lane.b32.xlu0 %v278, 64
    %v1956 = vpop.permute.xlu0 %1955
    %1957 = vrot.lane.b32.xlu0 %v279, 64
    %v1958 = vpop.permute.xlu0 %1957
    %1959 = vrot.lane.b32.xlu0 %v280, 64
    %v1960 = vpop.permute.xlu0 %1959
    %1961 = vrot.lane.b32.xlu0 %v281, 64
    %v1962 = vpop.permute.xlu0 %1961
    %1963 = vrot.lane.b32.xlu0 %v282, 64
    %v1964 = vpop.permute.xlu0 %1963
    %1973 = vmatpush.bf16.msra.mxu0 %v1964
    %1974 = vmatpush.bf16.msra.mxu0 %v1962
    %1975 = vmatpush.bf16.msra.mxu0 %v1960
    %1976 = vmatpush.bf16.msra.mxu0 %v1958
    %1977 = vmatpush.bf16.msra.mxu0 %v1956
    %1978 = vmatpush.bf16.msra.mxu0 %v1954
    %1979 = vmatpush.bf16.msra.mxu0 %v1952
    %1980 = vmatpush.bf16.msra.mxu0 %v1950
    %1981 = vmatmul.bf16.gmra.mxu0 %v1941
    %v1982 = vpop.f32.mrf.mxu0
    %v1983 = vadd.f32 0.0, %v1982
    %v1984 = vpop.f32.mrf.mxu0
    %v1985 = vadd.f32 0.0, %v1984
    %1986 = vmatmul.bf16.gmra.mxu0 %v1942
    %v1987 = vpop.f32.mrf.mxu0
    %v1988 = vadd.f32 0.0, %v1987
    %v1989 = vpop.f32.mrf.mxu0
    %v1990 = vadd.f32 0.0, %v1989
    %1991 = vmatmul.bf16.gmra.mxu0 %v1943
    %v1992 = vpop.f32.mrf.mxu0
    %v1993 = vadd.f32 0.0, %v1992
    %v1994 = vpop.f32.mrf.mxu0
    %v1995 = vadd.f32 0.0, %v1994
    %1996 = vmatmul.bf16.gmra.mxu0 %v1944
    %v1997 = vpop.f32.mrf.mxu0
    %v1998 = vadd.f32 0.0, %v1997
    %v1999 = vpop.f32.mrf.mxu0
    %v2000 = vadd.f32 0.0, %v1999
    %2001 = vmatmul.bf16.gmra.mxu0 %v1945
    %v2002 = vpop.f32.mrf.mxu0
    %v2003 = vadd.f32 0.0, %v2002
    %v2004 = vpop.f32.mrf.mxu0
    %v2005 = vadd.f32 0.0, %v2004
    %2006 = vmatmul.bf16.gmra.mxu0 %v1946
    %v2007 = vpop.f32.mrf.mxu0
    %v2008 = vadd.f32 0.0, %v2007
    %v2009 = vpop.f32.mrf.mxu0
    %v2010 = vadd.f32 0.0, %v2009
    %2011 = vmatmul.bf16.gmra.mxu0 %v1947
    %v2012 = vpop.f32.mrf.mxu0
    %v2013 = vadd.f32 0.0, %v2012
    %v2014 = vpop.f32.mrf.mxu0
    %v2015 = vadd.f32 0.0, %v2014
    %2016 = vmatmul.bf16.gmra.mxu0 %v1948
    %v2017 = vpop.f32.mrf.mxu0
    %v2018 = vadd.f32 0.0, %v2017
    %v2019 = vpop.f32.mrf.mxu0
    %v2020 = vadd.f32 0.0, %v2019
    %2021 = vdwg.mxu0
    %2022 = vrot.lane.b32.xlu0 %v259, 48
    %v2023 = vpop.permute.xlu0 %2022
    %2024 = vrot.lane.b32.xlu0 %v260, 48
    %v2025 = vpop.permute.xlu0 %2024
    %2026 = vrot.lane.b32.xlu0 %v261, 48
    %v2027 = vpop.permute.xlu0 %2026
    %2028 = vrot.lane.b32.xlu0 %v262, 48
    %v2029 = vpop.permute.xlu0 %2028
    %2030 = vrot.lane.b32.xlu0 %v263, 48
    %v2031 = vpop.permute.xlu0 %2030
    %2032 = vrot.lane.b32.xlu0 %v264, 48
    %v2033 = vpop.permute.xlu0 %2032
    %2034 = vrot.lane.b32.xlu0 %v265, 48
    %v2035 = vpop.permute.xlu0 %2034
    %2036 = vrot.lane.b32.xlu0 %v266, 48
    %v2037 = vpop.permute.xlu0 %2036
    %2038 = vrot.lane.b32.xlu0 %v267, 48
    %v2039 = vpop.permute.xlu0 %2038
    %2040 = vrot.lane.b32.xlu0 %v268, 48
    %v2041 = vpop.permute.xlu0 %2040
    %2042 = vrot.lane.b32.xlu0 %v269, 48
    %v2043 = vpop.permute.xlu0 %2042
    %2044 = vrot.lane.b32.xlu0 %v270, 48
    %v2045 = vpop.permute.xlu0 %2044
    %2046 = vrot.lane.b32.xlu0 %v271, 48
    %v2047 = vpop.permute.xlu0 %2046
    %2048 = vrot.lane.b32.xlu0 %v272, 48
    %v2049 = vpop.permute.xlu0 %2048
    %2050 = vrot.lane.b32.xlu0 %v273, 48
    %v2051 = vpop.permute.xlu0 %2050
    %2052 = vrot.lane.b32.xlu0 %v274, 48
    %v2053 = vpop.permute.xlu0 %2052
    %v2055 = vsel %vm283, %v2023, 0
    %v2058 = vsel %vm283, %v2025, 0
    %v2061 = vsel %vm283, %v2027, 0
    %v2064 = vsel %vm283, %v2029, 0
    %v2067 = vsel %vm283, %v2031, 0
    %v2070 = vsel %vm283, %v2033, 0
    %v2073 = vsel %vm283, %v2035, 0
    %v2076 = vsel %vm283, %v2037, 0
    %v2079 = vsel %vm283, %v2039, 0
    %v2082 = vsel %vm283, %v2041, 0
    %v2085 = vsel %vm283, %v2043, 0
    %v2088 = vsel %vm283, %v2045, 0
    %v2091 = vsel %vm283, %v2047, 0
    %v2094 = vsel %vm283, %v2049, 0
    %v2097 = vsel %vm283, %v2051, 0
    %v2100 = vsel %vm283, %v2053, 0
    %2102 = vmatpush.bf16.xpose.msra.mxu0 %v2100
    %2103 = vmatpush.bf16.xpose.msra.mxu0 %v2097
    %2104 = vmatpush.bf16.xpose.msra.mxu0 %v2094
    %2105 = vmatpush.bf16.xpose.msra.mxu0 %v2091
    %2106 = vmatpush.bf16.xpose.msra.mxu0 %v2088
    %2107 = vmatpush.bf16.xpose.msra.mxu0 %v2085
    %2108 = vmatpush.bf16.xpose.msra.mxu0 %v2082
    %2109 = vmatpush.bf16.xpose.msra.mxu0 %v2079
    %2110 = vmatmul.bf16.gmra.mxu0 %v2055
    %v2111 = vpop.f32.mrf.mxu0
    %v2112 = vadd.f32 %v227, %v2111
    %v2113 = vpop.f32.mrf.mxu0
    %v2114 = vadd.f32 %v228, %v2113
    %2115 = vmatmul.bf16.gmra.mxu0 %v2058
    %v2116 = vpop.f32.mrf.mxu0
    %v2117 = vadd.f32 %v229, %v2116
    %v2118 = vpop.f32.mrf.mxu0
    %v2119 = vadd.f32 %v230, %v2118
    %2120 = vmatmul.bf16.gmra.mxu0 %v2061
    %v2121 = vpop.f32.mrf.mxu0
    %v2122 = vadd.f32 %v231, %v2121
    %v2123 = vpop.f32.mrf.mxu0
    %v2124 = vadd.f32 %v232, %v2123
    %2125 = vmatmul.bf16.gmra.mxu0 %v2064
    %v2126 = vpop.f32.mrf.mxu0
    %v2127 = vadd.f32 %v233, %v2126
    %v2128 = vpop.f32.mrf.mxu0
    %v2129 = vadd.f32 %v234, %v2128
    %2130 = vmatmul.bf16.gmra.mxu0 %v2067
    %v2131 = vpop.f32.mrf.mxu0
    %v2132 = vadd.f32 %v235, %v2131
    %v2133 = vpop.f32.mrf.mxu0
    %v2134 = vadd.f32 %v236, %v2133
    %2135 = vmatmul.bf16.gmra.mxu0 %v2070
    %v2136 = vpop.f32.mrf.mxu0
    %v2137 = vadd.f32 %v237, %v2136
    %v2138 = vpop.f32.mrf.mxu0
    %v2139 = vadd.f32 %v238, %v2138
    %2140 = vmatmul.bf16.gmra.mxu0 %v2073
    %v2141 = vpop.f32.mrf.mxu0
    %v2142 = vadd.f32 %v239, %v2141
    %v2143 = vpop.f32.mrf.mxu0
    %v2144 = vadd.f32 %v240, %v2143
    %2145 = vmatmul.bf16.gmra.mxu0 %v2076
    %v2146 = vpop.f32.mrf.mxu0
    %v2147 = vadd.f32 %v241, %v2146
    %v2148 = vpop.f32.mrf.mxu0
    %v2149 = vadd.f32 %v242, %v2148
    %2150 = vdwg.mxu0
    %2151 = vmax.xlane.f32.xlu0 %v2112
    %v2152 = vpop.xlane.xlu0 %2151
    %2153 = vmax.xlane.f32.xlu0 %v2114
    %v2154 = vpop.xlane.xlu0 %2153
    %2155 = vmax.xlane.f32.xlu0 %v2117
    %v2156 = vpop.xlane.xlu0 %2155
    %2157 = vmax.xlane.f32.xlu0 %v2119
    %v2158 = vpop.xlane.xlu0 %2157
    %2159 = vmax.xlane.f32.xlu0 %v2122
    %v2160 = vpop.xlane.xlu0 %2159
    %2161 = vmax.xlane.f32.xlu0 %v2124
    %v2162 = vpop.xlane.xlu0 %2161
    %2163 = vmax.xlane.f32.xlu0 %v2127
    %v2164 = vpop.xlane.xlu0 %2163
    %2165 = vmax.xlane.f32.xlu0 %v2129
    %v2166 = vpop.xlane.xlu0 %2165
    %2167 = vmax.xlane.f32.xlu0 %v2132
    %v2168 = vpop.xlane.xlu0 %2167
    %2169 = vmax.xlane.f32.xlu0 %v2134
    %v2170 = vpop.xlane.xlu0 %2169
    %2171 = vmax.xlane.f32.xlu0 %v2137
    %v2172 = vpop.xlane.xlu0 %2171
    %2173 = vmax.xlane.f32.xlu0 %v2139
    %v2174 = vpop.xlane.xlu0 %2173
    %2175 = vmax.xlane.f32.xlu0 %v2142
    %v2176 = vpop.xlane.xlu0 %2175
    %2177 = vmax.xlane.f32.xlu0 %v2144
    %v2178 = vpop.xlane.xlu0 %2177
    %2179 = vmax.xlane.f32.xlu0 %v2147
    %v2180 = vpop.xlane.xlu0 %2179
    %2181 = vmax.xlane.f32.xlu0 %v2149
    %v2182 = vpop.xlane.xlu0 %2181
    %v2183 = vsub.f32 %v2112, %v2152
    %v2184 = vsub.f32 %v2114, %v2154
    %v2185 = vsub.f32 %v2117, %v2156
    %v2186 = vsub.f32 %v2119, %v2158
    %v2187 = vsub.f32 %v2122, %v2160
    %v2188 = vsub.f32 %v2124, %v2162
    %v2189 = vsub.f32 %v2127, %v2164
    %v2190 = vsub.f32 %v2129, %v2166
    %v2191 = vsub.f32 %v2132, %v2168
    %v2192 = vsub.f32 %v2134, %v2170
    %v2193 = vsub.f32 %v2137, %v2172
    %v2194 = vsub.f32 %v2139, %v2174
    %v2195 = vsub.f32 %v2142, %v2176
    %v2196 = vsub.f32 %v2144, %v2178
    %v2197 = vsub.f32 %v2147, %v2180
    %v2198 = vsub.f32 %v2149, %v2182
    %v2199 = vmul.f32 %v2183, 1.442695
    %v2200 = vpow.pop %v2199
    %v2201 = vmul.f32 %v2184, 1.442695
    %v2202 = vpow.pop %v2201
    %v2203 = vmul.f32 %v2185, 1.442695
    %v2204 = vpow.pop %v2203
    %v2205 = vmul.f32 %v2186, 1.442695
    %v2206 = vpow.pop %v2205
    %v2207 = vmul.f32 %v2187, 1.442695
    %v2208 = vpow.pop %v2207
    %v2209 = vmul.f32 %v2188, 1.442695
    %v2210 = vpow.pop %v2209
    %v2211 = vmul.f32 %v2189, 1.442695
    %v2212 = vpow.pop %v2211
    %v2213 = vmul.f32 %v2190, 1.442695
    %v2214 = vpow.pop %v2213
    %v2215 = vmul.f32 %v2191, 1.442695
    %v2216 = vpow.pop %v2215
    %v2217 = vmul.f32 %v2192, 1.442695
    %v2218 = vpow.pop %v2217
    %v2219 = vmul.f32 %v2193, 1.442695
    %v2220 = vpow.pop %v2219
    %v2221 = vmul.f32 %v2194, 1.442695
    %v2222 = vpow.pop %v2221
    %v2223 = vmul.f32 %v2195, 1.442695
    %v2224 = vpow.pop %v2223
    %v2225 = vmul.f32 %v2196, 1.442695
    %v2226 = vpow.pop %v2225
    %v2227 = vmul.f32 %v2197, 1.442695
    %v2228 = vpow.pop %v2227
    %v2229 = vmul.f32 %v2198, 1.442695
    %v2230 = vpow.pop %v2229
    %2231 = vadd.xlane.f32.xlu0 %v2200
    %v2232 = vpop.xlane.xlu0 %2231
    %2233 = vadd.xlane.f32.xlu0 %v2202
    %v2234 = vpop.xlane.xlu0 %2233
    %2235 = vadd.xlane.f32.xlu0 %v2204
    %v2236 = vpop.xlane.xlu0 %2235
    %2237 = vadd.xlane.f32.xlu0 %v2206
    %v2238 = vpop.xlane.xlu0 %2237
    %2239 = vadd.xlane.f32.xlu0 %v2208
    %v2240 = vpop.xlane.xlu0 %2239
    %2241 = vadd.xlane.f32.xlu0 %v2210
    %v2242 = vpop.xlane.xlu0 %2241
    %2243 = vadd.xlane.f32.xlu0 %v2212
    %v2244 = vpop.xlane.xlu0 %2243
    %2245 = vadd.xlane.f32.xlu0 %v2214
    %v2246 = vpop.xlane.xlu0 %2245
    %2247 = vadd.xlane.f32.xlu0 %v2216
    %v2248 = vpop.xlane.xlu0 %2247
    %2249 = vadd.xlane.f32.xlu0 %v2218
    %v2250 = vpop.xlane.xlu0 %2249
    %2251 = vadd.xlane.f32.xlu0 %v2220
    %v2252 = vpop.xlane.xlu0 %2251
    %2253 = vadd.xlane.f32.xlu0 %v2222
    %v2254 = vpop.xlane.xlu0 %2253
    %2255 = vadd.xlane.f32.xlu0 %v2224
    %v2256 = vpop.xlane.xlu0 %2255
    %2257 = vadd.xlane.f32.xlu0 %v2226
    %v2258 = vpop.xlane.xlu0 %2257
    %2259 = vadd.xlane.f32.xlu0 %v2228
    %v2260 = vpop.xlane.xlu0 %2259
    %2261 = vadd.xlane.f32.xlu0 %v2230
    %v2262 = vpop.xlane.xlu0 %2261
    %v2263 = vrcp.pop %v2232
    %v2264 = vrcp.pop %v2234
    %v2265 = vrcp.pop %v2236
    %v2266 = vrcp.pop %v2238
    %v2267 = vrcp.pop %v2240
    %v2268 = vrcp.pop %v2242
    %v2269 = vrcp.pop %v2244
    %v2270 = vrcp.pop %v2246
    %v2271 = vrcp.pop %v2248
    %v2272 = vrcp.pop %v2250
    %v2273 = vrcp.pop %v2252
    %v2274 = vrcp.pop %v2254
    %v2275 = vrcp.pop %v2256
    %v2276 = vrcp.pop %v2258
    %v2277 = vrcp.pop %v2260
    %v2278 = vrcp.pop %v2262
    %v2279 = vmul.f32 %v2200, %v2263
    %v2280 = vmul.f32 %v2202, %v2264
    %v2281 = vmul.f32 %v2204, %v2265
    %v2282 = vmul.f32 %v2206, %v2266
    %v2283 = vmul.f32 %v2208, %v2267
    %v2284 = vmul.f32 %v2210, %v2268
    %v2285 = vmul.f32 %v2212, %v2269
    %v2286 = vmul.f32 %v2214, %v2270
    %v2287 = vmul.f32 %v2216, %v2271
    %v2288 = vmul.f32 %v2218, %v2272
    %v2289 = vmul.f32 %v2220, %v2273
    %v2290 = vmul.f32 %v2222, %v2274
    %v2291 = vmul.f32 %v2224, %v2275
    %v2292 = vmul.f32 %v2226, %v2276
    %v2293 = vmul.f32 %v2228, %v2277
    %v2294 = vmul.f32 %v2230, %v2278
    %v2295 = vpack.c.bf16 %v2280, %v2279
    %v2296 = vpack.c.bf16 %v2282, %v2281
    %v2297 = vpack.c.bf16 %v2284, %v2283
    %v2298 = vpack.c.bf16 %v2286, %v2285
    %v2299 = vpack.c.bf16 %v2288, %v2287
    %v2300 = vpack.c.bf16 %v2290, %v2289
    %v2301 = vpack.c.bf16 %v2292, %v2291
    %v2302 = vpack.c.bf16 %v2294, %v2293
    %2303 = vrot.lane.b32.xlu0 %v275, 48
    %v2304 = vpop.permute.xlu0 %2303
    %2305 = vrot.lane.b32.xlu0 %v276, 48
    %v2306 = vpop.permute.xlu0 %2305
    %2307 = vrot.lane.b32.xlu0 %v277, 48
    %v2308 = vpop.permute.xlu0 %2307
    %2309 = vrot.lane.b32.xlu0 %v278, 48
    %v2310 = vpop.permute.xlu0 %2309
    %2311 = vrot.lane.b32.xlu0 %v279, 48
    %v2312 = vpop.permute.xlu0 %2311
    %2313 = vrot.lane.b32.xlu0 %v280, 48
    %v2314 = vpop.permute.xlu0 %2313
    %2315 = vrot.lane.b32.xlu0 %v281, 48
    %v2316 = vpop.permute.xlu0 %2315
    %2317 = vrot.lane.b32.xlu0 %v282, 48
    %v2318 = vpop.permute.xlu0 %2317
    %2327 = vmatpush.bf16.msra.mxu0 %v2318
    %2328 = vmatpush.bf16.msra.mxu0 %v2316
    %2329 = vmatpush.bf16.msra.mxu0 %v2314
    %2330 = vmatpush.bf16.msra.mxu0 %v2312
    %2331 = vmatpush.bf16.msra.mxu0 %v2310
    %2332 = vmatpush.bf16.msra.mxu0 %v2308
    %2333 = vmatpush.bf16.msra.mxu0 %v2306
    %2334 = vmatpush.bf16.msra.mxu0 %v2304
    %2335 = vmatmul.bf16.gmra.mxu0 %v2295
    %v2336 = vpop.f32.mrf.mxu0
    %v2337 = vadd.f32 0.0, %v2336
    %v2338 = vpop.f32.mrf.mxu0
    %v2339 = vadd.f32 0.0, %v2338
    %2340 = vmatmul.bf16.gmra.mxu0 %v2296
    %v2341 = vpop.f32.mrf.mxu0
    %v2342 = vadd.f32 0.0, %v2341
    %v2343 = vpop.f32.mrf.mxu0
    %v2344 = vadd.f32 0.0, %v2343
    %2345 = vmatmul.bf16.gmra.mxu0 %v2297
    %v2346 = vpop.f32.mrf.mxu0
    %v2347 = vadd.f32 0.0, %v2346
    %v2348 = vpop.f32.mrf.mxu0
    %v2349 = vadd.f32 0.0, %v2348
    %2350 = vmatmul.bf16.gmra.mxu0 %v2298
    %v2351 = vpop.f32.mrf.mxu0
    %v2352 = vadd.f32 0.0, %v2351
    %v2353 = vpop.f32.mrf.mxu0
    %v2354 = vadd.f32 0.0, %v2353
    %2355 = vmatmul.bf16.gmra.mxu0 %v2299
    %v2356 = vpop.f32.mrf.mxu0
    %v2357 = vadd.f32 0.0, %v2356
    %v2358 = vpop.f32.mrf.mxu0
    %v2359 = vadd.f32 0.0, %v2358
    %2360 = vmatmul.bf16.gmra.mxu0 %v2300
    %v2361 = vpop.f32.mrf.mxu0
    %v2362 = vadd.f32 0.0, %v2361
    %v2363 = vpop.f32.mrf.mxu0
    %v2364 = vadd.f32 0.0, %v2363
    %2365 = vmatmul.bf16.gmra.mxu0 %v2301
    %v2366 = vpop.f32.mrf.mxu0
    %v2367 = vadd.f32 0.0, %v2366
    %v2368 = vpop.f32.mrf.mxu0
    %v2369 = vadd.f32 0.0, %v2368
    %2370 = vmatmul.bf16.gmra.mxu0 %v2302
    %v2371 = vpop.f32.mrf.mxu0
    %v2372 = vadd.f32 0.0, %v2371
    %v2373 = vpop.f32.mrf.mxu0
    %v2374 = vadd.f32 0.0, %v2373
    %2375 = vdwg.mxu0
    %2376 = vrot.lane.b32.xlu0 %v259, 32
    %v2377 = vpop.permute.xlu0 %2376
    %2378 = vrot.lane.b32.xlu0 %v260, 32
    %v2379 = vpop.permute.xlu0 %2378
    %2380 = vrot.lane.b32.xlu0 %v261, 32
    %v2381 = vpop.permute.xlu0 %2380
    %2382 = vrot.lane.b32.xlu0 %v262, 32
    %v2383 = vpop.permute.xlu0 %2382
    %2384 = vrot.lane.b32.xlu0 %v263, 32
    %v2385 = vpop.permute.xlu0 %2384
    %2386 = vrot.lane.b32.xlu0 %v264, 32
    %v2387 = vpop.permute.xlu0 %2386
    %2388 = vrot.lane.b32.xlu0 %v265, 32
    %v2389 = vpop.permute.xlu0 %2388
    %2390 = vrot.lane.b32.xlu0 %v266, 32
    %v2391 = vpop.permute.xlu0 %2390
    %2392 = vrot.lane.b32.xlu0 %v267, 32
    %v2393 = vpop.permute.xlu0 %2392
    %2394 = vrot.lane.b32.xlu0 %v268, 32
    %v2395 = vpop.permute.xlu0 %2394
    %2396 = vrot.lane.b32.xlu0 %v269, 32
    %v2397 = vpop.permute.xlu0 %2396
    %2398 = vrot.lane.b32.xlu0 %v270, 32
    %v2399 = vpop.permute.xlu0 %2398
    %2400 = vrot.lane.b32.xlu0 %v271, 32
    %v2401 = vpop.permute.xlu0 %2400
    %2402 = vrot.lane.b32.xlu0 %v272, 32
    %v2403 = vpop.permute.xlu0 %2402
    %2404 = vrot.lane.b32.xlu0 %v273, 32
    %v2405 = vpop.permute.xlu0 %2404
    %2406 = vrot.lane.b32.xlu0 %v274, 32
    %v2407 = vpop.permute.xlu0 %2406
    %v2409 = vsel %vm283, %v2377, 0
    %v2412 = vsel %vm283, %v2379, 0
    %v2415 = vsel %vm283, %v2381, 0
    %v2418 = vsel %vm283, %v2383, 0
    %v2421 = vsel %vm283, %v2385, 0
    %v2424 = vsel %vm283, %v2387, 0
    %v2427 = vsel %vm283, %v2389, 0
    %v2430 = vsel %vm283, %v2391, 0
    %v2433 = vsel %vm283, %v2393, 0
    %v2436 = vsel %vm283, %v2395, 0
    %v2439 = vsel %vm283, %v2397, 0
    %v2442 = vsel %vm283, %v2399, 0
    %v2445 = vsel %vm283, %v2401, 0
    %v2448 = vsel %vm283, %v2403, 0
    %v2451 = vsel %vm283, %v2405, 0
    %v2454 = vsel %vm283, %v2407, 0
    %2456 = vmatpush.bf16.xpose.msra.mxu0 %v2454
    %2457 = vmatpush.bf16.xpose.msra.mxu0 %v2451
    %2458 = vmatpush.bf16.xpose.msra.mxu0 %v2448
    %2459 = vmatpush.bf16.xpose.msra.mxu0 %v2445
    %2460 = vmatpush.bf16.xpose.msra.mxu0 %v2442
    %2461 = vmatpush.bf16.xpose.msra.mxu0 %v2439
    %2462 = vmatpush.bf16.xpose.msra.mxu0 %v2436
    %2463 = vmatpush.bf16.xpose.msra.mxu0 %v2433
    %2464 = vmatmul.bf16.gmra.mxu0 %v2409
    %v2465 = vpop.f32.mrf.mxu0
    %v2466 = vadd.f32 %v227, %v2465
    %v2467 = vpop.f32.mrf.mxu0
    %v2468 = vadd.f32 %v228, %v2467
    %2469 = vmatmul.bf16.gmra.mxu0 %v2412
    %v2470 = vpop.f32.mrf.mxu0
    %v2471 = vadd.f32 %v229, %v2470
    %v2472 = vpop.f32.mrf.mxu0
    %v2473 = vadd.f32 %v230, %v2472
    %2474 = vmatmul.bf16.gmra.mxu0 %v2415
    %v2475 = vpop.f32.mrf.mxu0
    %v2476 = vadd.f32 %v231, %v2475
    %v2477 = vpop.f32.mrf.mxu0
    %v2478 = vadd.f32 %v232, %v2477
    %2479 = vmatmul.bf16.gmra.mxu0 %v2418
    %v2480 = vpop.f32.mrf.mxu0
    %v2481 = vadd.f32 %v233, %v2480
    %v2482 = vpop.f32.mrf.mxu0
    %v2483 = vadd.f32 %v234, %v2482
    %2484 = vmatmul.bf16.gmra.mxu0 %v2421
    %v2485 = vpop.f32.mrf.mxu0
    %v2486 = vadd.f32 %v235, %v2485
    %v2487 = vpop.f32.mrf.mxu0
    %v2488 = vadd.f32 %v236, %v2487
    %2489 = vmatmul.bf16.gmra.mxu0 %v2424
    %v2490 = vpop.f32.mrf.mxu0
    %v2491 = vadd.f32 %v237, %v2490
    %v2492 = vpop.f32.mrf.mxu0
    %v2493 = vadd.f32 %v238, %v2492
    %2494 = vmatmul.bf16.gmra.mxu0 %v2427
    %v2495 = vpop.f32.mrf.mxu0
    %v2496 = vadd.f32 %v239, %v2495
    %v2497 = vpop.f32.mrf.mxu0
    %v2498 = vadd.f32 %v240, %v2497
    %2499 = vmatmul.bf16.gmra.mxu0 %v2430
    %v2500 = vpop.f32.mrf.mxu0
    %v2501 = vadd.f32 %v241, %v2500
    %v2502 = vpop.f32.mrf.mxu0
    %v2503 = vadd.f32 %v242, %v2502
    %2504 = vdwg.mxu0
    %2505 = vmax.xlane.f32.xlu0 %v2466
    %v2506 = vpop.xlane.xlu0 %2505
    %2507 = vmax.xlane.f32.xlu0 %v2468
    %v2508 = vpop.xlane.xlu0 %2507
    %2509 = vmax.xlane.f32.xlu0 %v2471
    %v2510 = vpop.xlane.xlu0 %2509
    %2511 = vmax.xlane.f32.xlu0 %v2473
    %v2512 = vpop.xlane.xlu0 %2511
    %2513 = vmax.xlane.f32.xlu0 %v2476
    %v2514 = vpop.xlane.xlu0 %2513
    %2515 = vmax.xlane.f32.xlu0 %v2478
    %v2516 = vpop.xlane.xlu0 %2515
    %2517 = vmax.xlane.f32.xlu0 %v2481
    %v2518 = vpop.xlane.xlu0 %2517
    %2519 = vmax.xlane.f32.xlu0 %v2483
    %v2520 = vpop.xlane.xlu0 %2519
    %2521 = vmax.xlane.f32.xlu0 %v2486
    %v2522 = vpop.xlane.xlu0 %2521
    %2523 = vmax.xlane.f32.xlu0 %v2488
    %v2524 = vpop.xlane.xlu0 %2523
    %2525 = vmax.xlane.f32.xlu0 %v2491
    %v2526 = vpop.xlane.xlu0 %2525
    %2527 = vmax.xlane.f32.xlu0 %v2493
    %v2528 = vpop.xlane.xlu0 %2527
    %2529 = vmax.xlane.f32.xlu0 %v2496
    %v2530 = vpop.xlane.xlu0 %2529
    %2531 = vmax.xlane.f32.xlu0 %v2498
    %v2532 = vpop.xlane.xlu0 %2531
    %2533 = vmax.xlane.f32.xlu0 %v2501
    %v2534 = vpop.xlane.xlu0 %2533
    %2535 = vmax.xlane.f32.xlu0 %v2503
    %v2536 = vpop.xlane.xlu0 %2535
    %v2537 = vsub.f32 %v2466, %v2506
    %v2538 = vsub.f32 %v2468, %v2508
    %v2539 = vsub.f32 %v2471, %v2510
    %v2540 = vsub.f32 %v2473, %v2512
    %v2541 = vsub.f32 %v2476, %v2514
    %v2542 = vsub.f32 %v2478, %v2516
    %v2543 = vsub.f32 %v2481, %v2518
    %v2544 = vsub.f32 %v2483, %v2520
    %v2545 = vsub.f32 %v2486, %v2522
    %v2546 = vsub.f32 %v2488, %v2524
    %v2547 = vsub.f32 %v2491, %v2526
    %v2548 = vsub.f32 %v2493, %v2528
    %v2549 = vsub.f32 %v2496, %v2530
    %v2550 = vsub.f32 %v2498, %v2532
    %v2551 = vsub.f32 %v2501, %v2534
    %v2552 = vsub.f32 %v2503, %v2536
    %v2553 = vmul.f32 %v2537, 1.442695
    %v2554 = vpow.pop %v2553
    %v2555 = vmul.f32 %v2538, 1.442695
    %v2556 = vpow.pop %v2555
    %v2557 = vmul.f32 %v2539, 1.442695
    %v2558 = vpow.pop %v2557
    %v2559 = vmul.f32 %v2540, 1.442695
    %v2560 = vpow.pop %v2559
    %v2561 = vmul.f32 %v2541, 1.442695
    %v2562 = vpow.pop %v2561
    %v2563 = vmul.f32 %v2542, 1.442695
    %v2564 = vpow.pop %v2563
    %v2565 = vmul.f32 %v2543, 1.442695
    %v2566 = vpow.pop %v2565
    %v2567 = vmul.f32 %v2544, 1.442695
    %v2568 = vpow.pop %v2567
    %v2569 = vmul.f32 %v2545, 1.442695
    %v2570 = vpow.pop %v2569
    %v2571 = vmul.f32 %v2546, 1.442695
    %v2572 = vpow.pop %v2571
    %v2573 = vmul.f32 %v2547, 1.442695
    %v2574 = vpow.pop %v2573
    %v2575 = vmul.f32 %v2548, 1.442695
    %v2576 = vpow.pop %v2575
    %v2577 = vmul.f32 %v2549, 1.442695
    %v2578 = vpow.pop %v2577
    %v2579 = vmul.f32 %v2550, 1.442695
    %v2580 = vpow.pop %v2579
    %v2581 = vmul.f32 %v2551, 1.442695
    %v2582 = vpow.pop %v2581
    %v2583 = vmul.f32 %v2552, 1.442695
    %v2584 = vpow.pop %v2583
    %2585 = vadd.xlane.f32.xlu0 %v2554
    %v2586 = vpop.xlane.xlu0 %2585
    %2587 = vadd.xlane.f32.xlu0 %v2556
    %v2588 = vpop.xlane.xlu0 %2587
    %2589 = vadd.xlane.f32.xlu0 %v2558
    %v2590 = vpop.xlane.xlu0 %2589
    %2591 = vadd.xlane.f32.xlu0 %v2560
    %v2592 = vpop.xlane.xlu0 %2591
    %2593 = vadd.xlane.f32.xlu0 %v2562
    %v2594 = vpop.xlane.xlu0 %2593
    %2595 = vadd.xlane.f32.xlu0 %v2564
    %v2596 = vpop.xlane.xlu0 %2595
    %2597 = vadd.xlane.f32.xlu0 %v2566
    %v2598 = vpop.xlane.xlu0 %2597
    %2599 = vadd.xlane.f32.xlu0 %v2568
    %v2600 = vpop.xlane.xlu0 %2599
    %2601 = vadd.xlane.f32.xlu0 %v2570
    %v2602 = vpop.xlane.xlu0 %2601
    %2603 = vadd.xlane.f32.xlu0 %v2572
    %v2604 = vpop.xlane.xlu0 %2603
    %2605 = vadd.xlane.f32.xlu0 %v2574
    %v2606 = vpop.xlane.xlu0 %2605
    %2607 = vadd.xlane.f32.xlu0 %v2576
    %v2608 = vpop.xlane.xlu0 %2607
    %2609 = vadd.xlane.f32.xlu0 %v2578
    %v2610 = vpop.xlane.xlu0 %2609
    %2611 = vadd.xlane.f32.xlu0 %v2580
    %v2612 = vpop.xlane.xlu0 %2611
    %2613 = vadd.xlane.f32.xlu0 %v2582
    %v2614 = vpop.xlane.xlu0 %2613
    %2615 = vadd.xlane.f32.xlu0 %v2584
    %v2616 = vpop.xlane.xlu0 %2615
    %v2617 = vrcp.pop %v2586
    %v2618 = vrcp.pop %v2588
    %v2619 = vrcp.pop %v2590
    %v2620 = vrcp.pop %v2592
    %v2621 = vrcp.pop %v2594
    %v2622 = vrcp.pop %v2596
    %v2623 = vrcp.pop %v2598
    %v2624 = vrcp.pop %v2600
    %v2625 = vrcp.pop %v2602
    %v2626 = vrcp.pop %v2604
    %v2627 = vrcp.pop %v2606
    %v2628 = vrcp.pop %v2608
    %v2629 = vrcp.pop %v2610
    %v2630 = vrcp.pop %v2612
    %v2631 = vrcp.pop %v2614
    %v2632 = vrcp.pop %v2616
    %v2633 = vmul.f32 %v2554, %v2617
    %v2634 = vmul.f32 %v2556, %v2618
    %v2635 = vmul.f32 %v2558, %v2619
    %v2636 = vmul.f32 %v2560, %v2620
    %v2637 = vmul.f32 %v2562, %v2621
    %v2638 = vmul.f32 %v2564, %v2622
    %v2639 = vmul.f32 %v2566, %v2623
    %v2640 = vmul.f32 %v2568, %v2624
    %v2641 = vmul.f32 %v2570, %v2625
    %v2642 = vmul.f32 %v2572, %v2626
    %v2643 = vmul.f32 %v2574, %v2627
    %v2644 = vmul.f32 %v2576, %v2628
    %v2645 = vmul.f32 %v2578, %v2629
    %v2646 = vmul.f32 %v2580, %v2630
    %v2647 = vmul.f32 %v2582, %v2631
    %v2648 = vmul.f32 %v2584, %v2632
    %v2649 = vpack.c.bf16 %v2634, %v2633
    %v2650 = vpack.c.bf16 %v2636, %v2635
    %v2651 = vpack.c.bf16 %v2638, %v2637
    %v2652 = vpack.c.bf16 %v2640, %v2639
    %v2653 = vpack.c.bf16 %v2642, %v2641
    %v2654 = vpack.c.bf16 %v2644, %v2643
    %v2655 = vpack.c.bf16 %v2646, %v2645
    %v2656 = vpack.c.bf16 %v2648, %v2647
    %2657 = vrot.lane.b32.xlu0 %v275, 32
    %v2658 = vpop.permute.xlu0 %2657
    %2659 = vrot.lane.b32.xlu0 %v276, 32
    %v2660 = vpop.permute.xlu0 %2659
    %2661 = vrot.lane.b32.xlu0 %v277, 32
    %v2662 = vpop.permute.xlu0 %2661
    %2663 = vrot.lane.b32.xlu0 %v278, 32
    %v2664 = vpop.permute.xlu0 %2663
    %2665 = vrot.lane.b32.xlu0 %v279, 32
    %v2666 = vpop.permute.xlu0 %2665
    %2667 = vrot.lane.b32.xlu0 %v280, 32
    %v2668 = vpop.permute.xlu0 %2667
    %2669 = vrot.lane.b32.xlu0 %v281, 32
    %v2670 = vpop.permute.xlu0 %2669
    %2671 = vrot.lane.b32.xlu0 %v282, 32
    %v2672 = vpop.permute.xlu0 %2671
    %2681 = vmatpush.bf16.msra.mxu0 %v2672
    %2682 = vmatpush.bf16.msra.mxu0 %v2670
    %2683 = vmatpush.bf16.msra.mxu0 %v2668
    %2684 = vmatpush.bf16.msra.mxu0 %v2666
    %2685 = vmatpush.bf16.msra.mxu0 %v2664
    %2686 = vmatpush.bf16.msra.mxu0 %v2662
    %2687 = vmatpush.bf16.msra.mxu0 %v2660
    %2688 = vmatpush.bf16.msra.mxu0 %v2658
    %2689 = vmatmul.bf16.gmra.mxu0 %v2649
    %v2690 = vpop.f32.mrf.mxu0
    %v2691 = vadd.f32 0.0, %v2690
    %v2692 = vpop.f32.mrf.mxu0
    %v2693 = vadd.f32 0.0, %v2692
    %2694 = vmatmul.bf16.gmra.mxu0 %v2650
    %v2695 = vpop.f32.mrf.mxu0
    %v2696 = vadd.f32 0.0, %v2695
    %v2697 = vpop.f32.mrf.mxu0
    %v2698 = vadd.f32 0.0, %v2697
    %2699 = vmatmul.bf16.gmra.mxu0 %v2651
    %v2700 = vpop.f32.mrf.mxu0
    %v2701 = vadd.f32 0.0, %v2700
    %v2702 = vpop.f32.mrf.mxu0
    %v2703 = vadd.f32 0.0, %v2702
    %2704 = vmatmul.bf16.gmra.mxu0 %v2652
    %v2705 = vpop.f32.mrf.mxu0
    %v2706 = vadd.f32 0.0, %v2705
    %v2707 = vpop.f32.mrf.mxu0
    %v2708 = vadd.f32 0.0, %v2707
    %2709 = vmatmul.bf16.gmra.mxu0 %v2653
    %v2710 = vpop.f32.mrf.mxu0
    %v2711 = vadd.f32 0.0, %v2710
    %v2712 = vpop.f32.mrf.mxu0
    %v2713 = vadd.f32 0.0, %v2712
    %2714 = vmatmul.bf16.gmra.mxu0 %v2654
    %v2715 = vpop.f32.mrf.mxu0
    %v2716 = vadd.f32 0.0, %v2715
    %v2717 = vpop.f32.mrf.mxu0
    %v2718 = vadd.f32 0.0, %v2717
    %2719 = vmatmul.bf16.gmra.mxu0 %v2655
    %v2720 = vpop.f32.mrf.mxu0
    %v2721 = vadd.f32 0.0, %v2720
    %v2722 = vpop.f32.mrf.mxu0
    %v2723 = vadd.f32 0.0, %v2722
    %2724 = vmatmul.bf16.gmra.mxu0 %v2656
    %v2725 = vpop.f32.mrf.mxu0
    %v2726 = vadd.f32 0.0, %v2725
    %v2727 = vpop.f32.mrf.mxu0
    %v2728 = vadd.f32 0.0, %v2727
    %2729 = vdwg.mxu0
    %2730 = vrot.lane.b32.xlu0 %v259, 16
    %v2731 = vpop.permute.xlu0 %2730
    %2732 = vrot.lane.b32.xlu0 %v260, 16
    %v2733 = vpop.permute.xlu0 %2732
    %2734 = vrot.lane.b32.xlu0 %v261, 16
    %v2735 = vpop.permute.xlu0 %2734
    %2736 = vrot.lane.b32.xlu0 %v262, 16
    %v2737 = vpop.permute.xlu0 %2736
    %2738 = vrot.lane.b32.xlu0 %v263, 16
    %v2739 = vpop.permute.xlu0 %2738
    %2740 = vrot.lane.b32.xlu0 %v264, 16
    %v2741 = vpop.permute.xlu0 %2740
    %2742 = vrot.lane.b32.xlu0 %v265, 16
    %v2743 = vpop.permute.xlu0 %2742
    %2744 = vrot.lane.b32.xlu0 %v266, 16
    %v2745 = vpop.permute.xlu0 %2744
    %2746 = vrot.lane.b32.xlu0 %v267, 16
    %v2747 = vpop.permute.xlu0 %2746
    %2748 = vrot.lane.b32.xlu0 %v268, 16
    %v2749 = vpop.permute.xlu0 %2748
    %2750 = vrot.lane.b32.xlu0 %v269, 16
    %v2751 = vpop.permute.xlu0 %2750
    %2752 = vrot.lane.b32.xlu0 %v270, 16
    %v2753 = vpop.permute.xlu0 %2752
    %2754 = vrot.lane.b32.xlu0 %v271, 16
    %v2755 = vpop.permute.xlu0 %2754
    %2756 = vrot.lane.b32.xlu0 %v272, 16
    %v2757 = vpop.permute.xlu0 %2756
    %2758 = vrot.lane.b32.xlu0 %v273, 16
    %v2759 = vpop.permute.xlu0 %2758
    %2760 = vrot.lane.b32.xlu0 %v274, 16
    %v2761 = vpop.permute.xlu0 %2760
    %v2763 = vsel %vm283, %v2731, 0
    %v2766 = vsel %vm283, %v2733, 0
    %v2769 = vsel %vm283, %v2735, 0
    %v2772 = vsel %vm283, %v2737, 0
    %v2775 = vsel %vm283, %v2739, 0
    %v2778 = vsel %vm283, %v2741, 0
    %v2781 = vsel %vm283, %v2743, 0
    %v2784 = vsel %vm283, %v2745, 0
    %v2787 = vsel %vm283, %v2747, 0
    %v2790 = vsel %vm283, %v2749, 0
    %v2793 = vsel %vm283, %v2751, 0
    %v2796 = vsel %vm283, %v2753, 0
    %v2799 = vsel %vm283, %v2755, 0
    %v2802 = vsel %vm283, %v2757, 0
    %v2805 = vsel %vm283, %v2759, 0
    %v2808 = vsel %vm283, %v2761, 0
    %2810 = vmatpush.bf16.xpose.msra.mxu0 %v2808
    %2811 = vmatpush.bf16.xpose.msra.mxu0 %v2805
    %2812 = vmatpush.bf16.xpose.msra.mxu0 %v2802
    %2813 = vmatpush.bf16.xpose.msra.mxu0 %v2799
    %2814 = vmatpush.bf16.xpose.msra.mxu0 %v2796
    %2815 = vmatpush.bf16.xpose.msra.mxu0 %v2793
    %2816 = vmatpush.bf16.xpose.msra.mxu0 %v2790
    %2817 = vmatpush.bf16.xpose.msra.mxu0 %v2787
    %2818 = vmatmul.bf16.gmra.mxu0 %v2763
    %v2819 = vpop.f32.mrf.mxu0
    %v2820 = vadd.f32 %v227, %v2819
    %v2821 = vpop.f32.mrf.mxu0
    %v2822 = vadd.f32 %v228, %v2821
    %2823 = vmatmul.bf16.gmra.mxu0 %v2766
    %v2824 = vpop.f32.mrf.mxu0
    %v2825 = vadd.f32 %v229, %v2824
    %v2826 = vpop.f32.mrf.mxu0
    %v2827 = vadd.f32 %v230, %v2826
    %2828 = vmatmul.bf16.gmra.mxu0 %v2769
    %v2829 = vpop.f32.mrf.mxu0
    %v2830 = vadd.f32 %v231, %v2829
    %v2831 = vpop.f32.mrf.mxu0
    %v2832 = vadd.f32 %v232, %v2831
    %2833 = vmatmul.bf16.gmra.mxu0 %v2772
    %v2834 = vpop.f32.mrf.mxu0
    %v2835 = vadd.f32 %v233, %v2834
    %v2836 = vpop.f32.mrf.mxu0
    %v2837 = vadd.f32 %v234, %v2836
    %2838 = vmatmul.bf16.gmra.mxu0 %v2775
    %v2839 = vpop.f32.mrf.mxu0
    %v2840 = vadd.f32 %v235, %v2839
    %v2841 = vpop.f32.mrf.mxu0
    %v2842 = vadd.f32 %v236, %v2841
    %2843 = vmatmul.bf16.gmra.mxu0 %v2778
    %v2844 = vpop.f32.mrf.mxu0
    %v2845 = vadd.f32 %v237, %v2844
    %v2846 = vpop.f32.mrf.mxu0
    %v2847 = vadd.f32 %v238, %v2846
    %2848 = vmatmul.bf16.gmra.mxu0 %v2781
    %v2849 = vpop.f32.mrf.mxu0
    %v2850 = vadd.f32 %v239, %v2849
    %v2851 = vpop.f32.mrf.mxu0
    %v2852 = vadd.f32 %v240, %v2851
    %2853 = vmatmul.bf16.gmra.mxu0 %v2784
    %v2854 = vpop.f32.mrf.mxu0
    %v2855 = vadd.f32 %v241, %v2854
    %v2856 = vpop.f32.mrf.mxu0
    %v2857 = vadd.f32 %v242, %v2856
    %2858 = vdwg.mxu0
    %2859 = vmax.xlane.f32.xlu0 %v2820
    %v2860 = vpop.xlane.xlu0 %2859
    %2861 = vmax.xlane.f32.xlu0 %v2822
    %v2862 = vpop.xlane.xlu0 %2861
    %2863 = vmax.xlane.f32.xlu0 %v2825
    %v2864 = vpop.xlane.xlu0 %2863
    %2865 = vmax.xlane.f32.xlu0 %v2827
    %v2866 = vpop.xlane.xlu0 %2865
    %2867 = vmax.xlane.f32.xlu0 %v2830
    %v2868 = vpop.xlane.xlu0 %2867
    %2869 = vmax.xlane.f32.xlu0 %v2832
    %v2870 = vpop.xlane.xlu0 %2869
    %2871 = vmax.xlane.f32.xlu0 %v2835
    %v2872 = vpop.xlane.xlu0 %2871
    %2873 = vmax.xlane.f32.xlu0 %v2837
    %v2874 = vpop.xlane.xlu0 %2873
    %2875 = vmax.xlane.f32.xlu0 %v2840
    %v2876 = vpop.xlane.xlu0 %2875
    %2877 = vmax.xlane.f32.xlu0 %v2842
    %v2878 = vpop.xlane.xlu0 %2877
    %2879 = vmax.xlane.f32.xlu0 %v2845
    %v2880 = vpop.xlane.xlu0 %2879
    %2881 = vmax.xlane.f32.xlu0 %v2847
    %v2882 = vpop.xlane.xlu0 %2881
    %2883 = vmax.xlane.f32.xlu0 %v2850
    %v2884 = vpop.xlane.xlu0 %2883
    %2885 = vmax.xlane.f32.xlu0 %v2852
    %v2886 = vpop.xlane.xlu0 %2885
    %2887 = vmax.xlane.f32.xlu0 %v2855
    %v2888 = vpop.xlane.xlu0 %2887
    %2889 = vmax.xlane.f32.xlu0 %v2857
    %v2890 = vpop.xlane.xlu0 %2889
    %v2891 = vsub.f32 %v2820, %v2860
    %v2892 = vsub.f32 %v2822, %v2862
    %v2893 = vsub.f32 %v2825, %v2864
    %v2894 = vsub.f32 %v2827, %v2866
    %v2895 = vsub.f32 %v2830, %v2868
    %v2896 = vsub.f32 %v2832, %v2870
    %v2897 = vsub.f32 %v2835, %v2872
    %v2898 = vsub.f32 %v2837, %v2874
    %v2899 = vsub.f32 %v2840, %v2876
    %v2900 = vsub.f32 %v2842, %v2878
    %v2901 = vsub.f32 %v2845, %v2880
    %v2902 = vsub.f32 %v2847, %v2882
    %v2903 = vsub.f32 %v2850, %v2884
    %v2904 = vsub.f32 %v2852, %v2886
    %v2905 = vsub.f32 %v2855, %v2888
    %v2906 = vsub.f32 %v2857, %v2890
    %v2907 = vmul.f32 %v2891, 1.442695
    %v2908 = vpow.pop %v2907
    %v2909 = vmul.f32 %v2892, 1.442695
    %v2910 = vpow.pop %v2909
    %v2911 = vmul.f32 %v2893, 1.442695
    %v2912 = vpow.pop %v2911
    %v2913 = vmul.f32 %v2894, 1.442695
    %v2914 = vpow.pop %v2913
    %v2915 = vmul.f32 %v2895, 1.442695
    %v2916 = vpow.pop %v2915
    %v2917 = vmul.f32 %v2896, 1.442695
    %v2918 = vpow.pop %v2917
    %v2919 = vmul.f32 %v2897, 1.442695
    %v2920 = vpow.pop %v2919
    %v2921 = vmul.f32 %v2898, 1.442695
    %v2922 = vpow.pop %v2921
    %v2923 = vmul.f32 %v2899, 1.442695
    %v2924 = vpow.pop %v2923
    %v2925 = vmul.f32 %v2900, 1.442695
    %v2926 = vpow.pop %v2925
    %v2927 = vmul.f32 %v2901, 1.442695
    %v2928 = vpow.pop %v2927
    %v2929 = vmul.f32 %v2902, 1.442695
    %v2930 = vpow.pop %v2929
    %v2931 = vmul.f32 %v2903, 1.442695
    %v2932 = vpow.pop %v2931
    %v2933 = vmul.f32 %v2904, 1.442695
    %v2934 = vpow.pop %v2933
    %v2935 = vmul.f32 %v2905, 1.442695
    %v2936 = vpow.pop %v2935
    %v2937 = vmul.f32 %v2906, 1.442695
    %v2938 = vpow.pop %v2937
    %2939 = vadd.xlane.f32.xlu0 %v2908
    %v2940 = vpop.xlane.xlu0 %2939
    %2941 = vadd.xlane.f32.xlu0 %v2910
    %v2942 = vpop.xlane.xlu0 %2941
    %2943 = vadd.xlane.f32.xlu0 %v2912
    %v2944 = vpop.xlane.xlu0 %2943
    %2945 = vadd.xlane.f32.xlu0 %v2914
    %v2946 = vpop.xlane.xlu0 %2945
    %2947 = vadd.xlane.f32.xlu0 %v2916
    %v2948 = vpop.xlane.xlu0 %2947
    %2949 = vadd.xlane.f32.xlu0 %v2918
    %v2950 = vpop.xlane.xlu0 %2949
    %2951 = vadd.xlane.f32.xlu0 %v2920
    %v2952 = vpop.xlane.xlu0 %2951
    %2953 = vadd.xlane.f32.xlu0 %v2922
    %v2954 = vpop.xlane.xlu0 %2953
    %2955 = vadd.xlane.f32.xlu0 %v2924
    %v2956 = vpop.xlane.xlu0 %2955
    %2957 = vadd.xlane.f32.xlu0 %v2926
    %v2958 = vpop.xlane.xlu0 %2957
    %2959 = vadd.xlane.f32.xlu0 %v2928
    %v2960 = vpop.xlane.xlu0 %2959
    %2961 = vadd.xlane.f32.xlu0 %v2930
    %v2962 = vpop.xlane.xlu0 %2961
    %2963 = vadd.xlane.f32.xlu0 %v2932
    %v2964 = vpop.xlane.xlu0 %2963
    %2965 = vadd.xlane.f32.xlu0 %v2934
    %v2966 = vpop.xlane.xlu0 %2965
    %2967 = vadd.xlane.f32.xlu0 %v2936
    %v2968 = vpop.xlane.xlu0 %2967
    %2969 = vadd.xlane.f32.xlu0 %v2938
    %v2970 = vpop.xlane.xlu0 %2969
    %v2971 = vrcp.pop %v2940
    %v2972 = vrcp.pop %v2942
    %v2973 = vrcp.pop %v2944
    %v2974 = vrcp.pop %v2946
    %v2975 = vrcp.pop %v2948
    %v2976 = vrcp.pop %v2950
    %v2977 = vrcp.pop %v2952
    %v2978 = vrcp.pop %v2954
    %v2979 = vrcp.pop %v2956
    %v2980 = vrcp.pop %v2958
    %v2981 = vrcp.pop %v2960
    %v2982 = vrcp.pop %v2962
    %v2983 = vrcp.pop %v2964
    %v2984 = vrcp.pop %v2966
    %v2985 = vrcp.pop %v2968
    %v2986 = vrcp.pop %v2970
    %v2987 = vmul.f32 %v2908, %v2971
    %v2988 = vmul.f32 %v2910, %v2972
    %v2989 = vmul.f32 %v2912, %v2973
    %v2990 = vmul.f32 %v2914, %v2974
    %v2991 = vmul.f32 %v2916, %v2975
    %v2992 = vmul.f32 %v2918, %v2976
    %v2993 = vmul.f32 %v2920, %v2977
    %v2994 = vmul.f32 %v2922, %v2978
    %v2995 = vmul.f32 %v2924, %v2979
    %v2996 = vmul.f32 %v2926, %v2980
    %v2997 = vmul.f32 %v2928, %v2981
    %v2998 = vmul.f32 %v2930, %v2982
    %v2999 = vmul.f32 %v2932, %v2983
    %v3000 = vmul.f32 %v2934, %v2984
    %v3001 = vmul.f32 %v2936, %v2985
    %v3002 = vmul.f32 %v2938, %v2986
    %v3003 = vpack.c.bf16 %v2988, %v2987
    %v3004 = vpack.c.bf16 %v2990, %v2989
    %v3005 = vpack.c.bf16 %v2992, %v2991
    %v3006 = vpack.c.bf16 %v2994, %v2993
    %v3007 = vpack.c.bf16 %v2996, %v2995
    %v3008 = vpack.c.bf16 %v2998, %v2997
    %v3009 = vpack.c.bf16 %v3000, %v2999
    %v3010 = vpack.c.bf16 %v3002, %v3001
    %3011 = vrot.lane.b32.xlu0 %v275, 16
    %v3012 = vpop.permute.xlu0 %3011
    %3013 = vrot.lane.b32.xlu0 %v276, 16
    %v3014 = vpop.permute.xlu0 %3013
    %3015 = vrot.lane.b32.xlu0 %v277, 16
    %v3016 = vpop.permute.xlu0 %3015
    %3017 = vrot.lane.b32.xlu0 %v278, 16
    %v3018 = vpop.permute.xlu0 %3017
    %3019 = vrot.lane.b32.xlu0 %v279, 16
    %v3020 = vpop.permute.xlu0 %3019
    %3021 = vrot.lane.b32.xlu0 %v280, 16
    %v3022 = vpop.permute.xlu0 %3021
    %3023 = vrot.lane.b32.xlu0 %v281, 16
    %v3024 = vpop.permute.xlu0 %3023
    %3025 = vrot.lane.b32.xlu0 %v282, 16
    %v3026 = vpop.permute.xlu0 %3025
    %3035 = vmatpush.bf16.msra.mxu0 %v3026
    %3036 = vmatpush.bf16.msra.mxu0 %v3024
    %3037 = vmatpush.bf16.msra.mxu0 %v3022
    %3038 = vmatpush.bf16.msra.mxu0 %v3020
    %3039 = vmatpush.bf16.msra.mxu0 %v3018
    %3040 = vmatpush.bf16.msra.mxu0 %v3016
    %3041 = vmatpush.bf16.msra.mxu0 %v3014
    %3042 = vmatpush.bf16.msra.mxu0 %v3012
    %3043 = vmatmul.bf16.gmra.mxu0 %v3003
    %v3044 = vpop.f32.mrf.mxu0
    %v3045 = vadd.f32 0.0, %v3044
    %v3046 = vpop.f32.mrf.mxu0
    %v3047 = vadd.f32 0.0, %v3046
    %3048 = vmatmul.bf16.gmra.mxu0 %v3004
    %v3049 = vpop.f32.mrf.mxu0
    %v3050 = vadd.f32 0.0, %v3049
    %v3051 = vpop.f32.mrf.mxu0
    %v3052 = vadd.f32 0.0, %v3051
    %3053 = vmatmul.bf16.gmra.mxu0 %v3005
    %v3054 = vpop.f32.mrf.mxu0
    %v3055 = vadd.f32 0.0, %v3054
    %v3056 = vpop.f32.mrf.mxu0
    %v3057 = vadd.f32 0.0, %v3056
    %3058 = vmatmul.bf16.gmra.mxu0 %v3006
    %v3059 = vpop.f32.mrf.mxu0
    %v3060 = vadd.f32 0.0, %v3059
    %v3061 = vpop.f32.mrf.mxu0
    %v3062 = vadd.f32 0.0, %v3061
    %3063 = vmatmul.bf16.gmra.mxu0 %v3007
    %v3064 = vpop.f32.mrf.mxu0
    %v3065 = vadd.f32 0.0, %v3064
    %v3066 = vpop.f32.mrf.mxu0
    %v3067 = vadd.f32 0.0, %v3066
    %3068 = vmatmul.bf16.gmra.mxu0 %v3008
    %v3069 = vpop.f32.mrf.mxu0
    %v3070 = vadd.f32 0.0, %v3069
    %v3071 = vpop.f32.mrf.mxu0
    %v3072 = vadd.f32 0.0, %v3071
    %3073 = vmatmul.bf16.gmra.mxu0 %v3009
    %v3074 = vpop.f32.mrf.mxu0
    %v3075 = vadd.f32 0.0, %v3074
    %v3076 = vpop.f32.mrf.mxu0
    %v3077 = vadd.f32 0.0, %v3076
    %3078 = vmatmul.bf16.gmra.mxu0 %v3010
    %v3079 = vpop.f32.mrf.mxu0
    %v3080 = vadd.f32 0.0, %v3079
    %v3081 = vpop.f32.mrf.mxu0
    %v3082 = vadd.f32 0.0, %v3081
    %3083 = vdwg.mxu0
    %3100 = vrot.lane.b32.xlu0 %v921, 16
    %v3101 = vpop.permute.xlu0 %3100
    %3102 = vrot.lane.b32.xlu0 %v923, 16
    %v3103 = vpop.permute.xlu0 %3102
    %3104 = vrot.lane.b32.xlu0 %v926, 16
    %v3105 = vpop.permute.xlu0 %3104
    %3106 = vrot.lane.b32.xlu0 %v928, 16
    %v3107 = vpop.permute.xlu0 %3106
    %3108 = vrot.lane.b32.xlu0 %v931, 16
    %v3109 = vpop.permute.xlu0 %3108
    %3110 = vrot.lane.b32.xlu0 %v933, 16
    %v3111 = vpop.permute.xlu0 %3110
    %3112 = vrot.lane.b32.xlu0 %v936, 16
    %v3113 = vpop.permute.xlu0 %3112
    %3114 = vrot.lane.b32.xlu0 %v938, 16
    %v3115 = vpop.permute.xlu0 %3114
    %3116 = vrot.lane.b32.xlu0 %v941, 16
    %v3117 = vpop.permute.xlu0 %3116
    %3118 = vrot.lane.b32.xlu0 %v943, 16
    %v3119 = vpop.permute.xlu0 %3118
    %3120 = vrot.lane.b32.xlu0 %v946, 16
    %v3121 = vpop.permute.xlu0 %3120
    %3122 = vrot.lane.b32.xlu0 %v948, 16
    %v3123 = vpop.permute.xlu0 %3122
    %3124 = vrot.lane.b32.xlu0 %v951, 16
    %v3125 = vpop.permute.xlu0 %3124
    %3126 = vrot.lane.b32.xlu0 %v953, 16
    %v3127 = vpop.permute.xlu0 %3126
    %3128 = vrot.lane.b32.xlu0 %v956, 16
    %v3129 = vpop.permute.xlu0 %3128
    %3130 = vrot.lane.b32.xlu0 %v958, 16
    %v3131 = vpop.permute.xlu0 %3130
    %3164 = vrot.lane.b32.xlu0 %v1275, 32
    %v3165 = vpop.permute.xlu0 %3164
    %3166 = vrot.lane.b32.xlu0 %v1277, 32
    %v3167 = vpop.permute.xlu0 %3166
    %3168 = vrot.lane.b32.xlu0 %v1280, 32
    %v3169 = vpop.permute.xlu0 %3168
    %3170 = vrot.lane.b32.xlu0 %v1282, 32
    %v3171 = vpop.permute.xlu0 %3170
    %3172 = vrot.lane.b32.xlu0 %v1285, 32
    %v3173 = vpop.permute.xlu0 %3172
    %3174 = vrot.lane.b32.xlu0 %v1287, 32
    %v3175 = vpop.permute.xlu0 %3174
    %3176 = vrot.lane.b32.xlu0 %v1290, 32
    %v3177 = vpop.permute.xlu0 %3176
    %3178 = vrot.lane.b32.xlu0 %v1292, 32
    %v3179 = vpop.permute.xlu0 %3178
    %3180 = vrot.lane.b32.xlu0 %v1295, 32
    %v3181 = vpop.permute.xlu0 %3180
    %3182 = vrot.lane.b32.xlu0 %v1297, 32
    %v3183 = vpop.permute.xlu0 %3182
    %3184 = vrot.lane.b32.xlu0 %v1300, 32
    %v3185 = vpop.permute.xlu0 %3184
    %3186 = vrot.lane.b32.xlu0 %v1302, 32
    %v3187 = vpop.permute.xlu0 %3186
    %3188 = vrot.lane.b32.xlu0 %v1305, 32
    %v3189 = vpop.permute.xlu0 %3188
    %3190 = vrot.lane.b32.xlu0 %v1307, 32
    %v3191 = vpop.permute.xlu0 %3190
    %3192 = vrot.lane.b32.xlu0 %v1310, 32
    %v3193 = vpop.permute.xlu0 %3192
    %3194 = vrot.lane.b32.xlu0 %v1312, 32
    %v3195 = vpop.permute.xlu0 %3194
    %3228 = vrot.lane.b32.xlu0 %v1629, 48
    %v3229 = vpop.permute.xlu0 %3228
    %3230 = vrot.lane.b32.xlu0 %v1631, 48
    %v3231 = vpop.permute.xlu0 %3230
    %3232 = vrot.lane.b32.xlu0 %v1634, 48
    %v3233 = vpop.permute.xlu0 %3232
    %3234 = vrot.lane.b32.xlu0 %v1636, 48
    %v3235 = vpop.permute.xlu0 %3234
    %3236 = vrot.lane.b32.xlu0 %v1639, 48
    %v3237 = vpop.permute.xlu0 %3236
    %3238 = vrot.lane.b32.xlu0 %v1641, 48
    %v3239 = vpop.permute.xlu0 %3238
    %3240 = vrot.lane.b32.xlu0 %v1644, 48
    %v3241 = vpop.permute.xlu0 %3240
    %3242 = vrot.lane.b32.xlu0 %v1646, 48
    %v3243 = vpop.permute.xlu0 %3242
    %3244 = vrot.lane.b32.xlu0 %v1649, 48
    %v3245 = vpop.permute.xlu0 %3244
    %3246 = vrot.lane.b32.xlu0 %v1651, 48
    %v3247 = vpop.permute.xlu0 %3246
    %3248 = vrot.lane.b32.xlu0 %v1654, 48
    %v3249 = vpop.permute.xlu0 %3248
    %3250 = vrot.lane.b32.xlu0 %v1656, 48
    %v3251 = vpop.permute.xlu0 %3250
    %3252 = vrot.lane.b32.xlu0 %v1659, 48
    %v3253 = vpop.permute.xlu0 %3252
    %3254 = vrot.lane.b32.xlu0 %v1661, 48
    %v3255 = vpop.permute.xlu0 %3254
    %3256 = vrot.lane.b32.xlu0 %v1664, 48
    %v3257 = vpop.permute.xlu0 %3256
    %3258 = vrot.lane.b32.xlu0 %v1666, 48
    %v3259 = vpop.permute.xlu0 %3258
    %3292 = vrot.lane.b32.xlu0 %v1983, 64
    %v3293 = vpop.permute.xlu0 %3292
    %3294 = vrot.lane.b32.xlu0 %v1985, 64
    %v3295 = vpop.permute.xlu0 %3294
    %3296 = vrot.lane.b32.xlu0 %v1988, 64
    %v3297 = vpop.permute.xlu0 %3296
    %3298 = vrot.lane.b32.xlu0 %v1990, 64
    %v3299 = vpop.permute.xlu0 %3298
    %3300 = vrot.lane.b32.xlu0 %v1993, 64
    %v3301 = vpop.permute.xlu0 %3300
    %3302 = vrot.lane.b32.xlu0 %v1995, 64
    %v3303 = vpop.permute.xlu0 %3302
    %3304 = vrot.lane.b32.xlu0 %v1998, 64
    %v3305 = vpop.permute.xlu0 %3304
    %3306 = vrot.lane.b32.xlu0 %v2000, 64
    %v3307 = vpop.permute.xlu0 %3306
    %3308 = vrot.lane.b32.xlu0 %v2003, 64
    %v3309 = vpop.permute.xlu0 %3308
    %3310 = vrot.lane.b32.xlu0 %v2005, 64
    %v3311 = vpop.permute.xlu0 %3310
    %3312 = vrot.lane.b32.xlu0 %v2008, 64
    %v3313 = vpop.permute.xlu0 %3312
    %3314 = vrot.lane.b32.xlu0 %v2010, 64
    %v3315 = vpop.permute.xlu0 %3314
    %3316 = vrot.lane.b32.xlu0 %v2013, 64
    %v3317 = vpop.permute.xlu0 %3316
    %3318 = vrot.lane.b32.xlu0 %v2015, 64
    %v3319 = vpop.permute.xlu0 %3318
    %3320 = vrot.lane.b32.xlu0 %v2018, 64
    %v3321 = vpop.permute.xlu0 %3320
    %3322 = vrot.lane.b32.xlu0 %v2020, 64
    %v3323 = vpop.permute.xlu0 %3322
    %3356 = vrot.lane.b32.xlu0 %v2337, 80
    %v3357 = vpop.permute.xlu0 %3356
    %3358 = vrot.lane.b32.xlu0 %v2339, 80
    %v3359 = vpop.permute.xlu0 %3358
    %3360 = vrot.lane.b32.xlu0 %v2342, 80
    %v3361 = vpop.permute.xlu0 %3360
    %3362 = vrot.lane.b32.xlu0 %v2344, 80
    %v3363 = vpop.permute.xlu0 %3362
    %3364 = vrot.lane.b32.xlu0 %v2347, 80
    %v3365 = vpop.permute.xlu0 %3364
    %3366 = vrot.lane.b32.xlu0 %v2349, 80
    %v3367 = vpop.permute.xlu0 %3366
    %3368 = vrot.lane.b32.xlu0 %v2352, 80
    %v3369 = vpop.permute.xlu0 %3368
    %3370 = vrot.lane.b32.xlu0 %v2354, 80
    %v3371 = vpop.permute.xlu0 %3370
    %3372 = vrot.lane.b32.xlu0 %v2357, 80
    %v3373 = vpop.permute.xlu0 %3372
    %3374 = vrot.lane.b32.xlu0 %v2359, 80
    %v3375 = vpop.permute.xlu0 %3374
    %3376 = vrot.lane.b32.xlu0 %v2362, 80
    %v3377 = vpop.permute.xlu0 %3376
    %3378 = vrot.lane.b32.xlu0 %v2364, 80
    %v3379 = vpop.permute.xlu0 %3378
    %3380 = vrot.lane.b32.xlu0 %v2367, 80
    %v3381 = vpop.permute.xlu0 %3380
    %3382 = vrot.lane.b32.xlu0 %v2369, 80
    %v3383 = vpop.permute.xlu0 %3382
    %3384 = vrot.lane.b32.xlu0 %v2372, 80
    %v3385 = vpop.permute.xlu0 %3384
    %3386 = vrot.lane.b32.xlu0 %v2374, 80
    %v3387 = vpop.permute.xlu0 %3386
    %3420 = vrot.lane.b32.xlu0 %v2691, 96
    %v3421 = vpop.permute.xlu0 %3420
    %3422 = vrot.lane.b32.xlu0 %v2693, 96
    %v3423 = vpop.permute.xlu0 %3422
    %3424 = vrot.lane.b32.xlu0 %v2696, 96
    %v3425 = vpop.permute.xlu0 %3424
    %3426 = vrot.lane.b32.xlu0 %v2698, 96
    %v3427 = vpop.permute.xlu0 %3426
    %3428 = vrot.lane.b32.xlu0 %v2701, 96
    %v3429 = vpop.permute.xlu0 %3428
    %3430 = vrot.lane.b32.xlu0 %v2703, 96
    %v3431 = vpop.permute.xlu0 %3430
    %3432 = vrot.lane.b32.xlu0 %v2706, 96
    %v3433 = vpop.permute.xlu0 %3432
    %3434 = vrot.lane.b32.xlu0 %v2708, 96
    %v3435 = vpop.permute.xlu0 %3434
    %3436 = vrot.lane.b32.xlu0 %v2711, 96
    %v3437 = vpop.permute.xlu0 %3436
    %3438 = vrot.lane.b32.xlu0 %v2713, 96
    %v3439 = vpop.permute.xlu0 %3438
    %3440 = vrot.lane.b32.xlu0 %v2716, 96
    %v3441 = vpop.permute.xlu0 %3440
    %3442 = vrot.lane.b32.xlu0 %v2718, 96
    %v3443 = vpop.permute.xlu0 %3442
    %3444 = vrot.lane.b32.xlu0 %v2721, 96
    %v3445 = vpop.permute.xlu0 %3444
    %3446 = vrot.lane.b32.xlu0 %v2723, 96
    %v3447 = vpop.permute.xlu0 %3446
    %3448 = vrot.lane.b32.xlu0 %v2726, 96
    %v3449 = vpop.permute.xlu0 %3448
    %3450 = vrot.lane.b32.xlu0 %v2728, 96
    %v3451 = vpop.permute.xlu0 %3450
    %3484 = vrot.lane.b32.xlu0 %v3045, 112
    %v3485 = vpop.permute.xlu0 %3484
    %3486 = vrot.lane.b32.xlu0 %v3047, 112
    %v3487 = vpop.permute.xlu0 %3486
    %3488 = vrot.lane.b32.xlu0 %v3050, 112
    %v3489 = vpop.permute.xlu0 %3488
    %3490 = vrot.lane.b32.xlu0 %v3052, 112
    %v3491 = vpop.permute.xlu0 %3490
    %3492 = vrot.lane.b32.xlu0 %v3055, 112
    %v3493 = vpop.permute.xlu0 %3492
    %3494 = vrot.lane.b32.xlu0 %v3057, 112
    %v3495 = vpop.permute.xlu0 %3494
    %3496 = vrot.lane.b32.xlu0 %v3060, 112
    %v3497 = vpop.permute.xlu0 %3496
    %3498 = vrot.lane.b32.xlu0 %v3062, 112
    %v3499 = vpop.permute.xlu0 %3498
    %3500 = vrot.lane.b32.xlu0 %v3065, 112
    %v3501 = vpop.permute.xlu0 %3500
    %3502 = vrot.lane.b32.xlu0 %v3067, 112
    %v3503 = vpop.permute.xlu0 %3502
    %3504 = vrot.lane.b32.xlu0 %v3070, 112
    %v3505 = vpop.permute.xlu0 %3504
    %3506 = vrot.lane.b32.xlu0 %v3072, 112
    %v3507 = vpop.permute.xlu0 %3506
    %3508 = vrot.lane.b32.xlu0 %v3075, 112
    %v3509 = vpop.permute.xlu0 %3508
    %3510 = vrot.lane.b32.xlu0 %v3077, 112
    %v3511 = vpop.permute.xlu0 %3510
    %3512 = vrot.lane.b32.xlu0 %v3080, 112
    %v3513 = vpop.permute.xlu0 %3512
    %3514 = vrot.lane.b32.xlu0 %v3082, 112
    %v3515 = vpop.permute.xlu0 %3514
    %v3532 = vsel %vm283, %v543, %v3101
    %v3533 = vsel %vm283, %v545, %v3103
    %v3534 = vsel %vm283, %v548, %v3105
    %v3535 = vsel %vm283, %v550, %v3107
    %v3536 = vsel %vm283, %v553, %v3109
    %v3537 = vsel %vm283, %v555, %v3111
    %v3538 = vsel %vm283, %v558, %v3113
    %v3539 = vsel %vm283, %v560, %v3115
    %v3540 = vsel %vm283, %v563, %v3117
    %v3541 = vsel %vm283, %v565, %v3119
    %v3542 = vsel %vm283, %v568, %v3121
    %v3543 = vsel %vm283, %v570, %v3123
    %v3544 = vsel %vm283, %v573, %v3125
    %v3545 = vsel %vm283, %v575, %v3127
    %v3546 = vsel %vm283, %v578, %v3129
    %v3547 = vsel %vm283, %v580, %v3131
    %vm3548 = vcmask 261120
    %v3549 = vsel %vm3548, %v3532, %v3165
    %v3550 = vsel %vm3548, %v3533, %v3167
    %v3551 = vsel %vm3548, %v3534, %v3169
    %v3552 = vsel %vm3548, %v3535, %v3171
    %v3553 = vsel %vm3548, %v3536, %v3173
    %v3554 = vsel %vm3548, %v3537, %v3175
    %v3555 = vsel %vm3548, %v3538, %v3177
    %v3556 = vsel %vm3548, %v3539, %v3179
    %v3557 = vsel %vm3548, %v3540, %v3181
    %v3558 = vsel %vm3548, %v3541, %v3183
    %v3559 = vsel %vm3548, %v3542, %v3185
    %v3560 = vsel %vm3548, %v3543, %v3187
    %v3561 = vsel %vm3548, %v3544, %v3189
    %v3562 = vsel %vm3548, %v3545, %v3191
    %v3563 = vsel %vm3548, %v3546, %v3193
    %v3564 = vsel %vm3548, %v3547, %v3195
    %vm3565 = vcmask 392192
    %v3566 = vsel %vm3565, %v3549, %v3229
    %v3567 = vsel %vm3565, %v3550, %v3231
    %v3568 = vsel %vm3565, %v3551, %v3233
    %v3569 = vsel %vm3565, %v3552, %v3235
    %v3570 = vsel %vm3565, %v3553, %v3237
    %v3571 = vsel %vm3565, %v3554, %v3239
    %v3572 = vsel %vm3565, %v3555, %v3241
    %v3573 = vsel %vm3565, %v3556, %v3243
    %v3574 = vsel %vm3565, %v3557, %v3245
    %v3575 = vsel %vm3565, %v3558, %v3247
    %v3576 = vsel %vm3565, %v3559, %v3249
    %v3577 = vsel %vm3565, %v3560, %v3251
    %v3578 = vsel %vm3565, %v3561, %v3253
    %v3579 = vsel %vm3565, %v3562, %v3255
    %v3580 = vsel %vm3565, %v3563, %v3257
    %v3581 = vsel %vm3565, %v3564, %v3259
    %vm3582 = vcmask 523264
    %v3583 = vsel %vm3582, %v3566, %v3293
    %v3584 = vsel %vm3582, %v3567, %v3295
    %v3585 = vsel %vm3582, %v3568, %v3297
    %v3586 = vsel %vm3582, %v3569, %v3299
    %v3587 = vsel %vm3582, %v3570, %v3301
    %v3588 = vsel %vm3582, %v3571, %v3303
    %v3589 = vsel %vm3582, %v3572, %v3305
    %v3590 = vsel %vm3582, %v3573, %v3307
    %v3591 = vsel %vm3582, %v3574, %v3309
    %v3592 = vsel %vm3582, %v3575, %v3311
    %v3593 = vsel %vm3582, %v3576, %v3313
    %v3594 = vsel %vm3582, %v3577, %v3315
    %v3595 = vsel %vm3582, %v3578, %v3317
    %v3596 = vsel %vm3582, %v3579, %v3319
    %v3597 = vsel %vm3582, %v3580, %v3321
    %v3598 = vsel %vm3582, %v3581, %v3323
    %vm3599 = vcmask 654336
    %v3600 = vsel %vm3599, %v3583, %v3357
    %v3601 = vsel %vm3599, %v3584, %v3359
    %v3602 = vsel %vm3599, %v3585, %v3361
    %v3603 = vsel %vm3599, %v3586, %v3363
    %v3604 = vsel %vm3599, %v3587, %v3365
    %v3605 = vsel %vm3599, %v3588, %v3367
    %v3606 = vsel %vm3599, %v3589, %v3369
    %v3607 = vsel %vm3599, %v3590, %v3371
    %v3608 = vsel %vm3599, %v3591, %v3373
    %v3609 = vsel %vm3599, %v3592, %v3375
    %v3610 = vsel %vm3599, %v3593, %v3377
    %v3611 = vsel %vm3599, %v3594, %v3379
    %v3612 = vsel %vm3599, %v3595, %v3381
    %v3613 = vsel %vm3599, %v3596, %v3383
    %v3614 = vsel %vm3599, %v3597, %v3385
    %v3615 = vsel %vm3599, %v3598, %v3387
    %vm3616 = vcmask 785408
    %v3617 = vsel %vm3616, %v3600, %v3421
    %v3618 = vsel %vm3616, %v3601, %v3423
    %v3619 = vsel %vm3616, %v3602, %v3425
    %v3620 = vsel %vm3616, %v3603, %v3427
    %v3621 = vsel %vm3616, %v3604, %v3429
    %v3622 = vsel %vm3616, %v3605, %v3431
    %v3623 = vsel %vm3616, %v3606, %v3433
    %v3624 = vsel %vm3616, %v3607, %v3435
    %v3625 = vsel %vm3616, %v3608, %v3437
    %v3626 = vsel %vm3616, %v3609, %v3439
    %v3627 = vsel %vm3616, %v3610, %v3441
    %v3628 = vsel %vm3616, %v3611, %v3443
    %v3629 = vsel %vm3616, %v3612, %v3445
    %v3630 = vsel %vm3616, %v3613, %v3447
    %v3631 = vsel %vm3616, %v3614, %v3449
    %v3632 = vsel %vm3616, %v3615, %v3451
    %vm3633 = vcmask 916480
    %v3634 = vsel %vm3633, %v3617, %v3485
    %v3635 = vsel %vm3633, %v3618, %v3487
    %v3636 = vsel %vm3633, %v3619, %v3489
    %v3637 = vsel %vm3633, %v3620, %v3491
    %v3638 = vsel %vm3633, %v3621, %v3493
    %v3639 = vsel %vm3633, %v3622, %v3495
    %v3640 = vsel %vm3633, %v3623, %v3497
    %v3641 = vsel %vm3633, %v3624, %v3499
    %v3642 = vsel %vm3633, %v3625, %v3501
    %v3643 = vsel %vm3633, %v3626, %v3503
    %v3644 = vsel %vm3633, %v3627, %v3505
    %v3645 = vsel %vm3633, %v3628, %v3507
    %v3646 = vsel %vm3633, %v3629, %v3509
    %v3647 = vsel %vm3633, %v3630, %v3511
    %v3648 = vsel %vm3633, %v3631, %v3513
    %v3649 = vsel %vm3633, %v3632, %v3515
    %v3650 = vpack.c.bf16 %v3635, %v3634
    %v3651 = vpack.c.bf16 %v3637, %v3636
    %v3652 = vpack.c.bf16 %v3639, %v3638
    %v3653 = vpack.c.bf16 %v3641, %v3640
    %v3654 = vpack.c.bf16 %v3643, %v3642
    %v3655 = vpack.c.bf16 %v3645, %v3644
    %v3656 = vpack.c.bf16 %v3647, %v3646
    %v3657 = vpack.c.bf16 %v3649, %v3648
    %v3658 = vld [vmem:[#allocation2] sm:$0xf]
    %v3659 = vld [vmem:[#allocation2 + $0x4] sm:$0xf]
    %v3660 = vld [vmem:[#allocation2 + $0x8] sm:$0xf]
    %v3661 = vld [vmem:[#allocation2 + $0xc] sm:$0xf]
    %v3662 = vld [vmem:[#allocation2 + $0x10] sm:$0xf]
    %v3663 = vld [vmem:[#allocation2 + $0x14] sm:$0xf]
    %v3664 = vld [vmem:[#allocation2 + $0x18] sm:$0xf]
    %v3665 = vld [vmem:[#allocation2 + $0x1c] sm:$0xf]
    %v3666 = vld [vmem:[#allocation2 + $0x20] sm:$0xf]
    %v3667 = vld [vmem:[#allocation2 + $0x24] sm:$0xf]
    %v3668 = vld [vmem:[#allocation2 + $0x28] sm:$0xf]
    %v3669 = vld [vmem:[#allocation2 + $0x2c] sm:$0xf]
    %v3670 = vld [vmem:[#allocation2 + $0x30] sm:$0xf]
    %v3671 = vld [vmem:[#allocation2 + $0x34] sm:$0xf]
    %v3672 = vld [vmem:[#allocation2 + $0x38] sm:$0xf]
    %v3673 = vld [vmem:[#allocation2 + $0x3c] sm:$0xf]
    %v3674 = vld [vmem:[%s6] sm:$0x1]
    %v3676 = vperm.slane %v3674, 0
    %v3694 = vunpack.c.l.b16 %v3658
    %v3695 = vunpack.c.l.b16 %v3659
    %v3696 = vunpack.c.l.b16 %v3660
    %v3697 = vunpack.c.l.b16 %v3661
    %v3698 = vunpack.c.l.b16 %v3662
    %v3699 = vunpack.c.l.b16 %v3663
    %v3700 = vunpack.c.l.b16 %v3664
    %v3701 = vunpack.c.l.b16 %v3665
    %v3702 = vunpack.c.l.b16 %v3666
    %v3703 = vunpack.c.l.b16 %v3667
    %v3704 = vunpack.c.l.b16 %v3668
    %v3705 = vunpack.c.l.b16 %v3669
    %v3706 = vunpack.c.l.b16 %v3670
    %v3707 = vunpack.c.l.b16 %v3671
    %v3708 = vunpack.c.l.b16 %v3672
    %v3709 = vunpack.c.l.b16 %v3673
    %v3710 = vpack.c.b16 %v3695, %v3694
    %v3711 = vpack.c.b16 %v3697, %v3696
    %v3712 = vpack.c.b16 %v3699, %v3698
    %v3713 = vpack.c.b16 %v3701, %v3700
    %v3714 = vpack.c.b16 %v3703, %v3702
    %v3715 = vpack.c.b16 %v3705, %v3704
    %v3716 = vpack.c.b16 %v3707, %v3706
    %v3717 = vpack.c.b16 %v3709, %v3708
    %3726 = vmatpush.bf16.msra.mxu0 %v3717
    %3727 = vmatpush.bf16.msra.mxu0 %v3716
    %3728 = vmatpush.bf16.msra.mxu0 %v3715
    %3729 = vmatpush.bf16.msra.mxu0 %v3714
    %3730 = vmatpush.bf16.msra.mxu0 %v3713
    %3731 = vmatpush.bf16.msra.mxu0 %v3712
    %3732 = vmatpush.bf16.msra.mxu0 %v3711
    %3733 = vmatpush.bf16.msra.mxu0 %v3710
    %3734 = vmatmul.bf16.gmra.mxu0 %v3650
    %v3735 = vpop.f32.mrf.mxu0
    %v3736 = vadd.f32 %v3676, %v3735
    %v3737 = vpop.f32.mrf.mxu0
    %v3738 = vadd.f32 %v3676, %v3737
    %3739 = vmatmul.bf16.gmra.mxu0 %v3651
    %v3740 = vpop.f32.mrf.mxu0
    %v3741 = vadd.f32 %v3676, %v3740
    %v3742 = vpop.f32.mrf.mxu0
    %v3743 = vadd.f32 %v3676, %v3742
    %3744 = vmatmul.bf16.gmra.mxu0 %v3652
    %v3745 = vpop.f32.mrf.mxu0
    %v3746 = vadd.f32 %v3676, %v3745
    %v3747 = vpop.f32.mrf.mxu0
    %v3748 = vadd.f32 %v3676, %v3747
    %3749 = vmatmul.bf16.gmra.mxu0 %v3653
    %v3750 = vpop.f32.mrf.mxu0
    %v3751 = vadd.f32 %v3676, %v3750
    %v3752 = vpop.f32.mrf.mxu0
    %v3753 = vadd.f32 %v3676, %v3752
    %3754 = vmatmul.bf16.gmra.mxu0 %v3654
    %v3755 = vpop.f32.mrf.mxu0
    %v3756 = vadd.f32 %v3676, %v3755
    %v3757 = vpop.f32.mrf.mxu0
    %v3758 = vadd.f32 %v3676, %v3757
    %3759 = vmatmul.bf16.gmra.mxu0 %v3655
    %v3760 = vpop.f32.mrf.mxu0
    %v3761 = vadd.f32 %v3676, %v3760
    %v3762 = vpop.f32.mrf.mxu0
    %v3763 = vadd.f32 %v3676, %v3762
    %3764 = vmatmul.bf16.gmra.mxu0 %v3656
    %v3765 = vpop.f32.mrf.mxu0
    %v3766 = vadd.f32 %v3676, %v3765
    %v3767 = vpop.f32.mrf.mxu0
    %v3768 = vadd.f32 %v3676, %v3767
    %3769 = vmatmul.bf16.gmra.mxu0 %v3657
    %v3770 = vpop.f32.mrf.mxu0
    %v3771 = vadd.f32 %v3676, %v3770
    %v3772 = vpop.f32.mrf.mxu0
    %v3773 = vadd.f32 %v3676, %v3772
    %3774 = vdwg.mxu0
    %v3775 = vld [vmem:[%s2] sm:$0xff]
    %v3776 = vld [vmem:[%s2 + $0x8] sm:$0xff]
    %v3777 = vld [vmem:[%s2 + $0x10] sm:$0xff]
    %v3778 = vld [vmem:[%s2 + $0x18] sm:$0xff]
    %v3779 = vld [vmem:[%s2 + $0x20] sm:$0xff]
    %v3780 = vld [vmem:[%s2 + $0x28] sm:$0xff]
    %v3781 = vld [vmem:[%s2 + $0x30] sm:$0xff]
    %v3782 = vld [vmem:[%s2 + $0x38] sm:$0xff]
    %v3783 = vld [vmem:[%s2 + $0x40] sm:$0xff]
    %v3784 = vld [vmem:[%s2 + $0x48] sm:$0xff]
    %v3785 = vld [vmem:[%s2 + $0x50] sm:$0xff]
    %v3786 = vld [vmem:[%s2 + $0x58] sm:$0xff]
    %v3787 = vld [vmem:[%s2 + $0x60] sm:$0xff]
    %v3788 = vld [vmem:[%s2 + $0x68] sm:$0xff]
    %v3789 = vld [vmem:[%s2 + $0x70] sm:$0xff]
    %v3790 = vld [vmem:[%s2 + $0x78] sm:$0xff]
    %v3791 = vadd.f32 %v3775, %v3736
    %v3792 = vadd.f32 %v3776, %v3738
    %v3793 = vadd.f32 %v3777, %v3741
    %v3794 = vadd.f32 %v3778, %v3743
    %v3795 = vadd.f32 %v3779, %v3746
    %v3796 = vadd.f32 %v3780, %v3748
    %v3797 = vadd.f32 %v3781, %v3751
    %v3798 = vadd.f32 %v3782, %v3753
    %v3799 = vadd.f32 %v3783, %v3756
    %v3800 = vadd.f32 %v3784, %v3758
    %v3801 = vadd.f32 %v3785, %v3761
    %v3802 = vadd.f32 %v3786, %v3763
    %v3803 = vadd.f32 %v3787, %v3766
    %v3804 = vadd.f32 %v3788, %v3768
    %v3805 = vadd.f32 %v3789, %v3771
    %v3806 = vadd.f32 %v3790, %v3773
    %3807 = vadd.xlane.f32.xlu0 %v3791
    %v3808 = vpop.xlane.xlu0 %3807
    %3809 = vadd.xlane.f32.xlu0 %v3792
    %v3810 = vpop.xlane.xlu0 %3809
    %3811 = vadd.xlane.f32.xlu0 %v3793
    %v3812 = vpop.xlane.xlu0 %3811
    %3813 = vadd.xlane.f32.xlu0 %v3794
    %v3814 = vpop.xlane.xlu0 %3813
    %3815 = vadd.xlane.f32.xlu0 %v3795
    %v3816 = vpop.xlane.xlu0 %3815
    %3817 = vadd.xlane.f32.xlu0 %v3796
    %v3818 = vpop.xlane.xlu0 %3817
    %3819 = vadd.xlane.f32.xlu0 %v3797
    %v3820 = vpop.xlane.xlu0 %3819
    %3821 = vadd.xlane.f32.xlu0 %v3798
    %v3822 = vpop.xlane.xlu0 %3821
    %3823 = vadd.xlane.f32.xlu0 %v3799
    %v3824 = vpop.xlane.xlu0 %3823
    %3825 = vadd.xlane.f32.xlu0 %v3800
    %v3826 = vpop.xlane.xlu0 %3825
    %3827 = vadd.xlane.f32.xlu0 %v3801
    %v3828 = vpop.xlane.xlu0 %3827
    %3829 = vadd.xlane.f32.xlu0 %v3802
    %v3830 = vpop.xlane.xlu0 %3829
    %3831 = vadd.xlane.f32.xlu0 %v3803
    %v3832 = vpop.xlane.xlu0 %3831
    %3833 = vadd.xlane.f32.xlu0 %v3804
    %v3834 = vpop.xlane.xlu0 %3833
    %3835 = vadd.xlane.f32.xlu0 %v3805
    %v3836 = vpop.xlane.xlu0 %3835
    %3837 = vadd.xlane.f32.xlu0 %v3806
    %v3838 = vpop.xlane.xlu0 %3837
    %v3839 = vrcp.pop 128.0
    %v3840 = vmul.f32 128.0, %v3839
    %v3841 = vsub.f32 1.0, %v3840
    %v3842 = vmul.f32 %v3839, %v3841
    %v3843 = vadd.f32 %v3839, %v3842
    %vm3844 = vweird.f32 %v3839
    %v3845 = vsel %vm3844, %v3839, %v3843
    %v3846 = vmul.f32 %v3808, %v3845
    %v3847 = vmul.f32 %v3810, %v3845
    %v3848 = vmul.f32 %v3812, %v3845
    %v3849 = vmul.f32 %v3814, %v3845
    %v3850 = vmul.f32 %v3816, %v3845
    %v3851 = vmul.f32 %v3818, %v3845
    %v3852 = vmul.f32 %v3820, %v3845
    %v3853 = vmul.f32 %v3822, %v3845
    %v3854 = vmul.f32 %v3824, %v3845
    %v3855 = vmul.f32 %v3826, %v3845
    %v3856 = vmul.f32 %v3828, %v3845
    %v3857 = vmul.f32 %v3830, %v3845
    %v3858 = vmul.f32 %v3832, %v3845
    %v3859 = vmul.f32 %v3834, %v3845
    %v3860 = vmul.f32 %v3836, %v3845
    %v3861 = vmul.f32 %v3838, %v3845
    %v3862 = vsub.f32 %v3791, %v3846
    %v3863 = vsub.f32 %v3792, %v3847
    %v3864 = vsub.f32 %v3793, %v3848
    %v3865 = vsub.f32 %v3794, %v3849
    %v3866 = vsub.f32 %v3795, %v3850
    %v3867 = vsub.f32 %v3796, %v3851
    %v3868 = vsub.f32 %v3797, %v3852
    %v3869 = vsub.f32 %v3798, %v3853
    %v3870 = vsub.f32 %v3799, %v3854
    %v3871 = vsub.f32 %v3800, %v3855
    %v3872 = vsub.f32 %v3801, %v3856
    %v3873 = vsub.f32 %v3802, %v3857
    %v3874 = vsub.f32 %v3803, %v3858
    %v3875 = vsub.f32 %v3804, %v3859
    %v3876 = vsub.f32 %v3805, %v3860
    %v3877 = vsub.f32 %v3806, %v3861
    %v3878 = vmul.f32 %v3862, %v3862
    %v3879 = vmul.f32 %v3863, %v3863
    %v3880 = vmul.f32 %v3864, %v3864
    %v3881 = vmul.f32 %v3865, %v3865
    %v3882 = vmul.f32 %v3866, %v3866
    %v3883 = vmul.f32 %v3867, %v3867
    %v3884 = vmul.f32 %v3868, %v3868
    %v3885 = vmul.f32 %v3869, %v3869
    %v3886 = vmul.f32 %v3870, %v3870
    %v3887 = vmul.f32 %v3871, %v3871
    %v3888 = vmul.f32 %v3872, %v3872
    %v3889 = vmul.f32 %v3873, %v3873
    %v3890 = vmul.f32 %v3874, %v3874
    %v3891 = vmul.f32 %v3875, %v3875
    %v3892 = vmul.f32 %v3876, %v3876
    %v3893 = vmul.f32 %v3877, %v3877
    %3894 = vadd.xlane.f32.xlu0 %v3878
    %v3895 = vpop.xlane.xlu0 %3894
    %3896 = vadd.xlane.f32.xlu0 %v3879
    %v3897 = vpop.xlane.xlu0 %3896
    %3898 = vadd.xlane.f32.xlu0 %v3880
    %v3899 = vpop.xlane.xlu0 %3898
    %3900 = vadd.xlane.f32.xlu0 %v3881
    %v3901 = vpop.xlane.xlu0 %3900
    %3902 = vadd.xlane.f32.xlu0 %v3882
    %v3903 = vpop.xlane.xlu0 %3902
    %3904 = vadd.xlane.f32.xlu0 %v3883
    %v3905 = vpop.xlane.xlu0 %3904
    %3906 = vadd.xlane.f32.xlu0 %v3884
    %v3907 = vpop.xlane.xlu0 %3906
    %3908 = vadd.xlane.f32.xlu0 %v3885
    %v3909 = vpop.xlane.xlu0 %3908
    %3910 = vadd.xlane.f32.xlu0 %v3886
    %v3911 = vpop.xlane.xlu0 %3910
    %3912 = vadd.xlane.f32.xlu0 %v3887
    %v3913 = vpop.xlane.xlu0 %3912
    %3914 = vadd.xlane.f32.xlu0 %v3888
    %v3915 = vpop.xlane.xlu0 %3914
    %3916 = vadd.xlane.f32.xlu0 %v3889
    %v3917 = vpop.xlane.xlu0 %3916
    %3918 = vadd.xlane.f32.xlu0 %v3890
    %v3919 = vpop.xlane.xlu0 %3918
    %3920 = vadd.xlane.f32.xlu0 %v3891
    %v3921 = vpop.xlane.xlu0 %3920
    %3922 = vadd.xlane.f32.xlu0 %v3892
    %v3923 = vpop.xlane.xlu0 %3922
    %3924 = vadd.xlane.f32.xlu0 %v3893
    %v3925 = vpop.xlane.xlu0 %3924
    %v3926 = vmul.f32 %v3895, %v3845
    %v3927 = vmul.f32 %v3897, %v3845
    %v3928 = vmul.f32 %v3899, %v3845
    %v3929 = vmul.f32 %v3901, %v3845
    %v3930 = vmul.f32 %v3903, %v3845
    %v3931 = vmul.f32 %v3905, %v3845
    %v3932 = vmul.f32 %v3907, %v3845
    %v3933 = vmul.f32 %v3909, %v3845
    %v3934 = vmul.f32 %v3911, %v3845
    %v3935 = vmul.f32 %v3913, %v3845
    %v3936 = vmul.f32 %v3915, %v3845
    %v3937 = vmul.f32 %v3917, %v3845
    %v3938 = vmul.f32 %v3919, %v3845
    %v3939 = vmul.f32 %v3921, %v3845
    %v3940 = vmul.f32 %v3923, %v3845
    %v3941 = vmul.f32 %v3925, %v3845
    %v3942 = vadd.f32 %v3926, 1e-05
    %v3943 = vadd.f32 %v3927, 1e-05
    %v3944 = vadd.f32 %v3928, 1e-05
    %v3945 = vadd.f32 %v3929, 1e-05
    %v3946 = vadd.f32 %v3930, 1e-05
    %v3947 = vadd.f32 %v3931, 1e-05
    %v3948 = vadd.f32 %v3932, 1e-05
    %v3949 = vadd.f32 %v3933, 1e-05
    %v3950 = vadd.f32 %v3934, 1e-05
    %v3951 = vadd.f32 %v3935, 1e-05
    %v3952 = vadd.f32 %v3936, 1e-05
    %v3953 = vadd.f32 %v3937, 1e-05
    %v3954 = vadd.f32 %v3938, 1e-05
    %v3955 = vadd.f32 %v3939, 1e-05
    %v3956 = vadd.f32 %v3940, 1e-05
    %v3957 = vadd.f32 %v3941, 1e-05
    %v3958 = vrsqrt.pop %v3942
    %v3959 = vmul.f32 %v3958, %v3942
    %v3960 = vmul.f32 %v3959, %v3958
    %v3961 = vmul.f32 0.5, %v3960
    %v3962 = vsub.f32 1.5, %v3961
    %v3963 = vmul.f32 %v3958, %v3962
    %vm3964 = vweird.f32 %v3942
    %vm3965 = vweird.f32 %v3958
    %vm3966 = vmor %vm3964, %vm3965
    %v3967 = vsel %vm3966, %v3958, %v3963
    %v3968 = vrsqrt.pop %v3943
    %v3969 = vmul.f32 %v3968, %v3943
    %v3970 = vmul.f32 %v3969, %v3968
    %v3971 = vmul.f32 0.5, %v3970
    %v3972 = vsub.f32 1.5, %v3971
    %v3973 = vmul.f32 %v3968, %v3972
    %vm3974 = vweird.f32 %v3943
    %vm3975 = vweird.f32 %v3968
    %vm3976 = vmor %vm3974, %vm3975
    %v3977 = vsel %vm3976, %v3968, %v3973
    %v3978 = vrsqrt.pop %v3944
    %v3979 = vmul.f32 %v3978, %v3944
    %v3980 = vmul.f32 %v3979, %v3978
    %v3981 = vmul.f32 0.5, %v3980
    %v3982 = vsub.f32 1.5, %v3981
    %v3983 = vmul.f32 %v3978, %v3982
    %vm3984 = vweird.f32 %v3944
    %vm3985 = vweird.f32 %v3978
    %vm3986 = vmor %vm3984, %vm3985
    %v3987 = vsel %vm3986, %v3978, %v3983
    %v3988 = vrsqrt.pop %v3945
    %v3989 = vmul.f32 %v3988, %v3945
    %v3990 = vmul.f32 %v3989, %v3988
    %v3991 = vmul.f32 0.5, %v3990
    %v3992 = vsub.f32 1.5, %v3991
    %v3993 = vmul.f32 %v3988, %v3992
    %vm3994 = vweird.f32 %v3945
    %vm3995 = vweird.f32 %v3988
    %vm3996 = vmor %vm3994, %vm3995
    %v3997 = vsel %vm3996, %v3988, %v3993
    %v3998 = vrsqrt.pop %v3946
    %v3999 = vmul.f32 %v3998, %v3946
    %v4000 = vmul.f32 %v3999, %v3998
    %v4001 = vmul.f32 0.5, %v4000
    %v4002 = vsub.f32 1.5, %v4001
    %v4003 = vmul.f32 %v3998, %v4002
    %vm4004 = vweird.f32 %v3946
    %vm4005 = vweird.f32 %v3998
    %vm4006 = vmor %vm4004, %vm4005
    %v4007 = vsel %vm4006, %v3998, %v4003
    %v4008 = vrsqrt.pop %v3947
    %v4009 = vmul.f32 %v4008, %v3947
    %v4010 = vmul.f32 %v4009, %v4008
    %v4011 = vmul.f32 0.5, %v4010
    %v4012 = vsub.f32 1.5, %v4011
    %v4013 = vmul.f32 %v4008, %v4012
    %vm4014 = vweird.f32 %v3947
    %vm4015 = vweird.f32 %v4008
    %vm4016 = vmor %vm4014, %vm4015
    %v4017 = vsel %vm4016, %v4008, %v4013
    %v4018 = vrsqrt.pop %v3948
    %v4019 = vmul.f32 %v4018, %v3948
    %v4020 = vmul.f32 %v4019, %v4018
    %v4021 = vmul.f32 0.5, %v4020
    %v4022 = vsub.f32 1.5, %v4021
    %v4023 = vmul.f32 %v4018, %v4022
    %vm4024 = vweird.f32 %v3948
    %vm4025 = vweird.f32 %v4018
    %vm4026 = vmor %vm4024, %vm4025
    %v4027 = vsel %vm4026, %v4018, %v4023
    %v4028 = vrsqrt.pop %v3949
    %v4029 = vmul.f32 %v4028, %v3949
    %v4030 = vmul.f32 %v4029, %v4028
    %v4031 = vmul.f32 0.5, %v4030
    %v4032 = vsub.f32 1.5, %v4031
    %v4033 = vmul.f32 %v4028, %v4032
    %vm4034 = vweird.f32 %v3949
    %vm4035 = vweird.f32 %v4028
    %vm4036 = vmor %vm4034, %vm4035
    %v4037 = vsel %vm4036, %v4028, %v4033
    %v4038 = vrsqrt.pop %v3950
    %v4039 = vmul.f32 %v4038, %v3950
    %v4040 = vmul.f32 %v4039, %v4038
    %v4041 = vmul.f32 0.5, %v4040
    %v4042 = vsub.f32 1.5, %v4041
    %v4043 = vmul.f32 %v4038, %v4042
    %vm4044 = vweird.f32 %v3950
    %vm4045 = vweird.f32 %v4038
    %vm4046 = vmor %vm4044, %vm4045
    %v4047 = vsel %vm4046, %v4038, %v4043
    %v4048 = vrsqrt.pop %v3951
    %v4049 = vmul.f32 %v4048, %v3951
    %v4050 = vmul.f32 %v4049, %v4048
    %v4051 = vmul.f32 0.5, %v4050
    %v4052 = vsub.f32 1.5, %v4051
    %v4053 = vmul.f32 %v4048, %v4052
    %vm4054 = vweird.f32 %v3951
    %vm4055 = vweird.f32 %v4048
    %vm4056 = vmor %vm4054, %vm4055
    %v4057 = vsel %vm4056, %v4048, %v4053
    %v4058 = vrsqrt.pop %v3952
    %v4059 = vmul.f32 %v4058, %v3952
    %v4060 = vmul.f32 %v4059, %v4058
    %v4061 = vmul.f32 0.5, %v4060
    %v4062 = vsub.f32 1.5, %v4061
    %v4063 = vmul.f32 %v4058, %v4062
    %vm4064 = vweird.f32 %v3952
    %vm4065 = vweird.f32 %v4058
    %vm4066 = vmor %vm4064, %vm4065
    %v4067 = vsel %vm4066, %v4058, %v4063
    %v4068 = vrsqrt.pop %v3953
    %v4069 = vmul.f32 %v4068, %v3953
    %v4070 = vmul.f32 %v4069, %v4068
    %v4071 = vmul.f32 0.5, %v4070
    %v4072 = vsub.f32 1.5, %v4071
    %v4073 = vmul.f32 %v4068, %v4072
    %vm4074 = vweird.f32 %v3953
    %vm4075 = vweird.f32 %v4068
    %vm4076 = vmor %vm4074, %vm4075
    %v4077 = vsel %vm4076, %v4068, %v4073
    %v4078 = vrsqrt.pop %v3954
    %v4079 = vmul.f32 %v4078, %v3954
    %v4080 = vmul.f32 %v4079, %v4078
    %v4081 = vmul.f32 0.5, %v4080
    %v4082 = vsub.f32 1.5, %v4081
    %v4083 = vmul.f32 %v4078, %v4082
    %vm4084 = vweird.f32 %v3954
    %vm4085 = vweird.f32 %v4078
    %vm4086 = vmor %vm4084, %vm4085
    %v4087 = vsel %vm4086, %v4078, %v4083
    %v4088 = vrsqrt.pop %v3955
    %v4089 = vmul.f32 %v4088, %v3955
    %v4090 = vmul.f32 %v4089, %v4088
    %v4091 = vmul.f32 0.5, %v4090
    %v4092 = vsub.f32 1.5, %v4091
    %v4093 = vmul.f32 %v4088, %v4092
    %vm4094 = vweird.f32 %v3955
    %vm4095 = vweird.f32 %v4088
    %vm4096 = vmor %vm4094, %vm4095
    %v4097 = vsel %vm4096, %v4088, %v4093
    %v4098 = vrsqrt.pop %v3956
    %v4099 = vmul.f32 %v4098, %v3956
    %v4100 = vmul.f32 %v4099, %v4098
    %v4101 = vmul.f32 0.5, %v4100
    %v4102 = vsub.f32 1.5, %v4101
    %v4103 = vmul.f32 %v4098, %v4102
    %vm4104 = vweird.f32 %v3956
    %vm4105 = vweird.f32 %v4098
    %vm4106 = vmor %vm4104, %vm4105
    %v4107 = vsel %vm4106, %v4098, %v4103
    %v4108 = vrsqrt.pop %v3957
    %v4109 = vmul.f32 %v4108, %v3957
    %v4110 = vmul.f32 %v4109, %v4108
    %v4111 = vmul.f32 0.5, %v4110
    %v4112 = vsub.f32 1.5, %v4111
    %v4113 = vmul.f32 %v4108, %v4112
    %vm4114 = vweird.f32 %v3957
    %vm4115 = vweird.f32 %v4108
    %vm4116 = vmor %vm4114, %vm4115
    %v4117 = vsel %vm4116, %v4108, %v4113
    %v4118 = vmul.f32 %v3862, %v3967
    %v4119 = vmul.f32 %v3863, %v3977
    %v4120 = vmul.f32 %v3864, %v3987
    %v4121 = vmul.f32 %v3865, %v3997
    %v4122 = vmul.f32 %v3866, %v4007
    %v4123 = vmul.f32 %v3867, %v4017
    %v4124 = vmul.f32 %v3868, %v4027
    %v4125 = vmul.f32 %v3869, %v4037
    %v4126 = vmul.f32 %v3870, %v4047
    %v4127 = vmul.f32 %v3871, %v4057
    %v4128 = vmul.f32 %v3872, %v4067
    %v4129 = vmul.f32 %v3873, %v4077
    %v4130 = vmul.f32 %v3874, %v4087
    %v4131 = vmul.f32 %v3875, %v4097
    %v4132 = vmul.f32 %v3876, %v4107
    %v4133 = vmul.f32 %v3877, %v4117
    %v4134 = vld [vmem:[%s7] sm:$0x1]
    %v4136 = vperm.slane %v4134, 0
    %v4138 = vmul.f32 %v4118, %v4136
    %v4139 = vmul.f32 %v4119, %v4136
    %v4140 = vmul.f32 %v4120, %v4136
    %v4141 = vmul.f32 %v4121, %v4136
    %v4142 = vmul.f32 %v4122, %v4136
    %v4143 = vmul.f32 %v4123, %v4136
    %v4144 = vmul.f32 %v4124, %v4136
    %v4145 = vmul.f32 %v4125, %v4136
    %v4146 = vmul.f32 %v4126, %v4136
    %v4147 = vmul.f32 %v4127, %v4136
    %v4148 = vmul.f32 %v4128, %v4136
    %v4149 = vmul.f32 %v4129, %v4136
    %v4150 = vmul.f32 %v4130, %v4136
    %v4151 = vmul.f32 %v4131, %v4136
    %v4152 = vmul.f32 %v4132, %v4136
    %v4153 = vmul.f32 %v4133, %v4136
    %v4154 = vld [vmem:[%s8] sm:$0x1]
    %v4156 = vperm.slane %v4154, 0
    %v4158 = vadd.f32 %v4138, %v4156
    %v4159 = vadd.f32 %v4139, %v4156
    %v4160 = vadd.f32 %v4140, %v4156
    %v4161 = vadd.f32 %v4141, %v4156
    %v4162 = vadd.f32 %v4142, %v4156
    %v4163 = vadd.f32 %v4143, %v4156
    %v4164 = vadd.f32 %v4144, %v4156
    %v4165 = vadd.f32 %v4145, %v4156
    %v4166 = vadd.f32 %v4146, %v4156
    %v4167 = vadd.f32 %v4147, %v4156
    %v4168 = vadd.f32 %v4148, %v4156
    %v4169 = vadd.f32 %v4149, %v4156
    %v4170 = vadd.f32 %v4150, %v4156
    %v4171 = vadd.f32 %v4151, %v4156
    %v4172 = vadd.f32 %v4152, %v4156
    %v4173 = vadd.f32 %v4153, %v4156
    %v4174 = vpack.c.bf16 %v4159, %v4158
    %v4175 = vpack.c.bf16 %v4161, %v4160
    %v4176 = vpack.c.bf16 %v4163, %v4162
    %v4177 = vpack.c.bf16 %v4165, %v4164
    %v4178 = vpack.c.bf16 %v4167, %v4166
    %v4179 = vpack.c.bf16 %v4169, %v4168
    %v4180 = vpack.c.bf16 %v4171, %v4170
    %v4181 = vpack.c.bf16 %v4173, %v4172
    %v4182 = vld [vmem:[#allocation4] sm:$0xff]
    %v4183 = vld [vmem:[#allocation4 + $0x8] sm:$0xff]
    %v4184 = vld [vmem:[#allocation4 + $0x10] sm:$0xff]
    %v4185 = vld [vmem:[#allocation4 + $0x18] sm:$0xff]
    %v4186 = vld [vmem:[#allocation4 + $0x20] sm:$0xff]
    %v4187 = vld [vmem:[#allocation4 + $0x28] sm:$0xff]
    %v4188 = vld [vmem:[#allocation4 + $0x30] sm:$0xff]
    %v4189 = vld [vmem:[#allocation4 + $0x38] sm:$0xff]
    %v4190 = vld [vmem:[#allocation4 + $0x40] sm:$0xff]
    %v4191 = vld [vmem:[#allocation4 + $0x48] sm:$0xff]
    %v4192 = vld [vmem:[#allocation4 + $0x50] sm:$0xff]
    %v4193 = vld [vmem:[#allocation4 + $0x58] sm:$0xff]
    %v4194 = vld [vmem:[#allocation4 + $0x60] sm:$0xff]
    %v4195 = vld [vmem:[#allocation4 + $0x68] sm:$0xff]
    %v4196 = vld [vmem:[#allocation4 + $0x70] sm:$0xff]
    %v4197 = vld [vmem:[#allocation4 + $0x78] sm:$0xff]
    %v4198 = vld [vmem:[%s10] sm:$0x3]
    %v4200 = vperm.slane %v4198, 0
    %v4201 = vperm.slane %v4198, 1
    %v4220 = vunpack.c.l.b16 %v4182
    %v4221 = vunpack.c.h.b16 %v4182
    %v4222 = vunpack.c.l.b16 %v4183
    %v4223 = vunpack.c.h.b16 %v4183
    %v4224 = vunpack.c.l.b16 %v4184
    %v4225 = vunpack.c.h.b16 %v4184
    %v4226 = vunpack.c.l.b16 %v4185
    %v4227 = vunpack.c.h.b16 %v4185
    %v4228 = vunpack.c.l.b16 %v4186
    %v4229 = vunpack.c.h.b16 %v4186
    %v4230 = vunpack.c.l.b16 %v4187
    %v4231 = vunpack.c.h.b16 %v4187
    %v4232 = vunpack.c.l.b16 %v4188
    %v4233 = vunpack.c.h.b16 %v4188
    %v4234 = vunpack.c.l.b16 %v4189
    %v4235 = vunpack.c.h.b16 %v4189
    %v4236 = vunpack.c.l.b16 %v4190
    %v4237 = vunpack.c.h.b16 %v4190
    %v4238 = vunpack.c.l.b16 %v4191
    %v4239 = vunpack.c.h.b16 %v4191
    %v4240 = vunpack.c.l.b16 %v4192
    %v4241 = vunpack.c.h.b16 %v4192
    %v4242 = vunpack.c.l.b16 %v4193
    %v4243 = vunpack.c.h.b16 %v4193
    %v4244 = vunpack.c.l.b16 %v4194
    %v4245 = vunpack.c.h.b16 %v4194
    %v4246 = vunpack.c.l.b16 %v4195
    %v4247 = vunpack.c.h.b16 %v4195
    %v4248 = vunpack.c.l.b16 %v4196
    %v4249 = vunpack.c.h.b16 %v4196
    %v4250 = vunpack.c.l.b16 %v4197
    %v4251 = vunpack.c.h.b16 %v4197
    %v4252 = vpack.c.b16 %v4222, %v4220
    %v4253 = vpack.c.b16 %v4223, %v4221
    %v4254 = vpack.c.b16 %v4226, %v4224
    %v4255 = vpack.c.b16 %v4227, %v4225
    %v4256 = vpack.c.b16 %v4230, %v4228
    %v4257 = vpack.c.b16 %v4231, %v4229
    %v4258 = vpack.c.b16 %v4234, %v4232
    %v4259 = vpack.c.b16 %v4235, %v4233
    %v4260 = vpack.c.b16 %v4238, %v4236
    %v4261 = vpack.c.b16 %v4239, %v4237
    %v4262 = vpack.c.b16 %v4242, %v4240
    %v4263 = vpack.c.b16 %v4243, %v4241
    %v4264 = vpack.c.b16 %v4246, %v4244
    %v4265 = vpack.c.b16 %v4247, %v4245
    %v4266 = vpack.c.b16 %v4250, %v4248
    %v4267 = vpack.c.b16 %v4251, %v4249
    %4284 = vmatpush.bf16.msra.mxu0 %v4266
    %4285 = vmatpush.bf16.msra.mxu0 %v4264
    %4286 = vmatpush.bf16.msra.mxu0 %v4262
    %4287 = vmatpush.bf16.msra.mxu0 %v4260
    %4288 = vmatpush.bf16.msra.mxu0 %v4258
    %4289 = vmatpush.bf16.msra.mxu0 %v4256
    %4290 = vmatpush.bf16.msra.mxu0 %v4254
    %4291 = vmatpush.bf16.msra.mxu0 %v4252
    %4292 = vmatmul.bf16.gmra.mxu0 %v4174
    %v4293 = vpop.f32.mrf.mxu0
    %v4294 = vadd.f32 %v4200, %v4293
    %v4295 = vpop.f32.mrf.mxu0
    %v4296 = vadd.f32 %v4200, %v4295
    %4297 = vmatmul.bf16.gmra.mxu0 %v4175
    %v4298 = vpop.f32.mrf.mxu0
    %v4299 = vadd.f32 %v4200, %v4298
    %v4300 = vpop.f32.mrf.mxu0
    %v4301 = vadd.f32 %v4200, %v4300
    %4302 = vmatmul.bf16.gmra.mxu0 %v4176
    %v4303 = vpop.f32.mrf.mxu0
    %v4304 = vadd.f32 %v4200, %v4303
    %v4305 = vpop.f32.mrf.mxu0
    %v4306 = vadd.f32 %v4200, %v4305
    %4307 = vmatmul.bf16.gmra.mxu0 %v4177
    %v4308 = vpop.f32.mrf.mxu0
    %v4309 = vadd.f32 %v4200, %v4308
    %v4310 = vpop.f32.mrf.mxu0
    %v4311 = vadd.f32 %v4200, %v4310
    %4312 = vmatmul.bf16.gmra.mxu0 %v4178
    %v4313 = vpop.f32.mrf.mxu0
    %v4314 = vadd.f32 %v4200, %v4313
    %v4315 = vpop.f32.mrf.mxu0
    %v4316 = vadd.f32 %v4200, %v4315
    %4317 = vmatmul.bf16.gmra.mxu0 %v4179
    %v4318 = vpop.f32.mrf.mxu0
    %v4319 = vadd.f32 %v4200, %v4318
    %v4320 = vpop.f32.mrf.mxu0
    %v4321 = vadd.f32 %v4200, %v4320
    %4322 = vmatmul.bf16.gmra.mxu0 %v4180
    %v4323 = vpop.f32.mrf.mxu0
    %v4324 = vadd.f32 %v4200, %v4323
    %v4325 = vpop.f32.mrf.mxu0
    %v4326 = vadd.f32 %v4200, %v4325
    %4327 = vmatmul.bf16.gmra.mxu0 %v4181
    %v4328 = vpop.f32.mrf.mxu0
    %v4329 = vadd.f32 %v4200, %v4328
    %v4330 = vpop.f32.mrf.mxu0
    %v4331 = vadd.f32 %v4200, %v4330
    %4332 = vdwg.mxu0
    %4333 = vmatpush.bf16.msra.mxu0 %v4267
    %4334 = vmatpush.bf16.msra.mxu0 %v4265
    %4335 = vmatpush.bf16.msra.mxu0 %v4263
    %4336 = vmatpush.bf16.msra.mxu0 %v4261
    %4337 = vmatpush.bf16.msra.mxu0 %v4259
    %4338 = vmatpush.bf16.msra.mxu0 %v4257
    %4339 = vmatpush.bf16.msra.mxu0 %v4255
    %4340 = vmatpush.bf16.msra.mxu0 %v4253
    %4341 = vmatmul.bf16.gmra.mxu0 %v4174
    %v4342 = vpop.f32.mrf.mxu0
    %v4343 = vadd.f32 %v4201, %v4342
    %v4344 = vpop.f32.mrf.mxu0
    %v4345 = vadd.f32 %v4201, %v4344
    %4346 = vmatmul.bf16.gmra.mxu0 %v4175
    %v4347 = vpop.f32.mrf.mxu0
    %v4348 = vadd.f32 %v4201, %v4347
    %v4349 = vpop.f32.mrf.mxu0
    %v4350 = vadd.f32 %v4201, %v4349
    %4351 = vmatmul.bf16.gmra.mxu0 %v4176
    %v4352 = vpop.f32.mrf.mxu0
    %v4353 = vadd.f32 %v4201, %v4352
    %v4354 = vpop.f32.mrf.mxu0
    %v4355 = vadd.f32 %v4201, %v4354
    %4356 = vmatmul.bf16.gmra.mxu0 %v4177
    %v4357 = vpop.f32.mrf.mxu0
    %v4358 = vadd.f32 %v4201, %v4357
    %v4359 = vpop.f32.mrf.mxu0
    %v4360 = vadd.f32 %v4201, %v4359
    %4361 = vmatmul.bf16.gmra.mxu0 %v4178
    %v4362 = vpop.f32.mrf.mxu0
    %v4363 = vadd.f32 %v4201, %v4362
    %v4364 = vpop.f32.mrf.mxu0
    %v4365 = vadd.f32 %v4201, %v4364
    %4366 = vmatmul.bf16.gmra.mxu0 %v4179
    %v4367 = vpop.f32.mrf.mxu0
    %v4368 = vadd.f32 %v4201, %v4367
    %v4369 = vpop.f32.mrf.mxu0
    %v4370 = vadd.f32 %v4201, %v4369
    %4371 = vmatmul.bf16.gmra.mxu0 %v4180
    %v4372 = vpop.f32.mrf.mxu0
    %v4373 = vadd.f32 %v4201, %v4372
    %v4374 = vpop.f32.mrf.mxu0
    %v4375 = vadd.f32 %v4201, %v4374
    %4376 = vmatmul.bf16.gmra.mxu0 %v4181
    %v4377 = vpop.f32.mrf.mxu0
    %v4378 = vadd.f32 %v4201, %v4377
    %v4379 = vpop.f32.mrf.mxu0
    %v4380 = vadd.f32 %v4201, %v4379
    %4381 = vdwg.mxu0
    %v4382 = vmax.f32 %v4294, 0.0
    %v4383 = vmax.f32 %v4343, 0.0
    %v4384 = vmax.f32 %v4296, 0.0
    %v4385 = vmax.f32 %v4345, 0.0
    %v4386 = vmax.f32 %v4299, 0.0
    %v4387 = vmax.f32 %v4348, 0.0
    %v4388 = vmax.f32 %v4301, 0.0
    %v4389 = vmax.f32 %v4350, 0.0
    %v4390 = vmax.f32 %v4304, 0.0
    %v4391 = vmax.f32 %v4353, 0.0
    %v4392 = vmax.f32 %v4306, 0.0
    %v4393 = vmax.f32 %v4355, 0.0
    %v4394 = vmax.f32 %v4309, 0.0
    %v4395 = vmax.f32 %v4358, 0.0
    %v4396 = vmax.f32 %v4311, 0.0
    %v4397 = vmax.f32 %v4360, 0.0
    %v4398 = vmax.f32 %v4314, 0.0
    %v4399 = vmax.f32 %v4363, 0.0
    %v4400 = vmax.f32 %v4316, 0.0
    %v4401 = vmax.f32 %v4365, 0.0
    %v4402 = vmax.f32 %v4319, 0.0
    %v4403 = vmax.f32 %v4368, 0.0
    %v4404 = vmax.f32 %v4321, 0.0
    %v4405 = vmax.f32 %v4370, 0.0
    %v4406 = vmax.f32 %v4324, 0.0
    %v4407 = vmax.f32 %v4373, 0.0
    %v4408 = vmax.f32 %v4326, 0.0
    %v4409 = vmax.f32 %v4375, 0.0
    %v4410 = vmax.f32 %v4329, 0.0
    %v4411 = vmax.f32 %v4378, 0.0
    %v4412 = vmax.f32 %v4331, 0.0
    %v4413 = vmax.f32 %v4380, 0.0
    %v4414 = vpack.c.bf16 %v4384, %v4382
    %v4415 = vpack.c.bf16 %v4385, %v4383
    %v4416 = vpack.c.bf16 %v4388, %v4386
    %v4417 = vpack.c.bf16 %v4389, %v4387
    %v4418 = vpack.c.bf16 %v4392, %v4390
    %v4419 = vpack.c.bf16 %v4393, %v4391
    %v4420 = vpack.c.bf16 %v4396, %v4394
    %v4421 = vpack.c.bf16 %v4397, %v4395
    %v4422 = vpack.c.bf16 %v4400, %v4398
    %v4423 = vpack.c.bf16 %v4401, %v4399
    %v4424 = vpack.c.bf16 %v4404, %v4402
    %v4425 = vpack.c.bf16 %v4405, %v4403
    %v4426 = vpack.c.bf16 %v4408, %v4406
    %v4427 = vpack.c.bf16 %v4409, %v4407
    %v4428 = vpack.c.bf16 %v4412, %v4410
    %v4429 = vpack.c.bf16 %v4413, %v4411
    %v4430 = vld [vmem:[#allocation6] sm:$0xf]
    %v4431 = vld [vmem:[#allocation6 + $0x4] sm:$0xf]
    %v4432 = vld [vmem:[#allocation6 + $0x8] sm:$0xf]
    %v4433 = vld [vmem:[#allocation6 + $0xc] sm:$0xf]
    %v4434 = vld [vmem:[#allocation6 + $0x10] sm:$0xf]
    %v4435 = vld [vmem:[#allocation6 + $0x14] sm:$0xf]
    %v4436 = vld [vmem:[#allocation6 + $0x18] sm:$0xf]
    %v4437 = vld [vmem:[#allocation6 + $0x1c] sm:$0xf]
    %v4438 = vld [vmem:[#allocation6 + $0x20] sm:$0xf]
    %v4439 = vld [vmem:[#allocation6 + $0x24] sm:$0xf]
    %v4440 = vld [vmem:[#allocation6 + $0x28] sm:$0xf]
    %v4441 = vld [vmem:[#allocation6 + $0x2c] sm:$0xf]
    %v4442 = vld [vmem:[#allocation6 + $0x30] sm:$0xf]
    %v4443 = vld [vmem:[#allocation6 + $0x34] sm:$0xf]
    %v4444 = vld [vmem:[#allocation6 + $0x38] sm:$0xf]
    %v4445 = vld [vmem:[#allocation6 + $0x3c] sm:$0xf]
    %v4446 = vld [vmem:[#allocation6 + $0x40] sm:$0xf]
    %v4447 = vld [vmem:[#allocation6 + $0x44] sm:$0xf]
    %v4448 = vld [vmem:[#allocation6 + $0x48] sm:$0xf]
    %v4449 = vld [vmem:[#allocation6 + $0x4c] sm:$0xf]
    %v4450 = vld [vmem:[#allocation6 + $0x50] sm:$0xf]
    %v4451 = vld [vmem:[#allocation6 + $0x54] sm:$0xf]
    %v4452 = vld [vmem:[#allocation6 + $0x58] sm:$0xf]
    %v4453 = vld [vmem:[#allocation6 + $0x5c] sm:$0xf]
    %v4454 = vld [vmem:[#allocation6 + $0x60] sm:$0xf]
    %v4455 = vld [vmem:[#allocation6 + $0x64] sm:$0xf]
    %v4456 = vld [vmem:[#allocation6 + $0x68] sm:$0xf]
    %v4457 = vld [vmem:[#allocation6 + $0x6c] sm:$0xf]
    %v4458 = vld [vmem:[#allocation6 + $0x70] sm:$0xf]
    %v4459 = vld [vmem:[#allocation6 + $0x74] sm:$0xf]
    %v4460 = vld [vmem:[#allocation6 + $0x78] sm:$0xf]
    %v4461 = vld [vmem:[#allocation6 + $0x7c] sm:$0xf]
    %v4462 = vld [vmem:[%s12] sm:$0x1]
    %v4464 = vperm.slane %v4462, 0
    %v4498 = vunpack.c.l.b16 %v4430
    %v4499 = vunpack.c.l.b16 %v4431
    %v4500 = vunpack.c.l.b16 %v4432
    %v4501 = vunpack.c.l.b16 %v4433
    %v4502 = vunpack.c.l.b16 %v4434
    %v4503 = vunpack.c.l.b16 %v4435
    %v4504 = vunpack.c.l.b16 %v4436
    %v4505 = vunpack.c.l.b16 %v4437
    %v4506 = vunpack.c.l.b16 %v4438
    %v4507 = vunpack.c.l.b16 %v4439
    %v4508 = vunpack.c.l.b16 %v4440
    %v4509 = vunpack.c.l.b16 %v4441
    %v4510 = vunpack.c.l.b16 %v4442
    %v4511 = vunpack.c.l.b16 %v4443
    %v4512 = vunpack.c.l.b16 %v4444
    %v4513 = vunpack.c.l.b16 %v4445
    %v4514 = vunpack.c.l.b16 %v4446
    %v4515 = vunpack.c.l.b16 %v4447
    %v4516 = vunpack.c.l.b16 %v4448
    %v4517 = vunpack.c.l.b16 %v4449
    %v4518 = vunpack.c.l.b16 %v4450
    %v4519 = vunpack.c.l.b16 %v4451
    %v4520 = vunpack.c.l.b16 %v4452
    %v4521 = vunpack.c.l.b16 %v4453
    %v4522 = vunpack.c.l.b16 %v4454
    %v4523 = vunpack.c.l.b16 %v4455
    %v4524 = vunpack.c.l.b16 %v4456
    %v4525 = vunpack.c.l.b16 %v4457
    %v4526 = vunpack.c.l.b16 %v4458
    %v4527 = vunpack.c.l.b16 %v4459
    %v4528 = vunpack.c.l.b16 %v4460
    %v4529 = vunpack.c.l.b16 %v4461
    %v4530 = vpack.c.b16 %v4499, %v4498
    %v4531 = vpack.c.b16 %v4501, %v4500
    %v4532 = vpack.c.b16 %v4503, %v4502
    %v4533 = vpack.c.b16 %v4505, %v4504
    %v4534 = vpack.c.b16 %v4507, %v4506
    %v4535 = vpack.c.b16 %v4509, %v4508
    %v4536 = vpack.c.b16 %v4511, %v4510
    %v4537 = vpack.c.b16 %v4513, %v4512
    %v4538 = vpack.c.b16 %v4515, %v4514
    %v4539 = vpack.c.b16 %v4517, %v4516
    %v4540 = vpack.c.b16 %v4519, %v4518
    %v4541 = vpack.c.b16 %v4521, %v4520
    %v4542 = vpack.c.b16 %v4523, %v4522
    %v4543 = vpack.c.b16 %v4525, %v4524
    %v4544 = vpack.c.b16 %v4527, %v4526
    %v4545 = vpack.c.b16 %v4529, %v4528
    %4562 = vmatpush.bf16.msra.mxu0 %v4537
    %4563 = vmatpush.bf16.msra.mxu0 %v4536
    %4564 = vmatpush.bf16.msra.mxu0 %v4535
    %4565 = vmatpush.bf16.msra.mxu0 %v4534
    %4566 = vmatpush.bf16.msra.mxu0 %v4533
    %4567 = vmatpush.bf16.msra.mxu0 %v4532
    %4568 = vmatpush.bf16.msra.mxu0 %v4531
    %4569 = vmatpush.bf16.msra.mxu0 %v4530
    %4570 = vmatmul.bf16.gmra.mxu0 %v4414
    %v4571 = vpop.f32.mrf.mxu0
    %v4572 = vadd.f32 %v4464, %v4571
    %v4573 = vpop.f32.mrf.mxu0
    %v4574 = vadd.f32 %v4464, %v4573
    %4575 = vmatmul.bf16.gmra.mxu0 %v4416
    %v4576 = vpop.f32.mrf.mxu0
    %v4577 = vadd.f32 %v4464, %v4576
    %v4578 = vpop.f32.mrf.mxu0
    %v4579 = vadd.f32 %v4464, %v4578
    %4580 = vmatmul.bf16.gmra.mxu0 %v4418
    %v4581 = vpop.f32.mrf.mxu0
    %v4582 = vadd.f32 %v4464, %v4581
    %v4583 = vpop.f32.mrf.mxu0
    %v4584 = vadd.f32 %v4464, %v4583
    %4585 = vmatmul.bf16.gmra.mxu0 %v4420
    %v4586 = vpop.f32.mrf.mxu0
    %v4587 = vadd.f32 %v4464, %v4586
    %v4588 = vpop.f32.mrf.mxu0
    %v4589 = vadd.f32 %v4464, %v4588
    %4590 = vmatmul.bf16.gmra.mxu0 %v4422
    %v4591 = vpop.f32.mrf.mxu0
    %v4592 = vadd.f32 %v4464, %v4591
    %v4593 = vpop.f32.mrf.mxu0
    %v4594 = vadd.f32 %v4464, %v4593
    %4595 = vmatmul.bf16.gmra.mxu0 %v4424
    %v4596 = vpop.f32.mrf.mxu0
    %v4597 = vadd.f32 %v4464, %v4596
    %v4598 = vpop.f32.mrf.mxu0
    %v4599 = vadd.f32 %v4464, %v4598
    %4600 = vmatmul.bf16.gmra.mxu0 %v4426
    %v4601 = vpop.f32.mrf.mxu0
    %v4602 = vadd.f32 %v4464, %v4601
    %v4603 = vpop.f32.mrf.mxu0
    %v4604 = vadd.f32 %v4464, %v4603
    %4605 = vmatmul.bf16.gmra.mxu0 %v4428
    %v4606 = vpop.f32.mrf.mxu0
    %v4607 = vadd.f32 %v4464, %v4606
    %v4608 = vpop.f32.mrf.mxu0
    %v4609 = vadd.f32 %v4464, %v4608
    %4610 = vdwg.mxu0
    %4611 = vmatpush.bf16.msra.mxu0 %v4545
    %4612 = vmatpush.bf16.msra.mxu0 %v4544
    %4613 = vmatpush.bf16.msra.mxu0 %v4543
    %4614 = vmatpush.bf16.msra.mxu0 %v4542
    %4615 = vmatpush.bf16.msra.mxu0 %v4541
    %4616 = vmatpush.bf16.msra.mxu0 %v4540
    %4617 = vmatpush.bf16.msra.mxu0 %v4539
    %4618 = vmatpush.bf16.msra.mxu0 %v4538
    %4619 = vmatmul.bf16.gmra.mxu0 %v4415
    %v4620 = vpop.f32.mrf.mxu0
    %v4621 = vadd.f32 %v4572, %v4620
    %v4622 = vpop.f32.mrf.mxu0
    %v4623 = vadd.f32 %v4574, %v4622
    %4624 = vmatmul.bf16.gmra.mxu0 %v4417
    %v4625 = vpop.f32.mrf.mxu0
    %v4626 = vadd.f32 %v4577, %v4625
    %v4627 = vpop.f32.mrf.mxu0
    %v4628 = vadd.f32 %v4579, %v4627
    %4629 = vmatmul.bf16.gmra.mxu0 %v4419
    %v4630 = vpop.f32.mrf.mxu0
    %v4631 = vadd.f32 %v4582, %v4630
    %v4632 = vpop.f32.mrf.mxu0
    %v4633 = vadd.f32 %v4584, %v4632
    %4634 = vmatmul.bf16.gmra.mxu0 %v4421
    %v4635 = vpop.f32.mrf.mxu0
    %v4636 = vadd.f32 %v4587, %v4635
    %v4637 = vpop.f32.mrf.mxu0
    %v4638 = vadd.f32 %v4589, %v4637
    %4639 = vmatmul.bf16.gmra.mxu0 %v4423
    %v4640 = vpop.f32.mrf.mxu0
    %v4641 = vadd.f32 %v4592, %v4640
    %v4642 = vpop.f32.mrf.mxu0
    %v4643 = vadd.f32 %v4594, %v4642
    %4644 = vmatmul.bf16.gmra.mxu0 %v4425
    %v4645 = vpop.f32.mrf.mxu0
    %v4646 = vadd.f32 %v4597, %v4645
    %v4647 = vpop.f32.mrf.mxu0
    %v4648 = vadd.f32 %v4599, %v4647
    %4649 = vmatmul.bf16.gmra.mxu0 %v4427
    %v4650 = vpop.f32.mrf.mxu0
    %v4651 = vadd.f32 %v4602, %v4650
    %v4652 = vpop.f32.mrf.mxu0
    %v4653 = vadd.f32 %v4604, %v4652
    %4654 = vmatmul.bf16.gmra.mxu0 %v4429
    %v4655 = vpop.f32.mrf.mxu0
    %v4656 = vadd.f32 %v4607, %v4655
    %v4657 = vpop.f32.mrf.mxu0
    %v4658 = vadd.f32 %v4609, %v4657
    %4659 = vdwg.mxu0
    %v4660 = vadd.f32 %v4158, %v4621
    %v4661 = vadd.f32 %v4159, %v4623
    %v4662 = vadd.f32 %v4160, %v4626
    %v4663 = vadd.f32 %v4161, %v4628
    %v4664 = vadd.f32 %v4162, %v4631
    %v4665 = vadd.f32 %v4163, %v4633
    %v4666 = vadd.f32 %v4164, %v4636
    %v4667 = vadd.f32 %v4165, %v4638
    %v4668 = vadd.f32 %v4166, %v4641
    %v4669 = vadd.f32 %v4167, %v4643
    %v4670 = vadd.f32 %v4168, %v4646
    %v4671 = vadd.f32 %v4169, %v4648
    %v4672 = vadd.f32 %v4170, %v4651
    %v4673 = vadd.f32 %v4171, %v4653
    %v4674 = vadd.f32 %v4172, %v4656
    %v4675 = vadd.f32 %v4173, %v4658
    %4676 = vadd.xlane.f32.xlu0 %v4660
    %v4677 = vpop.xlane.xlu0 %4676
    %4678 = vadd.xlane.f32.xlu0 %v4661
    %v4679 = vpop.xlane.xlu0 %4678
    %4680 = vadd.xlane.f32.xlu0 %v4662
    %v4681 = vpop.xlane.xlu0 %4680
    %4682 = vadd.xlane.f32.xlu0 %v4663
    %v4683 = vpop.xlane.xlu0 %4682
    %4684 = vadd.xlane.f32.xlu0 %v4664
    %v4685 = vpop.xlane.xlu0 %4684
    %4686 = vadd.xlane.f32.xlu0 %v4665
    %v4687 = vpop.xlane.xlu0 %4686
    %4688 = vadd.xlane.f32.xlu0 %v4666
    %v4689 = vpop.xlane.xlu0 %4688
    %4690 = vadd.xlane.f32.xlu0 %v4667
    %v4691 = vpop.xlane.xlu0 %4690
    %4692 = vadd.xlane.f32.xlu0 %v4668
    %v4693 = vpop.xlane.xlu0 %4692
    %4694 = vadd.xlane.f32.xlu0 %v4669
    %v4695 = vpop.xlane.xlu0 %4694
    %4696 = vadd.xlane.f32.xlu0 %v4670
    %v4697 = vpop.xlane.xlu0 %4696
    %4698 = vadd.xlane.f32.xlu0 %v4671
    %v4699 = vpop.xlane.xlu0 %4698
    %4700 = vadd.xlane.f32.xlu0 %v4672
    %v4701 = vpop.xlane.xlu0 %4700
    %4702 = vadd.xlane.f32.xlu0 %v4673
    %v4703 = vpop.xlane.xlu0 %4702
    %4704 = vadd.xlane.f32.xlu0 %v4674
    %v4705 = vpop.xlane.xlu0 %4704
    %4706 = vadd.xlane.f32.xlu0 %v4675
    %v4707 = vpop.xlane.xlu0 %4706
    %v4708 = vmul.f32 %v4677, %v3845
    %v4709 = vmul.f32 %v4679, %v3845
    %v4710 = vmul.f32 %v4681, %v3845
    %v4711 = vmul.f32 %v4683, %v3845
    %v4712 = vmul.f32 %v4685, %v3845
    %v4713 = vmul.f32 %v4687, %v3845
    %v4714 = vmul.f32 %v4689, %v3845
    %v4715 = vmul.f32 %v4691, %v3845
    %v4716 = vmul.f32 %v4693, %v3845
    %v4717 = vmul.f32 %v4695, %v3845
    %v4718 = vmul.f32 %v4697, %v3845
    %v4719 = vmul.f32 %v4699, %v3845
    %v4720 = vmul.f32 %v4701, %v3845
    %v4721 = vmul.f32 %v4703, %v3845
    %v4722 = vmul.f32 %v4705, %v3845
    %v4723 = vmul.f32 %v4707, %v3845
    %v4724 = vsub.f32 %v4660, %v4708
    %v4725 = vsub.f32 %v4661, %v4709
    %v4726 = vsub.f32 %v4662, %v4710
    %v4727 = vsub.f32 %v4663, %v4711
    %v4728 = vsub.f32 %v4664, %v4712
    %v4729 = vsub.f32 %v4665, %v4713
    %v4730 = vsub.f32 %v4666, %v4714
    %v4731 = vsub.f32 %v4667, %v4715
    %v4732 = vsub.f32 %v4668, %v4716
    %v4733 = vsub.f32 %v4669, %v4717
    %v4734 = vsub.f32 %v4670, %v4718
    %v4735 = vsub.f32 %v4671, %v4719
    %v4736 = vsub.f32 %v4672, %v4720
    %v4737 = vsub.f32 %v4673, %v4721
    %v4738 = vsub.f32 %v4674, %v4722
    %v4739 = vsub.f32 %v4675, %v4723
    %v4740 = vmul.f32 %v4724, %v4724
    %v4741 = vmul.f32 %v4725, %v4725
    %v4742 = vmul.f32 %v4726, %v4726
    %v4743 = vmul.f32 %v4727, %v4727
    %v4744 = vmul.f32 %v4728, %v4728
    %v4745 = vmul.f32 %v4729, %v4729
    %v4746 = vmul.f32 %v4730, %v4730
    %v4747 = vmul.f32 %v4731, %v4731
    %v4748 = vmul.f32 %v4732, %v4732
    %v4749 = vmul.f32 %v4733, %v4733
    %v4750 = vmul.f32 %v4734, %v4734
    %v4751 = vmul.f32 %v4735, %v4735
    %v4752 = vmul.f32 %v4736, %v4736
    %v4753 = vmul.f32 %v4737, %v4737
    %v4754 = vmul.f32 %v4738, %v4738
    %v4755 = vmul.f32 %v4739, %v4739
    %4756 = vadd.xlane.f32.xlu0 %v4740
    %v4757 = vpop.xlane.xlu0 %4756
    %4758 = vadd.xlane.f32.xlu0 %v4741
    %v4759 = vpop.xlane.xlu0 %4758
    %4760 = vadd.xlane.f32.xlu0 %v4742
    %v4761 = vpop.xlane.xlu0 %4760
    %4762 = vadd.xlane.f32.xlu0 %v4743
    %v4763 = vpop.xlane.xlu0 %4762
    %4764 = vadd.xlane.f32.xlu0 %v4744
    %v4765 = vpop.xlane.xlu0 %4764
    %4766 = vadd.xlane.f32.xlu0 %v4745
    %v4767 = vpop.xlane.xlu0 %4766
    %4768 = vadd.xlane.f32.xlu0 %v4746
    %v4769 = vpop.xlane.xlu0 %4768
    %4770 = vadd.xlane.f32.xlu0 %v4747
    %v4771 = vpop.xlane.xlu0 %4770
    %4772 = vadd.xlane.f32.xlu0 %v4748
    %v4773 = vpop.xlane.xlu0 %4772
    %4774 = vadd.xlane.f32.xlu0 %v4749
    %v4775 = vpop.xlane.xlu0 %4774
    %4776 = vadd.xlane.f32.xlu0 %v4750
    %v4777 = vpop.xlane.xlu0 %4776
    %4778 = vadd.xlane.f32.xlu0 %v4751
    %v4779 = vpop.xlane.xlu0 %4778
    %4780 = vadd.xlane.f32.xlu0 %v4752
    %v4781 = vpop.xlane.xlu0 %4780
    %4782 = vadd.xlane.f32.xlu0 %v4753
    %v4783 = vpop.xlane.xlu0 %4782
    %4784 = vadd.xlane.f32.xlu0 %v4754
    %v4785 = vpop.xlane.xlu0 %4784
    %4786 = vadd.xlane.f32.xlu0 %v4755
    %v4787 = vpop.xlane.xlu0 %4786
    %v4788 = vmul.f32 %v4757, %v3845
    %v4789 = vmul.f32 %v4759, %v3845
    %v4790 = vmul.f32 %v4761, %v3845
    %v4791 = vmul.f32 %v4763, %v3845
    %v4792 = vmul.f32 %v4765, %v3845
    %v4793 = vmul.f32 %v4767, %v3845
    %v4794 = vmul.f32 %v4769, %v3845
    %v4795 = vmul.f32 %v4771, %v3845
    %v4796 = vmul.f32 %v4773, %v3845
    %v4797 = vmul.f32 %v4775, %v3845
    %v4798 = vmul.f32 %v4777, %v3845
    %v4799 = vmul.f32 %v4779, %v3845
    %v4800 = vmul.f32 %v4781, %v3845
    %v4801 = vmul.f32 %v4783, %v3845
    %v4802 = vmul.f32 %v4785, %v3845
    %v4803 = vmul.f32 %v4787, %v3845
    %v4804 = vadd.f32 %v4788, 1e-05
    %v4805 = vadd.f32 %v4789, 1e-05
    %v4806 = vadd.f32 %v4790, 1e-05
    %v4807 = vadd.f32 %v4791, 1e-05
    %v4808 = vadd.f32 %v4792, 1e-05
    %v4809 = vadd.f32 %v4793, 1e-05
    %v4810 = vadd.f32 %v4794, 1e-05
    %v4811 = vadd.f32 %v4795, 1e-05
    %v4812 = vadd.f32 %v4796, 1e-05
    %v4813 = vadd.f32 %v4797, 1e-05
    %v4814 = vadd.f32 %v4798, 1e-05
    %v4815 = vadd.f32 %v4799, 1e-05
    %v4816 = vadd.f32 %v4800, 1e-05
    %v4817 = vadd.f32 %v4801, 1e-05
    %v4818 = vadd.f32 %v4802, 1e-05
    %v4819 = vadd.f32 %v4803, 1e-05
    %v4820 = vrsqrt.pop %v4804
    %v4821 = vmul.f32 %v4820, %v4804
    %v4822 = vmul.f32 %v4821, %v4820
    %v4823 = vmul.f32 0.5, %v4822
    %v4824 = vsub.f32 1.5, %v4823
    %v4825 = vmul.f32 %v4820, %v4824
    %vm4826 = vweird.f32 %v4804
    %vm4827 = vweird.f32 %v4820
    %vm4828 = vmor %vm4826, %vm4827
    %v4829 = vsel %vm4828, %v4820, %v4825
    %v4830 = vrsqrt.pop %v4805
    %v4831 = vmul.f32 %v4830, %v4805
    %v4832 = vmul.f32 %v4831, %v4830
    %v4833 = vmul.f32 0.5, %v4832
    %v4834 = vsub.f32 1.5, %v4833
    %v4835 = vmul.f32 %v4830, %v4834
    %vm4836 = vweird.f32 %v4805
    %vm4837 = vweird.f32 %v4830
    %vm4838 = vmor %vm4836, %vm4837
    %v4839 = vsel %vm4838, %v4830, %v4835
    %v4840 = vrsqrt.pop %v4806
    %v4841 = vmul.f32 %v4840, %v4806
    %v4842 = vmul.f32 %v4841, %v4840
    %v4843 = vmul.f32 0.5, %v4842
    %v4844 = vsub.f32 1.5, %v4843
    %v4845 = vmul.f32 %v4840, %v4844
    %vm4846 = vweird.f32 %v4806
    %vm4847 = vweird.f32 %v4840
    %vm4848 = vmor %vm4846, %vm4847
    %v4849 = vsel %vm4848, %v4840, %v4845
    %v4850 = vrsqrt.pop %v4807
    %v4851 = vmul.f32 %v4850, %v4807
    %v4852 = vmul.f32 %v4851, %v4850
    %v4853 = vmul.f32 0.5, %v4852
    %v4854 = vsub.f32 1.5, %v4853
    %v4855 = vmul.f32 %v4850, %v4854
    %vm4856 = vweird.f32 %v4807
    %vm4857 = vweird.f32 %v4850
    %vm4858 = vmor %vm4856, %vm4857
    %v4859 = vsel %vm4858, %v4850, %v4855
    %v4860 = vrsqrt.pop %v4808
    %v4861 = vmul.f32 %v4860, %v4808
    %v4862 = vmul.f32 %v4861, %v4860
    %v4863 = vmul.f32 0.5, %v4862
    %v4864 = vsub.f32 1.5, %v4863
    %v4865 = vmul.f32 %v4860, %v4864
    %vm4866 = vweird.f32 %v4808
    %vm4867 = vweird.f32 %v4860
    %vm4868 = vmor %vm4866, %vm4867
    %v4869 = vsel %vm4868, %v4860, %v4865
    %v4870 = vrsqrt.pop %v4809
    %v4871 = vmul.f32 %v4870, %v4809
    %v4872 = vmul.f32 %v4871, %v4870
    %v4873 = vmul.f32 0.5, %v4872
    %v4874 = vsub.f32 1.5, %v4873
    %v4875 = vmul.f32 %v4870, %v4874
    %vm4876 = vweird.f32 %v4809
    %vm4877 = vweird.f32 %v4870
    %vm4878 = vmor %vm4876, %vm4877
    %v4879 = vsel %vm4878, %v4870, %v4875
    %v4880 = vrsqrt.pop %v4810
    %v4881 = vmul.f32 %v4880, %v4810
    %v4882 = vmul.f32 %v4881, %v4880
    %v4883 = vmul.f32 0.5, %v4882
    %v4884 = vsub.f32 1.5, %v4883
    %v4885 = vmul.f32 %v4880, %v4884
    %vm4886 = vweird.f32 %v4810
    %vm4887 = vweird.f32 %v4880
    %vm4888 = vmor %vm4886, %vm4887
    %v4889 = vsel %vm4888, %v4880, %v4885
    %v4890 = vrsqrt.pop %v4811
    %v4891 = vmul.f32 %v4890, %v4811
    %v4892 = vmul.f32 %v4891, %v4890
    %v4893 = vmul.f32 0.5, %v4892
    %v4894 = vsub.f32 1.5, %v4893
    %v4895 = vmul.f32 %v4890, %v4894
    %vm4896 = vweird.f32 %v4811
    %vm4897 = vweird.f32 %v4890
    %vm4898 = vmor %vm4896, %vm4897
    %v4899 = vsel %vm4898, %v4890, %v4895
    %v4900 = vrsqrt.pop %v4812
    %v4901 = vmul.f32 %v4900, %v4812
    %v4902 = vmul.f32 %v4901, %v4900
    %v4903 = vmul.f32 0.5, %v4902
    %v4904 = vsub.f32 1.5, %v4903
    %v4905 = vmul.f32 %v4900, %v4904
    %vm4906 = vweird.f32 %v4812
    %vm4907 = vweird.f32 %v4900
    %vm4908 = vmor %vm4906, %vm4907
    %v4909 = vsel %vm4908, %v4900, %v4905
    %v4910 = vrsqrt.pop %v4813
    %v4911 = vmul.f32 %v4910, %v4813
    %v4912 = vmul.f32 %v4911, %v4910
    %v4913 = vmul.f32 0.5, %v4912
    %v4914 = vsub.f32 1.5, %v4913
    %v4915 = vmul.f32 %v4910, %v4914
    %vm4916 = vweird.f32 %v4813
    %vm4917 = vweird.f32 %v4910
    %vm4918 = vmor %vm4916, %vm4917
    %v4919 = vsel %vm4918, %v4910, %v4915
    %v4920 = vrsqrt.pop %v4814
    %v4921 = vmul.f32 %v4920, %v4814
    %v4922 = vmul.f32 %v4921, %v4920
    %v4923 = vmul.f32 0.5, %v4922
    %v4924 = vsub.f32 1.5, %v4923
    %v4925 = vmul.f32 %v4920, %v4924
    %vm4926 = vweird.f32 %v4814
    %vm4927 = vweird.f32 %v4920
    %vm4928 = vmor %vm4926, %vm4927
    %v4929 = vsel %vm4928, %v4920, %v4925
    %v4930 = vrsqrt.pop %v4815
    %v4931 = vmul.f32 %v4930, %v4815
    %v4932 = vmul.f32 %v4931, %v4930
    %v4933 = vmul.f32 0.5, %v4932
    %v4934 = vsub.f32 1.5, %v4933
    %v4935 = vmul.f32 %v4930, %v4934
    %vm4936 = vweird.f32 %v4815
    %vm4937 = vweird.f32 %v4930
    %vm4938 = vmor %vm4936, %vm4937
    %v4939 = vsel %vm4938, %v4930, %v4935
    %v4940 = vrsqrt.pop %v4816
    %v4941 = vmul.f32 %v4940, %v4816
    %v4942 = vmul.f32 %v4941, %v4940
    %v4943 = vmul.f32 0.5, %v4942
    %v4944 = vsub.f32 1.5, %v4943
    %v4945 = vmul.f32 %v4940, %v4944
    %vm4946 = vweird.f32 %v4816
    %vm4947 = vweird.f32 %v4940
    %vm4948 = vmor %vm4946, %vm4947
    %v4949 = vsel %vm4948, %v4940, %v4945
    %v4950 = vrsqrt.pop %v4817
    %v4951 = vmul.f32 %v4950, %v4817
    %v4952 = vmul.f32 %v4951, %v4950
    %v4953 = vmul.f32 0.5, %v4952
    %v4954 = vsub.f32 1.5, %v4953
    %v4955 = vmul.f32 %v4950, %v4954
    %vm4956 = vweird.f32 %v4817
    %vm4957 = vweird.f32 %v4950
    %vm4958 = vmor %vm4956, %vm4957
    %v4959 = vsel %vm4958, %v4950, %v4955
    %v4960 = vrsqrt.pop %v4818
    %v4961 = vmul.f32 %v4960, %v4818
    %v4962 = vmul.f32 %v4961, %v4960
    %v4963 = vmul.f32 0.5, %v4962
    %v4964 = vsub.f32 1.5, %v4963
    %v4965 = vmul.f32 %v4960, %v4964
    %vm4966 = vweird.f32 %v4818
    %vm4967 = vweird.f32 %v4960
    %vm4968 = vmor %vm4966, %vm4967
    %v4969 = vsel %vm4968, %v4960, %v4965
    %v4970 = vrsqrt.pop %v4819
    %v4971 = vmul.f32 %v4970, %v4819
    %v4972 = vmul.f32 %v4971, %v4970
    %v4973 = vmul.f32 0.5, %v4972
    %v4974 = vsub.f32 1.5, %v4973
    %v4975 = vmul.f32 %v4970, %v4974
    %vm4976 = vweird.f32 %v4819
    %vm4977 = vweird.f32 %v4970
    %vm4978 = vmor %vm4976, %vm4977
    %v4979 = vsel %vm4978, %v4970, %v4975
    %v4980 = vmul.f32 %v4724, %v4829
    %v4981 = vmul.f32 %v4725, %v4839
    %v4982 = vmul.f32 %v4726, %v4849
    %v4983 = vmul.f32 %v4727, %v4859
    %v4984 = vmul.f32 %v4728, %v4869
    %v4985 = vmul.f32 %v4729, %v4879
    %v4986 = vmul.f32 %v4730, %v4889
    %v4987 = vmul.f32 %v4731, %v4899
    %v4988 = vmul.f32 %v4732, %v4909
    %v4989 = vmul.f32 %v4733, %v4919
    %v4990 = vmul.f32 %v4734, %v4929
    %v4991 = vmul.f32 %v4735, %v4939
    %v4992 = vmul.f32 %v4736, %v4949
    %v4993 = vmul.f32 %v4737, %v4959
    %v4994 = vmul.f32 %v4738, %v4969
    %v4995 = vmul.f32 %v4739, %v4979
    %v4996 = vld [vmem:[%s13] sm:$0x1]
    %v4998 = vperm.slane %v4996, 0
    %v5000 = vmul.f32 %v4980, %v4998
    %v5001 = vmul.f32 %v4981, %v4998
    %v5002 = vmul.f32 %v4982, %v4998
    %v5003 = vmul.f32 %v4983, %v4998
    %v5004 = vmul.f32 %v4984, %v4998
    %v5005 = vmul.f32 %v4985, %v4998
    %v5006 = vmul.f32 %v4986, %v4998
    %v5007 = vmul.f32 %v4987, %v4998
    %v5008 = vmul.f32 %v4988, %v4998
    %v5009 = vmul.f32 %v4989, %v4998
    %v5010 = vmul.f32 %v4990, %v4998
    %v5011 = vmul.f32 %v4991, %v4998
    %v5012 = vmul.f32 %v4992, %v4998
    %v5013 = vmul.f32 %v4993, %v4998
    %v5014 = vmul.f32 %v4994, %v4998
    %v5015 = vmul.f32 %v4995, %v4998
    %v5016 = vld [vmem:[%s14] sm:$0x1]
    %v5018 = vperm.slane %v5016, 0
    %v5020 = vadd.f32 %v5000, %v5018
    %v5021 = vadd.f32 %v5001, %v5018
    %v5022 = vadd.f32 %v5002, %v5018
    %v5023 = vadd.f32 %v5003, %v5018
    %v5024 = vadd.f32 %v5004, %v5018
    %v5025 = vadd.f32 %v5005, %v5018
    %v5026 = vadd.f32 %v5006, %v5018
    %v5027 = vadd.f32 %v5007, %v5018
    %v5028 = vadd.f32 %v5008, %v5018
    %v5029 = vadd.f32 %v5009, %v5018
    %v5030 = vadd.f32 %v5010, %v5018
    %v5031 = vadd.f32 %v5011, %v5018
    %v5032 = vadd.f32 %v5012, %v5018
    %v5033 = vadd.f32 %v5013, %v5018
    %v5034 = vadd.f32 %v5014, %v5018
    %v5035 = vadd.f32 %v5015, %v5018
    %5036 = vst [vmem:[%s15] sm:$0xff] %v5020
    %5037 = vst [vmem:[%s15 + $0x8] sm:$0xff] %v5021
    %5038 = vst [vmem:[%s15 + $0x10] sm:$0xff] %v5022
    %5039 = vst [vmem:[%s15 + $0x18] sm:$0xff] %v5023
    %5040 = vst [vmem:[%s15 + $0x20] sm:$0xff] %v5024
    %5041 = vst [vmem:[%s15 + $0x28] sm:$0xff] %v5025
    %5042 = vst [vmem:[%s15 + $0x30] sm:$0xff] %v5026
    %5043 = vst [vmem:[%s15 + $0x38] sm:$0xff] %v5027
    %5044 = vst [vmem:[%s15 + $0x40] sm:$0xff] %v5028
    %5045 = vst [vmem:[%s15 + $0x48] sm:$0xff] %v5029
    %5046 = vst [vmem:[%s15 + $0x50] sm:$0xff] %v5030
    %5047 = vst [vmem:[%s15 + $0x58] sm:$0xff] %v5031
    %5048 = vst [vmem:[%s15 + $0x60] sm:$0xff] %v5032
    %5049 = vst [vmem:[%s15 + $0x68] sm:$0xff] %v5033
    %5050 = vst [vmem:[%s15 + $0x70] sm:$0xff] %v5034
    %5051 = vst [vmem:[%s15 + $0x78] sm:$0xff] %v5035
    // Predicated region
    $region74: #{graph_transformer_forward.8} parent=1 // pred_check
      _
    $region75: #{graph_transformer_forward.8} parent=1 // pred_check_branch
      %5053 = sbr.rel (0) target = $region77
    $region76: #{graph_transformer_forward.8} parent=1 // pred_region
      _
    $region77: #{graph_transformer_forward.8} parent=1 // pred_fallthru
      _
    // Predicated region
    $region78: #{graph_transformer_forward.8} parent=1 // pred_check
      _
    $region79: #{graph_transformer_forward.8} parent=1 // pred_check_branch
      %5055 = sbr.rel (0) target = $region81
    $region80: #{graph_transformer_forward.8} parent=1 // pred_region
      _
    $region81: #{graph_transformer_forward.8} parent=1 // pred_fallthru
      _
    %5056 = vsyncpa [#allocation3], 1
    %5057 = vsyncpa [#allocation5], 1

</llo_original>
